<compile_context>
chip_gen: v6e
topology: v6e:2x2x1
jax: 0.10.0
libtpu: 0.0.40
codegen_flags: <defaults>
</compile_context>

<pallas_src>
import functools

import jax
import jax.numpy as jnp
from jax.experimental import pallas as pl
from jax.experimental.pallas import tpu as pltpu


# ----------------------------------------------------------------------------
# Static row offsets inside the packed weight slab (shared by kernel + wrapper)
# ----------------------------------------------------------------------------
def _align8(x):
    return -(-x // 8) * 8


def _offsets(F, Hd):
    o = {}
    r = 0

    def sec(name, n):
        nonlocal r
        o[name] = r
        r = _align8(r + n)

    sec("w_hh", 4 * Hd)   # 4 stacked (Hd, Hd) gate blocks, gate order [i,f,g,o]
    sec("w1d", Hd)        # (Hd, F)
    sec("w1c", Hd)        # (Hd, F)
    sec("w1h", F)         # (F, F)
    sec("w_ih", 4)        # 4 rows, each (1, Hd)
    sec("b_l", 4)         # 4 rows, each (1, Hd)  (b_ih + b_hh)
    sec("b1", 1)          # (1, F)
    sec("w2", 1)          # (1, F)
    sec("wfcc", F)        # (F, 1) column
    sec("wfinh", Hd)      # (Hd, 1) column
    sec("wfinc", F)       # (F, 1) column
    o["rows"] = r
    return o


# ----------------------------------------------------------------------------
# Pallas kernel: full decoder forward, recurrence fully unrolled in-kernel
# ----------------------------------------------------------------------------
def _decoder_kernel(T, F, Hd, H_ref, Y_ref, P_ref, scal_ref, out_ref):
    B = H_ref.shape[0]
    off = _offsets(F, Hd)

    # ---- hoisted, loop-invariant loads from the single packed operand -------
    w_hh = [P_ref[off["w_hh"] + g * Hd: off["w_hh"] + (g + 1) * Hd, 0:Hd]
            for g in range(4)]                                   # 4 x (Hd, Hd)
    w1d = P_ref[off["w1d"]:off["w1d"] + Hd, 0:F]                 # (Hd, F)
    w1c = P_ref[off["w1c"]:off["w1c"] + Hd, 0:F]                 # (Hd, F)
    w1h = P_ref[off["w1h"]:off["w1h"] + F, 0:F]                  # (F, F)
    w_ih = [P_ref[off["w_ih"] + g: off["w_ih"] + g + 1, 0:Hd]
            for g in range(4)]                                   # 4 x (1, Hd)
    b_l = [P_ref[off["b_l"] + g: off["b_l"] + g + 1, 0:Hd]
           for g in range(4)]                                    # 4 x (1, Hd)
    b1 = P_ref[off["b1"]:off["b1"] + 1, 0:F]                     # (1, F)
    w2row = P_ref[off["w2"]:off["w2"] + 1, 0:F]                  # (1, F)
    wfcc = P_ref[off["wfcc"]:off["wfcc"] + F, 0:1]               # (F, 1)
    wfinh = P_ref[off["wfinh"]:off["wfinh"] + Hd, 0:1]           # (Hd, 1)
    wfinc = P_ref[off["wfinc"]:off["wfinc"] + F, 0:1]            # (F, 1)

    b2 = scal_ref[0]
    bfc = scal_ref[1]
    wfc_y = scal_ref[2]
    bfin = scal_ref[3]

    H = H_ref[...]                                               # (B, T, F)
    Yv = Y_ref[...]                                              # (B, T)

    # ---- loop-invariant precompute ------------------------------------------
    # attn layer 1, H part:  H @ W1_H + b1
    zH = (jnp.dot(H.reshape(B * T, F), w1h,
                  preferred_element_type=jnp.float32) + b1).reshape(B, T, F)
    # fc() contribution that only depends on Y:  Y[:, t] * w_y + b_fc
    ydrive = Yv * wfc_y + bfc                                    # (B, T)
    # attn layer 2 weight broadcast, hoisted (broadcasts are not CSE'd by JAX)
    w2b = jnp.broadcast_to(w2row.reshape(1, 1, F), (B, 1, F))    # (B, 1, F)

    d = jnp.zeros((B, Hd), jnp.float32)                          # hidden state
    c = jnp.zeros((B, Hd), jnp.float32)                          # cell state
    ctx = jnp.zeros((B, F), jnp.float32)                         # context

    # ---- fully unrolled recurrence (T is a static Python int) ---------------
    for t in range(T):
        # attention MLP, decomposed: tanh(d@W1d + c@W1c + (H@W1h + b1))
        s = (jnp.dot(d, w1d, preferred_element_type=jnp.float32)
             + jnp.dot(c, w1c, preferred_element_type=jnp.float32))   # (B, F)
        z = jnp.tanh(zH + s[:, None, :])                               # (B, T, F)

        # scores: e[b,1,t] = w2 . z[b,t,:] + b2   (MXU contraction over F)
        e = jnp.einsum("bqf,btf->bqt", w2b, z,
                       preferred_element_type=jnp.float32) + b2        # (B, 1, T)

        # softmax over the timestep axis (dim=1 in the PyTorch code)
        e_max = jnp.max(e, axis=-1, keepdims=True)
        p = jnp.exp(e - e_max)
        beta = p / jnp.sum(p, axis=-1, keepdims=True)                  # (B, 1, T)

        # context = bmm(beta, H)   (MXU contraction over T)
        ctx = jnp.einsum("bqt,btf->bqf", beta, H,
                         preferred_element_type=jnp.float32)[:, 0, :]  # (B, F)

        # y_tilde = fc(cat(context, Y[:, t]))
        y_tilde = (jnp.dot(ctx, wfcc, preferred_element_type=jnp.float32)
                   + ydrive[:, t:t + 1])                               # (B, 1)

        # one LSTM step (input size 1), gate order [i, f, g, o]; per-gate GEMMs
        g_pre = [jnp.dot(d, w_hh[g], preferred_element_type=jnp.float32)
                 + y_tilde * w_ih[g] + b_l[g] for g in range(4)]
        i_g = jax.nn.sigmoid(g_pre[0])
        f_g = jax.nn.sigmoid(g_pre[1])
        g_g = jnp.tanh(g_pre[2])
        o_g = jax.nn.sigmoid(g_pre[3])
        c = f_g * c + i_g * g_g
        d = o_g * jnp.tanh(c)

    # y_pred = fc_final(cat(d_n[0], context))
    out_ref[...] = (jnp.dot(d, wfinh, preferred_element_type=jnp.float32)
                    + jnp.dot(ctx, wfinc, preferred_element_type=jnp.float32)
                    + bfin)


# ----------------------------------------------------------------------------
# Wrapper: pack weights into one VMEM slab + one SMEM scalar vector
# ----------------------------------------------------------------------------
def _pack_weights(params, F, Hd, width=128):
    o = _offsets(F, Hd)
    W = max(width, Hd, F)
    R = _align8(o["rows"])
    P = jnp.zeros((R, W), jnp.float32)

    def put(P, row, arr):
        arr = jnp.asarray(arr, jnp.float32)
        return P.at[row:row + arr.shape[0], 0:arr.shape[1]].set(arr)

    for g in range(4):
        P = put(P, o["w_hh"] + g * Hd, params["w_hh"][:, g * Hd:(g + 1) * Hd])
        P = put(P, o["w_ih"] + g, params["w_ih"][:, g * Hd:(g + 1) * Hd])
        P = put(P, o["b_l"] + g, params["b_lstm"][:, g * Hd:(g + 1) * Hd])
    P = put(P, o["w1d"], params["w1d"])
    P = put(P, o["w1c"], params["w1c"])
    P = put(P, o["w1h"], params["w1h"])
    P = put(P, o["b1"], params["b1"])
    P = put(P, o["w2"], params["w2"])
    P = put(P, o["wfcc"], params["wfc_c"].T)
    P = put(P, o["wfinh"], params["wfin_h"].T)
    P = put(P, o["wfinc"], params["wfin_c"].T)
    return P


def decoder_pallas(H, Y, params, hid_dim):
    B, T, F = H.shape
    Hd = hid_dim
    P = _pack_weights(params, F, Hd)
    scal = jnp.stack([params["b2"][0, 0], params["bfc"][0, 0],
                      params["wfc_y"][0, 0], params["bfin"][0, 0]]
                     ).astype(jnp.float32)

    vmem = pl.BlockSpec(memory_space=pltpu.MemorySpace.VMEM)
    smem = pl.BlockSpec(memory_space=pltpu.MemorySpace.SMEM)

    return pl.pallas_call(
        functools.partial(_decoder_kernel, T, F, Hd),
        out_shape=jax.ShapeDtypeStruct((B, 1), jnp.float32),
        in_specs=[vmem, vmem, vmem, smem],
        out_specs=vmem,
        compiler_params=pltpu.CompilerParams(vmem_limit_bytes=32 * 1024 * 1024),
    )(H.astype(jnp.float32), Y.astype(jnp.float32), P, scal)


# ----------------------------------------------------------------------------
# Pure-JAX reference (mirrors the PyTorch forward exactly) for validation
# ----------------------------------------------------------------------------
def decoder_ref(H, Y, params, hid_dim):
    B, T, F = H.shape
    Hd = hid_dim
    d = jnp.zeros((B, Hd), jnp.float32)
    c = jnp.zeros((B, Hd), jnp.float32)
    ctx = jnp.zeros((B, F), jnp.float32)
    W1 = jnp.concatenate([params["w1d"], params["w1c"], params["w1h"]], axis=0)
    for t in range(T):
        x = jnp.concatenate(
            [jnp.broadcast_to(d[:, None, :], (B, T, Hd)),
             jnp.broadcast_to(c[:, None, :], (B, T, Hd)), H], axis=2)
        z = jnp.tanh(x @ W1 + params["b1"])
        e = jnp.sum(z * params["w2"][None, :, :], axis=-1) + params["b2"][0, 0]
        beta = jax.nn.softmax(e, axis=1)
        ctx = jnp.einsum("bt,btf->bf", beta, H)
        y_tilde = (jnp.sum(ctx * params["wfc_c"], axis=-1, keepdims=True)
                   + Y[:, t:t + 1] * params["wfc_y"][0, 0] + params["bfc"][0, 0])
        gates = y_tilde * params["w_ih"] + d @ params["w_hh"] + params["b_lstm"]
        i_g = jax.nn.sigmoid(gates[:, 0 * Hd:1 * Hd])
        f_g = jax.nn.sigmoid(gates[:, 1 * Hd:2 * Hd])
        g_g = jnp.tanh(gates[:, 2 * Hd:3 * Hd])
        o_g = jax.nn.sigmoid(gates[:, 3 * Hd:4 * Hd])
        c = f_g * c + i_g * g_g
        d = o_g * jnp.tanh(c)
    return (jnp.sum(d * params["wfin_h"], axis=-1, keepdims=True)
            + jnp.sum(ctx * params["wfin_c"], axis=-1, keepdims=True)
            + params["bfin"][0, 0])


# ----------------------------------------------------------------------------
# Deterministic parameter construction (synthetic init; shapes from __init__)
# ----------------------------------------------------------------------------
def make_params(key, timesteps, feat_dim, hid_dim):
    def u(k, shape, scale=0.2):
        return jax.random.uniform(k, shape, jnp.float32, -scale, scale)

    ks = jax.random.split(key, 16)
    F, Hd = feat_dim, hid_dim
    return {
        # attn: Linear(2*Hd + F -> F), Tanh, Linear(F -> 1)  (pre-transposed)
        "w1d": u(ks[0], (Hd, F)),
        "w1c": u(ks[1], (Hd, F)),
        "w1h": u(ks[2], (F, F)),
        "b1":  u(ks[3], (1, F)),
        "w2":  u(ks[4], (1, F)),
        "b2":  u(ks[5], (1, 1)),
        # fc: Linear(F + 1 -> 1) split into context part and scalar Y part
        "wfc_c": u(ks[6], (1, F)),
        "wfc_y": u(ks[7], (1, 1)),
        "bfc":   u(ks[8], (1, 1)),
        # LSTM(input_size=1, hidden_size=Hd): pre-transposed, gate order [i,f,g,o]
        "w_ih":   u(ks[9], (1, 4 * Hd)),
        "w_hh":   u(ks[10], (Hd, 4 * Hd)),
        "b_lstm": u(ks[11], (1, 4 * Hd)),
        # fc_final: Linear(Hd + F -> 1) split into hidden and context parts
        "wfin_h": u(ks[12], (1, Hd)),
        "wfin_c": u(ks[13], (1, F)),
        "bfin":   u(ks[14], (1, 1)),
    }


if __name__ == "__main__":
    B, T, F, Hd = 2, 8, 16, 32   # batch, timesteps, encoder feat dim, decoder hid dim

    key = jax.random.PRNGKey(0)
    k_h, k_y, k_p = jax.random.split(key, 3)
    H = jax.random.normal(k_h, (B, T, F), jnp.float32)   # encoder hidden states
    Y = jax.random.normal(k_y, (B, T), jnp.float32)      # driving series targets
    params = make_params(k_p, T, F, Hd)

    out = decoder_pallas(H, Y, params, Hd)
    out = jax.block_until_ready(out)

    ref = decoder_ref(H, Y, params, Hd)
    assert out.shape == (B, 1)
    assert jnp.allclose(out, ref, atol=1e-4, rtol=1e-4), (out, ref)

    print("KERNEL_OK")
</pallas_src>

<mosaic_0001>
module attributes {stable_mosaic.version = 11 : i64} {
  func.func @_decoder_kernel(%arg0: memref<2x8x16xf32, #tpu.memory_space<vmem>>, %arg1: memref<2x8xf32, #tpu.memory_space<vmem>>, %arg2: memref<304x128xf32, #tpu.memory_space<vmem>>, %arg3: memref<4xf32, #tpu.memory_space<smem>>, %arg4: memref<2x1xf32, #tpu.memory_space<vmem>>) attributes {dimension_semantics = [], scalar_prefetch = 0 : i64, scratch_operands = 0 : i64, tpu.core_type = #tpu.core_type<tc>} {
    %c0 = arith.constant 0 : index
    %c0_0 = arith.constant 0 : index
    %0 = vector.load %arg2[%c0, %c0_0] : memref<304x128xf32, #tpu.memory_space<vmem>>, vector<32x32xf32>
    %c32 = arith.constant 32 : index
    %c0_1 = arith.constant 0 : index
    %1 = vector.load %arg2[%c32, %c0_1] : memref<304x128xf32, #tpu.memory_space<vmem>>, vector<32x32xf32>
    %c64 = arith.constant 64 : index
    %c0_2 = arith.constant 0 : index
    %2 = vector.load %arg2[%c64, %c0_2] : memref<304x128xf32, #tpu.memory_space<vmem>>, vector<32x32xf32>
    %c96 = arith.constant 96 : index
    %c0_3 = arith.constant 0 : index
    %3 = vector.load %arg2[%c96, %c0_3] : memref<304x128xf32, #tpu.memory_space<vmem>>, vector<32x32xf32>
    %c128 = arith.constant 128 : index
    %c0_4 = arith.constant 0 : index
    %4 = vector.load %arg2[%c128, %c0_4] : memref<304x128xf32, #tpu.memory_space<vmem>>, vector<32x16xf32>
    %c160 = arith.constant 160 : index
    %c0_5 = arith.constant 0 : index
    %5 = vector.load %arg2[%c160, %c0_5] : memref<304x128xf32, #tpu.memory_space<vmem>>, vector<32x16xf32>
    %c192 = arith.constant 192 : index
    %c0_6 = arith.constant 0 : index
    %6 = vector.load %arg2[%c192, %c0_6] : memref<304x128xf32, #tpu.memory_space<vmem>>, vector<16x16xf32>
    %c208 = arith.constant 208 : index
    %c0_7 = arith.constant 0 : index
    %7 = vector.load %arg2[%c208, %c0_7] : memref<304x128xf32, #tpu.memory_space<vmem>>, vector<1x32xf32>
    %c209 = arith.constant 209 : index
    %c0_8 = arith.constant 0 : index
    %8 = vector.load %arg2[%c209, %c0_8] : memref<304x128xf32, #tpu.memory_space<vmem>>, vector<1x32xf32>
    %c210 = arith.constant 210 : index
    %c0_9 = arith.constant 0 : index
    %9 = vector.load %arg2[%c210, %c0_9] : memref<304x128xf32, #tpu.memory_space<vmem>>, vector<1x32xf32>
    %c211 = arith.constant 211 : index
    %c0_10 = arith.constant 0 : index
    %10 = vector.load %arg2[%c211, %c0_10] : memref<304x128xf32, #tpu.memory_space<vmem>>, vector<1x32xf32>
    %c216 = arith.constant 216 : index
    %c0_11 = arith.constant 0 : index
    %11 = vector.load %arg2[%c216, %c0_11] : memref<304x128xf32, #tpu.memory_space<vmem>>, vector<1x32xf32>
    %c217 = arith.constant 217 : index
    %c0_12 = arith.constant 0 : index
    %12 = vector.load %arg2[%c217, %c0_12] : memref<304x128xf32, #tpu.memory_space<vmem>>, vector<1x32xf32>
    %c218 = arith.constant 218 : index
    %c0_13 = arith.constant 0 : index
    %13 = vector.load %arg2[%c218, %c0_13] : memref<304x128xf32, #tpu.memory_space<vmem>>, vector<1x32xf32>
    %c219 = arith.constant 219 : index
    %c0_14 = arith.constant 0 : index
    %14 = vector.load %arg2[%c219, %c0_14] : memref<304x128xf32, #tpu.memory_space<vmem>>, vector<1x32xf32>
    %c224 = arith.constant 224 : index
    %c0_15 = arith.constant 0 : index
    %15 = vector.load %arg2[%c224, %c0_15] : memref<304x128xf32, #tpu.memory_space<vmem>>, vector<1x16xf32>
    %c232 = arith.constant 232 : index
    %c0_16 = arith.constant 0 : index
    %16 = vector.load %arg2[%c232, %c0_16] : memref<304x128xf32, #tpu.memory_space<vmem>>, vector<1x16xf32>
    %c240 = arith.constant 240 : index
    %c0_17 = arith.constant 0 : index
    %17 = vector.load %arg2[%c240, %c0_17] : memref<304x128xf32, #tpu.memory_space<vmem>>, vector<16x1xf32>
    %c256 = arith.constant 256 : index
    %c0_18 = arith.constant 0 : index
    %18 = vector.load %arg2[%c256, %c0_18] : memref<304x128xf32, #tpu.memory_space<vmem>>, vector<32x1xf32>
    %c288 = arith.constant 288 : index
    %c0_19 = arith.constant 0 : index
    %19 = vector.load %arg2[%c288, %c0_19] : memref<304x128xf32, #tpu.memory_space<vmem>>, vector<16x1xf32>
    %c0_20 = arith.constant 0 : index
    %20 = memref.load %arg3[%c0_20] : memref<4xf32, #tpu.memory_space<smem>>
    %c1 = arith.constant 1 : index
    %21 = memref.load %arg3[%c1] : memref<4xf32, #tpu.memory_space<smem>>
    %c2 = arith.constant 2 : index
    %22 = memref.load %arg3[%c2] : memref<4xf32, #tpu.memory_space<smem>>
    %c3 = arith.constant 3 : index
    %23 = memref.load %arg3[%c3] : memref<4xf32, #tpu.memory_space<smem>>
    %c0_21 = arith.constant 0 : index
    %c0_22 = arith.constant 0 : index
    %c0_23 = arith.constant 0 : index
    %24 = vector.load %arg0[%c0_21, %c0_22, %c0_23] : memref<2x8x16xf32, #tpu.memory_space<vmem>>, vector<2x8x16xf32>
    %c0_24 = arith.constant 0 : index
    %c0_25 = arith.constant 0 : index
    %25 = vector.load %arg1[%c0_24, %c0_25] : memref<2x8xf32, #tpu.memory_space<vmem>>, vector<2x8xf32>
    %26 = vector.shape_cast %24 : vector<2x8x16xf32> to vector<16x16xf32>
    %cst = arith.constant dense<0.000000e+00> : vector<16x16xf32>
    %27 = tpu.matmul %26, %6, %cst {dimension_numbers = #tpu.dot_dimension_numbers<[1], [0], [0], [1], [0, 0, 1, 1], [], []>} : vector<16x16xf32>, vector<16x16xf32>, vector<16x16xf32> -> vector<16x16xf32>
    %28 = vector.broadcast %15 : vector<1x16xf32> to vector<16x16xf32>
    %29 = arith.addf %27, %28 : vector<16x16xf32>
    %30 = vector.shape_cast %29 : vector<16x16xf32> to vector<2x8x16xf32>
    %31 = vector.broadcast %22 : f32 to vector<2x8xf32>
    %32 = arith.mulf %25, %31 : vector<2x8xf32>
    %33 = vector.broadcast %21 : f32 to vector<2x8xf32>
    %34 = arith.addf %32, %33 : vector<2x8xf32>
    %35 = vector.shape_cast %16 : vector<1x16xf32> to vector<1x1x16xf32>
    %36 = vector.shape_cast %35 : vector<1x1x16xf32> to vector<1x1x16xf32>
    %37 = vector.broadcast %36 : vector<1x1x16xf32> to vector<2x1x16xf32>
    %cst_26 = arith.constant 0.000000e+00 : f32
    %38 = vector.broadcast %cst_26 : f32 to vector<2x32xf32>
    %cst_27 = arith.constant 0.000000e+00 : f32
    %39 = vector.broadcast %cst_27 : f32 to vector<2x32xf32>
    %cst_28 = arith.constant dense<0.000000e+00> : vector<2x16xf32>
    %40 = tpu.matmul %38, %4, %cst_28 {dimension_numbers = #tpu.dot_dimension_numbers<[1], [0], [0], [1], [0, 0, 1, 1], [], []>} : vector<2x32xf32>, vector<32x16xf32>, vector<2x16xf32> -> vector<2x16xf32>
    %cst_29 = arith.constant dense<0.000000e+00> : vector<2x16xf32>
    %41 = tpu.matmul %39, %5, %cst_29 {dimension_numbers = #tpu.dot_dimension_numbers<[1], [0], [0], [1], [0, 0, 1, 1], [], []>} : vector<2x32xf32>, vector<32x16xf32>, vector<2x16xf32> -> vector<2x16xf32>
    %42 = arith.addf %40, %41 : vector<2x16xf32>
    %43 = vector.shape_cast %42 : vector<2x16xf32> to vector<2x1x16xf32>
    %44 = vector.broadcast %43 : vector<2x1x16xf32> to vector<2x8x16xf32>
    %45 = arith.addf %30, %44 : vector<2x8x16xf32>
    %46 = math.tanh %45 : vector<2x8x16xf32>
    "tpu.trace_start"() <{level = 10 : i32, message = "bqf,btf->bqt"}> : () -> ()
    %cst_30 = arith.constant dense<0.000000e+00> : vector<2x1x8xf32>
    %47 = tpu.matmul %37, %46, %cst_30 {dimension_numbers = #tpu.dot_dimension_numbers<[2], [2], [1], [1], [0, 0, 0, 1, 1, 1], [0], [0]>} : vector<2x1x16xf32>, vector<2x8x16xf32>, vector<2x1x8xf32> -> vector<2x1x8xf32>
    "tpu.trace_stop"() : () -> ()
    %48 = vector.broadcast %20 : f32 to vector<2x1x8xf32>
    %49 = arith.addf %47, %48 : vector<2x1x8xf32>
    %cst_31 = arith.constant dense<0xFF800000> : vector<2x1xf32>
    %50 = vector.multi_reduction <maximumf>, %49, %cst_31 [2] : vector<2x1x8xf32> to vector<2x1xf32>
    %51 = vector.shape_cast %50 : vector<2x1xf32> to vector<2x1x1xf32>
    %52 = vector.broadcast %51 : vector<2x1x1xf32> to vector<2x1x8xf32>
    %53 = arith.subf %49, %52 : vector<2x1x8xf32>
    %54 = math.exp %53 : vector<2x1x8xf32>
    %cst_32 = arith.constant dense<0.000000e+00> : vector<2x1xf32>
    %55 = vector.multi_reduction <add>, %54, %cst_32 [2] : vector<2x1x8xf32> to vector<2x1xf32>
    %56 = vector.shape_cast %55 : vector<2x1xf32> to vector<2x1x1xf32>
    %57 = vector.broadcast %56 : vector<2x1x1xf32> to vector<2x1x8xf32>
    %58 = arith.divf %54, %57 : vector<2x1x8xf32>
    "tpu.trace_start"() <{level = 10 : i32, message = "bqt,btf->bqf"}> : () -> ()
    %cst_33 = arith.constant dense<0.000000e+00> : vector<2x1x16xf32>
    %59 = tpu.matmul %58, %24, %cst_33 {dimension_numbers = #tpu.dot_dimension_numbers<[2], [1], [1], [2], [0, 0, 0, 1, 1, 2], [0], [0]>} : vector<2x1x8xf32>, vector<2x8x16xf32>, vector<2x1x16xf32> -> vector<2x1x16xf32>
    "tpu.trace_stop"() : () -> ()
    %60 = vector.shape_cast %59 : vector<2x1x16xf32> to vector<2x16xf32>
    %cst_34 = arith.constant dense<0.000000e+00> : vector<2x1xf32>
    %61 = tpu.matmul %60, %17, %cst_34 {dimension_numbers = #tpu.dot_dimension_numbers<[1], [0], [0], [1], [0, 0, 1, 1], [], []>} : vector<2x16xf32>, vector<16x1xf32>, vector<2x1xf32> -> vector<2x1xf32>
    %62 = vector.extract_strided_slice %34 {offsets = [0, 0], sizes = [2, 1], strides = [1, 1]} : vector<2x8xf32> to vector<2x1xf32>
    %63 = arith.addf %61, %62 : vector<2x1xf32>
    %cst_35 = arith.constant dense<0.000000e+00> : vector<2x32xf32>
    %64 = tpu.matmul %38, %0, %cst_35 {dimension_numbers = #tpu.dot_dimension_numbers<[1], [0], [0], [1], [0, 0, 1, 1], [], []>} : vector<2x32xf32>, vector<32x32xf32>, vector<2x32xf32> -> vector<2x32xf32>
    %65 = vector.broadcast %63 : vector<2x1xf32> to vector<2x32xf32>
    %66 = vector.broadcast %7 : vector<1x32xf32> to vector<2x32xf32>
    %67 = arith.mulf %65, %66 : vector<2x32xf32>
    %68 = arith.addf %64, %67 : vector<2x32xf32>
    %69 = vector.broadcast %11 : vector<1x32xf32> to vector<2x32xf32>
    %70 = arith.addf %68, %69 : vector<2x32xf32>
    %cst_36 = arith.constant dense<0.000000e+00> : vector<2x32xf32>
    %71 = tpu.matmul %38, %1, %cst_36 {dimension_numbers = #tpu.dot_dimension_numbers<[1], [0], [0], [1], [0, 0, 1, 1], [], []>} : vector<2x32xf32>, vector<32x32xf32>, vector<2x32xf32> -> vector<2x32xf32>
    %72 = vector.broadcast %63 : vector<2x1xf32> to vector<2x32xf32>
    %73 = vector.broadcast %8 : vector<1x32xf32> to vector<2x32xf32>
    %74 = arith.mulf %72, %73 : vector<2x32xf32>
    %75 = arith.addf %71, %74 : vector<2x32xf32>
    %76 = vector.broadcast %12 : vector<1x32xf32> to vector<2x32xf32>
    %77 = arith.addf %75, %76 : vector<2x32xf32>
    %cst_37 = arith.constant dense<0.000000e+00> : vector<2x32xf32>
    %78 = tpu.matmul %38, %2, %cst_37 {dimension_numbers = #tpu.dot_dimension_numbers<[1], [0], [0], [1], [0, 0, 1, 1], [], []>} : vector<2x32xf32>, vector<32x32xf32>, vector<2x32xf32> -> vector<2x32xf32>
    %79 = vector.broadcast %63 : vector<2x1xf32> to vector<2x32xf32>
    %80 = vector.broadcast %9 : vector<1x32xf32> to vector<2x32xf32>
    %81 = arith.mulf %79, %80 : vector<2x32xf32>
    %82 = arith.addf %78, %81 : vector<2x32xf32>
    %83 = vector.broadcast %13 : vector<1x32xf32> to vector<2x32xf32>
    %84 = arith.addf %82, %83 : vector<2x32xf32>
    %cst_38 = arith.constant dense<0.000000e+00> : vector<2x32xf32>
    %85 = tpu.matmul %38, %3, %cst_38 {dimension_numbers = #tpu.dot_dimension_numbers<[1], [0], [0], [1], [0, 0, 1, 1], [], []>} : vector<2x32xf32>, vector<32x32xf32>, vector<2x32xf32> -> vector<2x32xf32>
    %86 = vector.broadcast %63 : vector<2x1xf32> to vector<2x32xf32>
    %87 = vector.broadcast %10 : vector<1x32xf32> to vector<2x32xf32>
    %88 = arith.mulf %86, %87 : vector<2x32xf32>
    %89 = arith.addf %85, %88 : vector<2x32xf32>
    %90 = vector.broadcast %14 : vector<1x32xf32> to vector<2x32xf32>
    %91 = arith.addf %89, %90 : vector<2x32xf32>
    %92 = arith.negf %70 : vector<2x32xf32>
    %93 = math.exp %92 : vector<2x32xf32>
    %cst_39 = arith.constant 1.000000e+00 : f32
    %94 = vector.broadcast %cst_39 : f32 to vector<2x32xf32>
    %95 = arith.addf %94, %93 : vector<2x32xf32>
    %96 = arith.divf %94, %95 : vector<2x32xf32>
    %97 = arith.negf %77 : vector<2x32xf32>
    %98 = math.exp %97 : vector<2x32xf32>
    %cst_40 = arith.constant 1.000000e+00 : f32
    %99 = vector.broadcast %cst_40 : f32 to vector<2x32xf32>
    %100 = arith.addf %99, %98 : vector<2x32xf32>
    %101 = arith.divf %99, %100 : vector<2x32xf32>
    %102 = math.tanh %84 : vector<2x32xf32>
    %103 = arith.negf %91 : vector<2x32xf32>
    %104 = math.exp %103 : vector<2x32xf32>
    %cst_41 = arith.constant 1.000000e+00 : f32
    %105 = vector.broadcast %cst_41 : f32 to vector<2x32xf32>
    %106 = arith.addf %105, %104 : vector<2x32xf32>
    %107 = arith.divf %105, %106 : vector<2x32xf32>
    %108 = arith.mulf %101, %39 : vector<2x32xf32>
    %109 = arith.mulf %96, %102 : vector<2x32xf32>
    %110 = arith.addf %108, %109 : vector<2x32xf32>
    %111 = math.tanh %110 : vector<2x32xf32>
    %112 = arith.mulf %107, %111 : vector<2x32xf32>
    %cst_42 = arith.constant dense<0.000000e+00> : vector<2x16xf32>
    %113 = tpu.matmul %112, %4, %cst_42 {dimension_numbers = #tpu.dot_dimension_numbers<[1], [0], [0], [1], [0, 0, 1, 1], [], []>} : vector<2x32xf32>, vector<32x16xf32>, vector<2x16xf32> -> vector<2x16xf32>
    %cst_43 = arith.constant dense<0.000000e+00> : vector<2x16xf32>
    %114 = tpu.matmul %110, %5, %cst_43 {dimension_numbers = #tpu.dot_dimension_numbers<[1], [0], [0], [1], [0, 0, 1, 1], [], []>} : vector<2x32xf32>, vector<32x16xf32>, vector<2x16xf32> -> vector<2x16xf32>
    %115 = arith.addf %113, %114 : vector<2x16xf32>
    %116 = vector.shape_cast %115 : vector<2x16xf32> to vector<2x1x16xf32>
    %117 = vector.broadcast %116 : vector<2x1x16xf32> to vector<2x8x16xf32>
    %118 = arith.addf %30, %117 : vector<2x8x16xf32>
    %119 = math.tanh %118 : vector<2x8x16xf32>
    "tpu.trace_start"() <{level = 10 : i32, message = "bqf,btf->bqt"}> : () -> ()
    %cst_44 = arith.constant dense<0.000000e+00> : vector<2x1x8xf32>
    %120 = tpu.matmul %37, %119, %cst_44 {dimension_numbers = #tpu.dot_dimension_numbers<[2], [2], [1], [1], [0, 0, 0, 1, 1, 1], [0], [0]>} : vector<2x1x16xf32>, vector<2x8x16xf32>, vector<2x1x8xf32> -> vector<2x1x8xf32>
    "tpu.trace_stop"() : () -> ()
    %121 = vector.broadcast %20 : f32 to vector<2x1x8xf32>
    %122 = arith.addf %120, %121 : vector<2x1x8xf32>
    %cst_45 = arith.constant dense<0xFF800000> : vector<2x1xf32>
    %123 = vector.multi_reduction <maximumf>, %122, %cst_45 [2] : vector<2x1x8xf32> to vector<2x1xf32>
    %124 = vector.shape_cast %123 : vector<2x1xf32> to vector<2x1x1xf32>
    %125 = vector.broadcast %124 : vector<2x1x1xf32> to vector<2x1x8xf32>
    %126 = arith.subf %122, %125 : vector<2x1x8xf32>
    %127 = math.exp %126 : vector<2x1x8xf32>
    %cst_46 = arith.constant dense<0.000000e+00> : vector<2x1xf32>
    %128 = vector.multi_reduction <add>, %127, %cst_46 [2] : vector<2x1x8xf32> to vector<2x1xf32>
    %129 = vector.shape_cast %128 : vector<2x1xf32> to vector<2x1x1xf32>
    %130 = vector.broadcast %129 : vector<2x1x1xf32> to vector<2x1x8xf32>
    %131 = arith.divf %127, %130 : vector<2x1x8xf32>
    "tpu.trace_start"() <{level = 10 : i32, message = "bqt,btf->bqf"}> : () -> ()
    %cst_47 = arith.constant dense<0.000000e+00> : vector<2x1x16xf32>
    %132 = tpu.matmul %131, %24, %cst_47 {dimension_numbers = #tpu.dot_dimension_numbers<[2], [1], [1], [2], [0, 0, 0, 1, 1, 2], [0], [0]>} : vector<2x1x8xf32>, vector<2x8x16xf32>, vector<2x1x16xf32> -> vector<2x1x16xf32>
    "tpu.trace_stop"() : () -> ()
    %133 = vector.shape_cast %132 : vector<2x1x16xf32> to vector<2x16xf32>
    %cst_48 = arith.constant dense<0.000000e+00> : vector<2x1xf32>
    %134 = tpu.matmul %133, %17, %cst_48 {dimension_numbers = #tpu.dot_dimension_numbers<[1], [0], [0], [1], [0, 0, 1, 1], [], []>} : vector<2x16xf32>, vector<16x1xf32>, vector<2x1xf32> -> vector<2x1xf32>
    %135 = vector.extract_strided_slice %34 {offsets = [0, 1], sizes = [2, 1], strides = [1, 1]} : vector<2x8xf32> to vector<2x1xf32>
    %136 = arith.addf %134, %135 : vector<2x1xf32>
    %cst_49 = arith.constant dense<0.000000e+00> : vector<2x32xf32>
    %137 = tpu.matmul %112, %0, %cst_49 {dimension_numbers = #tpu.dot_dimension_numbers<[1], [0], [0], [1], [0, 0, 1, 1], [], []>} : vector<2x32xf32>, vector<32x32xf32>, vector<2x32xf32> -> vector<2x32xf32>
    %138 = vector.broadcast %136 : vector<2x1xf32> to vector<2x32xf32>
    %139 = vector.broadcast %7 : vector<1x32xf32> to vector<2x32xf32>
    %140 = arith.mulf %138, %139 : vector<2x32xf32>
    %141 = arith.addf %137, %140 : vector<2x32xf32>
    %142 = vector.broadcast %11 : vector<1x32xf32> to vector<2x32xf32>
    %143 = arith.addf %141, %142 : vector<2x32xf32>
    %cst_50 = arith.constant dense<0.000000e+00> : vector<2x32xf32>
    %144 = tpu.matmul %112, %1, %cst_50 {dimension_numbers = #tpu.dot_dimension_numbers<[1], [0], [0], [1], [0, 0, 1, 1], [], []>} : vector<2x32xf32>, vector<32x32xf32>, vector<2x32xf32> -> vector<2x32xf32>
    %145 = vector.broadcast %136 : vector<2x1xf32> to vector<2x32xf32>
    %146 = vector.broadcast %8 : vector<1x32xf32> to vector<2x32xf32>
    %147 = arith.mulf %145, %146 : vector<2x32xf32>
    %148 = arith.addf %144, %147 : vector<2x32xf32>
    %149 = vector.broadcast %12 : vector<1x32xf32> to vector<2x32xf32>
    %150 = arith.addf %148, %149 : vector<2x32xf32>
    %cst_51 = arith.constant dense<0.000000e+00> : vector<2x32xf32>
    %151 = tpu.matmul %112, %2, %cst_51 {dimension_numbers = #tpu.dot_dimension_numbers<[1], [0], [0], [1], [0, 0, 1, 1], [], []>} : vector<2x32xf32>, vector<32x32xf32>, vector<2x32xf32> -> vector<2x32xf32>
    %152 = vector.broadcast %136 : vector<2x1xf32> to vector<2x32xf32>
    %153 = vector.broadcast %9 : vector<1x32xf32> to vector<2x32xf32>
    %154 = arith.mulf %152, %153 : vector<2x32xf32>
    %155 = arith.addf %151, %154 : vector<2x32xf32>
    %156 = vector.broadcast %13 : vector<1x32xf32> to vector<2x32xf32>
    %157 = arith.addf %155, %156 : vector<2x32xf32>
    %cst_52 = arith.constant dense<0.000000e+00> : vector<2x32xf32>
    %158 = tpu.matmul %112, %3, %cst_52 {dimension_numbers = #tpu.dot_dimension_numbers<[1], [0], [0], [1], [0, 0, 1, 1], [], []>} : vector<2x32xf32>, vector<32x32xf32>, vector<2x32xf32> -> vector<2x32xf32>
    %159 = vector.broadcast %136 : vector<2x1xf32> to vector<2x32xf32>
    %160 = vector.broadcast %10 : vector<1x32xf32> to vector<2x32xf32>
    %161 = arith.mulf %159, %160 : vector<2x32xf32>
    %162 = arith.addf %158, %161 : vector<2x32xf32>
    %163 = vector.broadcast %14 : vector<1x32xf32> to vector<2x32xf32>
    %164 = arith.addf %162, %163 : vector<2x32xf32>
    %165 = arith.negf %143 : vector<2x32xf32>
    %166 = math.exp %165 : vector<2x32xf32>
    %cst_53 = arith.constant 1.000000e+00 : f32
    %167 = vector.broadcast %cst_53 : f32 to vector<2x32xf32>
    %168 = arith.addf %167, %166 : vector<2x32xf32>
    %169 = arith.divf %167, %168 : vector<2x32xf32>
    %170 = arith.negf %150 : vector<2x32xf32>
    %171 = math.exp %170 : vector<2x32xf32>
    %cst_54 = arith.constant 1.000000e+00 : f32
    %172 = vector.broadcast %cst_54 : f32 to vector<2x32xf32>
    %173 = arith.addf %172, %171 : vector<2x32xf32>
    %174 = arith.divf %172, %173 : vector<2x32xf32>
    %175 = math.tanh %157 : vector<2x32xf32>
    %176 = arith.negf %164 : vector<2x32xf32>
    %177 = math.exp %176 : vector<2x32xf32>
    %cst_55 = arith.constant 1.000000e+00 : f32
    %178 = vector.broadcast %cst_55 : f32 to vector<2x32xf32>
    %179 = arith.addf %178, %177 : vector<2x32xf32>
    %180 = arith.divf %178, %179 : vector<2x32xf32>
    %181 = arith.mulf %174, %110 : vector<2x32xf32>
    %182 = arith.mulf %169, %175 : vector<2x32xf32>
    %183 = arith.addf %181, %182 : vector<2x32xf32>
    %184 = math.tanh %183 : vector<2x32xf32>
    %185 = arith.mulf %180, %184 : vector<2x32xf32>
    %cst_56 = arith.constant dense<0.000000e+00> : vector<2x16xf32>
    %186 = tpu.matmul %185, %4, %cst_56 {dimension_numbers = #tpu.dot_dimension_numbers<[1], [0], [0], [1], [0, 0, 1, 1], [], []>} : vector<2x32xf32>, vector<32x16xf32>, vector<2x16xf32> -> vector<2x16xf32>
    %cst_57 = arith.constant dense<0.000000e+00> : vector<2x16xf32>
    %187 = tpu.matmul %183, %5, %cst_57 {dimension_numbers = #tpu.dot_dimension_numbers<[1], [0], [0], [1], [0, 0, 1, 1], [], []>} : vector<2x32xf32>, vector<32x16xf32>, vector<2x16xf32> -> vector<2x16xf32>
    %188 = arith.addf %186, %187 : vector<2x16xf32>
    %189 = vector.shape_cast %188 : vector<2x16xf32> to vector<2x1x16xf32>
    %190 = vector.broadcast %189 : vector<2x1x16xf32> to vector<2x8x16xf32>
    %191 = arith.addf %30, %190 : vector<2x8x16xf32>
    %192 = math.tanh %191 : vector<2x8x16xf32>
    "tpu.trace_start"() <{level = 10 : i32, message = "bqf,btf->bqt"}> : () -> ()
    %cst_58 = arith.constant dense<0.000000e+00> : vector<2x1x8xf32>
    %193 = tpu.matmul %37, %192, %cst_58 {dimension_numbers = #tpu.dot_dimension_numbers<[2], [2], [1], [1], [0, 0, 0, 1, 1, 1], [0], [0]>} : vector<2x1x16xf32>, vector<2x8x16xf32>, vector<2x1x8xf32> -> vector<2x1x8xf32>
    "tpu.trace_stop"() : () -> ()
    %194 = vector.broadcast %20 : f32 to vector<2x1x8xf32>
    %195 = arith.addf %193, %194 : vector<2x1x8xf32>
    %cst_59 = arith.constant dense<0xFF800000> : vector<2x1xf32>
    %196 = vector.multi_reduction <maximumf>, %195, %cst_59 [2] : vector<2x1x8xf32> to vector<2x1xf32>
    %197 = vector.shape_cast %196 : vector<2x1xf32> to vector<2x1x1xf32>
    %198 = vector.broadcast %197 : vector<2x1x1xf32> to vector<2x1x8xf32>
    %199 = arith.subf %195, %198 : vector<2x1x8xf32>
    %200 = math.exp %199 : vector<2x1x8xf32>
    %cst_60 = arith.constant dense<0.000000e+00> : vector<2x1xf32>
    %201 = vector.multi_reduction <add>, %200, %cst_60 [2] : vector<2x1x8xf32> to vector<2x1xf32>
    %202 = vector.shape_cast %201 : vector<2x1xf32> to vector<2x1x1xf32>
    %203 = vector.broadcast %202 : vector<2x1x1xf32> to vector<2x1x8xf32>
    %204 = arith.divf %200, %203 : vector<2x1x8xf32>
    "tpu.trace_start"() <{level = 10 : i32, message = "bqt,btf->bqf"}> : () -> ()
    %cst_61 = arith.constant dense<0.000000e+00> : vector<2x1x16xf32>
    %205 = tpu.matmul %204, %24, %cst_61 {dimension_numbers = #tpu.dot_dimension_numbers<[2], [1], [1], [2], [0, 0, 0, 1, 1, 2], [0], [0]>} : vector<2x1x8xf32>, vector<2x8x16xf32>, vector<2x1x16xf32> -> vector<2x1x16xf32>
    "tpu.trace_stop"() : () -> ()
    %206 = vector.shape_cast %205 : vector<2x1x16xf32> to vector<2x16xf32>
    %cst_62 = arith.constant dense<0.000000e+00> : vector<2x1xf32>
    %207 = tpu.matmul %206, %17, %cst_62 {dimension_numbers = #tpu.dot_dimension_numbers<[1], [0], [0], [1], [0, 0, 1, 1], [], []>} : vector<2x16xf32>, vector<16x1xf32>, vector<2x1xf32> -> vector<2x1xf32>
    %208 = vector.extract_strided_slice %34 {offsets = [0, 2], sizes = [2, 1], strides = [1, 1]} : vector<2x8xf32> to vector<2x1xf32>
    %209 = arith.addf %207, %208 : vector<2x1xf32>
    %cst_63 = arith.constant dense<0.000000e+00> : vector<2x32xf32>
    %210 = tpu.matmul %185, %0, %cst_63 {dimension_numbers = #tpu.dot_dimension_numbers<[1], [0], [0], [1], [0, 0, 1, 1], [], []>} : vector<2x32xf32>, vector<32x32xf32>, vector<2x32xf32> -> vector<2x32xf32>
    %211 = vector.broadcast %209 : vector<2x1xf32> to vector<2x32xf32>
    %212 = vector.broadcast %7 : vector<1x32xf32> to vector<2x32xf32>
    %213 = arith.mulf %211, %212 : vector<2x32xf32>
    %214 = arith.addf %210, %213 : vector<2x32xf32>
    %215 = vector.broadcast %11 : vector<1x32xf32> to vector<2x32xf32>
    %216 = arith.addf %214, %215 : vector<2x32xf32>
    %cst_64 = arith.constant dense<0.000000e+00> : vector<2x32xf32>
    %217 = tpu.matmul %185, %1, %cst_64 {dimension_numbers = #tpu.dot_dimension_numbers<[1], [0], [0], [1], [0, 0, 1, 1], [], []>} : vector<2x32xf32>, vector<32x32xf32>, vector<2x32xf32> -> vector<2x32xf32>
    %218 = vector.broadcast %209 : vector<2x1xf32> to vector<2x32xf32>
    %219 = vector.broadcast %8 : vector<1x32xf32> to vector<2x32xf32>
    %220 = arith.mulf %218, %219 : vector<2x32xf32>
    %221 = arith.addf %217, %220 : vector<2x32xf32>
    %222 = vector.broadcast %12 : vector<1x32xf32> to vector<2x32xf32>
    %223 = arith.addf %221, %222 : vector<2x32xf32>
    %cst_65 = arith.constant dense<0.000000e+00> : vector<2x32xf32>
    %224 = tpu.matmul %185, %2, %cst_65 {dimension_numbers = #tpu.dot_dimension_numbers<[1], [0], [0], [1], [0, 0, 1, 1], [], []>} : vector<2x32xf32>, vector<32x32xf32>, vector<2x32xf32> -> vector<2x32xf32>
    %225 = vector.broadcast %209 : vector<2x1xf32> to vector<2x32xf32>
    %226 = vector.broadcast %9 : vector<1x32xf32> to vector<2x32xf32>
    %227 = arith.mulf %225, %226 : vector<2x32xf32>
    %228 = arith.addf %224, %227 : vector<2x32xf32>
    %229 = vector.broadcast %13 : vector<1x32xf32> to vector<2x32xf32>
    %230 = arith.addf %228, %229 : vector<2x32xf32>
    %cst_66 = arith.constant dense<0.000000e+00> : vector<2x32xf32>
    %231 = tpu.matmul %185, %3, %cst_66 {dimension_numbers = #tpu.dot_dimension_numbers<[1], [0], [0], [1], [0, 0, 1, 1], [], []>} : vector<2x32xf32>, vector<32x32xf32>, vector<2x32xf32> -> vector<2x32xf32>
    %232 = vector.broadcast %209 : vector<2x1xf32> to vector<2x32xf32>
    %233 = vector.broadcast %10 : vector<1x32xf32> to vector<2x32xf32>
    %234 = arith.mulf %232, %233 : vector<2x32xf32>
    %235 = arith.addf %231, %234 : vector<2x32xf32>
    %236 = vector.broadcast %14 : vector<1x32xf32> to vector<2x32xf32>
    %237 = arith.addf %235, %236 : vector<2x32xf32>
    %238 = arith.negf %216 : vector<2x32xf32>
    %239 = math.exp %238 : vector<2x32xf32>
    %cst_67 = arith.constant 1.000000e+00 : f32
    %240 = vector.broadcast %cst_67 : f32 to vector<2x32xf32>
    %241 = arith.addf %240, %239 : vector<2x32xf32>
    %242 = arith.divf %240, %241 : vector<2x32xf32>
    %243 = arith.negf %223 : vector<2x32xf32>
    %244 = math.exp %243 : vector<2x32xf32>
    %cst_68 = arith.constant 1.000000e+00 : f32
    %245 = vector.broadcast %cst_68 : f32 to vector<2x32xf32>
    %246 = arith.addf %245, %244 : vector<2x32xf32>
    %247 = arith.divf %245, %246 : vector<2x32xf32>
    %248 = math.tanh %230 : vector<2x32xf32>
    %249 = arith.negf %237 : vector<2x32xf32>
    %250 = math.exp %249 : vector<2x32xf32>
    %cst_69 = arith.constant 1.000000e+00 : f32
    %251 = vector.broadcast %cst_69 : f32 to vector<2x32xf32>
    %252 = arith.addf %251, %250 : vector<2x32xf32>
    %253 = arith.divf %251, %252 : vector<2x32xf32>
    %254 = arith.mulf %247, %183 : vector<2x32xf32>
    %255 = arith.mulf %242, %248 : vector<2x32xf32>
    %256 = arith.addf %254, %255 : vector<2x32xf32>
    %257 = math.tanh %256 : vector<2x32xf32>
    %258 = arith.mulf %253, %257 : vector<2x32xf32>
    %cst_70 = arith.constant dense<0.000000e+00> : vector<2x16xf32>
    %259 = tpu.matmul %258, %4, %cst_70 {dimension_numbers = #tpu.dot_dimension_numbers<[1], [0], [0], [1], [0, 0, 1, 1], [], []>} : vector<2x32xf32>, vector<32x16xf32>, vector<2x16xf32> -> vector<2x16xf32>
    %cst_71 = arith.constant dense<0.000000e+00> : vector<2x16xf32>
    %260 = tpu.matmul %256, %5, %cst_71 {dimension_numbers = #tpu.dot_dimension_numbers<[1], [0], [0], [1], [0, 0, 1, 1], [], []>} : vector<2x32xf32>, vector<32x16xf32>, vector<2x16xf32> -> vector<2x16xf32>
    %261 = arith.addf %259, %260 : vector<2x16xf32>
    %262 = vector.shape_cast %261 : vector<2x16xf32> to vector<2x1x16xf32>
    %263 = vector.broadcast %262 : vector<2x1x16xf32> to vector<2x8x16xf32>
    %264 = arith.addf %30, %263 : vector<2x8x16xf32>
    %265 = math.tanh %264 : vector<2x8x16xf32>
    "tpu.trace_start"() <{level = 10 : i32, message = "bqf,btf->bqt"}> : () -> ()
    %cst_72 = arith.constant dense<0.000000e+00> : vector<2x1x8xf32>
    %266 = tpu.matmul %37, %265, %cst_72 {dimension_numbers = #tpu.dot_dimension_numbers<[2], [2], [1], [1], [0, 0, 0, 1, 1, 1], [0], [0]>} : vector<2x1x16xf32>, vector<2x8x16xf32>, vector<2x1x8xf32> -> vector<2x1x8xf32>
    "tpu.trace_stop"() : () -> ()
    %267 = vector.broadcast %20 : f32 to vector<2x1x8xf32>
    %268 = arith.addf %266, %267 : vector<2x1x8xf32>
    %cst_73 = arith.constant dense<0xFF800000> : vector<2x1xf32>
    %269 = vector.multi_reduction <maximumf>, %268, %cst_73 [2] : vector<2x1x8xf32> to vector<2x1xf32>
    %270 = vector.shape_cast %269 : vector<2x1xf32> to vector<2x1x1xf32>
    %271 = vector.broadcast %270 : vector<2x1x1xf32> to vector<2x1x8xf32>
    %272 = arith.subf %268, %271 : vector<2x1x8xf32>
    %273 = math.exp %272 : vector<2x1x8xf32>
    %cst_74 = arith.constant dense<0.000000e+00> : vector<2x1xf32>
    %274 = vector.multi_reduction <add>, %273, %cst_74 [2] : vector<2x1x8xf32> to vector<2x1xf32>
    %275 = vector.shape_cast %274 : vector<2x1xf32> to vector<2x1x1xf32>
    %276 = vector.broadcast %275 : vector<2x1x1xf32> to vector<2x1x8xf32>
    %277 = arith.divf %273, %276 : vector<2x1x8xf32>
    "tpu.trace_start"() <{level = 10 : i32, message = "bqt,btf->bqf"}> : () -> ()
    %cst_75 = arith.constant dense<0.000000e+00> : vector<2x1x16xf32>
    %278 = tpu.matmul %277, %24, %cst_75 {dimension_numbers = #tpu.dot_dimension_numbers<[2], [1], [1], [2], [0, 0, 0, 1, 1, 2], [0], [0]>} : vector<2x1x8xf32>, vector<2x8x16xf32>, vector<2x1x16xf32> -> vector<2x1x16xf32>
    "tpu.trace_stop"() : () -> ()
    %279 = vector.shape_cast %278 : vector<2x1x16xf32> to vector<2x16xf32>
    %cst_76 = arith.constant dense<0.000000e+00> : vector<2x1xf32>
    %280 = tpu.matmul %279, %17, %cst_76 {dimension_numbers = #tpu.dot_dimension_numbers<[1], [0], [0], [1], [0, 0, 1, 1], [], []>} : vector<2x16xf32>, vector<16x1xf32>, vector<2x1xf32> -> vector<2x1xf32>
    %281 = vector.extract_strided_slice %34 {offsets = [0, 3], sizes = [2, 1], strides = [1, 1]} : vector<2x8xf32> to vector<2x1xf32>
    %282 = arith.addf %280, %281 : vector<2x1xf32>
    %cst_77 = arith.constant dense<0.000000e+00> : vector<2x32xf32>
    %283 = tpu.matmul %258, %0, %cst_77 {dimension_numbers = #tpu.dot_dimension_numbers<[1], [0], [0], [1], [0, 0, 1, 1], [], []>} : vector<2x32xf32>, vector<32x32xf32>, vector<2x32xf32> -> vector<2x32xf32>
    %284 = vector.broadcast %282 : vector<2x1xf32> to vector<2x32xf32>
    %285 = vector.broadcast %7 : vector<1x32xf32> to vector<2x32xf32>
    %286 = arith.mulf %284, %285 : vector<2x32xf32>
    %287 = arith.addf %283, %286 : vector<2x32xf32>
    %288 = vector.broadcast %11 : vector<1x32xf32> to vector<2x32xf32>
    %289 = arith.addf %287, %288 : vector<2x32xf32>
    %cst_78 = arith.constant dense<0.000000e+00> : vector<2x32xf32>
    %290 = tpu.matmul %258, %1, %cst_78 {dimension_numbers = #tpu.dot_dimension_numbers<[1], [0], [0], [1], [0, 0, 1, 1], [], []>} : vector<2x32xf32>, vector<32x32xf32>, vector<2x32xf32> -> vector<2x32xf32>
    %291 = vector.broadcast %282 : vector<2x1xf32> to vector<2x32xf32>
    %292 = vector.broadcast %8 : vector<1x32xf32> to vector<2x32xf32>
    %293 = arith.mulf %291, %292 : vector<2x32xf32>
    %294 = arith.addf %290, %293 : vector<2x32xf32>
    %295 = vector.broadcast %12 : vector<1x32xf32> to vector<2x32xf32>
    %296 = arith.addf %294, %295 : vector<2x32xf32>
    %cst_79 = arith.constant dense<0.000000e+00> : vector<2x32xf32>
    %297 = tpu.matmul %258, %2, %cst_79 {dimension_numbers = #tpu.dot_dimension_numbers<[1], [0], [0], [1], [0, 0, 1, 1], [], []>} : vector<2x32xf32>, vector<32x32xf32>, vector<2x32xf32> -> vector<2x32xf32>
    %298 = vector.broadcast %282 : vector<2x1xf32> to vector<2x32xf32>
    %299 = vector.broadcast %9 : vector<1x32xf32> to vector<2x32xf32>
    %300 = arith.mulf %298, %299 : vector<2x32xf32>
    %301 = arith.addf %297, %300 : vector<2x32xf32>
    %302 = vector.broadcast %13 : vector<1x32xf32> to vector<2x32xf32>
    %303 = arith.addf %301, %302 : vector<2x32xf32>
    %cst_80 = arith.constant dense<0.000000e+00> : vector<2x32xf32>
    %304 = tpu.matmul %258, %3, %cst_80 {dimension_numbers = #tpu.dot_dimension_numbers<[1], [0], [0], [1], [0, 0, 1, 1], [], []>} : vector<2x32xf32>, vector<32x32xf32>, vector<2x32xf32> -> vector<2x32xf32>
    %305 = vector.broadcast %282 : vector<2x1xf32> to vector<2x32xf32>
    %306 = vector.broadcast %10 : vector<1x32xf32> to vector<2x32xf32>
    %307 = arith.mulf %305, %306 : vector<2x32xf32>
    %308 = arith.addf %304, %307 : vector<2x32xf32>
    %309 = vector.broadcast %14 : vector<1x32xf32> to vector<2x32xf32>
    %310 = arith.addf %308, %309 : vector<2x32xf32>
    %311 = arith.negf %289 : vector<2x32xf32>
    %312 = math.exp %311 : vector<2x32xf32>
    %cst_81 = arith.constant 1.000000e+00 : f32
    %313 = vector.broadcast %cst_81 : f32 to vector<2x32xf32>
    %314 = arith.addf %313, %312 : vector<2x32xf32>
    %315 = arith.divf %313, %314 : vector<2x32xf32>
    %316 = arith.negf %296 : vector<2x32xf32>
    %317 = math.exp %316 : vector<2x32xf32>
    %cst_82 = arith.constant 1.000000e+00 : f32
    %318 = vector.broadcast %cst_82 : f32 to vector<2x32xf32>
    %319 = arith.addf %318, %317 : vector<2x32xf32>
    %320 = arith.divf %318, %319 : vector<2x32xf32>
    %321 = math.tanh %303 : vector<2x32xf32>
    %322 = arith.negf %310 : vector<2x32xf32>
    %323 = math.exp %322 : vector<2x32xf32>
    %cst_83 = arith.constant 1.000000e+00 : f32
    %324 = vector.broadcast %cst_83 : f32 to vector<2x32xf32>
    %325 = arith.addf %324, %323 : vector<2x32xf32>
    %326 = arith.divf %324, %325 : vector<2x32xf32>
    %327 = arith.mulf %320, %256 : vector<2x32xf32>
    %328 = arith.mulf %315, %321 : vector<2x32xf32>
    %329 = arith.addf %327, %328 : vector<2x32xf32>
    %330 = math.tanh %329 : vector<2x32xf32>
    %331 = arith.mulf %326, %330 : vector<2x32xf32>
    %cst_84 = arith.constant dense<0.000000e+00> : vector<2x16xf32>
    %332 = tpu.matmul %331, %4, %cst_84 {dimension_numbers = #tpu.dot_dimension_numbers<[1], [0], [0], [1], [0, 0, 1, 1], [], []>} : vector<2x32xf32>, vector<32x16xf32>, vector<2x16xf32> -> vector<2x16xf32>
    %cst_85 = arith.constant dense<0.000000e+00> : vector<2x16xf32>
    %333 = tpu.matmul %329, %5, %cst_85 {dimension_numbers = #tpu.dot_dimension_numbers<[1], [0], [0], [1], [0, 0, 1, 1], [], []>} : vector<2x32xf32>, vector<32x16xf32>, vector<2x16xf32> -> vector<2x16xf32>
    %334 = arith.addf %332, %333 : vector<2x16xf32>
    %335 = vector.shape_cast %334 : vector<2x16xf32> to vector<2x1x16xf32>
    %336 = vector.broadcast %335 : vector<2x1x16xf32> to vector<2x8x16xf32>
    %337 = arith.addf %30, %336 : vector<2x8x16xf32>
    %338 = math.tanh %337 : vector<2x8x16xf32>
    "tpu.trace_start"() <{level = 10 : i32, message = "bqf,btf->bqt"}> : () -> ()
    %cst_86 = arith.constant dense<0.000000e+00> : vector<2x1x8xf32>
    %339 = tpu.matmul %37, %338, %cst_86 {dimension_numbers = #tpu.dot_dimension_numbers<[2], [2], [1], [1], [0, 0, 0, 1, 1, 1], [0], [0]>} : vector<2x1x16xf32>, vector<2x8x16xf32>, vector<2x1x8xf32> -> vector<2x1x8xf32>
    "tpu.trace_stop"() : () -> ()
    %340 = vector.broadcast %20 : f32 to vector<2x1x8xf32>
    %341 = arith.addf %339, %340 : vector<2x1x8xf32>
    %cst_87 = arith.constant dense<0xFF800000> : vector<2x1xf32>
    %342 = vector.multi_reduction <maximumf>, %341, %cst_87 [2] : vector<2x1x8xf32> to vector<2x1xf32>
    %343 = vector.shape_cast %342 : vector<2x1xf32> to vector<2x1x1xf32>
    %344 = vector.broadcast %343 : vector<2x1x1xf32> to vector<2x1x8xf32>
    %345 = arith.subf %341, %344 : vector<2x1x8xf32>
    %346 = math.exp %345 : vector<2x1x8xf32>
    %cst_88 = arith.constant dense<0.000000e+00> : vector<2x1xf32>
    %347 = vector.multi_reduction <add>, %346, %cst_88 [2] : vector<2x1x8xf32> to vector<2x1xf32>
    %348 = vector.shape_cast %347 : vector<2x1xf32> to vector<2x1x1xf32>
    %349 = vector.broadcast %348 : vector<2x1x1xf32> to vector<2x1x8xf32>
    %350 = arith.divf %346, %349 : vector<2x1x8xf32>
    "tpu.trace_start"() <{level = 10 : i32, message = "bqt,btf->bqf"}> : () -> ()
    %cst_89 = arith.constant dense<0.000000e+00> : vector<2x1x16xf32>
    %351 = tpu.matmul %350, %24, %cst_89 {dimension_numbers = #tpu.dot_dimension_numbers<[2], [1], [1], [2], [0, 0, 0, 1, 1, 2], [0], [0]>} : vector<2x1x8xf32>, vector<2x8x16xf32>, vector<2x1x16xf32> -> vector<2x1x16xf32>
    "tpu.trace_stop"() : () -> ()
    %352 = vector.shape_cast %351 : vector<2x1x16xf32> to vector<2x16xf32>
    %cst_90 = arith.constant dense<0.000000e+00> : vector<2x1xf32>
    %353 = tpu.matmul %352, %17, %cst_90 {dimension_numbers = #tpu.dot_dimension_numbers<[1], [0], [0], [1], [0, 0, 1, 1], [], []>} : vector<2x16xf32>, vector<16x1xf32>, vector<2x1xf32> -> vector<2x1xf32>
    %354 = vector.extract_strided_slice %34 {offsets = [0, 4], sizes = [2, 1], strides = [1, 1]} : vector<2x8xf32> to vector<2x1xf32>
    %355 = arith.addf %353, %354 : vector<2x1xf32>
    %cst_91 = arith.constant dense<0.000000e+00> : vector<2x32xf32>
    %356 = tpu.matmul %331, %0, %cst_91 {dimension_numbers = #tpu.dot_dimension_numbers<[1], [0], [0], [1], [0, 0, 1, 1], [], []>} : vector<2x32xf32>, vector<32x32xf32>, vector<2x32xf32> -> vector<2x32xf32>
    %357 = vector.broadcast %355 : vector<2x1xf32> to vector<2x32xf32>
    %358 = vector.broadcast %7 : vector<1x32xf32> to vector<2x32xf32>
    %359 = arith.mulf %357, %358 : vector<2x32xf32>
    %360 = arith.addf %356, %359 : vector<2x32xf32>
    %361 = vector.broadcast %11 : vector<1x32xf32> to vector<2x32xf32>
    %362 = arith.addf %360, %361 : vector<2x32xf32>
    %cst_92 = arith.constant dense<0.000000e+00> : vector<2x32xf32>
    %363 = tpu.matmul %331, %1, %cst_92 {dimension_numbers = #tpu.dot_dimension_numbers<[1], [0], [0], [1], [0, 0, 1, 1], [], []>} : vector<2x32xf32>, vector<32x32xf32>, vector<2x32xf32> -> vector<2x32xf32>
    %364 = vector.broadcast %355 : vector<2x1xf32> to vector<2x32xf32>
    %365 = vector.broadcast %8 : vector<1x32xf32> to vector<2x32xf32>
    %366 = arith.mulf %364, %365 : vector<2x32xf32>
    %367 = arith.addf %363, %366 : vector<2x32xf32>
    %368 = vector.broadcast %12 : vector<1x32xf32> to vector<2x32xf32>
    %369 = arith.addf %367, %368 : vector<2x32xf32>
    %cst_93 = arith.constant dense<0.000000e+00> : vector<2x32xf32>
    %370 = tpu.matmul %331, %2, %cst_93 {dimension_numbers = #tpu.dot_dimension_numbers<[1], [0], [0], [1], [0, 0, 1, 1], [], []>} : vector<2x32xf32>, vector<32x32xf32>, vector<2x32xf32> -> vector<2x32xf32>
    %371 = vector.broadcast %355 : vector<2x1xf32> to vector<2x32xf32>
    %372 = vector.broadcast %9 : vector<1x32xf32> to vector<2x32xf32>
    %373 = arith.mulf %371, %372 : vector<2x32xf32>
    %374 = arith.addf %370, %373 : vector<2x32xf32>
    %375 = vector.broadcast %13 : vector<1x32xf32> to vector<2x32xf32>
    %376 = arith.addf %374, %375 : vector<2x32xf32>
    %cst_94 = arith.constant dense<0.000000e+00> : vector<2x32xf32>
    %377 = tpu.matmul %331, %3, %cst_94 {dimension_numbers = #tpu.dot_dimension_numbers<[1], [0], [0], [1], [0, 0, 1, 1], [], []>} : vector<2x32xf32>, vector<32x32xf32>, vector<2x32xf32> -> vector<2x32xf32>
    %378 = vector.broadcast %355 : vector<2x1xf32> to vector<2x32xf32>
    %379 = vector.broadcast %10 : vector<1x32xf32> to vector<2x32xf32>
    %380 = arith.mulf %378, %379 : vector<2x32xf32>
    %381 = arith.addf %377, %380 : vector<2x32xf32>
    %382 = vector.broadcast %14 : vector<1x32xf32> to vector<2x32xf32>
    %383 = arith.addf %381, %382 : vector<2x32xf32>
    %384 = arith.negf %362 : vector<2x32xf32>
    %385 = math.exp %384 : vector<2x32xf32>
    %cst_95 = arith.constant 1.000000e+00 : f32
    %386 = vector.broadcast %cst_95 : f32 to vector<2x32xf32>
    %387 = arith.addf %386, %385 : vector<2x32xf32>
    %388 = arith.divf %386, %387 : vector<2x32xf32>
    %389 = arith.negf %369 : vector<2x32xf32>
    %390 = math.exp %389 : vector<2x32xf32>
    %cst_96 = arith.constant 1.000000e+00 : f32
    %391 = vector.broadcast %cst_96 : f32 to vector<2x32xf32>
    %392 = arith.addf %391, %390 : vector<2x32xf32>
    %393 = arith.divf %391, %392 : vector<2x32xf32>
    %394 = math.tanh %376 : vector<2x32xf32>
    %395 = arith.negf %383 : vector<2x32xf32>
    %396 = math.exp %395 : vector<2x32xf32>
    %cst_97 = arith.constant 1.000000e+00 : f32
    %397 = vector.broadcast %cst_97 : f32 to vector<2x32xf32>
    %398 = arith.addf %397, %396 : vector<2x32xf32>
    %399 = arith.divf %397, %398 : vector<2x32xf32>
    %400 = arith.mulf %393, %329 : vector<2x32xf32>
    %401 = arith.mulf %388, %394 : vector<2x32xf32>
    %402 = arith.addf %400, %401 : vector<2x32xf32>
    %403 = math.tanh %402 : vector<2x32xf32>
    %404 = arith.mulf %399, %403 : vector<2x32xf32>
    %cst_98 = arith.constant dense<0.000000e+00> : vector<2x16xf32>
    %405 = tpu.matmul %404, %4, %cst_98 {dimension_numbers = #tpu.dot_dimension_numbers<[1], [0], [0], [1], [0, 0, 1, 1], [], []>} : vector<2x32xf32>, vector<32x16xf32>, vector<2x16xf32> -> vector<2x16xf32>
    %cst_99 = arith.constant dense<0.000000e+00> : vector<2x16xf32>
    %406 = tpu.matmul %402, %5, %cst_99 {dimension_numbers = #tpu.dot_dimension_numbers<[1], [0], [0], [1], [0, 0, 1, 1], [], []>} : vector<2x32xf32>, vector<32x16xf32>, vector<2x16xf32> -> vector<2x16xf32>
    %407 = arith.addf %405, %406 : vector<2x16xf32>
    %408 = vector.shape_cast %407 : vector<2x16xf32> to vector<2x1x16xf32>
    %409 = vector.broadcast %408 : vector<2x1x16xf32> to vector<2x8x16xf32>
    %410 = arith.addf %30, %409 : vector<2x8x16xf32>
    %411 = math.tanh %410 : vector<2x8x16xf32>
    "tpu.trace_start"() <{level = 10 : i32, message = "bqf,btf->bqt"}> : () -> ()
    %cst_100 = arith.constant dense<0.000000e+00> : vector<2x1x8xf32>
    %412 = tpu.matmul %37, %411, %cst_100 {dimension_numbers = #tpu.dot_dimension_numbers<[2], [2], [1], [1], [0, 0, 0, 1, 1, 1], [0], [0]>} : vector<2x1x16xf32>, vector<2x8x16xf32>, vector<2x1x8xf32> -> vector<2x1x8xf32>
    "tpu.trace_stop"() : () -> ()
    %413 = vector.broadcast %20 : f32 to vector<2x1x8xf32>
    %414 = arith.addf %412, %413 : vector<2x1x8xf32>
    %cst_101 = arith.constant dense<0xFF800000> : vector<2x1xf32>
    %415 = vector.multi_reduction <maximumf>, %414, %cst_101 [2] : vector<2x1x8xf32> to vector<2x1xf32>
    %416 = vector.shape_cast %415 : vector<2x1xf32> to vector<2x1x1xf32>
    %417 = vector.broadcast %416 : vector<2x1x1xf32> to vector<2x1x8xf32>
    %418 = arith.subf %414, %417 : vector<2x1x8xf32>
    %419 = math.exp %418 : vector<2x1x8xf32>
    %cst_102 = arith.constant dense<0.000000e+00> : vector<2x1xf32>
    %420 = vector.multi_reduction <add>, %419, %cst_102 [2] : vector<2x1x8xf32> to vector<2x1xf32>
    %421 = vector.shape_cast %420 : vector<2x1xf32> to vector<2x1x1xf32>
    %422 = vector.broadcast %421 : vector<2x1x1xf32> to vector<2x1x8xf32>
    %423 = arith.divf %419, %422 : vector<2x1x8xf32>
    "tpu.trace_start"() <{level = 10 : i32, message = "bqt,btf->bqf"}> : () -> ()
    %cst_103 = arith.constant dense<0.000000e+00> : vector<2x1x16xf32>
    %424 = tpu.matmul %423, %24, %cst_103 {dimension_numbers = #tpu.dot_dimension_numbers<[2], [1], [1], [2], [0, 0, 0, 1, 1, 2], [0], [0]>} : vector<2x1x8xf32>, vector<2x8x16xf32>, vector<2x1x16xf32> -> vector<2x1x16xf32>
    "tpu.trace_stop"() : () -> ()
    %425 = vector.shape_cast %424 : vector<2x1x16xf32> to vector<2x16xf32>
    %cst_104 = arith.constant dense<0.000000e+00> : vector<2x1xf32>
    %426 = tpu.matmul %425, %17, %cst_104 {dimension_numbers = #tpu.dot_dimension_numbers<[1], [0], [0], [1], [0, 0, 1, 1], [], []>} : vector<2x16xf32>, vector<16x1xf32>, vector<2x1xf32> -> vector<2x1xf32>
    %427 = vector.extract_strided_slice %34 {offsets = [0, 5], sizes = [2, 1], strides = [1, 1]} : vector<2x8xf32> to vector<2x1xf32>
    %428 = arith.addf %426, %427 : vector<2x1xf32>
    %cst_105 = arith.constant dense<0.000000e+00> : vector<2x32xf32>
    %429 = tpu.matmul %404, %0, %cst_105 {dimension_numbers = #tpu.dot_dimension_numbers<[1], [0], [0], [1], [0, 0, 1, 1], [], []>} : vector<2x32xf32>, vector<32x32xf32>, vector<2x32xf32> -> vector<2x32xf32>
    %430 = vector.broadcast %428 : vector<2x1xf32> to vector<2x32xf32>
    %431 = vector.broadcast %7 : vector<1x32xf32> to vector<2x32xf32>
    %432 = arith.mulf %430, %431 : vector<2x32xf32>
    %433 = arith.addf %429, %432 : vector<2x32xf32>
    %434 = vector.broadcast %11 : vector<1x32xf32> to vector<2x32xf32>
    %435 = arith.addf %433, %434 : vector<2x32xf32>
    %cst_106 = arith.constant dense<0.000000e+00> : vector<2x32xf32>
    %436 = tpu.matmul %404, %1, %cst_106 {dimension_numbers = #tpu.dot_dimension_numbers<[1], [0], [0], [1], [0, 0, 1, 1], [], []>} : vector<2x32xf32>, vector<32x32xf32>, vector<2x32xf32> -> vector<2x32xf32>
    %437 = vector.broadcast %428 : vector<2x1xf32> to vector<2x32xf32>
    %438 = vector.broadcast %8 : vector<1x32xf32> to vector<2x32xf32>
    %439 = arith.mulf %437, %438 : vector<2x32xf32>
    %440 = arith.addf %436, %439 : vector<2x32xf32>
    %441 = vector.broadcast %12 : vector<1x32xf32> to vector<2x32xf32>
    %442 = arith.addf %440, %441 : vector<2x32xf32>
    %cst_107 = arith.constant dense<0.000000e+00> : vector<2x32xf32>
    %443 = tpu.matmul %404, %2, %cst_107 {dimension_numbers = #tpu.dot_dimension_numbers<[1], [0], [0], [1], [0, 0, 1, 1], [], []>} : vector<2x32xf32>, vector<32x32xf32>, vector<2x32xf32> -> vector<2x32xf32>
    %444 = vector.broadcast %428 : vector<2x1xf32> to vector<2x32xf32>
    %445 = vector.broadcast %9 : vector<1x32xf32> to vector<2x32xf32>
    %446 = arith.mulf %444, %445 : vector<2x32xf32>
    %447 = arith.addf %443, %446 : vector<2x32xf32>
    %448 = vector.broadcast %13 : vector<1x32xf32> to vector<2x32xf32>
    %449 = arith.addf %447, %448 : vector<2x32xf32>
    %cst_108 = arith.constant dense<0.000000e+00> : vector<2x32xf32>
    %450 = tpu.matmul %404, %3, %cst_108 {dimension_numbers = #tpu.dot_dimension_numbers<[1], [0], [0], [1], [0, 0, 1, 1], [], []>} : vector<2x32xf32>, vector<32x32xf32>, vector<2x32xf32> -> vector<2x32xf32>
    %451 = vector.broadcast %428 : vector<2x1xf32> to vector<2x32xf32>
    %452 = vector.broadcast %10 : vector<1x32xf32> to vector<2x32xf32>
    %453 = arith.mulf %451, %452 : vector<2x32xf32>
    %454 = arith.addf %450, %453 : vector<2x32xf32>
    %455 = vector.broadcast %14 : vector<1x32xf32> to vector<2x32xf32>
    %456 = arith.addf %454, %455 : vector<2x32xf32>
    %457 = arith.negf %435 : vector<2x32xf32>
    %458 = math.exp %457 : vector<2x32xf32>
    %cst_109 = arith.constant 1.000000e+00 : f32
    %459 = vector.broadcast %cst_109 : f32 to vector<2x32xf32>
    %460 = arith.addf %459, %458 : vector<2x32xf32>
    %461 = arith.divf %459, %460 : vector<2x32xf32>
    %462 = arith.negf %442 : vector<2x32xf32>
    %463 = math.exp %462 : vector<2x32xf32>
    %cst_110 = arith.constant 1.000000e+00 : f32
    %464 = vector.broadcast %cst_110 : f32 to vector<2x32xf32>
    %465 = arith.addf %464, %463 : vector<2x32xf32>
    %466 = arith.divf %464, %465 : vector<2x32xf32>
    %467 = math.tanh %449 : vector<2x32xf32>
    %468 = arith.negf %456 : vector<2x32xf32>
    %469 = math.exp %468 : vector<2x32xf32>
    %cst_111 = arith.constant 1.000000e+00 : f32
    %470 = vector.broadcast %cst_111 : f32 to vector<2x32xf32>
    %471 = arith.addf %470, %469 : vector<2x32xf32>
    %472 = arith.divf %470, %471 : vector<2x32xf32>
    %473 = arith.mulf %466, %402 : vector<2x32xf32>
    %474 = arith.mulf %461, %467 : vector<2x32xf32>
    %475 = arith.addf %473, %474 : vector<2x32xf32>
    %476 = math.tanh %475 : vector<2x32xf32>
    %477 = arith.mulf %472, %476 : vector<2x32xf32>
    %cst_112 = arith.constant dense<0.000000e+00> : vector<2x16xf32>
    %478 = tpu.matmul %477, %4, %cst_112 {dimension_numbers = #tpu.dot_dimension_numbers<[1], [0], [0], [1], [0, 0, 1, 1], [], []>} : vector<2x32xf32>, vector<32x16xf32>, vector<2x16xf32> -> vector<2x16xf32>
    %cst_113 = arith.constant dense<0.000000e+00> : vector<2x16xf32>
    %479 = tpu.matmul %475, %5, %cst_113 {dimension_numbers = #tpu.dot_dimension_numbers<[1], [0], [0], [1], [0, 0, 1, 1], [], []>} : vector<2x32xf32>, vector<32x16xf32>, vector<2x16xf32> -> vector<2x16xf32>
    %480 = arith.addf %478, %479 : vector<2x16xf32>
    %481 = vector.shape_cast %480 : vector<2x16xf32> to vector<2x1x16xf32>
    %482 = vector.broadcast %481 : vector<2x1x16xf32> to vector<2x8x16xf32>
    %483 = arith.addf %30, %482 : vector<2x8x16xf32>
    %484 = math.tanh %483 : vector<2x8x16xf32>
    "tpu.trace_start"() <{level = 10 : i32, message = "bqf,btf->bqt"}> : () -> ()
    %cst_114 = arith.constant dense<0.000000e+00> : vector<2x1x8xf32>
    %485 = tpu.matmul %37, %484, %cst_114 {dimension_numbers = #tpu.dot_dimension_numbers<[2], [2], [1], [1], [0, 0, 0, 1, 1, 1], [0], [0]>} : vector<2x1x16xf32>, vector<2x8x16xf32>, vector<2x1x8xf32> -> vector<2x1x8xf32>
    "tpu.trace_stop"() : () -> ()
    %486 = vector.broadcast %20 : f32 to vector<2x1x8xf32>
    %487 = arith.addf %485, %486 : vector<2x1x8xf32>
    %cst_115 = arith.constant dense<0xFF800000> : vector<2x1xf32>
    %488 = vector.multi_reduction <maximumf>, %487, %cst_115 [2] : vector<2x1x8xf32> to vector<2x1xf32>
    %489 = vector.shape_cast %488 : vector<2x1xf32> to vector<2x1x1xf32>
    %490 = vector.broadcast %489 : vector<2x1x1xf32> to vector<2x1x8xf32>
    %491 = arith.subf %487, %490 : vector<2x1x8xf32>
    %492 = math.exp %491 : vector<2x1x8xf32>
    %cst_116 = arith.constant dense<0.000000e+00> : vector<2x1xf32>
    %493 = vector.multi_reduction <add>, %492, %cst_116 [2] : vector<2x1x8xf32> to vector<2x1xf32>
    %494 = vector.shape_cast %493 : vector<2x1xf32> to vector<2x1x1xf32>
    %495 = vector.broadcast %494 : vector<2x1x1xf32> to vector<2x1x8xf32>
    %496 = arith.divf %492, %495 : vector<2x1x8xf32>
    "tpu.trace_start"() <{level = 10 : i32, message = "bqt,btf->bqf"}> : () -> ()
    %cst_117 = arith.constant dense<0.000000e+00> : vector<2x1x16xf32>
    %497 = tpu.matmul %496, %24, %cst_117 {dimension_numbers = #tpu.dot_dimension_numbers<[2], [1], [1], [2], [0, 0, 0, 1, 1, 2], [0], [0]>} : vector<2x1x8xf32>, vector<2x8x16xf32>, vector<2x1x16xf32> -> vector<2x1x16xf32>
    "tpu.trace_stop"() : () -> ()
    %498 = vector.shape_cast %497 : vector<2x1x16xf32> to vector<2x16xf32>
    %cst_118 = arith.constant dense<0.000000e+00> : vector<2x1xf32>
    %499 = tpu.matmul %498, %17, %cst_118 {dimension_numbers = #tpu.dot_dimension_numbers<[1], [0], [0], [1], [0, 0, 1, 1], [], []>} : vector<2x16xf32>, vector<16x1xf32>, vector<2x1xf32> -> vector<2x1xf32>
    %500 = vector.extract_strided_slice %34 {offsets = [0, 6], sizes = [2, 1], strides = [1, 1]} : vector<2x8xf32> to vector<2x1xf32>
    %501 = arith.addf %499, %500 : vector<2x1xf32>
    %cst_119 = arith.constant dense<0.000000e+00> : vector<2x32xf32>
    %502 = tpu.matmul %477, %0, %cst_119 {dimension_numbers = #tpu.dot_dimension_numbers<[1], [0], [0], [1], [0, 0, 1, 1], [], []>} : vector<2x32xf32>, vector<32x32xf32>, vector<2x32xf32> -> vector<2x32xf32>
    %503 = vector.broadcast %501 : vector<2x1xf32> to vector<2x32xf32>
    %504 = vector.broadcast %7 : vector<1x32xf32> to vector<2x32xf32>
    %505 = arith.mulf %503, %504 : vector<2x32xf32>
    %506 = arith.addf %502, %505 : vector<2x32xf32>
    %507 = vector.broadcast %11 : vector<1x32xf32> to vector<2x32xf32>
    %508 = arith.addf %506, %507 : vector<2x32xf32>
    %cst_120 = arith.constant dense<0.000000e+00> : vector<2x32xf32>
    %509 = tpu.matmul %477, %1, %cst_120 {dimension_numbers = #tpu.dot_dimension_numbers<[1], [0], [0], [1], [0, 0, 1, 1], [], []>} : vector<2x32xf32>, vector<32x32xf32>, vector<2x32xf32> -> vector<2x32xf32>
    %510 = vector.broadcast %501 : vector<2x1xf32> to vector<2x32xf32>
    %511 = vector.broadcast %8 : vector<1x32xf32> to vector<2x32xf32>
    %512 = arith.mulf %510, %511 : vector<2x32xf32>
    %513 = arith.addf %509, %512 : vector<2x32xf32>
    %514 = vector.broadcast %12 : vector<1x32xf32> to vector<2x32xf32>
    %515 = arith.addf %513, %514 : vector<2x32xf32>
    %cst_121 = arith.constant dense<0.000000e+00> : vector<2x32xf32>
    %516 = tpu.matmul %477, %2, %cst_121 {dimension_numbers = #tpu.dot_dimension_numbers<[1], [0], [0], [1], [0, 0, 1, 1], [], []>} : vector<2x32xf32>, vector<32x32xf32>, vector<2x32xf32> -> vector<2x32xf32>
    %517 = vector.broadcast %501 : vector<2x1xf32> to vector<2x32xf32>
    %518 = vector.broadcast %9 : vector<1x32xf32> to vector<2x32xf32>
    %519 = arith.mulf %517, %518 : vector<2x32xf32>
    %520 = arith.addf %516, %519 : vector<2x32xf32>
    %521 = vector.broadcast %13 : vector<1x32xf32> to vector<2x32xf32>
    %522 = arith.addf %520, %521 : vector<2x32xf32>
    %cst_122 = arith.constant dense<0.000000e+00> : vector<2x32xf32>
    %523 = tpu.matmul %477, %3, %cst_122 {dimension_numbers = #tpu.dot_dimension_numbers<[1], [0], [0], [1], [0, 0, 1, 1], [], []>} : vector<2x32xf32>, vector<32x32xf32>, vector<2x32xf32> -> vector<2x32xf32>
    %524 = vector.broadcast %501 : vector<2x1xf32> to vector<2x32xf32>
    %525 = vector.broadcast %10 : vector<1x32xf32> to vector<2x32xf32>
    %526 = arith.mulf %524, %525 : vector<2x32xf32>
    %527 = arith.addf %523, %526 : vector<2x32xf32>
    %528 = vector.broadcast %14 : vector<1x32xf32> to vector<2x32xf32>
    %529 = arith.addf %527, %528 : vector<2x32xf32>
    %530 = arith.negf %508 : vector<2x32xf32>
    %531 = math.exp %530 : vector<2x32xf32>
    %cst_123 = arith.constant 1.000000e+00 : f32
    %532 = vector.broadcast %cst_123 : f32 to vector<2x32xf32>
    %533 = arith.addf %532, %531 : vector<2x32xf32>
    %534 = arith.divf %532, %533 : vector<2x32xf32>
    %535 = arith.negf %515 : vector<2x32xf32>
    %536 = math.exp %535 : vector<2x32xf32>
    %cst_124 = arith.constant 1.000000e+00 : f32
    %537 = vector.broadcast %cst_124 : f32 to vector<2x32xf32>
    %538 = arith.addf %537, %536 : vector<2x32xf32>
    %539 = arith.divf %537, %538 : vector<2x32xf32>
    %540 = math.tanh %522 : vector<2x32xf32>
    %541 = arith.negf %529 : vector<2x32xf32>
    %542 = math.exp %541 : vector<2x32xf32>
    %cst_125 = arith.constant 1.000000e+00 : f32
    %543 = vector.broadcast %cst_125 : f32 to vector<2x32xf32>
    %544 = arith.addf %543, %542 : vector<2x32xf32>
    %545 = arith.divf %543, %544 : vector<2x32xf32>
    %546 = arith.mulf %539, %475 : vector<2x32xf32>
    %547 = arith.mulf %534, %540 : vector<2x32xf32>
    %548 = arith.addf %546, %547 : vector<2x32xf32>
    %549 = math.tanh %548 : vector<2x32xf32>
    %550 = arith.mulf %545, %549 : vector<2x32xf32>
    %cst_126 = arith.constant dense<0.000000e+00> : vector<2x16xf32>
    %551 = tpu.matmul %550, %4, %cst_126 {dimension_numbers = #tpu.dot_dimension_numbers<[1], [0], [0], [1], [0, 0, 1, 1], [], []>} : vector<2x32xf32>, vector<32x16xf32>, vector<2x16xf32> -> vector<2x16xf32>
    %cst_127 = arith.constant dense<0.000000e+00> : vector<2x16xf32>
    %552 = tpu.matmul %548, %5, %cst_127 {dimension_numbers = #tpu.dot_dimension_numbers<[1], [0], [0], [1], [0, 0, 1, 1], [], []>} : vector<2x32xf32>, vector<32x16xf32>, vector<2x16xf32> -> vector<2x16xf32>
    %553 = arith.addf %551, %552 : vector<2x16xf32>
    %554 = vector.shape_cast %553 : vector<2x16xf32> to vector<2x1x16xf32>
    %555 = vector.broadcast %554 : vector<2x1x16xf32> to vector<2x8x16xf32>
    %556 = arith.addf %30, %555 : vector<2x8x16xf32>
    %557 = math.tanh %556 : vector<2x8x16xf32>
    "tpu.trace_start"() <{level = 10 : i32, message = "bqf,btf->bqt"}> : () -> ()
    %cst_128 = arith.constant dense<0.000000e+00> : vector<2x1x8xf32>
    %558 = tpu.matmul %37, %557, %cst_128 {dimension_numbers = #tpu.dot_dimension_numbers<[2], [2], [1], [1], [0, 0, 0, 1, 1, 1], [0], [0]>} : vector<2x1x16xf32>, vector<2x8x16xf32>, vector<2x1x8xf32> -> vector<2x1x8xf32>
    "tpu.trace_stop"() : () -> ()
    %559 = vector.broadcast %20 : f32 to vector<2x1x8xf32>
    %560 = arith.addf %558, %559 : vector<2x1x8xf32>
    %cst_129 = arith.constant dense<0xFF800000> : vector<2x1xf32>
    %561 = vector.multi_reduction <maximumf>, %560, %cst_129 [2] : vector<2x1x8xf32> to vector<2x1xf32>
    %562 = vector.shape_cast %561 : vector<2x1xf32> to vector<2x1x1xf32>
    %563 = vector.broadcast %562 : vector<2x1x1xf32> to vector<2x1x8xf32>
    %564 = arith.subf %560, %563 : vector<2x1x8xf32>
    %565 = math.exp %564 : vector<2x1x8xf32>
    %cst_130 = arith.constant dense<0.000000e+00> : vector<2x1xf32>
    %566 = vector.multi_reduction <add>, %565, %cst_130 [2] : vector<2x1x8xf32> to vector<2x1xf32>
    %567 = vector.shape_cast %566 : vector<2x1xf32> to vector<2x1x1xf32>
    %568 = vector.broadcast %567 : vector<2x1x1xf32> to vector<2x1x8xf32>
    %569 = arith.divf %565, %568 : vector<2x1x8xf32>
    "tpu.trace_start"() <{level = 10 : i32, message = "bqt,btf->bqf"}> : () -> ()
    %cst_131 = arith.constant dense<0.000000e+00> : vector<2x1x16xf32>
    %570 = tpu.matmul %569, %24, %cst_131 {dimension_numbers = #tpu.dot_dimension_numbers<[2], [1], [1], [2], [0, 0, 0, 1, 1, 2], [0], [0]>} : vector<2x1x8xf32>, vector<2x8x16xf32>, vector<2x1x16xf32> -> vector<2x1x16xf32>
    "tpu.trace_stop"() : () -> ()
    %571 = vector.shape_cast %570 : vector<2x1x16xf32> to vector<2x16xf32>
    %cst_132 = arith.constant dense<0.000000e+00> : vector<2x1xf32>
    %572 = tpu.matmul %571, %17, %cst_132 {dimension_numbers = #tpu.dot_dimension_numbers<[1], [0], [0], [1], [0, 0, 1, 1], [], []>} : vector<2x16xf32>, vector<16x1xf32>, vector<2x1xf32> -> vector<2x1xf32>
    %573 = vector.extract_strided_slice %34 {offsets = [0, 7], sizes = [2, 1], strides = [1, 1]} : vector<2x8xf32> to vector<2x1xf32>
    %574 = arith.addf %572, %573 : vector<2x1xf32>
    %cst_133 = arith.constant dense<0.000000e+00> : vector<2x32xf32>
    %575 = tpu.matmul %550, %0, %cst_133 {dimension_numbers = #tpu.dot_dimension_numbers<[1], [0], [0], [1], [0, 0, 1, 1], [], []>} : vector<2x32xf32>, vector<32x32xf32>, vector<2x32xf32> -> vector<2x32xf32>
    %576 = vector.broadcast %574 : vector<2x1xf32> to vector<2x32xf32>
    %577 = vector.broadcast %7 : vector<1x32xf32> to vector<2x32xf32>
    %578 = arith.mulf %576, %577 : vector<2x32xf32>
    %579 = arith.addf %575, %578 : vector<2x32xf32>
    %580 = vector.broadcast %11 : vector<1x32xf32> to vector<2x32xf32>
    %581 = arith.addf %579, %580 : vector<2x32xf32>
    %cst_134 = arith.constant dense<0.000000e+00> : vector<2x32xf32>
    %582 = tpu.matmul %550, %1, %cst_134 {dimension_numbers = #tpu.dot_dimension_numbers<[1], [0], [0], [1], [0, 0, 1, 1], [], []>} : vector<2x32xf32>, vector<32x32xf32>, vector<2x32xf32> -> vector<2x32xf32>
    %583 = vector.broadcast %574 : vector<2x1xf32> to vector<2x32xf32>
    %584 = vector.broadcast %8 : vector<1x32xf32> to vector<2x32xf32>
    %585 = arith.mulf %583, %584 : vector<2x32xf32>
    %586 = arith.addf %582, %585 : vector<2x32xf32>
    %587 = vector.broadcast %12 : vector<1x32xf32> to vector<2x32xf32>
    %588 = arith.addf %586, %587 : vector<2x32xf32>
    %cst_135 = arith.constant dense<0.000000e+00> : vector<2x32xf32>
    %589 = tpu.matmul %550, %2, %cst_135 {dimension_numbers = #tpu.dot_dimension_numbers<[1], [0], [0], [1], [0, 0, 1, 1], [], []>} : vector<2x32xf32>, vector<32x32xf32>, vector<2x32xf32> -> vector<2x32xf32>
    %590 = vector.broadcast %574 : vector<2x1xf32> to vector<2x32xf32>
    %591 = vector.broadcast %9 : vector<1x32xf32> to vector<2x32xf32>
    %592 = arith.mulf %590, %591 : vector<2x32xf32>
    %593 = arith.addf %589, %592 : vector<2x32xf32>
    %594 = vector.broadcast %13 : vector<1x32xf32> to vector<2x32xf32>
    %595 = arith.addf %593, %594 : vector<2x32xf32>
    %cst_136 = arith.constant dense<0.000000e+00> : vector<2x32xf32>
    %596 = tpu.matmul %550, %3, %cst_136 {dimension_numbers = #tpu.dot_dimension_numbers<[1], [0], [0], [1], [0, 0, 1, 1], [], []>} : vector<2x32xf32>, vector<32x32xf32>, vector<2x32xf32> -> vector<2x32xf32>
    %597 = vector.broadcast %574 : vector<2x1xf32> to vector<2x32xf32>
    %598 = vector.broadcast %10 : vector<1x32xf32> to vector<2x32xf32>
    %599 = arith.mulf %597, %598 : vector<2x32xf32>
    %600 = arith.addf %596, %599 : vector<2x32xf32>
    %601 = vector.broadcast %14 : vector<1x32xf32> to vector<2x32xf32>
    %602 = arith.addf %600, %601 : vector<2x32xf32>
    %603 = arith.negf %581 : vector<2x32xf32>
    %604 = math.exp %603 : vector<2x32xf32>
    %cst_137 = arith.constant 1.000000e+00 : f32
    %605 = vector.broadcast %cst_137 : f32 to vector<2x32xf32>
    %606 = arith.addf %605, %604 : vector<2x32xf32>
    %607 = arith.divf %605, %606 : vector<2x32xf32>
    %608 = arith.negf %588 : vector<2x32xf32>
    %609 = math.exp %608 : vector<2x32xf32>
    %cst_138 = arith.constant 1.000000e+00 : f32
    %610 = vector.broadcast %cst_138 : f32 to vector<2x32xf32>
    %611 = arith.addf %610, %609 : vector<2x32xf32>
    %612 = arith.divf %610, %611 : vector<2x32xf32>
    %613 = math.tanh %595 : vector<2x32xf32>
    %614 = arith.negf %602 : vector<2x32xf32>
    %615 = math.exp %614 : vector<2x32xf32>
    %cst_139 = arith.constant 1.000000e+00 : f32
    %616 = vector.broadcast %cst_139 : f32 to vector<2x32xf32>
    %617 = arith.addf %616, %615 : vector<2x32xf32>
    %618 = arith.divf %616, %617 : vector<2x32xf32>
    %619 = arith.mulf %612, %548 : vector<2x32xf32>
    %620 = arith.mulf %607, %613 : vector<2x32xf32>
    %621 = arith.addf %619, %620 : vector<2x32xf32>
    %622 = math.tanh %621 : vector<2x32xf32>
    %623 = arith.mulf %618, %622 : vector<2x32xf32>
    %cst_140 = arith.constant dense<0.000000e+00> : vector<2x1xf32>
    %624 = tpu.matmul %623, %18, %cst_140 {dimension_numbers = #tpu.dot_dimension_numbers<[1], [0], [0], [1], [0, 0, 1, 1], [], []>} : vector<2x32xf32>, vector<32x1xf32>, vector<2x1xf32> -> vector<2x1xf32>
    %cst_141 = arith.constant dense<0.000000e+00> : vector<2x1xf32>
    %625 = tpu.matmul %571, %19, %cst_141 {dimension_numbers = #tpu.dot_dimension_numbers<[1], [0], [0], [1], [0, 0, 1, 1], [], []>} : vector<2x16xf32>, vector<16x1xf32>, vector<2x1xf32> -> vector<2x1xf32>
    %626 = arith.addf %624, %625 : vector<2x1xf32>
    %627 = vector.broadcast %23 : f32 to vector<2x1xf32>
    %628 = arith.addf %626, %627 : vector<2x1xf32>
    %c0_142 = arith.constant 0 : index
    %c0_143 = arith.constant 0 : index
    %629 = vector.load %arg4[%c0_142, %c0_143] : memref<2x1xf32, #tpu.memory_space<vmem>>, vector<2x1xf32>
    tpu.vector_store %arg4[%c0_142, %c0_143], %628 {strides = array<i32>} : memref<2x1xf32, #tpu.memory_space<vmem>>, vector<2x1xf32>,
    return
  }
}

</mosaic_0001>

<llo_original>
// kernel: tpu_custom_call.1
$region0: #{tpu_custom_call.1}
  #allocation0 [shape = 'u32[]', space=smem, size = 0x4, offset = 0x4, fixed_abs, tag = 'smem constant byte address 0x4 - core index']
  #allocation1 [shape = 'u32[144,128]{1,0:T(1,128)}', space=vmem, size = 0x12000, scoped, tag = 'internal scratch']
  %s0 = inlined_call_operand.hbm [shape: f32[2,8,16], index: 0, kind: input, shape index: {}]
  %s1 = inlined_call_operand.hbm [shape: f32[2,8], index: 1, kind: input, shape index: {}]
  %s2 = inlined_call_operand.hbm [shape: f32[304,128], index: 2, kind: input, shape index: {}]
  %s3 = inlined_call_operand.vmem [shape: f32[4], index: 3, kind: input, shape index: {}]
  %s4 = inlined_call_operand.vmem [shape: f32[2,1], index: 4, kind: output, shape index: {}]
  %s5 = sld [smem:[#allocation0]]
  $region42: #{tpu_custom_call.1} parent=0
    _
  %s7 = ssub.s32 1, %s5
  %s8 = scalar_select 0, %s7, %s5
  $region1: #{tpu_custom_call.1} parent=0
    #allocation2 [shape = 'u8[8192]{0}', space=vmem, size = 0x2000, scoped, tag = 'input window, operand 0, single buffered']
    #allocation3 [shape = 's32[1]{0}', space=sflag, size = 0x4, scoped, tag = 'scoped memory for tpu_custom_call.1']
    #allocation4 [shape = 's32[1]{0}', space=sflag, size = 0x4, scoped, tag = 'scoped memory for tpu_custom_call.1']
    #allocation5 [shape = 'u8[1024]{0}', space=vmem, size = 0x400, scoped, tag = 'input window, operand 1, single buffered']
    #allocation6 [shape = 's32[1]{0}', space=sflag, size = 0x4, scoped, tag = 'scoped memory for tpu_custom_call.1']
    #allocation7 [shape = 'u8[155648]{0}', space=vmem, size = 0x26000, scoped, tag = 'input window, operand 2, single buffered']
    #allocation8 [shape = 'u8[512]{0}', space=smem, size = 0x200, scoped, tag = 'input window, operand 3, single buffered']
    %9 = vsyncpa [#allocation3], 0
    %10 = vsyncpa [#allocation6], 0
    %11 = vsyncpa [#allocation4], 0
    // Predicated region
    $region2: #{tpu_custom_call.1} parent=1 // pred_check
      _
    $region3: #{tpu_custom_call.1} parent=1 // pred_check_branch
      %13 = sbr.rel (0) target = $region5
    $region4: #{tpu_custom_call.1} parent=1 // pred_region
      %s15 = ssub.s32 256, 256
      %16 = vsyncadd [#allocation3], %s15
      %s17 = sshll.u32 [#allocation2], 4
      %s18 = int_to_ptr.vmem [resolvable:$true] %s17
      %23 = dma.hbm_to_vmem [thread:$0]  %s0, 256, %s18, [#allocation3], 128, 128, 8
    $region5: #{tpu_custom_call.1} parent=1 // pred_fallthru
      _
    // Predicated region
    $region6: #{tpu_custom_call.1} parent=1 // pred_check
      _
    $region7: #{tpu_custom_call.1} parent=1 // pred_check_branch
      %25 = sbr.rel (0) target = $region9
    $region8: #{tpu_custom_call.1} parent=1 // pred_region
      %s27 = ssub.s32 32, 32
      %28 = vsyncadd [#allocation6], %s27
      %s30 = sshll.u32 [#allocation5], 4
      %s31 = int_to_ptr.vmem [resolvable:$true] %s30
      %33 = dma.hbm_to_vmem [thread:$0]  %s1, 32, %s31, [#allocation6]
    $region9: #{tpu_custom_call.1} parent=1 // pred_fallthru
      _
    // Predicated region
    $region10: #{tpu_custom_call.1} parent=1 // pred_check
      _
    $region11: #{tpu_custom_call.1} parent=1 // pred_check_branch
      %35 = sbr.rel (0) target = $region13
    $region12: #{tpu_custom_call.1} parent=1 // pred_region
      %s37 = ssub.s32 4864, 4864
      %38 = vsyncadd [#allocation6], %s37
      %s39 = sshll.u32 [#allocation7], 4
      %s40 = int_to_ptr.vmem [resolvable:$true] %s39
      %45 = dma.hbm_to_vmem [thread:$0]  %s2, 4864, %s40, [#allocation6], 128, 128, 8
    $region13: #{tpu_custom_call.1} parent=1 // pred_fallthru
      _
    // Predicated region
    $region14: #{tpu_custom_call.1} parent=1 // pred_check
      _
    $region15: #{tpu_custom_call.1} parent=1 // pred_check_branch
      %47 = sbr.rel (0) target = $region17
    $region16: #{tpu_custom_call.1} parent=1 // pred_region
      %s49 = ssub.s32 16, 16
      %50 = vsyncadd [#allocation4], %s49
      %s52 = sshll.u32 %s3, 4
      %s53 = int_to_ptr.vmem [resolvable:$true] %s52
      %55 = dma.vmem_to_smem %s53, 16, [#allocation8], [#allocation4]
    $region17: #{tpu_custom_call.1} parent=1 // pred_fallthru
      _
    // Predicated region
    $region18: #{tpu_custom_call.1} parent=1 // pred_check
      _
    $region19: #{tpu_custom_call.1} parent=1 // pred_check_branch
      %57 = sbr.rel (0) target = $region21
    $region20: #{tpu_custom_call.1} parent=1 // pred_region
      %58 = dma.done [#allocation3], 256
    $region21: #{tpu_custom_call.1} parent=1 // pred_fallthru
      _
    // Predicated region
    $region22: #{tpu_custom_call.1} parent=1 // pred_check
      _
    $region23: #{tpu_custom_call.1} parent=1 // pred_check_branch
      %60 = sbr.rel (0) target = $region25
    $region24: #{tpu_custom_call.1} parent=1 // pred_region
      %61 = dma.done [#allocation6], 32
    $region25: #{tpu_custom_call.1} parent=1 // pred_fallthru
      _
    // Predicated region
    $region26: #{tpu_custom_call.1} parent=1 // pred_check
      _
    $region27: #{tpu_custom_call.1} parent=1 // pred_check_branch
      %63 = sbr.rel (0) target = $region29
    $region28: #{tpu_custom_call.1} parent=1 // pred_region
      %64 = dma.done [#allocation6], 4864
    $region29: #{tpu_custom_call.1} parent=1 // pred_fallthru
      _
    // Predicated region
    $region30: #{tpu_custom_call.1} parent=1 // pred_check
      _
    $region31: #{tpu_custom_call.1} parent=1 // pred_check_branch
      %66 = sbr.rel (0) target = $region33
    $region32: #{tpu_custom_call.1} parent=1 // pred_region
      %67 = dma.done [#allocation4], 16
    $region33: #{tpu_custom_call.1} parent=1 // pred_fallthru
      _
    %68 = sfence
    %v69 = vld [vmem:[#allocation7] sm:$0xff]
    %v70 = vld [vmem:[#allocation7 + $0x8] sm:$0xff]
    %v71 = vld [vmem:[#allocation7 + $0x10] sm:$0xff]
    %v72 = vld [vmem:[#allocation7 + $0x18] sm:$0xff]
    %v73 = vld [vmem:[#allocation7 + $0x20] sm:$0xff]
    %v74 = vld [vmem:[#allocation7 + $0x28] sm:$0xff]
    %v75 = vld [vmem:[#allocation7 + $0x30] sm:$0xff]
    %v76 = vld [vmem:[#allocation7 + $0x38] sm:$0xff]
    %v77 = vld [vmem:[#allocation7 + $0x40] sm:$0xff]
    %v78 = vld [vmem:[#allocation7 + $0x48] sm:$0xff]
    %v79 = vld [vmem:[#allocation7 + $0x50] sm:$0xff]
    %v80 = vld [vmem:[#allocation7 + $0x58] sm:$0xff]
    %v81 = vld [vmem:[#allocation7 + $0x60] sm:$0xff]
    %v82 = vld [vmem:[#allocation7 + $0x68] sm:$0xff]
    %v83 = vld [vmem:[#allocation7 + $0x70] sm:$0xff]
    %v84 = vld [vmem:[#allocation7 + $0x78] sm:$0xff]
    %v85 = vld [vmem:[#allocation7 + $0x80] sm:$0xff]
    %v86 = vld [vmem:[#allocation7 + $0x88] sm:$0xff]
    %v87 = vld [vmem:[#allocation7 + $0x90] sm:$0xff]
    %v88 = vld [vmem:[#allocation7 + $0x98] sm:$0xff]
    %v89 = vld [vmem:[#allocation7 + $0xa0] sm:$0xff]
    %v90 = vld [vmem:[#allocation7 + $0xa8] sm:$0xff]
    %v91 = vld [vmem:[#allocation7 + $0xb0] sm:$0xff]
    %v92 = vld [vmem:[#allocation7 + $0xb8] sm:$0xff]
    %v93 = vld [vmem:[#allocation7 + $0xc0] sm:$0xff]
    %v94 = vld [vmem:[#allocation7 + $0xc8] sm:$0xff]
    %v95 = vld [vmem:[#allocation7 + $0xd0] sm:$0x1]
    %v96 = vld [vmem:[#allocation7 + $0xd1] sm:$0x1]
    %v97 = vld [vmem:[#allocation7 + $0xd2] sm:$0x1]
    %v98 = vld [vmem:[#allocation7 + $0xd3] sm:$0x1]
    %v99 = vld [vmem:[#allocation7 + $0xd8] sm:$0x1]
    %v100 = vld [vmem:[#allocation7 + $0xd9] sm:$0x1]
    %v101 = vld [vmem:[#allocation7 + $0xda] sm:$0x1]
    %v102 = vld [vmem:[#allocation7 + $0xdb] sm:$0x1]
    %v103 = vld [vmem:[#allocation7 + $0xe0] sm:$0x1]
    %v104 = vld [vmem:[#allocation7 + $0xe8] sm:$0x1]
    %v105 = vld [vmem:[#allocation7 + $0xf0] sm:$0xff]
    %v106 = vld [vmem:[#allocation7 + $0xf8] sm:$0xff]
    %v107 = vld [vmem:[#allocation7 + $0x100] sm:$0xff]
    %v108 = vld [vmem:[#allocation7 + $0x108] sm:$0xff]
    %v109 = vld [vmem:[#allocation7 + $0x110] sm:$0xff]
    %v110 = vld [vmem:[#allocation7 + $0x118] sm:$0xff]
    %v111 = vld [vmem:[#allocation7 + $0x120] sm:$0xff]
    %v112 = vld [vmem:[#allocation7 + $0x128] sm:$0xff]
    %s113 = sld [smem:[#allocation8]]
    %s114 = sld [smem:[#allocation8 + $0x1]]
    %s115 = sld [smem:[#allocation8 + $0x2]]
    %s116 = sld [smem:[#allocation8 + $0x3]]
    %v117 = vld [vmem:[#allocation2] sm:$0xff]
    %v118 = vld [vmem:[#allocation2 + $0x8] sm:$0xff]
    %v119 = vld [vmem:[#allocation5] sm:$0x3]
    %v120 = vlaneseq
    %v121 = vshrl.u32 %v120, 7
    %v122 = vsub.s32 0, %v121
    %v123 = vrot.slane %v103, %v122
    %vm124 = vcmask 130048
    %v126 = vsel %vm124, %v117, 0
    %v129 = vsel %vm124, %v118, 0
    %131 = vmatprep.subr.mxu0 0.0
    %132 = vmatpush1.msra.mxu0 0.0
    %133 = vmatprep.subr.mxu0 0.0
    %134 = vmatpush1.msra.mxu0 0.0
    %135 = vmatprep.subr.mxu0 0.0
    %136 = vmatpush1.msra.mxu0 0.0
    %137 = vmatprep.subr.mxu0 0.0
    %138 = vmatpush1.msra.mxu0 0.0
    %139 = vmatprep.subr.mxu0 0.0
    %140 = vmatpush1.msra.mxu0 0.0
    %141 = vmatprep.subr.mxu0 0.0
    %142 = vmatpush1.msra.mxu0 0.0
    %143 = vmatprep.subr.mxu0 0.0
    %144 = vmatpush1.msra.mxu0 0.0
    %145 = vmatprep.subr.mxu0 0.0
    %146 = vmatpush1.msra.mxu0 0.0
    %147 = vmatprep.subr.mxu0 0.0
    %148 = vmatpush1.msra.mxu0 0.0
    %149 = vmatprep.subr.mxu0 0.0
    %150 = vmatpush1.msra.mxu0 0.0
    %151 = vmatprep.subr.mxu0 0.0
    %152 = vmatpush1.msra.mxu0 0.0
    %153 = vmatprep.subr.mxu0 0.0
    %154 = vmatpush1.msra.mxu0 0.0
    %155 = vmatprep.subr.mxu0 0.0
    %156 = vmatpush1.msra.mxu0 0.0
    %157 = vmatprep.subr.mxu0 0.0
    %158 = vmatpush1.msra.mxu0 0.0
    %159 = vmatprep.subr.mxu0 0.0
    %160 = vmatpush1.msra.mxu0 %v94
    %161 = vmatprep.subr.mxu0 0.0
    %162 = vmatpush1.msra.mxu0 %v93
    %163 = vmatprep.subr.mxu0 0.0
    %164 = vmatpush2.msra.mxu0 0.0
    %165 = vmatprep.subr.mxu0 0.0
    %166 = vmatpush2.msra.mxu0 0.0
    %167 = vmatprep.subr.mxu0 0.0
    %168 = vmatpush2.msra.mxu0 0.0
    %169 = vmatprep.subr.mxu0 0.0
    %170 = vmatpush2.msra.mxu0 0.0
    %171 = vmatprep.subr.mxu0 0.0
    %172 = vmatpush2.msra.mxu0 0.0
    %173 = vmatprep.subr.mxu0 0.0
    %174 = vmatpush2.msra.mxu0 0.0
    %175 = vmatprep.subr.mxu0 0.0
    %176 = vmatpush2.msra.mxu0 0.0
    %177 = vmatprep.subr.mxu0 0.0
    %178 = vmatpush2.msra.mxu0 0.0
    %179 = vmatprep.subr.mxu0 0.0
    %180 = vmatpush2.msra.mxu0 0.0
    %181 = vmatprep.subr.mxu0 0.0
    %182 = vmatpush2.msra.mxu0 0.0
    %183 = vmatprep.subr.mxu0 0.0
    %184 = vmatpush2.msra.mxu0 0.0
    %185 = vmatprep.subr.mxu0 0.0
    %186 = vmatpush2.msra.mxu0 0.0
    %187 = vmatprep.subr.mxu0 0.0
    %188 = vmatpush2.msra.mxu0 0.0
    %189 = vmatprep.subr.mxu0 0.0
    %190 = vmatpush2.msra.mxu0 0.0
    %191 = vmatprep.subr.mxu0 0.0
    %192 = vmatpush2.msra.mxu0 0.0
    %193 = vmatprep.subr.mxu0 0.0
    %194 = vmatpush2.msra.mxu0 0.0
    %195 = vmatprep.mubr.f32.mxu0 0.0
    %196 = vmatmul.mubr.f32.gmra.mxu0 %v126
    %v197 = vpop.f32.mrf.mxu0
    %v198 = vadd.f32 %v123, %v197
    %v199 = vpop.f32.mrf.mxu0
    %200 = vmatprep.mubr.f32.mxu0 0.0
    %201 = vmatmul.mubr.f32.gmra.mxu0 %v129
    %v202 = vpop.f32.mrf.mxu0
    %v203 = vadd.f32 %v123, %v202
    %v204 = vpop.f32.mrf.mxu0
    %205 = vdwg.mxu0
    %v206 = vstv %s115
    %v207 = vmul.f32 %v119, %v206
    %v208 = vstv %s114
    %v209 = vadd.f32 %v207, %v208
    %vm210 = vcmask 261120
    %v212 = vsel %vm210, 0.0, 0
    %214 = vmatprep.subr.mxu0 0.0
    %215 = vmatpush1.msra.mxu0 0.0
    %216 = vmatprep.subr.mxu0 0.0
    %217 = vmatpush1.msra.mxu0 0.0
    %218 = vmatprep.subr.mxu0 0.0
    %219 = vmatpush1.msra.mxu0 0.0
    %220 = vmatprep.subr.mxu0 0.0
    %221 = vmatpush1.msra.mxu0 0.0
    %222 = vmatprep.subr.mxu0 0.0
    %223 = vmatpush1.msra.mxu0 0.0
    %224 = vmatprep.subr.mxu0 0.0
    %225 = vmatpush1.msra.mxu0 0.0
    %226 = vmatprep.subr.mxu0 0.0
    %227 = vmatpush1.msra.mxu0 0.0
    %228 = vmatprep.subr.mxu0 0.0
    %229 = vmatpush1.msra.mxu0 0.0
    %230 = vmatprep.subr.mxu0 0.0
    %231 = vmatpush1.msra.mxu0 0.0
    %232 = vmatprep.subr.mxu0 0.0
    %233 = vmatpush1.msra.mxu0 0.0
    %234 = vmatprep.subr.mxu0 0.0
    %235 = vmatpush1.msra.mxu0 0.0
    %236 = vmatprep.subr.mxu0 0.0
    %237 = vmatpush1.msra.mxu0 0.0
    %238 = vmatprep.subr.mxu0 0.0
    %239 = vmatpush1.msra.mxu0 %v92
    %240 = vmatprep.subr.mxu0 0.0
    %241 = vmatpush1.msra.mxu0 %v91
    %242 = vmatprep.subr.mxu0 0.0
    %243 = vmatpush1.msra.mxu0 %v90
    %244 = vmatprep.subr.mxu0 0.0
    %245 = vmatpush1.msra.mxu0 %v89
    %246 = vmatprep.subr.mxu0 0.0
    %247 = vmatpush2.msra.mxu0 0.0
    %248 = vmatprep.subr.mxu0 0.0
    %249 = vmatpush2.msra.mxu0 0.0
    %250 = vmatprep.subr.mxu0 0.0
    %251 = vmatpush2.msra.mxu0 0.0
    %252 = vmatprep.subr.mxu0 0.0
    %253 = vmatpush2.msra.mxu0 0.0
    %254 = vmatprep.subr.mxu0 0.0
    %255 = vmatpush2.msra.mxu0 0.0
    %256 = vmatprep.subr.mxu0 0.0
    %257 = vmatpush2.msra.mxu0 0.0
    %258 = vmatprep.subr.mxu0 0.0
    %259 = vmatpush2.msra.mxu0 0.0
    %260 = vmatprep.subr.mxu0 0.0
    %261 = vmatpush2.msra.mxu0 0.0
    %262 = vmatprep.subr.mxu0 0.0
    %263 = vmatpush2.msra.mxu0 0.0
    %264 = vmatprep.subr.mxu0 0.0
    %265 = vmatpush2.msra.mxu0 0.0
    %266 = vmatprep.subr.mxu0 0.0
    %267 = vmatpush2.msra.mxu0 0.0
    %268 = vmatprep.subr.mxu0 0.0
    %269 = vmatpush2.msra.mxu0 0.0
    %270 = vmatprep.subr.mxu0 0.0
    %271 = vmatpush2.msra.mxu0 0.0
    %272 = vmatprep.subr.mxu0 0.0
    %273 = vmatpush2.msra.mxu0 0.0
    %274 = vmatprep.subr.mxu0 0.0
    %275 = vmatpush2.msra.mxu0 0.0
    %276 = vmatprep.subr.mxu0 0.0
    %277 = vmatpush2.msra.mxu0 0.0
    %278 = vmatprep.mubr.f32.mxu0 0.0
    %279 = vmatmul.mubr.f32.gmra.mxu0 %v212
    %v280 = vpop.f32.mrf.mxu0
    %v281 = vadd.f32 0.0, %v280
    %v282 = vpop.f32.mrf.mxu0
    %283 = vdwg.mxu0
    %284 = vmatprep.subr.mxu0 0.0
    %285 = vmatpush1.msra.mxu0 0.0
    %286 = vmatprep.subr.mxu0 0.0
    %287 = vmatpush1.msra.mxu0 0.0
    %288 = vmatprep.subr.mxu0 0.0
    %289 = vmatpush1.msra.mxu0 0.0
    %290 = vmatprep.subr.mxu0 0.0
    %291 = vmatpush1.msra.mxu0 0.0
    %292 = vmatprep.subr.mxu0 0.0
    %293 = vmatpush1.msra.mxu0 0.0
    %294 = vmatprep.subr.mxu0 0.0
    %295 = vmatpush1.msra.mxu0 0.0
    %296 = vmatprep.subr.mxu0 0.0
    %297 = vmatpush1.msra.mxu0 0.0
    %298 = vmatprep.subr.mxu0 0.0
    %299 = vmatpush1.msra.mxu0 0.0
    %300 = vmatprep.subr.mxu0 0.0
    %301 = vmatpush1.msra.mxu0 0.0
    %302 = vmatprep.subr.mxu0 0.0
    %303 = vmatpush1.msra.mxu0 0.0
    %304 = vmatprep.subr.mxu0 0.0
    %305 = vmatpush1.msra.mxu0 0.0
    %306 = vmatprep.subr.mxu0 0.0
    %307 = vmatpush1.msra.mxu0 0.0
    %308 = vmatprep.subr.mxu0 0.0
    %309 = vmatpush1.msra.mxu0 %v88
    %310 = vmatprep.subr.mxu0 0.0
    %311 = vmatpush1.msra.mxu0 %v87
    %312 = vmatprep.subr.mxu0 0.0
    %313 = vmatpush1.msra.mxu0 %v86
    %314 = vmatprep.subr.mxu0 0.0
    %315 = vmatpush1.msra.mxu0 %v85
    %316 = vmatprep.subr.mxu0 0.0
    %317 = vmatpush2.msra.mxu0 0.0
    %318 = vmatprep.subr.mxu0 0.0
    %319 = vmatpush2.msra.mxu0 0.0
    %320 = vmatprep.subr.mxu0 0.0
    %321 = vmatpush2.msra.mxu0 0.0
    %322 = vmatprep.subr.mxu0 0.0
    %323 = vmatpush2.msra.mxu0 0.0
    %324 = vmatprep.subr.mxu0 0.0
    %325 = vmatpush2.msra.mxu0 0.0
    %326 = vmatprep.subr.mxu0 0.0
    %327 = vmatpush2.msra.mxu0 0.0
    %328 = vmatprep.subr.mxu0 0.0
    %329 = vmatpush2.msra.mxu0 0.0
    %330 = vmatprep.subr.mxu0 0.0
    %331 = vmatpush2.msra.mxu0 0.0
    %332 = vmatprep.subr.mxu0 0.0
    %333 = vmatpush2.msra.mxu0 0.0
    %334 = vmatprep.subr.mxu0 0.0
    %335 = vmatpush2.msra.mxu0 0.0
    %336 = vmatprep.subr.mxu0 0.0
    %337 = vmatpush2.msra.mxu0 0.0
    %338 = vmatprep.subr.mxu0 0.0
    %339 = vmatpush2.msra.mxu0 0.0
    %340 = vmatprep.subr.mxu0 0.0
    %341 = vmatpush2.msra.mxu0 0.0
    %342 = vmatprep.subr.mxu0 0.0
    %343 = vmatpush2.msra.mxu0 0.0
    %344 = vmatprep.subr.mxu0 0.0
    %345 = vmatpush2.msra.mxu0 0.0
    %346 = vmatprep.subr.mxu0 0.0
    %347 = vmatpush2.msra.mxu0 0.0
    %348 = vmatprep.mubr.f32.mxu0 0.0
    %349 = vmatmul.mubr.f32.gmra.mxu0 %v212
    %v350 = vpop.f32.mrf.mxu0
    %v351 = vadd.f32 %v281, %v350
    %v352 = vpop.f32.mrf.mxu0
    %353 = vdwg.mxu0
    %v356 = vunpack.c.l.s4 1966171168
    %v357 = vunpack.c.0.s8 %v356
    %v358 = vlaneseq
    %v359 = vshrl.u32 %v358, 7
    %v360 = vsub.s32 %v357, %v359
    %v361 = vrot.slane %v351, %v360
    %v362 = vcombine.high %v361, %v361
    %v364 = vunpack.c.l.s4 1966171168
    %v365 = vunpack.c.0.s8 %v364
    %v366 = vlaneseq
    %v367 = vshrl.u32 %v366, 7
    %v368 = vsub.s32 %v365, %v367
    %v369 = vrot.slane %v361, %v368
    %v371 = vunpack.c.l.s4 1966171168
    %v372 = vunpack.c.0.s8 %v371
    %v373 = vlaneseq
    %v374 = vshrl.u32 %v373, 7
    %v375 = vsub.s32 %v372, %v374
    %v376 = vrot.slane %v362, %v375
    %v377 = vlaneseq
    %v378 = vshrl.u32 %v377, 7
    %v379 = vsub.s32 0, %v378
    %v380 = vrot.slane %v369, %v379
    %v381 = vlaneseq
    %v382 = vshrl.u32 %v381, 7
    %v383 = vsub.s32 0, %v382
    %v384 = vrot.slane %v376, %v383
    %v387 = vadd.f32 %v198, %v380
    %v388 = vadd.f32 %v203, %v384
    %v389 = vtanh.pop %v387
    %v390 = vtanh.pop %v388
    %v391 = vstv %s113
    %v393 = vsel %vm124, %v104, 0
    %v396 = vsel %vm124, %v389, 0
    %398 = vmatprep.subr.mxu0 0.0
    %399 = vmatpush1.xpose.msra.mxu0 0.0
    %400 = vmatprep.subr.mxu0 0.0
    %401 = vmatpush1.xpose.msra.mxu0 0.0
    %402 = vmatprep.subr.mxu0 0.0
    %403 = vmatpush1.xpose.msra.mxu0 0.0
    %404 = vmatprep.subr.mxu0 0.0
    %405 = vmatpush1.xpose.msra.mxu0 0.0
    %406 = vmatprep.subr.mxu0 0.0
    %407 = vmatpush1.xpose.msra.mxu0 0.0
    %408 = vmatprep.subr.mxu0 0.0
    %409 = vmatpush1.xpose.msra.mxu0 0.0
    %410 = vmatprep.subr.mxu0 0.0
    %411 = vmatpush1.xpose.msra.mxu0 0.0
    %412 = vmatprep.subr.mxu0 0.0
    %413 = vmatpush1.xpose.msra.mxu0 0.0
    %414 = vmatprep.subr.mxu0 0.0
    %415 = vmatpush1.xpose.msra.mxu0 0.0
    %416 = vmatprep.subr.mxu0 0.0
    %417 = vmatpush1.xpose.msra.mxu0 0.0
    %418 = vmatprep.subr.mxu0 0.0
    %419 = vmatpush1.xpose.msra.mxu0 0.0
    %420 = vmatprep.subr.mxu0 0.0
    %421 = vmatpush1.xpose.msra.mxu0 0.0
    %422 = vmatprep.subr.mxu0 0.0
    %423 = vmatpush1.xpose.msra.mxu0 0.0
    %424 = vmatprep.subr.mxu0 0.0
    %425 = vmatpush1.xpose.msra.mxu0 0.0
    %426 = vmatprep.subr.mxu0 0.0
    %427 = vmatpush1.xpose.msra.mxu0 0.0
    %428 = vmatprep.subr.mxu0 0.0
    %429 = vmatpush1.xpose.msra.mxu0 %v396
    %430 = vmatprep.subr.mxu0 0.0
    %431 = vmatpush2.xpose.msra.mxu0 0.0
    %432 = vmatprep.subr.mxu0 0.0
    %433 = vmatpush2.xpose.msra.mxu0 0.0
    %434 = vmatprep.subr.mxu0 0.0
    %435 = vmatpush2.xpose.msra.mxu0 0.0
    %436 = vmatprep.subr.mxu0 0.0
    %437 = vmatpush2.xpose.msra.mxu0 0.0
    %438 = vmatprep.subr.mxu0 0.0
    %439 = vmatpush2.xpose.msra.mxu0 0.0
    %440 = vmatprep.subr.mxu0 0.0
    %441 = vmatpush2.xpose.msra.mxu0 0.0
    %442 = vmatprep.subr.mxu0 0.0
    %443 = vmatpush2.xpose.msra.mxu0 0.0
    %444 = vmatprep.subr.mxu0 0.0
    %445 = vmatpush2.xpose.msra.mxu0 0.0
    %446 = vmatprep.subr.mxu0 0.0
    %447 = vmatpush2.xpose.msra.mxu0 0.0
    %448 = vmatprep.subr.mxu0 0.0
    %449 = vmatpush2.xpose.msra.mxu0 0.0
    %450 = vmatprep.subr.mxu0 0.0
    %451 = vmatpush2.xpose.msra.mxu0 0.0
    %452 = vmatprep.subr.mxu0 0.0
    %453 = vmatpush2.xpose.msra.mxu0 0.0
    %454 = vmatprep.subr.mxu0 0.0
    %455 = vmatpush2.xpose.msra.mxu0 0.0
    %456 = vmatprep.subr.mxu0 0.0
    %457 = vmatpush2.xpose.msra.mxu0 0.0
    %458 = vmatprep.subr.mxu0 0.0
    %459 = vmatpush2.xpose.msra.mxu0 0.0
    %460 = vmatprep.subr.mxu0 0.0
    %461 = vmatpush2.xpose.msra.mxu0 0.0
    %462 = vmatprep.mubr.f32.mxu0 0.0
    %463 = vmatmul.mubr.f32.gmra.mxu0 %v393
    %v464 = vpop.f32.mrf.mxu0
    %v465 = vadd.f32 %v391, %v464
    %v466 = vpop.f32.mrf.mxu0
    %467 = vdwg.mxu0
    %v469 = vsel %vm124, %v390, 0
    %471 = vmatprep.subr.mxu0 0.0
    %472 = vmatpush1.xpose.msra.mxu0 0.0
    %473 = vmatprep.subr.mxu0 0.0
    %474 = vmatpush1.xpose.msra.mxu0 0.0
    %475 = vmatprep.subr.mxu0 0.0
    %476 = vmatpush1.xpose.msra.mxu0 0.0
    %477 = vmatprep.subr.mxu0 0.0
    %478 = vmatpush1.xpose.msra.mxu0 0.0
    %479 = vmatprep.subr.mxu0 0.0
    %480 = vmatpush1.xpose.msra.mxu0 0.0
    %481 = vmatprep.subr.mxu0 0.0
    %482 = vmatpush1.xpose.msra.mxu0 0.0
    %483 = vmatprep.subr.mxu0 0.0
    %484 = vmatpush1.xpose.msra.mxu0 0.0
    %485 = vmatprep.subr.mxu0 0.0
    %486 = vmatpush1.xpose.msra.mxu0 0.0
    %487 = vmatprep.subr.mxu0 0.0
    %488 = vmatpush1.xpose.msra.mxu0 0.0
    %489 = vmatprep.subr.mxu0 0.0
    %490 = vmatpush1.xpose.msra.mxu0 0.0
    %491 = vmatprep.subr.mxu0 0.0
    %492 = vmatpush1.xpose.msra.mxu0 0.0
    %493 = vmatprep.subr.mxu0 0.0
    %494 = vmatpush1.xpose.msra.mxu0 0.0
    %495 = vmatprep.subr.mxu0 0.0
    %496 = vmatpush1.xpose.msra.mxu0 0.0
    %497 = vmatprep.subr.mxu0 0.0
    %498 = vmatpush1.xpose.msra.mxu0 0.0
    %499 = vmatprep.subr.mxu0 0.0
    %500 = vmatpush1.xpose.msra.mxu0 0.0
    %501 = vmatprep.subr.mxu0 0.0
    %502 = vmatpush1.xpose.msra.mxu0 %v469
    %503 = vmatprep.subr.mxu0 0.0
    %504 = vmatpush2.xpose.msra.mxu0 0.0
    %505 = vmatprep.subr.mxu0 0.0
    %506 = vmatpush2.xpose.msra.mxu0 0.0
    %507 = vmatprep.subr.mxu0 0.0
    %508 = vmatpush2.xpose.msra.mxu0 0.0
    %509 = vmatprep.subr.mxu0 0.0
    %510 = vmatpush2.xpose.msra.mxu0 0.0
    %511 = vmatprep.subr.mxu0 0.0
    %512 = vmatpush2.xpose.msra.mxu0 0.0
    %513 = vmatprep.subr.mxu0 0.0
    %514 = vmatpush2.xpose.msra.mxu0 0.0
    %515 = vmatprep.subr.mxu0 0.0
    %516 = vmatpush2.xpose.msra.mxu0 0.0
    %517 = vmatprep.subr.mxu0 0.0
    %518 = vmatpush2.xpose.msra.mxu0 0.0
    %519 = vmatprep.subr.mxu0 0.0
    %520 = vmatpush2.xpose.msra.mxu0 0.0
    %521 = vmatprep.subr.mxu0 0.0
    %522 = vmatpush2.xpose.msra.mxu0 0.0
    %523 = vmatprep.subr.mxu0 0.0
    %524 = vmatpush2.xpose.msra.mxu0 0.0
    %525 = vmatprep.subr.mxu0 0.0
    %526 = vmatpush2.xpose.msra.mxu0 0.0
    %527 = vmatprep.subr.mxu0 0.0
    %528 = vmatpush2.xpose.msra.mxu0 0.0
    %529 = vmatprep.subr.mxu0 0.0
    %530 = vmatpush2.xpose.msra.mxu0 0.0
    %531 = vmatprep.subr.mxu0 0.0
    %532 = vmatpush2.xpose.msra.mxu0 0.0
    %533 = vmatprep.subr.mxu0 0.0
    %534 = vmatpush2.xpose.msra.mxu0 0.0
    %535 = vmatprep.mubr.f32.mxu0 0.0
    %536 = vmatmul.mubr.f32.gmra.mxu0 %v393
    %v537 = vpop.f32.mrf.mxu0
    %v538 = vadd.f32 %v391, %v537
    %v539 = vpop.f32.mrf.mxu0
    %540 = vdwg.mxu0
    %vm541 = vcmask 57344
    %v542 = vsel %vm541, %v465, -inf
    %543 = vmax.xlane.f32.xlu0 %v542
    %v544 = vpop.xlane.xlu0 %543
    %v545 = vsel %vm541, %v538, -inf
    %546 = vmax.xlane.f32.xlu0 %v545
    %v547 = vpop.xlane.xlu0 %546
    %v548 = vsub.f32 %v465, %v544
    %v549 = vsub.f32 %v538, %v547
    %v550 = vmul.f32 %v548, 1.442695
    %v551 = vpow.pop %v550
    %v552 = vmul.f32 %v549, 1.442695
    %v553 = vpow.pop %v552
    %v554 = vsel %vm541, %v551, 0.0
    %555 = vadd.xlane.f32.xlu0 %v554
    %v556 = vpop.xlane.xlu0 %555
    %v557 = vsel %vm541, %v553, 0.0
    %558 = vadd.xlane.f32.xlu0 %v557
    %v559 = vpop.xlane.xlu0 %558
    %v560 = vrcp.pop %v556
    %v561 = vmul.f32 %v551, %v560
    %v562 = vrcp.pop %v559
    %v563 = vmul.f32 %v553, %v562
    %vm564 = vcmask 64512
    %v566 = vsel %vm564, %v561, 0
    %568 = vmatprep.subr.mxu0 0.0
    %569 = vmatpush1.msra.mxu0 0.0
    %570 = vmatprep.subr.mxu0 0.0
    %571 = vmatpush1.msra.mxu0 0.0
    %572 = vmatprep.subr.mxu0 0.0
    %573 = vmatpush1.msra.mxu0 0.0
    %574 = vmatprep.subr.mxu0 0.0
    %575 = vmatpush1.msra.mxu0 0.0
    %576 = vmatprep.subr.mxu0 0.0
    %577 = vmatpush1.msra.mxu0 0.0
    %578 = vmatprep.subr.mxu0 0.0
    %579 = vmatpush1.msra.mxu0 0.0
    %580 = vmatprep.subr.mxu0 0.0
    %581 = vmatpush1.msra.mxu0 0.0
    %582 = vmatprep.subr.mxu0 0.0
    %583 = vmatpush1.msra.mxu0 0.0
    %584 = vmatprep.subr.mxu0 0.0
    %585 = vmatpush1.msra.mxu0 0.0
    %586 = vmatprep.subr.mxu0 0.0
    %587 = vmatpush1.msra.mxu0 0.0
    %588 = vmatprep.subr.mxu0 0.0
    %589 = vmatpush1.msra.mxu0 0.0
    %590 = vmatprep.subr.mxu0 0.0
    %591 = vmatpush1.msra.mxu0 0.0
    %592 = vmatprep.subr.mxu0 0.0
    %593 = vmatpush1.msra.mxu0 0.0
    %594 = vmatprep.subr.mxu0 0.0
    %595 = vmatpush1.msra.mxu0 0.0
    %596 = vmatprep.subr.mxu0 0.0
    %597 = vmatpush1.msra.mxu0 0.0
    %598 = vmatprep.subr.mxu0 0.0
    %599 = vmatpush1.msra.mxu0 %v117
    %600 = vmatprep.subr.mxu0 0.0
    %601 = vmatpush2.msra.mxu0 0.0
    %602 = vmatprep.subr.mxu0 0.0
    %603 = vmatpush2.msra.mxu0 0.0
    %604 = vmatprep.subr.mxu0 0.0
    %605 = vmatpush2.msra.mxu0 0.0
    %606 = vmatprep.subr.mxu0 0.0
    %607 = vmatpush2.msra.mxu0 0.0
    %608 = vmatprep.subr.mxu0 0.0
    %609 = vmatpush2.msra.mxu0 0.0
    %610 = vmatprep.subr.mxu0 0.0
    %611 = vmatpush2.msra.mxu0 0.0
    %612 = vmatprep.subr.mxu0 0.0
    %613 = vmatpush2.msra.mxu0 0.0
    %614 = vmatprep.subr.mxu0 0.0
    %615 = vmatpush2.msra.mxu0 0.0
    %616 = vmatprep.subr.mxu0 0.0
    %617 = vmatpush2.msra.mxu0 0.0
    %618 = vmatprep.subr.mxu0 0.0
    %619 = vmatpush2.msra.mxu0 0.0
    %620 = vmatprep.subr.mxu0 0.0
    %621 = vmatpush2.msra.mxu0 0.0
    %622 = vmatprep.subr.mxu0 0.0
    %623 = vmatpush2.msra.mxu0 0.0
    %624 = vmatprep.subr.mxu0 0.0
    %625 = vmatpush2.msra.mxu0 0.0
    %626 = vmatprep.subr.mxu0 0.0
    %627 = vmatpush2.msra.mxu0 0.0
    %628 = vmatprep.subr.mxu0 0.0
    %629 = vmatpush2.msra.mxu0 0.0
    %630 = vmatprep.subr.mxu0 0.0
    %631 = vmatpush2.msra.mxu0 0.0
    %632 = vmatprep.mubr.f32.mxu0 0.0
    %633 = vmatmul.mubr.f32.gmra.mxu0 %v566
    %v634 = vpop.f32.mrf.mxu0
    %v635 = vadd.f32 0.0, %v634
    %v636 = vpop.f32.mrf.mxu0
    %637 = vdwg.mxu0
    %v639 = vsel %vm564, %v563, 0
    %641 = vmatprep.subr.mxu0 0.0
    %642 = vmatpush1.msra.mxu0 0.0
    %643 = vmatprep.subr.mxu0 0.0
    %644 = vmatpush1.msra.mxu0 0.0
    %645 = vmatprep.subr.mxu0 0.0
    %646 = vmatpush1.msra.mxu0 0.0
    %647 = vmatprep.subr.mxu0 0.0
    %648 = vmatpush1.msra.mxu0 0.0
    %649 = vmatprep.subr.mxu0 0.0
    %650 = vmatpush1.msra.mxu0 0.0
    %651 = vmatprep.subr.mxu0 0.0
    %652 = vmatpush1.msra.mxu0 0.0
    %653 = vmatprep.subr.mxu0 0.0
    %654 = vmatpush1.msra.mxu0 0.0
    %655 = vmatprep.subr.mxu0 0.0
    %656 = vmatpush1.msra.mxu0 0.0
    %657 = vmatprep.subr.mxu0 0.0
    %658 = vmatpush1.msra.mxu0 0.0
    %659 = vmatprep.subr.mxu0 0.0
    %660 = vmatpush1.msra.mxu0 0.0
    %661 = vmatprep.subr.mxu0 0.0
    %662 = vmatpush1.msra.mxu0 0.0
    %663 = vmatprep.subr.mxu0 0.0
    %664 = vmatpush1.msra.mxu0 0.0
    %665 = vmatprep.subr.mxu0 0.0
    %666 = vmatpush1.msra.mxu0 0.0
    %667 = vmatprep.subr.mxu0 0.0
    %668 = vmatpush1.msra.mxu0 0.0
    %669 = vmatprep.subr.mxu0 0.0
    %670 = vmatpush1.msra.mxu0 0.0
    %671 = vmatprep.subr.mxu0 0.0
    %672 = vmatpush1.msra.mxu0 %v118
    %673 = vmatprep.subr.mxu0 0.0
    %674 = vmatpush2.msra.mxu0 0.0
    %675 = vmatprep.subr.mxu0 0.0
    %676 = vmatpush2.msra.mxu0 0.0
    %677 = vmatprep.subr.mxu0 0.0
    %678 = vmatpush2.msra.mxu0 0.0
    %679 = vmatprep.subr.mxu0 0.0
    %680 = vmatpush2.msra.mxu0 0.0
    %681 = vmatprep.subr.mxu0 0.0
    %682 = vmatpush2.msra.mxu0 0.0
    %683 = vmatprep.subr.mxu0 0.0
    %684 = vmatpush2.msra.mxu0 0.0
    %685 = vmatprep.subr.mxu0 0.0
    %686 = vmatpush2.msra.mxu0 0.0
    %687 = vmatprep.subr.mxu0 0.0
    %688 = vmatpush2.msra.mxu0 0.0
    %689 = vmatprep.subr.mxu0 0.0
    %690 = vmatpush2.msra.mxu0 0.0
    %691 = vmatprep.subr.mxu0 0.0
    %692 = vmatpush2.msra.mxu0 0.0
    %693 = vmatprep.subr.mxu0 0.0
    %694 = vmatpush2.msra.mxu0 0.0
    %695 = vmatprep.subr.mxu0 0.0
    %696 = vmatpush2.msra.mxu0 0.0
    %697 = vmatprep.subr.mxu0 0.0
    %698 = vmatpush2.msra.mxu0 0.0
    %699 = vmatprep.subr.mxu0 0.0
    %700 = vmatpush2.msra.mxu0 0.0
    %701 = vmatprep.subr.mxu0 0.0
    %702 = vmatpush2.msra.mxu0 0.0
    %703 = vmatprep.subr.mxu0 0.0
    %704 = vmatpush2.msra.mxu0 0.0
    %705 = vmatprep.mubr.f32.mxu0 0.0
    %706 = vmatmul.mubr.f32.gmra.mxu0 %v639
    %v707 = vpop.f32.mrf.mxu0
    %v708 = vadd.f32 0.0, %v707
    %v709 = vpop.f32.mrf.mxu0
    %710 = vdwg.mxu0
    %v713 = vrot.slane %v708, 7
    %vm714 = vcmask 1041409
    %v715 = vsel %vm714, %v713, %v635
    %v716 = vsel %vm124, %v715, 0
    %718 = vmatprep.subr.mxu0 0.0
    %719 = vmatpush1.msra.mxu0 0.0
    %720 = vmatprep.subr.mxu0 0.0
    %721 = vmatpush1.msra.mxu0 0.0
    %722 = vmatprep.subr.mxu0 0.0
    %723 = vmatpush1.msra.mxu0 0.0
    %724 = vmatprep.subr.mxu0 0.0
    %725 = vmatpush1.msra.mxu0 0.0
    %726 = vmatprep.subr.mxu0 0.0
    %727 = vmatpush1.msra.mxu0 0.0
    %728 = vmatprep.subr.mxu0 0.0
    %729 = vmatpush1.msra.mxu0 0.0
    %730 = vmatprep.subr.mxu0 0.0
    %731 = vmatpush1.msra.mxu0 0.0
    %732 = vmatprep.subr.mxu0 0.0
    %733 = vmatpush1.msra.mxu0 0.0
    %734 = vmatprep.subr.mxu0 0.0
    %735 = vmatpush1.msra.mxu0 0.0
    %736 = vmatprep.subr.mxu0 0.0
    %737 = vmatpush1.msra.mxu0 0.0
    %738 = vmatprep.subr.mxu0 0.0
    %739 = vmatpush1.msra.mxu0 0.0
    %740 = vmatprep.subr.mxu0 0.0
    %741 = vmatpush1.msra.mxu0 0.0
    %742 = vmatprep.subr.mxu0 0.0
    %743 = vmatpush1.msra.mxu0 0.0
    %744 = vmatprep.subr.mxu0 0.0
    %745 = vmatpush1.msra.mxu0 0.0
    %746 = vmatprep.subr.mxu0 0.0
    %747 = vmatpush1.msra.mxu0 %v106
    %748 = vmatprep.subr.mxu0 0.0
    %749 = vmatpush1.msra.mxu0 %v105
    %750 = vmatprep.subr.mxu0 0.0
    %751 = vmatpush2.msra.mxu0 0.0
    %752 = vmatprep.subr.mxu0 0.0
    %753 = vmatpush2.msra.mxu0 0.0
    %754 = vmatprep.subr.mxu0 0.0
    %755 = vmatpush2.msra.mxu0 0.0
    %756 = vmatprep.subr.mxu0 0.0
    %757 = vmatpush2.msra.mxu0 0.0
    %758 = vmatprep.subr.mxu0 0.0
    %759 = vmatpush2.msra.mxu0 0.0
    %760 = vmatprep.subr.mxu0 0.0
    %761 = vmatpush2.msra.mxu0 0.0
    %762 = vmatprep.subr.mxu0 0.0
    %763 = vmatpush2.msra.mxu0 0.0
    %764 = vmatprep.subr.mxu0 0.0
    %765 = vmatpush2.msra.mxu0 0.0
    %766 = vmatprep.subr.mxu0 0.0
    %767 = vmatpush2.msra.mxu0 0.0
    %768 = vmatprep.subr.mxu0 0.0
    %769 = vmatpush2.msra.mxu0 0.0
    %770 = vmatprep.subr.mxu0 0.0
    %771 = vmatpush2.msra.mxu0 0.0
    %772 = vmatprep.subr.mxu0 0.0
    %773 = vmatpush2.msra.mxu0 0.0
    %774 = vmatprep.subr.mxu0 0.0
    %775 = vmatpush2.msra.mxu0 0.0
    %776 = vmatprep.subr.mxu0 0.0
    %777 = vmatpush2.msra.mxu0 0.0
    %778 = vmatprep.subr.mxu0 0.0
    %779 = vmatpush2.msra.mxu0 0.0
    %780 = vmatprep.subr.mxu0 0.0
    %781 = vmatpush2.msra.mxu0 0.0
    %782 = vmatprep.mubr.f32.mxu0 0.0
    %783 = vmatmul.mubr.f32.gmra.mxu0 %v716
    %v784 = vpop.f32.mrf.mxu0
    %v785 = vadd.f32 %v209, %v784
    %v786 = vpop.f32.mrf.mxu0
    %787 = vdwg.mxu0
    %789 = vset.pattern.permute.xlu0 0
    %790 = vperm.xlu0 %789, %v785
    %v791 = vpop.permute.xlu0 %790
    %v793 = vlaneseq
    %v794 = vshrl.u32 %v793, 7
    %v795 = vsub.s32 0, %v794
    %v796 = vrot.slane %v95, %v795
    %v797 = vmul.f32 %v791, %v796
    %798 = vmatprep.subr.mxu0 0.0
    %799 = vmatpush1.msra.mxu0 0.0
    %800 = vmatprep.subr.mxu0 0.0
    %801 = vmatpush1.msra.mxu0 0.0
    %802 = vmatprep.subr.mxu0 0.0
    %803 = vmatpush1.msra.mxu0 0.0
    %804 = vmatprep.subr.mxu0 0.0
    %805 = vmatpush1.msra.mxu0 0.0
    %806 = vmatprep.subr.mxu0 0.0
    %807 = vmatpush1.msra.mxu0 0.0
    %808 = vmatprep.subr.mxu0 0.0
    %809 = vmatpush1.msra.mxu0 0.0
    %810 = vmatprep.subr.mxu0 0.0
    %811 = vmatpush1.msra.mxu0 0.0
    %812 = vmatprep.subr.mxu0 0.0
    %813 = vmatpush1.msra.mxu0 0.0
    %814 = vmatprep.subr.mxu0 0.0
    %815 = vmatpush1.msra.mxu0 0.0
    %816 = vmatprep.subr.mxu0 0.0
    %817 = vmatpush1.msra.mxu0 0.0
    %818 = vmatprep.subr.mxu0 0.0
    %819 = vmatpush1.msra.mxu0 0.0
    %820 = vmatprep.subr.mxu0 0.0
    %821 = vmatpush1.msra.mxu0 0.0
    %822 = vmatprep.subr.mxu0 0.0
    %823 = vmatpush1.msra.mxu0 %v72
    %824 = vmatprep.subr.mxu0 0.0
    %825 = vmatpush1.msra.mxu0 %v71
    %826 = vmatprep.subr.mxu0 0.0
    %827 = vmatpush1.msra.mxu0 %v70
    %828 = vmatprep.subr.mxu0 0.0
    %829 = vmatpush1.msra.mxu0 %v69
    %830 = vmatprep.subr.mxu0 0.0
    %831 = vmatpush2.msra.mxu0 0.0
    %832 = vmatprep.subr.mxu0 0.0
    %833 = vmatpush2.msra.mxu0 0.0
    %834 = vmatprep.subr.mxu0 0.0
    %835 = vmatpush2.msra.mxu0 0.0
    %836 = vmatprep.subr.mxu0 0.0
    %837 = vmatpush2.msra.mxu0 0.0
    %838 = vmatprep.subr.mxu0 0.0
    %839 = vmatpush2.msra.mxu0 0.0
    %840 = vmatprep.subr.mxu0 0.0
    %841 = vmatpush2.msra.mxu0 0.0
    %842 = vmatprep.subr.mxu0 0.0
    %843 = vmatpush2.msra.mxu0 0.0
    %844 = vmatprep.subr.mxu0 0.0
    %845 = vmatpush2.msra.mxu0 0.0
    %846 = vmatprep.subr.mxu0 0.0
    %847 = vmatpush2.msra.mxu0 0.0
    %848 = vmatprep.subr.mxu0 0.0
    %849 = vmatpush2.msra.mxu0 0.0
    %850 = vmatprep.subr.mxu0 0.0
    %851 = vmatpush2.msra.mxu0 0.0
    %852 = vmatprep.subr.mxu0 0.0
    %853 = vmatpush2.msra.mxu0 0.0
    %854 = vmatprep.subr.mxu0 0.0
    %855 = vmatpush2.msra.mxu0 0.0
    %856 = vmatprep.subr.mxu0 0.0
    %857 = vmatpush2.msra.mxu0 0.0
    %858 = vmatprep.subr.mxu0 0.0
    %859 = vmatpush2.msra.mxu0 0.0
    %860 = vmatprep.subr.mxu0 0.0
    %861 = vmatpush2.msra.mxu0 0.0
    %862 = vmatprep.mubr.f32.mxu0 0.0
    %863 = vmatmul.mubr.f32.gmra.mxu0 %v212
    %v864 = vpop.f32.mrf.mxu0
    %v865 = vadd.f32 %v797, %v864
    %v866 = vpop.f32.mrf.mxu0
    %867 = vdwg.mxu0
    %v868 = vlaneseq
    %v869 = vshrl.u32 %v868, 7
    %v870 = vsub.s32 0, %v869
    %v871 = vrot.slane %v99, %v870
    %v872 = vadd.f32 %v865, %v871
    %v873 = vlaneseq
    %v874 = vshrl.u32 %v873, 7
    %v875 = vsub.s32 0, %v874
    %v876 = vrot.slane %v96, %v875
    %v877 = vmul.f32 %v791, %v876
    %878 = vmatprep.subr.mxu0 0.0
    %879 = vmatpush1.msra.mxu0 0.0
    %880 = vmatprep.subr.mxu0 0.0
    %881 = vmatpush1.msra.mxu0 0.0
    %882 = vmatprep.subr.mxu0 0.0
    %883 = vmatpush1.msra.mxu0 0.0
    %884 = vmatprep.subr.mxu0 0.0
    %885 = vmatpush1.msra.mxu0 0.0
    %886 = vmatprep.subr.mxu0 0.0
    %887 = vmatpush1.msra.mxu0 0.0
    %888 = vmatprep.subr.mxu0 0.0
    %889 = vmatpush1.msra.mxu0 0.0
    %890 = vmatprep.subr.mxu0 0.0
    %891 = vmatpush1.msra.mxu0 0.0
    %892 = vmatprep.subr.mxu0 0.0
    %893 = vmatpush1.msra.mxu0 0.0
    %894 = vmatprep.subr.mxu0 0.0
    %895 = vmatpush1.msra.mxu0 0.0
    %896 = vmatprep.subr.mxu0 0.0
    %897 = vmatpush1.msra.mxu0 0.0
    %898 = vmatprep.subr.mxu0 0.0
    %899 = vmatpush1.msra.mxu0 0.0
    %900 = vmatprep.subr.mxu0 0.0
    %901 = vmatpush1.msra.mxu0 0.0
    %902 = vmatprep.subr.mxu0 0.0
    %903 = vmatpush1.msra.mxu0 %v76
    %904 = vmatprep.subr.mxu0 0.0
    %905 = vmatpush1.msra.mxu0 %v75
    %906 = vmatprep.subr.mxu0 0.0
    %907 = vmatpush1.msra.mxu0 %v74
    %908 = vmatprep.subr.mxu0 0.0
    %909 = vmatpush1.msra.mxu0 %v73
    %910 = vmatprep.subr.mxu0 0.0
    %911 = vmatpush2.msra.mxu0 0.0
    %912 = vmatprep.subr.mxu0 0.0
    %913 = vmatpush2.msra.mxu0 0.0
    %914 = vmatprep.subr.mxu0 0.0
    %915 = vmatpush2.msra.mxu0 0.0
    %916 = vmatprep.subr.mxu0 0.0
    %917 = vmatpush2.msra.mxu0 0.0
    %918 = vmatprep.subr.mxu0 0.0
    %919 = vmatpush2.msra.mxu0 0.0
    %920 = vmatprep.subr.mxu0 0.0
    %921 = vmatpush2.msra.mxu0 0.0
    %922 = vmatprep.subr.mxu0 0.0
    %923 = vmatpush2.msra.mxu0 0.0
    %924 = vmatprep.subr.mxu0 0.0
    %925 = vmatpush2.msra.mxu0 0.0
    %926 = vmatprep.subr.mxu0 0.0
    %927 = vmatpush2.msra.mxu0 0.0
    %928 = vmatprep.subr.mxu0 0.0
    %929 = vmatpush2.msra.mxu0 0.0
    %930 = vmatprep.subr.mxu0 0.0
    %931 = vmatpush2.msra.mxu0 0.0
    %932 = vmatprep.subr.mxu0 0.0
    %933 = vmatpush2.msra.mxu0 0.0
    %934 = vmatprep.subr.mxu0 0.0
    %935 = vmatpush2.msra.mxu0 0.0
    %936 = vmatprep.subr.mxu0 0.0
    %937 = vmatpush2.msra.mxu0 0.0
    %938 = vmatprep.subr.mxu0 0.0
    %939 = vmatpush2.msra.mxu0 0.0
    %940 = vmatprep.subr.mxu0 0.0
    %941 = vmatpush2.msra.mxu0 0.0
    %942 = vmatprep.mubr.f32.mxu0 0.0
    %943 = vmatmul.mubr.f32.gmra.mxu0 %v212
    %v944 = vpop.f32.mrf.mxu0
    %v945 = vadd.f32 %v877, %v944
    %v946 = vpop.f32.mrf.mxu0
    %947 = vdwg.mxu0
    %v948 = vlaneseq
    %v949 = vshrl.u32 %v948, 7
    %v950 = vsub.s32 0, %v949
    %v951 = vrot.slane %v100, %v950
    %v952 = vadd.f32 %v945, %v951
    %v953 = vlaneseq
    %v954 = vshrl.u32 %v953, 7
    %v955 = vsub.s32 0, %v954
    %v956 = vrot.slane %v97, %v955
    %v957 = vmul.f32 %v791, %v956
    %958 = vmatprep.subr.mxu0 0.0
    %959 = vmatpush1.msra.mxu0 0.0
    %960 = vmatprep.subr.mxu0 0.0
    %961 = vmatpush1.msra.mxu0 0.0
    %962 = vmatprep.subr.mxu0 0.0
    %963 = vmatpush1.msra.mxu0 0.0
    %964 = vmatprep.subr.mxu0 0.0
    %965 = vmatpush1.msra.mxu0 0.0
    %966 = vmatprep.subr.mxu0 0.0
    %967 = vmatpush1.msra.mxu0 0.0
    %968 = vmatprep.subr.mxu0 0.0
    %969 = vmatpush1.msra.mxu0 0.0
    %970 = vmatprep.subr.mxu0 0.0
    %971 = vmatpush1.msra.mxu0 0.0
    %972 = vmatprep.subr.mxu0 0.0
    %973 = vmatpush1.msra.mxu0 0.0
    %974 = vmatprep.subr.mxu0 0.0
    %975 = vmatpush1.msra.mxu0 0.0
    %976 = vmatprep.subr.mxu0 0.0
    %977 = vmatpush1.msra.mxu0 0.0
    %978 = vmatprep.subr.mxu0 0.0
    %979 = vmatpush1.msra.mxu0 0.0
    %980 = vmatprep.subr.mxu0 0.0
    %981 = vmatpush1.msra.mxu0 0.0
    %982 = vmatprep.subr.mxu0 0.0
    %983 = vmatpush1.msra.mxu0 %v80
    %984 = vmatprep.subr.mxu0 0.0
    %985 = vmatpush1.msra.mxu0 %v79
    %986 = vmatprep.subr.mxu0 0.0
    %987 = vmatpush1.msra.mxu0 %v78
    %988 = vmatprep.subr.mxu0 0.0
    %989 = vmatpush1.msra.mxu0 %v77
    %990 = vmatprep.subr.mxu0 0.0
    %991 = vmatpush2.msra.mxu0 0.0
    %992 = vmatprep.subr.mxu0 0.0
    %993 = vmatpush2.msra.mxu0 0.0
    %994 = vmatprep.subr.mxu0 0.0
    %995 = vmatpush2.msra.mxu0 0.0
    %996 = vmatprep.subr.mxu0 0.0
    %997 = vmatpush2.msra.mxu0 0.0
    %998 = vmatprep.subr.mxu0 0.0
    %999 = vmatpush2.msra.mxu0 0.0
    %1000 = vmatprep.subr.mxu0 0.0
    %1001 = vmatpush2.msra.mxu0 0.0
    %1002 = vmatprep.subr.mxu0 0.0
    %1003 = vmatpush2.msra.mxu0 0.0
    %1004 = vmatprep.subr.mxu0 0.0
    %1005 = vmatpush2.msra.mxu0 0.0
    %1006 = vmatprep.subr.mxu0 0.0
    %1007 = vmatpush2.msra.mxu0 0.0
    %1008 = vmatprep.subr.mxu0 0.0
    %1009 = vmatpush2.msra.mxu0 0.0
    %1010 = vmatprep.subr.mxu0 0.0
    %1011 = vmatpush2.msra.mxu0 0.0
    %1012 = vmatprep.subr.mxu0 0.0
    %1013 = vmatpush2.msra.mxu0 0.0
    %1014 = vmatprep.subr.mxu0 0.0
    %1015 = vmatpush2.msra.mxu0 0.0
    %1016 = vmatprep.subr.mxu0 0.0
    %1017 = vmatpush2.msra.mxu0 0.0
    %1018 = vmatprep.subr.mxu0 0.0
    %1019 = vmatpush2.msra.mxu0 0.0
    %1020 = vmatprep.subr.mxu0 0.0
    %1021 = vmatpush2.msra.mxu0 0.0
    %1022 = vmatprep.mubr.f32.mxu0 0.0
    %1023 = vmatmul.mubr.f32.gmra.mxu0 %v212
    %v1024 = vpop.f32.mrf.mxu0
    %v1025 = vadd.f32 %v957, %v1024
    %v1026 = vpop.f32.mrf.mxu0
    %1027 = vdwg.mxu0
    %v1028 = vlaneseq
    %v1029 = vshrl.u32 %v1028, 7
    %v1030 = vsub.s32 0, %v1029
    %v1031 = vrot.slane %v101, %v1030
    %v1032 = vadd.f32 %v1025, %v1031
    %v1033 = vlaneseq
    %v1034 = vshrl.u32 %v1033, 7
    %v1035 = vsub.s32 0, %v1034
    %v1036 = vrot.slane %v98, %v1035
    %v1037 = vmul.f32 %v791, %v1036
    %1038 = vmatprep.subr.mxu0 0.0
    %1039 = vmatpush1.msra.mxu0 0.0
    %1040 = vmatprep.subr.mxu0 0.0
    %1041 = vmatpush1.msra.mxu0 0.0
    %1042 = vmatprep.subr.mxu0 0.0
    %1043 = vmatpush1.msra.mxu0 0.0
    %1044 = vmatprep.subr.mxu0 0.0
    %1045 = vmatpush1.msra.mxu0 0.0
    %1046 = vmatprep.subr.mxu0 0.0
    %1047 = vmatpush1.msra.mxu0 0.0
    %1048 = vmatprep.subr.mxu0 0.0
    %1049 = vmatpush1.msra.mxu0 0.0
    %1050 = vmatprep.subr.mxu0 0.0
    %1051 = vmatpush1.msra.mxu0 0.0
    %1052 = vmatprep.subr.mxu0 0.0
    %1053 = vmatpush1.msra.mxu0 0.0
    %1054 = vmatprep.subr.mxu0 0.0
    %1055 = vmatpush1.msra.mxu0 0.0
    %1056 = vmatprep.subr.mxu0 0.0
    %1057 = vmatpush1.msra.mxu0 0.0
    %1058 = vmatprep.subr.mxu0 0.0
    %1059 = vmatpush1.msra.mxu0 0.0
    %1060 = vmatprep.subr.mxu0 0.0
    %1061 = vmatpush1.msra.mxu0 0.0
    %1062 = vmatprep.subr.mxu0 0.0
    %1063 = vmatpush1.msra.mxu0 %v84
    %1064 = vmatprep.subr.mxu0 0.0
    %1065 = vmatpush1.msra.mxu0 %v83
    %1066 = vmatprep.subr.mxu0 0.0
    %1067 = vmatpush1.msra.mxu0 %v82
    %1068 = vmatprep.subr.mxu0 0.0
    %1069 = vmatpush1.msra.mxu0 %v81
    %1070 = vmatprep.subr.mxu0 0.0
    %1071 = vmatpush2.msra.mxu0 0.0
    %1072 = vmatprep.subr.mxu0 0.0
    %1073 = vmatpush2.msra.mxu0 0.0
    %1074 = vmatprep.subr.mxu0 0.0
    %1075 = vmatpush2.msra.mxu0 0.0
    %1076 = vmatprep.subr.mxu0 0.0
    %1077 = vmatpush2.msra.mxu0 0.0
    %1078 = vmatprep.subr.mxu0 0.0
    %1079 = vmatpush2.msra.mxu0 0.0
    %1080 = vmatprep.subr.mxu0 0.0
    %1081 = vmatpush2.msra.mxu0 0.0
    %1082 = vmatprep.subr.mxu0 0.0
    %1083 = vmatpush2.msra.mxu0 0.0
    %1084 = vmatprep.subr.mxu0 0.0
    %1085 = vmatpush2.msra.mxu0 0.0
    %1086 = vmatprep.subr.mxu0 0.0
    %1087 = vmatpush2.msra.mxu0 0.0
    %1088 = vmatprep.subr.mxu0 0.0
    %1089 = vmatpush2.msra.mxu0 0.0
    %1090 = vmatprep.subr.mxu0 0.0
    %1091 = vmatpush2.msra.mxu0 0.0
    %1092 = vmatprep.subr.mxu0 0.0
    %1093 = vmatpush2.msra.mxu0 0.0
    %1094 = vmatprep.subr.mxu0 0.0
    %1095 = vmatpush2.msra.mxu0 0.0
    %1096 = vmatprep.subr.mxu0 0.0
    %1097 = vmatpush2.msra.mxu0 0.0
    %1098 = vmatprep.subr.mxu0 0.0
    %1099 = vmatpush2.msra.mxu0 0.0
    %1100 = vmatprep.subr.mxu0 0.0
    %1101 = vmatpush2.msra.mxu0 0.0
    %1102 = vmatprep.mubr.f32.mxu0 0.0
    %1103 = vmatmul.mubr.f32.gmra.mxu0 %v212
    %v1104 = vpop.f32.mrf.mxu0
    %v1105 = vadd.f32 %v1037, %v1104
    %v1106 = vpop.f32.mrf.mxu0
    %1107 = vdwg.mxu0
    %v1108 = vlaneseq
    %v1109 = vshrl.u32 %v1108, 7
    %v1110 = vsub.s32 0, %v1109
    %v1111 = vrot.slane %v102, %v1110
    %v1112 = vadd.f32 %v1105, %v1111
    %v1113 = vxor.u32 %v872, 2147483648
    %v1114 = vmul.f32 %v1113, 1.442695
    %v1115 = vpow.pop %v1114
    %v1116 = vadd.f32 %v1115, 1.0
    %v1117 = vrcp.pop %v1116
    %v1118 = vmul.f32 1.0, %v1117
    %v1119 = vxor.u32 %v952, 2147483648
    %v1120 = vmul.f32 %v1119, 1.442695
    %v1121 = vpow.pop %v1120
    %v1122 = vadd.f32 %v1121, 1.0
    %v1123 = vrcp.pop %v1122
    %v1124 = vmul.f32 1.0, %v1123
    %v1125 = vtanh.pop %v1032
    %v1126 = vxor.u32 %v1112, 2147483648
    %v1127 = vmul.f32 %v1126, 1.442695
    %v1128 = vpow.pop %v1127
    %v1129 = vadd.f32 %v1128, 1.0
    %v1130 = vrcp.pop %v1129
    %v1131 = vmul.f32 1.0, %v1130
    %v1132 = vmul.f32 %v1124, 0.0
    %v1133 = vmul.f32 %v1118, %v1125
    %v1134 = vadd.f32 %v1132, %v1133
    %v1135 = vtanh.pop %v1134
    %v1136 = vmul.f32 %v1131, %v1135
    %v1138 = vsel %vm210, %v1134, 0
    %1140 = vmatprep.subr.mxu0 0.0
    %1141 = vmatpush1.msra.mxu0 0.0
    %1142 = vmatprep.subr.mxu0 0.0
    %1143 = vmatpush1.msra.mxu0 0.0
    %1144 = vmatprep.subr.mxu0 0.0
    %1145 = vmatpush1.msra.mxu0 0.0
    %1146 = vmatprep.subr.mxu0 0.0
    %1147 = vmatpush1.msra.mxu0 0.0
    %1148 = vmatprep.subr.mxu0 0.0
    %1149 = vmatpush1.msra.mxu0 0.0
    %1150 = vmatprep.subr.mxu0 0.0
    %1151 = vmatpush1.msra.mxu0 0.0
    %1152 = vmatprep.subr.mxu0 0.0
    %1153 = vmatpush1.msra.mxu0 0.0
    %1154 = vmatprep.subr.mxu0 0.0
    %1155 = vmatpush1.msra.mxu0 0.0
    %1156 = vmatprep.subr.mxu0 0.0
    %1157 = vmatpush1.msra.mxu0 0.0
    %1158 = vmatprep.subr.mxu0 0.0
    %1159 = vmatpush1.msra.mxu0 0.0
    %1160 = vmatprep.subr.mxu0 0.0
    %1161 = vmatpush1.msra.mxu0 0.0
    %1162 = vmatprep.subr.mxu0 0.0
    %1163 = vmatpush1.msra.mxu0 0.0
    %1164 = vmatprep.subr.mxu0 0.0
    %1165 = vmatpush1.msra.mxu0 %v92
    %1166 = vmatprep.subr.mxu0 0.0
    %1167 = vmatpush1.msra.mxu0 %v91
    %1168 = vmatprep.subr.mxu0 0.0
    %1169 = vmatpush1.msra.mxu0 %v90
    %1170 = vmatprep.subr.mxu0 0.0
    %1171 = vmatpush1.msra.mxu0 %v89
    %1172 = vmatprep.subr.mxu0 0.0
    %1173 = vmatpush2.msra.mxu0 0.0
    %1174 = vmatprep.subr.mxu0 0.0
    %1175 = vmatpush2.msra.mxu0 0.0
    %1176 = vmatprep.subr.mxu0 0.0
    %1177 = vmatpush2.msra.mxu0 0.0
    %1178 = vmatprep.subr.mxu0 0.0
    %1179 = vmatpush2.msra.mxu0 0.0
    %1180 = vmatprep.subr.mxu0 0.0
    %1181 = vmatpush2.msra.mxu0 0.0
    %1182 = vmatprep.subr.mxu0 0.0
    %1183 = vmatpush2.msra.mxu0 0.0
    %1184 = vmatprep.subr.mxu0 0.0
    %1185 = vmatpush2.msra.mxu0 0.0
    %1186 = vmatprep.subr.mxu0 0.0
    %1187 = vmatpush2.msra.mxu0 0.0
    %1188 = vmatprep.subr.mxu0 0.0
    %1189 = vmatpush2.msra.mxu0 0.0
    %1190 = vmatprep.subr.mxu0 0.0
    %1191 = vmatpush2.msra.mxu0 0.0
    %1192 = vmatprep.subr.mxu0 0.0
    %1193 = vmatpush2.msra.mxu0 0.0
    %1194 = vmatprep.subr.mxu0 0.0
    %1195 = vmatpush2.msra.mxu0 0.0
    %1196 = vmatprep.subr.mxu0 0.0
    %1197 = vmatpush2.msra.mxu0 0.0
    %1198 = vmatprep.subr.mxu0 0.0
    %1199 = vmatpush2.msra.mxu0 0.0
    %1200 = vmatprep.subr.mxu0 0.0
    %1201 = vmatpush2.msra.mxu0 0.0
    %1202 = vmatprep.subr.mxu0 0.0
    %1203 = vmatpush2.msra.mxu0 0.0
    %1204 = vmatprep.mubr.f32.mxu0 0.0
    %1205 = vmatmul.mubr.f32.gmra.mxu0 %v1138
    %v1206 = vpop.f32.mrf.mxu0
    %v1207 = vadd.f32 0.0, %v1206
    %v1208 = vpop.f32.mrf.mxu0
    %1209 = vdwg.mxu0
    %v1211 = vsel %vm210, %v1136, 0
    %1213 = vmatprep.subr.mxu0 0.0
    %1214 = vmatpush1.msra.mxu0 0.0
    %1215 = vmatprep.subr.mxu0 0.0
    %1216 = vmatpush1.msra.mxu0 0.0
    %1217 = vmatprep.subr.mxu0 0.0
    %1218 = vmatpush1.msra.mxu0 0.0
    %1219 = vmatprep.subr.mxu0 0.0
    %1220 = vmatpush1.msra.mxu0 0.0
    %1221 = vmatprep.subr.mxu0 0.0
    %1222 = vmatpush1.msra.mxu0 0.0
    %1223 = vmatprep.subr.mxu0 0.0
    %1224 = vmatpush1.msra.mxu0 0.0
    %1225 = vmatprep.subr.mxu0 0.0
    %1226 = vmatpush1.msra.mxu0 0.0
    %1227 = vmatprep.subr.mxu0 0.0
    %1228 = vmatpush1.msra.mxu0 0.0
    %1229 = vmatprep.subr.mxu0 0.0
    %1230 = vmatpush1.msra.mxu0 0.0
    %1231 = vmatprep.subr.mxu0 0.0
    %1232 = vmatpush1.msra.mxu0 0.0
    %1233 = vmatprep.subr.mxu0 0.0
    %1234 = vmatpush1.msra.mxu0 0.0
    %1235 = vmatprep.subr.mxu0 0.0
    %1236 = vmatpush1.msra.mxu0 0.0
    %1237 = vmatprep.subr.mxu0 0.0
    %1238 = vmatpush1.msra.mxu0 %v88
    %1239 = vmatprep.subr.mxu0 0.0
    %1240 = vmatpush1.msra.mxu0 %v87
    %1241 = vmatprep.subr.mxu0 0.0
    %1242 = vmatpush1.msra.mxu0 %v86
    %1243 = vmatprep.subr.mxu0 0.0
    %1244 = vmatpush1.msra.mxu0 %v85
    %1245 = vmatprep.subr.mxu0 0.0
    %1246 = vmatpush2.msra.mxu0 0.0
    %1247 = vmatprep.subr.mxu0 0.0
    %1248 = vmatpush2.msra.mxu0 0.0
    %1249 = vmatprep.subr.mxu0 0.0
    %1250 = vmatpush2.msra.mxu0 0.0
    %1251 = vmatprep.subr.mxu0 0.0
    %1252 = vmatpush2.msra.mxu0 0.0
    %1253 = vmatprep.subr.mxu0 0.0
    %1254 = vmatpush2.msra.mxu0 0.0
    %1255 = vmatprep.subr.mxu0 0.0
    %1256 = vmatpush2.msra.mxu0 0.0
    %1257 = vmatprep.subr.mxu0 0.0
    %1258 = vmatpush2.msra.mxu0 0.0
    %1259 = vmatprep.subr.mxu0 0.0
    %1260 = vmatpush2.msra.mxu0 0.0
    %1261 = vmatprep.subr.mxu0 0.0
    %1262 = vmatpush2.msra.mxu0 0.0
    %1263 = vmatprep.subr.mxu0 0.0
    %1264 = vmatpush2.msra.mxu0 0.0
    %1265 = vmatprep.subr.mxu0 0.0
    %1266 = vmatpush2.msra.mxu0 0.0
    %1267 = vmatprep.subr.mxu0 0.0
    %1268 = vmatpush2.msra.mxu0 0.0
    %1269 = vmatprep.subr.mxu0 0.0
    %1270 = vmatpush2.msra.mxu0 0.0
    %1271 = vmatprep.subr.mxu0 0.0
    %1272 = vmatpush2.msra.mxu0 0.0
    %1273 = vmatprep.subr.mxu0 0.0
    %1274 = vmatpush2.msra.mxu0 0.0
    %1275 = vmatprep.subr.mxu0 0.0
    %1276 = vmatpush2.msra.mxu0 0.0
    %1277 = vmatprep.mubr.f32.mxu0 0.0
    %1278 = vmatmul.mubr.f32.gmra.mxu0 %v1211
    %v1279 = vpop.f32.mrf.mxu0
    %v1280 = vadd.f32 %v1207, %v1279
    %v1281 = vpop.f32.mrf.mxu0
    %1282 = vdwg.mxu0
    %v1285 = vunpack.c.l.s4 1966171168
    %v1286 = vunpack.c.0.s8 %v1285
    %v1287 = vlaneseq
    %v1288 = vshrl.u32 %v1287, 7
    %v1289 = vsub.s32 %v1286, %v1288
    %v1290 = vrot.slane %v1280, %v1289
    %v1291 = vcombine.high %v1290, %v1290
    %v1293 = vunpack.c.l.s4 1966171168
    %v1294 = vunpack.c.0.s8 %v1293
    %v1295 = vlaneseq
    %v1296 = vshrl.u32 %v1295, 7
    %v1297 = vsub.s32 %v1294, %v1296
    %v1298 = vrot.slane %v1290, %v1297
    %v1300 = vunpack.c.l.s4 1966171168
    %v1301 = vunpack.c.0.s8 %v1300
    %v1302 = vlaneseq
    %v1303 = vshrl.u32 %v1302, 7
    %v1304 = vsub.s32 %v1301, %v1303
    %v1305 = vrot.slane %v1291, %v1304
    %v1306 = vlaneseq
    %v1307 = vshrl.u32 %v1306, 7
    %v1308 = vsub.s32 0, %v1307
    %v1309 = vrot.slane %v1298, %v1308
    %v1310 = vlaneseq
    %v1311 = vshrl.u32 %v1310, 7
    %v1312 = vsub.s32 0, %v1311
    %v1313 = vrot.slane %v1305, %v1312
    %v1316 = vadd.f32 %v198, %v1309
    %v1317 = vadd.f32 %v203, %v1313
    %v1318 = vtanh.pop %v1316
    %v1319 = vtanh.pop %v1317
    %v1321 = vsel %vm124, %v1318, 0
    %1323 = vmatprep.subr.mxu0 0.0
    %1324 = vmatpush1.xpose.msra.mxu0 0.0
    %1325 = vmatprep.subr.mxu0 0.0
    %1326 = vmatpush1.xpose.msra.mxu0 0.0
    %1327 = vmatprep.subr.mxu0 0.0
    %1328 = vmatpush1.xpose.msra.mxu0 0.0
    %1329 = vmatprep.subr.mxu0 0.0
    %1330 = vmatpush1.xpose.msra.mxu0 0.0
    %1331 = vmatprep.subr.mxu0 0.0
    %1332 = vmatpush1.xpose.msra.mxu0 0.0
    %1333 = vmatprep.subr.mxu0 0.0
    %1334 = vmatpush1.xpose.msra.mxu0 0.0
    %1335 = vmatprep.subr.mxu0 0.0
    %1336 = vmatpush1.xpose.msra.mxu0 0.0
    %1337 = vmatprep.subr.mxu0 0.0
    %1338 = vmatpush1.xpose.msra.mxu0 0.0
    %1339 = vmatprep.subr.mxu0 0.0
    %1340 = vmatpush1.xpose.msra.mxu0 0.0
    %1341 = vmatprep.subr.mxu0 0.0
    %1342 = vmatpush1.xpose.msra.mxu0 0.0
    %1343 = vmatprep.subr.mxu0 0.0
    %1344 = vmatpush1.xpose.msra.mxu0 0.0
    %1345 = vmatprep.subr.mxu0 0.0
    %1346 = vmatpush1.xpose.msra.mxu0 0.0
    %1347 = vmatprep.subr.mxu0 0.0
    %1348 = vmatpush1.xpose.msra.mxu0 0.0
    %1349 = vmatprep.subr.mxu0 0.0
    %1350 = vmatpush1.xpose.msra.mxu0 0.0
    %1351 = vmatprep.subr.mxu0 0.0
    %1352 = vmatpush1.xpose.msra.mxu0 0.0
    %1353 = vmatprep.subr.mxu0 0.0
    %1354 = vmatpush1.xpose.msra.mxu0 %v1321
    %1355 = vmatprep.subr.mxu0 0.0
    %1356 = vmatpush2.xpose.msra.mxu0 0.0
    %1357 = vmatprep.subr.mxu0 0.0
    %1358 = vmatpush2.xpose.msra.mxu0 0.0
    %1359 = vmatprep.subr.mxu0 0.0
    %1360 = vmatpush2.xpose.msra.mxu0 0.0
    %1361 = vmatprep.subr.mxu0 0.0
    %1362 = vmatpush2.xpose.msra.mxu0 0.0
    %1363 = vmatprep.subr.mxu0 0.0
    %1364 = vmatpush2.xpose.msra.mxu0 0.0
    %1365 = vmatprep.subr.mxu0 0.0
    %1366 = vmatpush2.xpose.msra.mxu0 0.0
    %1367 = vmatprep.subr.mxu0 0.0
    %1368 = vmatpush2.xpose.msra.mxu0 0.0
    %1369 = vmatprep.subr.mxu0 0.0
    %1370 = vmatpush2.xpose.msra.mxu0 0.0
    %1371 = vmatprep.subr.mxu0 0.0
    %1372 = vmatpush2.xpose.msra.mxu0 0.0
    %1373 = vmatprep.subr.mxu0 0.0
    %1374 = vmatpush2.xpose.msra.mxu0 0.0
    %1375 = vmatprep.subr.mxu0 0.0
    %1376 = vmatpush2.xpose.msra.mxu0 0.0
    %1377 = vmatprep.subr.mxu0 0.0
    %1378 = vmatpush2.xpose.msra.mxu0 0.0
    %1379 = vmatprep.subr.mxu0 0.0
    %1380 = vmatpush2.xpose.msra.mxu0 0.0
    %1381 = vmatprep.subr.mxu0 0.0
    %1382 = vmatpush2.xpose.msra.mxu0 0.0
    %1383 = vmatprep.subr.mxu0 0.0
    %1384 = vmatpush2.xpose.msra.mxu0 0.0
    %1385 = vmatprep.subr.mxu0 0.0
    %1386 = vmatpush2.xpose.msra.mxu0 0.0
    %1387 = vmatprep.mubr.f32.mxu0 0.0
    %1388 = vmatmul.mubr.f32.gmra.mxu0 %v393
    %v1389 = vpop.f32.mrf.mxu0
    %v1390 = vadd.f32 %v391, %v1389
    %v1391 = vpop.f32.mrf.mxu0
    %1392 = vdwg.mxu0
    %v1394 = vsel %vm124, %v1319, 0
    %1396 = vmatprep.subr.mxu0 0.0
    %1397 = vmatpush1.xpose.msra.mxu0 0.0
    %1398 = vmatprep.subr.mxu0 0.0
    %1399 = vmatpush1.xpose.msra.mxu0 0.0
    %1400 = vmatprep.subr.mxu0 0.0
    %1401 = vmatpush1.xpose.msra.mxu0 0.0
    %1402 = vmatprep.subr.mxu0 0.0
    %1403 = vmatpush1.xpose.msra.mxu0 0.0
    %1404 = vmatprep.subr.mxu0 0.0
    %1405 = vmatpush1.xpose.msra.mxu0 0.0
    %1406 = vmatprep.subr.mxu0 0.0
    %1407 = vmatpush1.xpose.msra.mxu0 0.0
    %1408 = vmatprep.subr.mxu0 0.0
    %1409 = vmatpush1.xpose.msra.mxu0 0.0
    %1410 = vmatprep.subr.mxu0 0.0
    %1411 = vmatpush1.xpose.msra.mxu0 0.0
    %1412 = vmatprep.subr.mxu0 0.0
    %1413 = vmatpush1.xpose.msra.mxu0 0.0
    %1414 = vmatprep.subr.mxu0 0.0
    %1415 = vmatpush1.xpose.msra.mxu0 0.0
    %1416 = vmatprep.subr.mxu0 0.0
    %1417 = vmatpush1.xpose.msra.mxu0 0.0
    %1418 = vmatprep.subr.mxu0 0.0
    %1419 = vmatpush1.xpose.msra.mxu0 0.0
    %1420 = vmatprep.subr.mxu0 0.0
    %1421 = vmatpush1.xpose.msra.mxu0 0.0
    %1422 = vmatprep.subr.mxu0 0.0
    %1423 = vmatpush1.xpose.msra.mxu0 0.0
    %1424 = vmatprep.subr.mxu0 0.0
    %1425 = vmatpush1.xpose.msra.mxu0 0.0
    %1426 = vmatprep.subr.mxu0 0.0
    %1427 = vmatpush1.xpose.msra.mxu0 %v1394
    %1428 = vmatprep.subr.mxu0 0.0
    %1429 = vmatpush2.xpose.msra.mxu0 0.0
    %1430 = vmatprep.subr.mxu0 0.0
    %1431 = vmatpush2.xpose.msra.mxu0 0.0
    %1432 = vmatprep.subr.mxu0 0.0
    %1433 = vmatpush2.xpose.msra.mxu0 0.0
    %1434 = vmatprep.subr.mxu0 0.0
    %1435 = vmatpush2.xpose.msra.mxu0 0.0
    %1436 = vmatprep.subr.mxu0 0.0
    %1437 = vmatpush2.xpose.msra.mxu0 0.0
    %1438 = vmatprep.subr.mxu0 0.0
    %1439 = vmatpush2.xpose.msra.mxu0 0.0
    %1440 = vmatprep.subr.mxu0 0.0
    %1441 = vmatpush2.xpose.msra.mxu0 0.0
    %1442 = vmatprep.subr.mxu0 0.0
    %1443 = vmatpush2.xpose.msra.mxu0 0.0
    %1444 = vmatprep.subr.mxu0 0.0
    %1445 = vmatpush2.xpose.msra.mxu0 0.0
    %1446 = vmatprep.subr.mxu0 0.0
    %1447 = vmatpush2.xpose.msra.mxu0 0.0
    %1448 = vmatprep.subr.mxu0 0.0
    %1449 = vmatpush2.xpose.msra.mxu0 0.0
    %1450 = vmatprep.subr.mxu0 0.0
    %1451 = vmatpush2.xpose.msra.mxu0 0.0
    %1452 = vmatprep.subr.mxu0 0.0
    %1453 = vmatpush2.xpose.msra.mxu0 0.0
    %1454 = vmatprep.subr.mxu0 0.0
    %1455 = vmatpush2.xpose.msra.mxu0 0.0
    %1456 = vmatprep.subr.mxu0 0.0
    %1457 = vmatpush2.xpose.msra.mxu0 0.0
    %1458 = vmatprep.subr.mxu0 0.0
    %1459 = vmatpush2.xpose.msra.mxu0 0.0
    %1460 = vmatprep.mubr.f32.mxu0 0.0
    %1461 = vmatmul.mubr.f32.gmra.mxu0 %v393
    %v1462 = vpop.f32.mrf.mxu0
    %v1463 = vadd.f32 %v391, %v1462
    %v1464 = vpop.f32.mrf.mxu0
    %1465 = vdwg.mxu0
    %v1466 = vsel %vm541, %v1390, -inf
    %1467 = vmax.xlane.f32.xlu0 %v1466
    %v1468 = vpop.xlane.xlu0 %1467
    %v1469 = vsel %vm541, %v1463, -inf
    %1470 = vmax.xlane.f32.xlu0 %v1469
    %v1471 = vpop.xlane.xlu0 %1470
    %v1472 = vsub.f32 %v1390, %v1468
    %v1473 = vsub.f32 %v1463, %v1471
    %v1474 = vmul.f32 %v1472, 1.442695
    %v1475 = vpow.pop %v1474
    %v1476 = vmul.f32 %v1473, 1.442695
    %v1477 = vpow.pop %v1476
    %v1478 = vsel %vm541, %v1475, 0.0
    %1479 = vadd.xlane.f32.xlu0 %v1478
    %v1480 = vpop.xlane.xlu0 %1479
    %v1481 = vsel %vm541, %v1477, 0.0
    %1482 = vadd.xlane.f32.xlu0 %v1481
    %v1483 = vpop.xlane.xlu0 %1482
    %v1484 = vrcp.pop %v1480
    %v1485 = vmul.f32 %v1475, %v1484
    %v1486 = vrcp.pop %v1483
    %v1487 = vmul.f32 %v1477, %v1486
    %v1489 = vsel %vm564, %v1485, 0
    %1491 = vmatprep.subr.mxu0 0.0
    %1492 = vmatpush1.msra.mxu0 0.0
    %1493 = vmatprep.subr.mxu0 0.0
    %1494 = vmatpush1.msra.mxu0 0.0
    %1495 = vmatprep.subr.mxu0 0.0
    %1496 = vmatpush1.msra.mxu0 0.0
    %1497 = vmatprep.subr.mxu0 0.0
    %1498 = vmatpush1.msra.mxu0 0.0
    %1499 = vmatprep.subr.mxu0 0.0
    %1500 = vmatpush1.msra.mxu0 0.0
    %1501 = vmatprep.subr.mxu0 0.0
    %1502 = vmatpush1.msra.mxu0 0.0
    %1503 = vmatprep.subr.mxu0 0.0
    %1504 = vmatpush1.msra.mxu0 0.0
    %1505 = vmatprep.subr.mxu0 0.0
    %1506 = vmatpush1.msra.mxu0 0.0
    %1507 = vmatprep.subr.mxu0 0.0
    %1508 = vmatpush1.msra.mxu0 0.0
    %1509 = vmatprep.subr.mxu0 0.0
    %1510 = vmatpush1.msra.mxu0 0.0
    %1511 = vmatprep.subr.mxu0 0.0
    %1512 = vmatpush1.msra.mxu0 0.0
    %1513 = vmatprep.subr.mxu0 0.0
    %1514 = vmatpush1.msra.mxu0 0.0
    %1515 = vmatprep.subr.mxu0 0.0
    %1516 = vmatpush1.msra.mxu0 0.0
    %1517 = vmatprep.subr.mxu0 0.0
    %1518 = vmatpush1.msra.mxu0 0.0
    %1519 = vmatprep.subr.mxu0 0.0
    %1520 = vmatpush1.msra.mxu0 0.0
    %1521 = vmatprep.subr.mxu0 0.0
    %1522 = vmatpush1.msra.mxu0 %v117
    %1523 = vmatprep.subr.mxu0 0.0
    %1524 = vmatpush2.msra.mxu0 0.0
    %1525 = vmatprep.subr.mxu0 0.0
    %1526 = vmatpush2.msra.mxu0 0.0
    %1527 = vmatprep.subr.mxu0 0.0
    %1528 = vmatpush2.msra.mxu0 0.0
    %1529 = vmatprep.subr.mxu0 0.0
    %1530 = vmatpush2.msra.mxu0 0.0
    %1531 = vmatprep.subr.mxu0 0.0
    %1532 = vmatpush2.msra.mxu0 0.0
    %1533 = vmatprep.subr.mxu0 0.0
    %1534 = vmatpush2.msra.mxu0 0.0
    %1535 = vmatprep.subr.mxu0 0.0
    %1536 = vmatpush2.msra.mxu0 0.0
    %1537 = vmatprep.subr.mxu0 0.0
    %1538 = vmatpush2.msra.mxu0 0.0
    %1539 = vmatprep.subr.mxu0 0.0
    %1540 = vmatpush2.msra.mxu0 0.0
    %1541 = vmatprep.subr.mxu0 0.0
    %1542 = vmatpush2.msra.mxu0 0.0
    %1543 = vmatprep.subr.mxu0 0.0
    %1544 = vmatpush2.msra.mxu0 0.0
    %1545 = vmatprep.subr.mxu0 0.0
    %1546 = vmatpush2.msra.mxu0 0.0
    %1547 = vmatprep.subr.mxu0 0.0
    %1548 = vmatpush2.msra.mxu0 0.0
    %1549 = vmatprep.subr.mxu0 0.0
    %1550 = vmatpush2.msra.mxu0 0.0
    %1551 = vmatprep.subr.mxu0 0.0
    %1552 = vmatpush2.msra.mxu0 0.0
    %1553 = vmatprep.subr.mxu0 0.0
    %1554 = vmatpush2.msra.mxu0 0.0
    %1555 = vmatprep.mubr.f32.mxu0 0.0
    %1556 = vmatmul.mubr.f32.gmra.mxu0 %v1489
    %v1557 = vpop.f32.mrf.mxu0
    %v1558 = vadd.f32 0.0, %v1557
    %v1559 = vpop.f32.mrf.mxu0
    %1560 = vdwg.mxu0
    %v1562 = vsel %vm564, %v1487, 0
    %1564 = vmatprep.subr.mxu0 0.0
    %1565 = vmatpush1.msra.mxu0 0.0
    %1566 = vmatprep.subr.mxu0 0.0
    %1567 = vmatpush1.msra.mxu0 0.0
    %1568 = vmatprep.subr.mxu0 0.0
    %1569 = vmatpush1.msra.mxu0 0.0
    %1570 = vmatprep.subr.mxu0 0.0
    %1571 = vmatpush1.msra.mxu0 0.0
    %1572 = vmatprep.subr.mxu0 0.0
    %1573 = vmatpush1.msra.mxu0 0.0
    %1574 = vmatprep.subr.mxu0 0.0
    %1575 = vmatpush1.msra.mxu0 0.0
    %1576 = vmatprep.subr.mxu0 0.0
    %1577 = vmatpush1.msra.mxu0 0.0
    %1578 = vmatprep.subr.mxu0 0.0
    %1579 = vmatpush1.msra.mxu0 0.0
    %1580 = vmatprep.subr.mxu0 0.0
    %1581 = vmatpush1.msra.mxu0 0.0
    %1582 = vmatprep.subr.mxu0 0.0
    %1583 = vmatpush1.msra.mxu0 0.0
    %1584 = vmatprep.subr.mxu0 0.0
    %1585 = vmatpush1.msra.mxu0 0.0
    %1586 = vmatprep.subr.mxu0 0.0
    %1587 = vmatpush1.msra.mxu0 0.0
    %1588 = vmatprep.subr.mxu0 0.0
    %1589 = vmatpush1.msra.mxu0 0.0
    %1590 = vmatprep.subr.mxu0 0.0
    %1591 = vmatpush1.msra.mxu0 0.0
    %1592 = vmatprep.subr.mxu0 0.0
    %1593 = vmatpush1.msra.mxu0 0.0
    %1594 = vmatprep.subr.mxu0 0.0
    %1595 = vmatpush1.msra.mxu0 %v118
    %1596 = vmatprep.subr.mxu0 0.0
    %1597 = vmatpush2.msra.mxu0 0.0
    %1598 = vmatprep.subr.mxu0 0.0
    %1599 = vmatpush2.msra.mxu0 0.0
    %1600 = vmatprep.subr.mxu0 0.0
    %1601 = vmatpush2.msra.mxu0 0.0
    %1602 = vmatprep.subr.mxu0 0.0
    %1603 = vmatpush2.msra.mxu0 0.0
    %1604 = vmatprep.subr.mxu0 0.0
    %1605 = vmatpush2.msra.mxu0 0.0
    %1606 = vmatprep.subr.mxu0 0.0
    %1607 = vmatpush2.msra.mxu0 0.0
    %1608 = vmatprep.subr.mxu0 0.0
    %1609 = vmatpush2.msra.mxu0 0.0
    %1610 = vmatprep.subr.mxu0 0.0
    %1611 = vmatpush2.msra.mxu0 0.0
    %1612 = vmatprep.subr.mxu0 0.0
    %1613 = vmatpush2.msra.mxu0 0.0
    %1614 = vmatprep.subr.mxu0 0.0
    %1615 = vmatpush2.msra.mxu0 0.0
    %1616 = vmatprep.subr.mxu0 0.0
    %1617 = vmatpush2.msra.mxu0 0.0
    %1618 = vmatprep.subr.mxu0 0.0
    %1619 = vmatpush2.msra.mxu0 0.0
    %1620 = vmatprep.subr.mxu0 0.0
    %1621 = vmatpush2.msra.mxu0 0.0
    %1622 = vmatprep.subr.mxu0 0.0
    %1623 = vmatpush2.msra.mxu0 0.0
    %1624 = vmatprep.subr.mxu0 0.0
    %1625 = vmatpush2.msra.mxu0 0.0
    %1626 = vmatprep.subr.mxu0 0.0
    %1627 = vmatpush2.msra.mxu0 0.0
    %1628 = vmatprep.mubr.f32.mxu0 0.0
    %1629 = vmatmul.mubr.f32.gmra.mxu0 %v1562
    %v1630 = vpop.f32.mrf.mxu0
    %v1631 = vadd.f32 0.0, %v1630
    %v1632 = vpop.f32.mrf.mxu0
    %1633 = vdwg.mxu0
    %v1636 = vrot.slane %v1631, 7
    %v1637 = vsel %vm714, %v1636, %v1558
    %1639 = vrot.lane.b32.xlu0 %v209, 127
    %v1640 = vpop.permute.xlu0 %1639
    %v1642 = vsel %vm124, %v1637, 0
    %1644 = vmatprep.subr.mxu0 0.0
    %1645 = vmatpush1.msra.mxu0 0.0
    %1646 = vmatprep.subr.mxu0 0.0
    %1647 = vmatpush1.msra.mxu0 0.0
    %1648 = vmatprep.subr.mxu0 0.0
    %1649 = vmatpush1.msra.mxu0 0.0
    %1650 = vmatprep.subr.mxu0 0.0
    %1651 = vmatpush1.msra.mxu0 0.0
    %1652 = vmatprep.subr.mxu0 0.0
    %1653 = vmatpush1.msra.mxu0 0.0
    %1654 = vmatprep.subr.mxu0 0.0
    %1655 = vmatpush1.msra.mxu0 0.0
    %1656 = vmatprep.subr.mxu0 0.0
    %1657 = vmatpush1.msra.mxu0 0.0
    %1658 = vmatprep.subr.mxu0 0.0
    %1659 = vmatpush1.msra.mxu0 0.0
    %1660 = vmatprep.subr.mxu0 0.0
    %1661 = vmatpush1.msra.mxu0 0.0
    %1662 = vmatprep.subr.mxu0 0.0
    %1663 = vmatpush1.msra.mxu0 0.0
    %1664 = vmatprep.subr.mxu0 0.0
    %1665 = vmatpush1.msra.mxu0 0.0
    %1666 = vmatprep.subr.mxu0 0.0
    %1667 = vmatpush1.msra.mxu0 0.0
    %1668 = vmatprep.subr.mxu0 0.0
    %1669 = vmatpush1.msra.mxu0 0.0
    %1670 = vmatprep.subr.mxu0 0.0
    %1671 = vmatpush1.msra.mxu0 0.0
    %1672 = vmatprep.subr.mxu0 0.0
    %1673 = vmatpush1.msra.mxu0 %v106
    %1674 = vmatprep.subr.mxu0 0.0
    %1675 = vmatpush1.msra.mxu0 %v105
    %1676 = vmatprep.subr.mxu0 0.0
    %1677 = vmatpush2.msra.mxu0 0.0
    %1678 = vmatprep.subr.mxu0 0.0
    %1679 = vmatpush2.msra.mxu0 0.0
    %1680 = vmatprep.subr.mxu0 0.0
    %1681 = vmatpush2.msra.mxu0 0.0
    %1682 = vmatprep.subr.mxu0 0.0
    %1683 = vmatpush2.msra.mxu0 0.0
    %1684 = vmatprep.subr.mxu0 0.0
    %1685 = vmatpush2.msra.mxu0 0.0
    %1686 = vmatprep.subr.mxu0 0.0
    %1687 = vmatpush2.msra.mxu0 0.0
    %1688 = vmatprep.subr.mxu0 0.0
    %1689 = vmatpush2.msra.mxu0 0.0
    %1690 = vmatprep.subr.mxu0 0.0
    %1691 = vmatpush2.msra.mxu0 0.0
    %1692 = vmatprep.subr.mxu0 0.0
    %1693 = vmatpush2.msra.mxu0 0.0
    %1694 = vmatprep.subr.mxu0 0.0
    %1695 = vmatpush2.msra.mxu0 0.0
    %1696 = vmatprep.subr.mxu0 0.0
    %1697 = vmatpush2.msra.mxu0 0.0
    %1698 = vmatprep.subr.mxu0 0.0
    %1699 = vmatpush2.msra.mxu0 0.0
    %1700 = vmatprep.subr.mxu0 0.0
    %1701 = vmatpush2.msra.mxu0 0.0
    %1702 = vmatprep.subr.mxu0 0.0
    %1703 = vmatpush2.msra.mxu0 0.0
    %1704 = vmatprep.subr.mxu0 0.0
    %1705 = vmatpush2.msra.mxu0 0.0
    %1706 = vmatprep.subr.mxu0 0.0
    %1707 = vmatpush2.msra.mxu0 0.0
    %1708 = vmatprep.mubr.f32.mxu0 0.0
    %1709 = vmatmul.mubr.f32.gmra.mxu0 %v1642
    %v1710 = vpop.f32.mrf.mxu0
    %v1711 = vadd.f32 %v1640, %v1710
    %v1712 = vpop.f32.mrf.mxu0
    %1713 = vdwg.mxu0
    %1715 = vset.pattern.permute.xlu0 0
    %1716 = vperm.xlu0 %1715, %v1711
    %v1717 = vpop.permute.xlu0 %1716
    %v1719 = vmul.f32 %v1717, %v796
    %1720 = vmatprep.subr.mxu0 0.0
    %1721 = vmatpush1.msra.mxu0 0.0
    %1722 = vmatprep.subr.mxu0 0.0
    %1723 = vmatpush1.msra.mxu0 0.0
    %1724 = vmatprep.subr.mxu0 0.0
    %1725 = vmatpush1.msra.mxu0 0.0
    %1726 = vmatprep.subr.mxu0 0.0
    %1727 = vmatpush1.msra.mxu0 0.0
    %1728 = vmatprep.subr.mxu0 0.0
    %1729 = vmatpush1.msra.mxu0 0.0
    %1730 = vmatprep.subr.mxu0 0.0
    %1731 = vmatpush1.msra.mxu0 0.0
    %1732 = vmatprep.subr.mxu0 0.0
    %1733 = vmatpush1.msra.mxu0 0.0
    %1734 = vmatprep.subr.mxu0 0.0
    %1735 = vmatpush1.msra.mxu0 0.0
    %1736 = vmatprep.subr.mxu0 0.0
    %1737 = vmatpush1.msra.mxu0 0.0
    %1738 = vmatprep.subr.mxu0 0.0
    %1739 = vmatpush1.msra.mxu0 0.0
    %1740 = vmatprep.subr.mxu0 0.0
    %1741 = vmatpush1.msra.mxu0 0.0
    %1742 = vmatprep.subr.mxu0 0.0
    %1743 = vmatpush1.msra.mxu0 0.0
    %1744 = vmatprep.subr.mxu0 0.0
    %1745 = vmatpush1.msra.mxu0 %v72
    %1746 = vmatprep.subr.mxu0 0.0
    %1747 = vmatpush1.msra.mxu0 %v71
    %1748 = vmatprep.subr.mxu0 0.0
    %1749 = vmatpush1.msra.mxu0 %v70
    %1750 = vmatprep.subr.mxu0 0.0
    %1751 = vmatpush1.msra.mxu0 %v69
    %1752 = vmatprep.subr.mxu0 0.0
    %1753 = vmatpush2.msra.mxu0 0.0
    %1754 = vmatprep.subr.mxu0 0.0
    %1755 = vmatpush2.msra.mxu0 0.0
    %1756 = vmatprep.subr.mxu0 0.0
    %1757 = vmatpush2.msra.mxu0 0.0
    %1758 = vmatprep.subr.mxu0 0.0
    %1759 = vmatpush2.msra.mxu0 0.0
    %1760 = vmatprep.subr.mxu0 0.0
    %1761 = vmatpush2.msra.mxu0 0.0
    %1762 = vmatprep.subr.mxu0 0.0
    %1763 = vmatpush2.msra.mxu0 0.0
    %1764 = vmatprep.subr.mxu0 0.0
    %1765 = vmatpush2.msra.mxu0 0.0
    %1766 = vmatprep.subr.mxu0 0.0
    %1767 = vmatpush2.msra.mxu0 0.0
    %1768 = vmatprep.subr.mxu0 0.0
    %1769 = vmatpush2.msra.mxu0 0.0
    %1770 = vmatprep.subr.mxu0 0.0
    %1771 = vmatpush2.msra.mxu0 0.0
    %1772 = vmatprep.subr.mxu0 0.0
    %1773 = vmatpush2.msra.mxu0 0.0
    %1774 = vmatprep.subr.mxu0 0.0
    %1775 = vmatpush2.msra.mxu0 0.0
    %1776 = vmatprep.subr.mxu0 0.0
    %1777 = vmatpush2.msra.mxu0 0.0
    %1778 = vmatprep.subr.mxu0 0.0
    %1779 = vmatpush2.msra.mxu0 0.0
    %1780 = vmatprep.subr.mxu0 0.0
    %1781 = vmatpush2.msra.mxu0 0.0
    %1782 = vmatprep.subr.mxu0 0.0
    %1783 = vmatpush2.msra.mxu0 0.0
    %1784 = vmatprep.mubr.f32.mxu0 0.0
    %1785 = vmatmul.mubr.f32.gmra.mxu0 %v1211
    %v1786 = vpop.f32.mrf.mxu0
    %v1787 = vadd.f32 %v1719, %v1786
    %v1788 = vpop.f32.mrf.mxu0
    %1789 = vdwg.mxu0
    %v1790 = vadd.f32 %v1787, %v871
    %v1791 = vmul.f32 %v1717, %v876
    %1792 = vmatprep.subr.mxu0 0.0
    %1793 = vmatpush1.msra.mxu0 0.0
    %1794 = vmatprep.subr.mxu0 0.0
    %1795 = vmatpush1.msra.mxu0 0.0
    %1796 = vmatprep.subr.mxu0 0.0
    %1797 = vmatpush1.msra.mxu0 0.0
    %1798 = vmatprep.subr.mxu0 0.0
    %1799 = vmatpush1.msra.mxu0 0.0
    %1800 = vmatprep.subr.mxu0 0.0
    %1801 = vmatpush1.msra.mxu0 0.0
    %1802 = vmatprep.subr.mxu0 0.0
    %1803 = vmatpush1.msra.mxu0 0.0
    %1804 = vmatprep.subr.mxu0 0.0
    %1805 = vmatpush1.msra.mxu0 0.0
    %1806 = vmatprep.subr.mxu0 0.0
    %1807 = vmatpush1.msra.mxu0 0.0
    %1808 = vmatprep.subr.mxu0 0.0
    %1809 = vmatpush1.msra.mxu0 0.0
    %1810 = vmatprep.subr.mxu0 0.0
    %1811 = vmatpush1.msra.mxu0 0.0
    %1812 = vmatprep.subr.mxu0 0.0
    %1813 = vmatpush1.msra.mxu0 0.0
    %1814 = vmatprep.subr.mxu0 0.0
    %1815 = vmatpush1.msra.mxu0 0.0
    %1816 = vmatprep.subr.mxu0 0.0
    %1817 = vmatpush1.msra.mxu0 %v76
    %1818 = vmatprep.subr.mxu0 0.0
    %1819 = vmatpush1.msra.mxu0 %v75
    %1820 = vmatprep.subr.mxu0 0.0
    %1821 = vmatpush1.msra.mxu0 %v74
    %1822 = vmatprep.subr.mxu0 0.0
    %1823 = vmatpush1.msra.mxu0 %v73
    %1824 = vmatprep.subr.mxu0 0.0
    %1825 = vmatpush2.msra.mxu0 0.0
    %1826 = vmatprep.subr.mxu0 0.0
    %1827 = vmatpush2.msra.mxu0 0.0
    %1828 = vmatprep.subr.mxu0 0.0
    %1829 = vmatpush2.msra.mxu0 0.0
    %1830 = vmatprep.subr.mxu0 0.0
    %1831 = vmatpush2.msra.mxu0 0.0
    %1832 = vmatprep.subr.mxu0 0.0
    %1833 = vmatpush2.msra.mxu0 0.0
    %1834 = vmatprep.subr.mxu0 0.0
    %1835 = vmatpush2.msra.mxu0 0.0
    %1836 = vmatprep.subr.mxu0 0.0
    %1837 = vmatpush2.msra.mxu0 0.0
    %1838 = vmatprep.subr.mxu0 0.0
    %1839 = vmatpush2.msra.mxu0 0.0
    %1840 = vmatprep.subr.mxu0 0.0
    %1841 = vmatpush2.msra.mxu0 0.0
    %1842 = vmatprep.subr.mxu0 0.0
    %1843 = vmatpush2.msra.mxu0 0.0
    %1844 = vmatprep.subr.mxu0 0.0
    %1845 = vmatpush2.msra.mxu0 0.0
    %1846 = vmatprep.subr.mxu0 0.0
    %1847 = vmatpush2.msra.mxu0 0.0
    %1848 = vmatprep.subr.mxu0 0.0
    %1849 = vmatpush2.msra.mxu0 0.0
    %1850 = vmatprep.subr.mxu0 0.0
    %1851 = vmatpush2.msra.mxu0 0.0
    %1852 = vmatprep.subr.mxu0 0.0
    %1853 = vmatpush2.msra.mxu0 0.0
    %1854 = vmatprep.subr.mxu0 0.0
    %1855 = vmatpush2.msra.mxu0 0.0
    %1856 = vmatprep.mubr.f32.mxu0 0.0
    %1857 = vmatmul.mubr.f32.gmra.mxu0 %v1211
    %v1858 = vpop.f32.mrf.mxu0
    %v1859 = vadd.f32 %v1791, %v1858
    %v1860 = vpop.f32.mrf.mxu0
    %1861 = vdwg.mxu0
    %v1862 = vadd.f32 %v1859, %v951
    %v1863 = vmul.f32 %v1717, %v956
    %1864 = vmatprep.subr.mxu0 0.0
    %1865 = vmatpush1.msra.mxu0 0.0
    %1866 = vmatprep.subr.mxu0 0.0
    %1867 = vmatpush1.msra.mxu0 0.0
    %1868 = vmatprep.subr.mxu0 0.0
    %1869 = vmatpush1.msra.mxu0 0.0
    %1870 = vmatprep.subr.mxu0 0.0
    %1871 = vmatpush1.msra.mxu0 0.0
    %1872 = vmatprep.subr.mxu0 0.0
    %1873 = vmatpush1.msra.mxu0 0.0
    %1874 = vmatprep.subr.mxu0 0.0
    %1875 = vmatpush1.msra.mxu0 0.0
    %1876 = vmatprep.subr.mxu0 0.0
    %1877 = vmatpush1.msra.mxu0 0.0
    %1878 = vmatprep.subr.mxu0 0.0
    %1879 = vmatpush1.msra.mxu0 0.0
    %1880 = vmatprep.subr.mxu0 0.0
    %1881 = vmatpush1.msra.mxu0 0.0
    %1882 = vmatprep.subr.mxu0 0.0
    %1883 = vmatpush1.msra.mxu0 0.0
    %1884 = vmatprep.subr.mxu0 0.0
    %1885 = vmatpush1.msra.mxu0 0.0
    %1886 = vmatprep.subr.mxu0 0.0
    %1887 = vmatpush1.msra.mxu0 0.0
    %1888 = vmatprep.subr.mxu0 0.0
    %1889 = vmatpush1.msra.mxu0 %v80
    %1890 = vmatprep.subr.mxu0 0.0
    %1891 = vmatpush1.msra.mxu0 %v79
    %1892 = vmatprep.subr.mxu0 0.0
    %1893 = vmatpush1.msra.mxu0 %v78
    %1894 = vmatprep.subr.mxu0 0.0
    %1895 = vmatpush1.msra.mxu0 %v77
    %1896 = vmatprep.subr.mxu0 0.0
    %1897 = vmatpush2.msra.mxu0 0.0
    %1898 = vmatprep.subr.mxu0 0.0
    %1899 = vmatpush2.msra.mxu0 0.0
    %1900 = vmatprep.subr.mxu0 0.0
    %1901 = vmatpush2.msra.mxu0 0.0
    %1902 = vmatprep.subr.mxu0 0.0
    %1903 = vmatpush2.msra.mxu0 0.0
    %1904 = vmatprep.subr.mxu0 0.0
    %1905 = vmatpush2.msra.mxu0 0.0
    %1906 = vmatprep.subr.mxu0 0.0
    %1907 = vmatpush2.msra.mxu0 0.0
    %1908 = vmatprep.subr.mxu0 0.0
    %1909 = vmatpush2.msra.mxu0 0.0
    %1910 = vmatprep.subr.mxu0 0.0
    %1911 = vmatpush2.msra.mxu0 0.0
    %1912 = vmatprep.subr.mxu0 0.0
    %1913 = vmatpush2.msra.mxu0 0.0
    %1914 = vmatprep.subr.mxu0 0.0
    %1915 = vmatpush2.msra.mxu0 0.0
    %1916 = vmatprep.subr.mxu0 0.0
    %1917 = vmatpush2.msra.mxu0 0.0
    %1918 = vmatprep.subr.mxu0 0.0
    %1919 = vmatpush2.msra.mxu0 0.0
    %1920 = vmatprep.subr.mxu0 0.0
    %1921 = vmatpush2.msra.mxu0 0.0
    %1922 = vmatprep.subr.mxu0 0.0
    %1923 = vmatpush2.msra.mxu0 0.0
    %1924 = vmatprep.subr.mxu0 0.0
    %1925 = vmatpush2.msra.mxu0 0.0
    %1926 = vmatprep.subr.mxu0 0.0
    %1927 = vmatpush2.msra.mxu0 0.0
    %1928 = vmatprep.mubr.f32.mxu0 0.0
    %1929 = vmatmul.mubr.f32.gmra.mxu0 %v1211
    %v1930 = vpop.f32.mrf.mxu0
    %v1931 = vadd.f32 %v1863, %v1930
    %v1932 = vpop.f32.mrf.mxu0
    %1933 = vdwg.mxu0
    %v1934 = vadd.f32 %v1931, %v1031
    %v1935 = vmul.f32 %v1717, %v1036
    %1936 = vmatprep.subr.mxu0 0.0
    %1937 = vmatpush1.msra.mxu0 0.0
    %1938 = vmatprep.subr.mxu0 0.0
    %1939 = vmatpush1.msra.mxu0 0.0
    %1940 = vmatprep.subr.mxu0 0.0
    %1941 = vmatpush1.msra.mxu0 0.0
    %1942 = vmatprep.subr.mxu0 0.0
    %1943 = vmatpush1.msra.mxu0 0.0
    %1944 = vmatprep.subr.mxu0 0.0
    %1945 = vmatpush1.msra.mxu0 0.0
    %1946 = vmatprep.subr.mxu0 0.0
    %1947 = vmatpush1.msra.mxu0 0.0
    %1948 = vmatprep.subr.mxu0 0.0
    %1949 = vmatpush1.msra.mxu0 0.0
    %1950 = vmatprep.subr.mxu0 0.0
    %1951 = vmatpush1.msra.mxu0 0.0
    %1952 = vmatprep.subr.mxu0 0.0
    %1953 = vmatpush1.msra.mxu0 0.0
    %1954 = vmatprep.subr.mxu0 0.0
    %1955 = vmatpush1.msra.mxu0 0.0
    %1956 = vmatprep.subr.mxu0 0.0
    %1957 = vmatpush1.msra.mxu0 0.0
    %1958 = vmatprep.subr.mxu0 0.0
    %1959 = vmatpush1.msra.mxu0 0.0
    %1960 = vmatprep.subr.mxu0 0.0
    %1961 = vmatpush1.msra.mxu0 %v84
    %1962 = vmatprep.subr.mxu0 0.0
    %1963 = vmatpush1.msra.mxu0 %v83
    %1964 = vmatprep.subr.mxu0 0.0
    %1965 = vmatpush1.msra.mxu0 %v82
    %1966 = vmatprep.subr.mxu0 0.0
    %1967 = vmatpush1.msra.mxu0 %v81
    %1968 = vmatprep.subr.mxu0 0.0
    %1969 = vmatpush2.msra.mxu0 0.0
    %1970 = vmatprep.subr.mxu0 0.0
    %1971 = vmatpush2.msra.mxu0 0.0
    %1972 = vmatprep.subr.mxu0 0.0
    %1973 = vmatpush2.msra.mxu0 0.0
    %1974 = vmatprep.subr.mxu0 0.0
    %1975 = vmatpush2.msra.mxu0 0.0
    %1976 = vmatprep.subr.mxu0 0.0
    %1977 = vmatpush2.msra.mxu0 0.0
    %1978 = vmatprep.subr.mxu0 0.0
    %1979 = vmatpush2.msra.mxu0 0.0
    %1980 = vmatprep.subr.mxu0 0.0
    %1981 = vmatpush2.msra.mxu0 0.0
    %1982 = vmatprep.subr.mxu0 0.0
    %1983 = vmatpush2.msra.mxu0 0.0
    %1984 = vmatprep.subr.mxu0 0.0
    %1985 = vmatpush2.msra.mxu0 0.0
    %1986 = vmatprep.subr.mxu0 0.0
    %1987 = vmatpush2.msra.mxu0 0.0
    %1988 = vmatprep.subr.mxu0 0.0
    %1989 = vmatpush2.msra.mxu0 0.0
    %1990 = vmatprep.subr.mxu0 0.0
    %1991 = vmatpush2.msra.mxu0 0.0
    %1992 = vmatprep.subr.mxu0 0.0
    %1993 = vmatpush2.msra.mxu0 0.0
    %1994 = vmatprep.subr.mxu0 0.0
    %1995 = vmatpush2.msra.mxu0 0.0
    %1996 = vmatprep.subr.mxu0 0.0
    %1997 = vmatpush2.msra.mxu0 0.0
    %1998 = vmatprep.subr.mxu0 0.0
    %1999 = vmatpush2.msra.mxu0 0.0
    %2000 = vmatprep.mubr.f32.mxu0 0.0
    %2001 = vmatmul.mubr.f32.gmra.mxu0 %v1211
    %v2002 = vpop.f32.mrf.mxu0
    %v2003 = vadd.f32 %v1935, %v2002
    %v2004 = vpop.f32.mrf.mxu0
    %2005 = vdwg.mxu0
    %v2006 = vadd.f32 %v2003, %v1111
    %v2007 = vxor.u32 %v1790, 2147483648
    %v2008 = vmul.f32 %v2007, 1.442695
    %v2009 = vpow.pop %v2008
    %v2010 = vadd.f32 %v2009, 1.0
    %v2011 = vrcp.pop %v2010
    %v2012 = vmul.f32 1.0, %v2011
    %v2013 = vxor.u32 %v1862, 2147483648
    %v2014 = vmul.f32 %v2013, 1.442695
    %v2015 = vpow.pop %v2014
    %v2016 = vadd.f32 %v2015, 1.0
    %v2017 = vrcp.pop %v2016
    %v2018 = vmul.f32 1.0, %v2017
    %v2019 = vtanh.pop %v1934
    %v2020 = vxor.u32 %v2006, 2147483648
    %v2021 = vmul.f32 %v2020, 1.442695
    %v2022 = vpow.pop %v2021
    %v2023 = vadd.f32 %v2022, 1.0
    %v2024 = vrcp.pop %v2023
    %v2025 = vmul.f32 1.0, %v2024
    %v2026 = vmul.f32 %v2018, %v1134
    %v2027 = vmul.f32 %v2012, %v2019
    %v2028 = vadd.f32 %v2026, %v2027
    %v2029 = vtanh.pop %v2028
    %v2030 = vmul.f32 %v2025, %v2029
    %v2032 = vsel %vm210, %v2028, 0
    %2034 = vmatprep.subr.mxu0 0.0
    %2035 = vmatpush1.msra.mxu0 0.0
    %2036 = vmatprep.subr.mxu0 0.0
    %2037 = vmatpush1.msra.mxu0 0.0
    %2038 = vmatprep.subr.mxu0 0.0
    %2039 = vmatpush1.msra.mxu0 0.0
    %2040 = vmatprep.subr.mxu0 0.0
    %2041 = vmatpush1.msra.mxu0 0.0
    %2042 = vmatprep.subr.mxu0 0.0
    %2043 = vmatpush1.msra.mxu0 0.0
    %2044 = vmatprep.subr.mxu0 0.0
    %2045 = vmatpush1.msra.mxu0 0.0
    %2046 = vmatprep.subr.mxu0 0.0
    %2047 = vmatpush1.msra.mxu0 0.0
    %2048 = vmatprep.subr.mxu0 0.0
    %2049 = vmatpush1.msra.mxu0 0.0
    %2050 = vmatprep.subr.mxu0 0.0
    %2051 = vmatpush1.msra.mxu0 0.0
    %2052 = vmatprep.subr.mxu0 0.0
    %2053 = vmatpush1.msra.mxu0 0.0
    %2054 = vmatprep.subr.mxu0 0.0
    %2055 = vmatpush1.msra.mxu0 0.0
    %2056 = vmatprep.subr.mxu0 0.0
    %2057 = vmatpush1.msra.mxu0 0.0
    %2058 = vmatprep.subr.mxu0 0.0
    %2059 = vmatpush1.msra.mxu0 %v92
    %2060 = vmatprep.subr.mxu0 0.0
    %2061 = vmatpush1.msra.mxu0 %v91
    %2062 = vmatprep.subr.mxu0 0.0
    %2063 = vmatpush1.msra.mxu0 %v90
    %2064 = vmatprep.subr.mxu0 0.0
    %2065 = vmatpush1.msra.mxu0 %v89
    %2066 = vmatprep.subr.mxu0 0.0
    %2067 = vmatpush2.msra.mxu0 0.0
    %2068 = vmatprep.subr.mxu0 0.0
    %2069 = vmatpush2.msra.mxu0 0.0
    %2070 = vmatprep.subr.mxu0 0.0
    %2071 = vmatpush2.msra.mxu0 0.0
    %2072 = vmatprep.subr.mxu0 0.0
    %2073 = vmatpush2.msra.mxu0 0.0
    %2074 = vmatprep.subr.mxu0 0.0
    %2075 = vmatpush2.msra.mxu0 0.0
    %2076 = vmatprep.subr.mxu0 0.0
    %2077 = vmatpush2.msra.mxu0 0.0
    %2078 = vmatprep.subr.mxu0 0.0
    %2079 = vmatpush2.msra.mxu0 0.0
    %2080 = vmatprep.subr.mxu0 0.0
    %2081 = vmatpush2.msra.mxu0 0.0
    %2082 = vmatprep.subr.mxu0 0.0
    %2083 = vmatpush2.msra.mxu0 0.0
    %2084 = vmatprep.subr.mxu0 0.0
    %2085 = vmatpush2.msra.mxu0 0.0
    %2086 = vmatprep.subr.mxu0 0.0
    %2087 = vmatpush2.msra.mxu0 0.0
    %2088 = vmatprep.subr.mxu0 0.0
    %2089 = vmatpush2.msra.mxu0 0.0
    %2090 = vmatprep.subr.mxu0 0.0
    %2091 = vmatpush2.msra.mxu0 0.0
    %2092 = vmatprep.subr.mxu0 0.0
    %2093 = vmatpush2.msra.mxu0 0.0
    %2094 = vmatprep.subr.mxu0 0.0
    %2095 = vmatpush2.msra.mxu0 0.0
    %2096 = vmatprep.subr.mxu0 0.0
    %2097 = vmatpush2.msra.mxu0 0.0
    %2098 = vmatprep.mubr.f32.mxu0 0.0
    %2099 = vmatmul.mubr.f32.gmra.mxu0 %v2032
    %v2100 = vpop.f32.mrf.mxu0
    %v2101 = vadd.f32 0.0, %v2100
    %v2102 = vpop.f32.mrf.mxu0
    %2103 = vdwg.mxu0
    %v2105 = vsel %vm210, %v2030, 0
    %2107 = vmatprep.subr.mxu0 0.0
    %2108 = vmatpush1.msra.mxu0 0.0
    %2109 = vmatprep.subr.mxu0 0.0
    %2110 = vmatpush1.msra.mxu0 0.0
    %2111 = vmatprep.subr.mxu0 0.0
    %2112 = vmatpush1.msra.mxu0 0.0
    %2113 = vmatprep.subr.mxu0 0.0
    %2114 = vmatpush1.msra.mxu0 0.0
    %2115 = vmatprep.subr.mxu0 0.0
    %2116 = vmatpush1.msra.mxu0 0.0
    %2117 = vmatprep.subr.mxu0 0.0
    %2118 = vmatpush1.msra.mxu0 0.0
    %2119 = vmatprep.subr.mxu0 0.0
    %2120 = vmatpush1.msra.mxu0 0.0
    %2121 = vmatprep.subr.mxu0 0.0
    %2122 = vmatpush1.msra.mxu0 0.0
    %2123 = vmatprep.subr.mxu0 0.0
    %2124 = vmatpush1.msra.mxu0 0.0
    %2125 = vmatprep.subr.mxu0 0.0
    %2126 = vmatpush1.msra.mxu0 0.0
    %2127 = vmatprep.subr.mxu0 0.0
    %2128 = vmatpush1.msra.mxu0 0.0
    %2129 = vmatprep.subr.mxu0 0.0
    %2130 = vmatpush1.msra.mxu0 0.0
    %2131 = vmatprep.subr.mxu0 0.0
    %2132 = vmatpush1.msra.mxu0 %v88
    %2133 = vmatprep.subr.mxu0 0.0
    %2134 = vmatpush1.msra.mxu0 %v87
    %2135 = vmatprep.subr.mxu0 0.0
    %2136 = vmatpush1.msra.mxu0 %v86
    %2137 = vmatprep.subr.mxu0 0.0
    %2138 = vmatpush1.msra.mxu0 %v85
    %2139 = vmatprep.subr.mxu0 0.0
    %2140 = vmatpush2.msra.mxu0 0.0
    %2141 = vmatprep.subr.mxu0 0.0
    %2142 = vmatpush2.msra.mxu0 0.0
    %2143 = vmatprep.subr.mxu0 0.0
    %2144 = vmatpush2.msra.mxu0 0.0
    %2145 = vmatprep.subr.mxu0 0.0
    %2146 = vmatpush2.msra.mxu0 0.0
    %2147 = vmatprep.subr.mxu0 0.0
    %2148 = vmatpush2.msra.mxu0 0.0
    %2149 = vmatprep.subr.mxu0 0.0
    %2150 = vmatpush2.msra.mxu0 0.0
    %2151 = vmatprep.subr.mxu0 0.0
    %2152 = vmatpush2.msra.mxu0 0.0
    %2153 = vmatprep.subr.mxu0 0.0
    %2154 = vmatpush2.msra.mxu0 0.0
    %2155 = vmatprep.subr.mxu0 0.0
    %2156 = vmatpush2.msra.mxu0 0.0
    %2157 = vmatprep.subr.mxu0 0.0
    %2158 = vmatpush2.msra.mxu0 0.0
    %2159 = vmatprep.subr.mxu0 0.0
    %2160 = vmatpush2.msra.mxu0 0.0
    %2161 = vmatprep.subr.mxu0 0.0
    %2162 = vmatpush2.msra.mxu0 0.0
    %2163 = vmatprep.subr.mxu0 0.0
    %2164 = vmatpush2.msra.mxu0 0.0
    %2165 = vmatprep.subr.mxu0 0.0
    %2166 = vmatpush2.msra.mxu0 0.0
    %2167 = vmatprep.subr.mxu0 0.0
    %2168 = vmatpush2.msra.mxu0 0.0
    %2169 = vmatprep.subr.mxu0 0.0
    %2170 = vmatpush2.msra.mxu0 0.0
    %2171 = vmatprep.mubr.f32.mxu0 0.0
    %2172 = vmatmul.mubr.f32.gmra.mxu0 %v2105
    %v2173 = vpop.f32.mrf.mxu0
    %v2174 = vadd.f32 %v2101, %v2173
    %v2175 = vpop.f32.mrf.mxu0
    %2176 = vdwg.mxu0
    %v2179 = vunpack.c.l.s4 1966171168
    %v2180 = vunpack.c.0.s8 %v2179
    %v2181 = vlaneseq
    %v2182 = vshrl.u32 %v2181, 7
    %v2183 = vsub.s32 %v2180, %v2182
    %v2184 = vrot.slane %v2174, %v2183
    %v2185 = vcombine.high %v2184, %v2184
    %v2187 = vunpack.c.l.s4 1966171168
    %v2188 = vunpack.c.0.s8 %v2187
    %v2189 = vlaneseq
    %v2190 = vshrl.u32 %v2189, 7
    %v2191 = vsub.s32 %v2188, %v2190
    %v2192 = vrot.slane %v2184, %v2191
    %v2194 = vunpack.c.l.s4 1966171168
    %v2195 = vunpack.c.0.s8 %v2194
    %v2196 = vlaneseq
    %v2197 = vshrl.u32 %v2196, 7
    %v2198 = vsub.s32 %v2195, %v2197
    %v2199 = vrot.slane %v2185, %v2198
    %v2200 = vlaneseq
    %v2201 = vshrl.u32 %v2200, 7
    %v2202 = vsub.s32 0, %v2201
    %v2203 = vrot.slane %v2192, %v2202
    %v2204 = vlaneseq
    %v2205 = vshrl.u32 %v2204, 7
    %v2206 = vsub.s32 0, %v2205
    %v2207 = vrot.slane %v2199, %v2206
    %v2210 = vadd.f32 %v198, %v2203
    %v2211 = vadd.f32 %v203, %v2207
    %v2212 = vtanh.pop %v2210
    %v2213 = vtanh.pop %v2211
    %v2215 = vsel %vm124, %v2212, 0
    %2217 = vmatprep.subr.mxu0 0.0
    %2218 = vmatpush1.xpose.msra.mxu0 0.0
    %2219 = vmatprep.subr.mxu0 0.0
    %2220 = vmatpush1.xpose.msra.mxu0 0.0
    %2221 = vmatprep.subr.mxu0 0.0
    %2222 = vmatpush1.xpose.msra.mxu0 0.0
    %2223 = vmatprep.subr.mxu0 0.0
    %2224 = vmatpush1.xpose.msra.mxu0 0.0
    %2225 = vmatprep.subr.mxu0 0.0
    %2226 = vmatpush1.xpose.msra.mxu0 0.0
    %2227 = vmatprep.subr.mxu0 0.0
    %2228 = vmatpush1.xpose.msra.mxu0 0.0
    %2229 = vmatprep.subr.mxu0 0.0
    %2230 = vmatpush1.xpose.msra.mxu0 0.0
    %2231 = vmatprep.subr.mxu0 0.0
    %2232 = vmatpush1.xpose.msra.mxu0 0.0
    %2233 = vmatprep.subr.mxu0 0.0
    %2234 = vmatpush1.xpose.msra.mxu0 0.0
    %2235 = vmatprep.subr.mxu0 0.0
    %2236 = vmatpush1.xpose.msra.mxu0 0.0
    %2237 = vmatprep.subr.mxu0 0.0
    %2238 = vmatpush1.xpose.msra.mxu0 0.0
    %2239 = vmatprep.subr.mxu0 0.0
    %2240 = vmatpush1.xpose.msra.mxu0 0.0
    %2241 = vmatprep.subr.mxu0 0.0
    %2242 = vmatpush1.xpose.msra.mxu0 0.0
    %2243 = vmatprep.subr.mxu0 0.0
    %2244 = vmatpush1.xpose.msra.mxu0 0.0
    %2245 = vmatprep.subr.mxu0 0.0
    %2246 = vmatpush1.xpose.msra.mxu0 0.0
    %2247 = vmatprep.subr.mxu0 0.0
    %2248 = vmatpush1.xpose.msra.mxu0 %v2215
    %2249 = vmatprep.subr.mxu0 0.0
    %2250 = vmatpush2.xpose.msra.mxu0 0.0
    %2251 = vmatprep.subr.mxu0 0.0
    %2252 = vmatpush2.xpose.msra.mxu0 0.0
    %2253 = vmatprep.subr.mxu0 0.0
    %2254 = vmatpush2.xpose.msra.mxu0 0.0
    %2255 = vmatprep.subr.mxu0 0.0
    %2256 = vmatpush2.xpose.msra.mxu0 0.0
    %2257 = vmatprep.subr.mxu0 0.0
    %2258 = vmatpush2.xpose.msra.mxu0 0.0
    %2259 = vmatprep.subr.mxu0 0.0
    %2260 = vmatpush2.xpose.msra.mxu0 0.0
    %2261 = vmatprep.subr.mxu0 0.0
    %2262 = vmatpush2.xpose.msra.mxu0 0.0
    %2263 = vmatprep.subr.mxu0 0.0
    %2264 = vmatpush2.xpose.msra.mxu0 0.0
    %2265 = vmatprep.subr.mxu0 0.0
    %2266 = vmatpush2.xpose.msra.mxu0 0.0
    %2267 = vmatprep.subr.mxu0 0.0
    %2268 = vmatpush2.xpose.msra.mxu0 0.0
    %2269 = vmatprep.subr.mxu0 0.0
    %2270 = vmatpush2.xpose.msra.mxu0 0.0
    %2271 = vmatprep.subr.mxu0 0.0
    %2272 = vmatpush2.xpose.msra.mxu0 0.0
    %2273 = vmatprep.subr.mxu0 0.0
    %2274 = vmatpush2.xpose.msra.mxu0 0.0
    %2275 = vmatprep.subr.mxu0 0.0
    %2276 = vmatpush2.xpose.msra.mxu0 0.0
    %2277 = vmatprep.subr.mxu0 0.0
    %2278 = vmatpush2.xpose.msra.mxu0 0.0
    %2279 = vmatprep.subr.mxu0 0.0
    %2280 = vmatpush2.xpose.msra.mxu0 0.0
    %2281 = vmatprep.mubr.f32.mxu0 0.0
    %2282 = vmatmul.mubr.f32.gmra.mxu0 %v393
    %v2283 = vpop.f32.mrf.mxu0
    %v2284 = vadd.f32 %v391, %v2283
    %v2285 = vpop.f32.mrf.mxu0
    %2286 = vdwg.mxu0
    %v2288 = vsel %vm124, %v2213, 0
    %2290 = vmatprep.subr.mxu0 0.0
    %2291 = vmatpush1.xpose.msra.mxu0 0.0
    %2292 = vmatprep.subr.mxu0 0.0
    %2293 = vmatpush1.xpose.msra.mxu0 0.0
    %2294 = vmatprep.subr.mxu0 0.0
    %2295 = vmatpush1.xpose.msra.mxu0 0.0
    %2296 = vmatprep.subr.mxu0 0.0
    %2297 = vmatpush1.xpose.msra.mxu0 0.0
    %2298 = vmatprep.subr.mxu0 0.0
    %2299 = vmatpush1.xpose.msra.mxu0 0.0
    %2300 = vmatprep.subr.mxu0 0.0
    %2301 = vmatpush1.xpose.msra.mxu0 0.0
    %2302 = vmatprep.subr.mxu0 0.0
    %2303 = vmatpush1.xpose.msra.mxu0 0.0
    %2304 = vmatprep.subr.mxu0 0.0
    %2305 = vmatpush1.xpose.msra.mxu0 0.0
    %2306 = vmatprep.subr.mxu0 0.0
    %2307 = vmatpush1.xpose.msra.mxu0 0.0
    %2308 = vmatprep.subr.mxu0 0.0
    %2309 = vmatpush1.xpose.msra.mxu0 0.0
    %2310 = vmatprep.subr.mxu0 0.0
    %2311 = vmatpush1.xpose.msra.mxu0 0.0
    %2312 = vmatprep.subr.mxu0 0.0
    %2313 = vmatpush1.xpose.msra.mxu0 0.0
    %2314 = vmatprep.subr.mxu0 0.0
    %2315 = vmatpush1.xpose.msra.mxu0 0.0
    %2316 = vmatprep.subr.mxu0 0.0
    %2317 = vmatpush1.xpose.msra.mxu0 0.0
    %2318 = vmatprep.subr.mxu0 0.0
    %2319 = vmatpush1.xpose.msra.mxu0 0.0
    %2320 = vmatprep.subr.mxu0 0.0
    %2321 = vmatpush1.xpose.msra.mxu0 %v2288
    %2322 = vmatprep.subr.mxu0 0.0
    %2323 = vmatpush2.xpose.msra.mxu0 0.0
    %2324 = vmatprep.subr.mxu0 0.0
    %2325 = vmatpush2.xpose.msra.mxu0 0.0
    %2326 = vmatprep.subr.mxu0 0.0
    %2327 = vmatpush2.xpose.msra.mxu0 0.0
    %2328 = vmatprep.subr.mxu0 0.0
    %2329 = vmatpush2.xpose.msra.mxu0 0.0
    %2330 = vmatprep.subr.mxu0 0.0
    %2331 = vmatpush2.xpose.msra.mxu0 0.0
    %2332 = vmatprep.subr.mxu0 0.0
    %2333 = vmatpush2.xpose.msra.mxu0 0.0
    %2334 = vmatprep.subr.mxu0 0.0
    %2335 = vmatpush2.xpose.msra.mxu0 0.0
    %2336 = vmatprep.subr.mxu0 0.0
    %2337 = vmatpush2.xpose.msra.mxu0 0.0
    %2338 = vmatprep.subr.mxu0 0.0
    %2339 = vmatpush2.xpose.msra.mxu0 0.0
    %2340 = vmatprep.subr.mxu0 0.0
    %2341 = vmatpush2.xpose.msra.mxu0 0.0
    %2342 = vmatprep.subr.mxu0 0.0
    %2343 = vmatpush2.xpose.msra.mxu0 0.0
    %2344 = vmatprep.subr.mxu0 0.0
    %2345 = vmatpush2.xpose.msra.mxu0 0.0
    %2346 = vmatprep.subr.mxu0 0.0
    %2347 = vmatpush2.xpose.msra.mxu0 0.0
    %2348 = vmatprep.subr.mxu0 0.0
    %2349 = vmatpush2.xpose.msra.mxu0 0.0
    %2350 = vmatprep.subr.mxu0 0.0
    %2351 = vmatpush2.xpose.msra.mxu0 0.0
    %2352 = vmatprep.subr.mxu0 0.0
    %2353 = vmatpush2.xpose.msra.mxu0 0.0
    %2354 = vmatprep.mubr.f32.mxu0 0.0
    %2355 = vmatmul.mubr.f32.gmra.mxu0 %v393
    %v2356 = vpop.f32.mrf.mxu0
    %v2357 = vadd.f32 %v391, %v2356
    %v2358 = vpop.f32.mrf.mxu0
    %2359 = vdwg.mxu0
    %v2360 = vsel %vm541, %v2284, -inf
    %2361 = vmax.xlane.f32.xlu0 %v2360
    %v2362 = vpop.xlane.xlu0 %2361
    %v2363 = vsel %vm541, %v2357, -inf
    %2364 = vmax.xlane.f32.xlu0 %v2363
    %v2365 = vpop.xlane.xlu0 %2364
    %v2366 = vsub.f32 %v2284, %v2362
    %v2367 = vsub.f32 %v2357, %v2365
    %v2368 = vmul.f32 %v2366, 1.442695
    %v2369 = vpow.pop %v2368
    %v2370 = vmul.f32 %v2367, 1.442695
    %v2371 = vpow.pop %v2370
    %v2372 = vsel %vm541, %v2369, 0.0
    %2373 = vadd.xlane.f32.xlu0 %v2372
    %v2374 = vpop.xlane.xlu0 %2373
    %v2375 = vsel %vm541, %v2371, 0.0
    %2376 = vadd.xlane.f32.xlu0 %v2375
    %v2377 = vpop.xlane.xlu0 %2376
    %v2378 = vrcp.pop %v2374
    %v2379 = vmul.f32 %v2369, %v2378
    %v2380 = vrcp.pop %v2377
    %v2381 = vmul.f32 %v2371, %v2380
    %v2383 = vsel %vm564, %v2379, 0
    %2385 = vmatprep.subr.mxu0 0.0
    %2386 = vmatpush1.msra.mxu0 0.0
    %2387 = vmatprep.subr.mxu0 0.0
    %2388 = vmatpush1.msra.mxu0 0.0
    %2389 = vmatprep.subr.mxu0 0.0
    %2390 = vmatpush1.msra.mxu0 0.0
    %2391 = vmatprep.subr.mxu0 0.0
    %2392 = vmatpush1.msra.mxu0 0.0
    %2393 = vmatprep.subr.mxu0 0.0
    %2394 = vmatpush1.msra.mxu0 0.0
    %2395 = vmatprep.subr.mxu0 0.0
    %2396 = vmatpush1.msra.mxu0 0.0
    %2397 = vmatprep.subr.mxu0 0.0
    %2398 = vmatpush1.msra.mxu0 0.0
    %2399 = vmatprep.subr.mxu0 0.0
    %2400 = vmatpush1.msra.mxu0 0.0
    %2401 = vmatprep.subr.mxu0 0.0
    %2402 = vmatpush1.msra.mxu0 0.0
    %2403 = vmatprep.subr.mxu0 0.0
    %2404 = vmatpush1.msra.mxu0 0.0
    %2405 = vmatprep.subr.mxu0 0.0
    %2406 = vmatpush1.msra.mxu0 0.0
    %2407 = vmatprep.subr.mxu0 0.0
    %2408 = vmatpush1.msra.mxu0 0.0
    %2409 = vmatprep.subr.mxu0 0.0
    %2410 = vmatpush1.msra.mxu0 0.0
    %2411 = vmatprep.subr.mxu0 0.0
    %2412 = vmatpush1.msra.mxu0 0.0
    %2413 = vmatprep.subr.mxu0 0.0
    %2414 = vmatpush1.msra.mxu0 0.0
    %2415 = vmatprep.subr.mxu0 0.0
    %2416 = vmatpush1.msra.mxu0 %v117
    %2417 = vmatprep.subr.mxu0 0.0
    %2418 = vmatpush2.msra.mxu0 0.0
    %2419 = vmatprep.subr.mxu0 0.0
    %2420 = vmatpush2.msra.mxu0 0.0
    %2421 = vmatprep.subr.mxu0 0.0
    %2422 = vmatpush2.msra.mxu0 0.0
    %2423 = vmatprep.subr.mxu0 0.0
    %2424 = vmatpush2.msra.mxu0 0.0
    %2425 = vmatprep.subr.mxu0 0.0
    %2426 = vmatpush2.msra.mxu0 0.0
    %2427 = vmatprep.subr.mxu0 0.0
    %2428 = vmatpush2.msra.mxu0 0.0
    %2429 = vmatprep.subr.mxu0 0.0
    %2430 = vmatpush2.msra.mxu0 0.0
    %2431 = vmatprep.subr.mxu0 0.0
    %2432 = vmatpush2.msra.mxu0 0.0
    %2433 = vmatprep.subr.mxu0 0.0
    %2434 = vmatpush2.msra.mxu0 0.0
    %2435 = vmatprep.subr.mxu0 0.0
    %2436 = vmatpush2.msra.mxu0 0.0
    %2437 = vmatprep.subr.mxu0 0.0
    %2438 = vmatpush2.msra.mxu0 0.0
    %2439 = vmatprep.subr.mxu0 0.0
    %2440 = vmatpush2.msra.mxu0 0.0
    %2441 = vmatprep.subr.mxu0 0.0
    %2442 = vmatpush2.msra.mxu0 0.0
    %2443 = vmatprep.subr.mxu0 0.0
    %2444 = vmatpush2.msra.mxu0 0.0
    %2445 = vmatprep.subr.mxu0 0.0
    %2446 = vmatpush2.msra.mxu0 0.0
    %2447 = vmatprep.subr.mxu0 0.0
    %2448 = vmatpush2.msra.mxu0 0.0
    %2449 = vmatprep.mubr.f32.mxu0 0.0
    %2450 = vmatmul.mubr.f32.gmra.mxu0 %v2383
    %v2451 = vpop.f32.mrf.mxu0
    %v2452 = vadd.f32 0.0, %v2451
    %v2453 = vpop.f32.mrf.mxu0
    %2454 = vdwg.mxu0
    %v2456 = vsel %vm564, %v2381, 0
    %2458 = vmatprep.subr.mxu0 0.0
    %2459 = vmatpush1.msra.mxu0 0.0
    %2460 = vmatprep.subr.mxu0 0.0
    %2461 = vmatpush1.msra.mxu0 0.0
    %2462 = vmatprep.subr.mxu0 0.0
    %2463 = vmatpush1.msra.mxu0 0.0
    %2464 = vmatprep.subr.mxu0 0.0
    %2465 = vmatpush1.msra.mxu0 0.0
    %2466 = vmatprep.subr.mxu0 0.0
    %2467 = vmatpush1.msra.mxu0 0.0
    %2468 = vmatprep.subr.mxu0 0.0
    %2469 = vmatpush1.msra.mxu0 0.0
    %2470 = vmatprep.subr.mxu0 0.0
    %2471 = vmatpush1.msra.mxu0 0.0
    %2472 = vmatprep.subr.mxu0 0.0
    %2473 = vmatpush1.msra.mxu0 0.0
    %2474 = vmatprep.subr.mxu0 0.0
    %2475 = vmatpush1.msra.mxu0 0.0
    %2476 = vmatprep.subr.mxu0 0.0
    %2477 = vmatpush1.msra.mxu0 0.0
    %2478 = vmatprep.subr.mxu0 0.0
    %2479 = vmatpush1.msra.mxu0 0.0
    %2480 = vmatprep.subr.mxu0 0.0
    %2481 = vmatpush1.msra.mxu0 0.0
    %2482 = vmatprep.subr.mxu0 0.0
    %2483 = vmatpush1.msra.mxu0 0.0
    %2484 = vmatprep.subr.mxu0 0.0
    %2485 = vmatpush1.msra.mxu0 0.0
    %2486 = vmatprep.subr.mxu0 0.0
    %2487 = vmatpush1.msra.mxu0 0.0
    %2488 = vmatprep.subr.mxu0 0.0
    %2489 = vmatpush1.msra.mxu0 %v118
    %2490 = vmatprep.subr.mxu0 0.0
    %2491 = vmatpush2.msra.mxu0 0.0
    %2492 = vmatprep.subr.mxu0 0.0
    %2493 = vmatpush2.msra.mxu0 0.0
    %2494 = vmatprep.subr.mxu0 0.0
    %2495 = vmatpush2.msra.mxu0 0.0
    %2496 = vmatprep.subr.mxu0 0.0
    %2497 = vmatpush2.msra.mxu0 0.0
    %2498 = vmatprep.subr.mxu0 0.0
    %2499 = vmatpush2.msra.mxu0 0.0
    %2500 = vmatprep.subr.mxu0 0.0
    %2501 = vmatpush2.msra.mxu0 0.0
    %2502 = vmatprep.subr.mxu0 0.0
    %2503 = vmatpush2.msra.mxu0 0.0
    %2504 = vmatprep.subr.mxu0 0.0
    %2505 = vmatpush2.msra.mxu0 0.0
    %2506 = vmatprep.subr.mxu0 0.0
    %2507 = vmatpush2.msra.mxu0 0.0
    %2508 = vmatprep.subr.mxu0 0.0
    %2509 = vmatpush2.msra.mxu0 0.0
    %2510 = vmatprep.subr.mxu0 0.0
    %2511 = vmatpush2.msra.mxu0 0.0
    %2512 = vmatprep.subr.mxu0 0.0
    %2513 = vmatpush2.msra.mxu0 0.0
    %2514 = vmatprep.subr.mxu0 0.0
    %2515 = vmatpush2.msra.mxu0 0.0
    %2516 = vmatprep.subr.mxu0 0.0
    %2517 = vmatpush2.msra.mxu0 0.0
    %2518 = vmatprep.subr.mxu0 0.0
    %2519 = vmatpush2.msra.mxu0 0.0
    %2520 = vmatprep.subr.mxu0 0.0
    %2521 = vmatpush2.msra.mxu0 0.0
    %2522 = vmatprep.mubr.f32.mxu0 0.0
    %2523 = vmatmul.mubr.f32.gmra.mxu0 %v2456
    %v2524 = vpop.f32.mrf.mxu0
    %v2525 = vadd.f32 0.0, %v2524
    %v2526 = vpop.f32.mrf.mxu0
    %2527 = vdwg.mxu0
    %v2530 = vrot.slane %v2525, 7
    %v2531 = vsel %vm714, %v2530, %v2452
    %2532 = vrot.lane.b32.xlu0 %v209, 126
    %v2533 = vpop.permute.xlu0 %2532
    %v2535 = vsel %vm124, %v2531, 0
    %2537 = vmatprep.subr.mxu0 0.0
    %2538 = vmatpush1.msra.mxu0 0.0
    %2539 = vmatprep.subr.mxu0 0.0
    %2540 = vmatpush1.msra.mxu0 0.0
    %2541 = vmatprep.subr.mxu0 0.0
    %2542 = vmatpush1.msra.mxu0 0.0
    %2543 = vmatprep.subr.mxu0 0.0
    %2544 = vmatpush1.msra.mxu0 0.0
    %2545 = vmatprep.subr.mxu0 0.0
    %2546 = vmatpush1.msra.mxu0 0.0
    %2547 = vmatprep.subr.mxu0 0.0
    %2548 = vmatpush1.msra.mxu0 0.0
    %2549 = vmatprep.subr.mxu0 0.0
    %2550 = vmatpush1.msra.mxu0 0.0
    %2551 = vmatprep.subr.mxu0 0.0
    %2552 = vmatpush1.msra.mxu0 0.0
    %2553 = vmatprep.subr.mxu0 0.0
    %2554 = vmatpush1.msra.mxu0 0.0
    %2555 = vmatprep.subr.mxu0 0.0
    %2556 = vmatpush1.msra.mxu0 0.0
    %2557 = vmatprep.subr.mxu0 0.0
    %2558 = vmatpush1.msra.mxu0 0.0
    %2559 = vmatprep.subr.mxu0 0.0
    %2560 = vmatpush1.msra.mxu0 0.0
    %2561 = vmatprep.subr.mxu0 0.0
    %2562 = vmatpush1.msra.mxu0 0.0
    %2563 = vmatprep.subr.mxu0 0.0
    %2564 = vmatpush1.msra.mxu0 0.0
    %2565 = vmatprep.subr.mxu0 0.0
    %2566 = vmatpush1.msra.mxu0 %v106
    %2567 = vmatprep.subr.mxu0 0.0
    %2568 = vmatpush1.msra.mxu0 %v105
    %2569 = vmatprep.subr.mxu0 0.0
    %2570 = vmatpush2.msra.mxu0 0.0
    %2571 = vmatprep.subr.mxu0 0.0
    %2572 = vmatpush2.msra.mxu0 0.0
    %2573 = vmatprep.subr.mxu0 0.0
    %2574 = vmatpush2.msra.mxu0 0.0
    %2575 = vmatprep.subr.mxu0 0.0
    %2576 = vmatpush2.msra.mxu0 0.0
    %2577 = vmatprep.subr.mxu0 0.0
    %2578 = vmatpush2.msra.mxu0 0.0
    %2579 = vmatprep.subr.mxu0 0.0
    %2580 = vmatpush2.msra.mxu0 0.0
    %2581 = vmatprep.subr.mxu0 0.0
    %2582 = vmatpush2.msra.mxu0 0.0
    %2583 = vmatprep.subr.mxu0 0.0
    %2584 = vmatpush2.msra.mxu0 0.0
    %2585 = vmatprep.subr.mxu0 0.0
    %2586 = vmatpush2.msra.mxu0 0.0
    %2587 = vmatprep.subr.mxu0 0.0
    %2588 = vmatpush2.msra.mxu0 0.0
    %2589 = vmatprep.subr.mxu0 0.0
    %2590 = vmatpush2.msra.mxu0 0.0
    %2591 = vmatprep.subr.mxu0 0.0
    %2592 = vmatpush2.msra.mxu0 0.0
    %2593 = vmatprep.subr.mxu0 0.0
    %2594 = vmatpush2.msra.mxu0 0.0
    %2595 = vmatprep.subr.mxu0 0.0
    %2596 = vmatpush2.msra.mxu0 0.0
    %2597 = vmatprep.subr.mxu0 0.0
    %2598 = vmatpush2.msra.mxu0 0.0
    %2599 = vmatprep.subr.mxu0 0.0
    %2600 = vmatpush2.msra.mxu0 0.0
    %2601 = vmatprep.mubr.f32.mxu0 0.0
    %2602 = vmatmul.mubr.f32.gmra.mxu0 %v2535
    %v2603 = vpop.f32.mrf.mxu0
    %v2604 = vadd.f32 %v2533, %v2603
    %v2605 = vpop.f32.mrf.mxu0
    %2606 = vdwg.mxu0
    %2608 = vset.pattern.permute.xlu0 0
    %2609 = vperm.xlu0 %2608, %v2604
    %v2610 = vpop.permute.xlu0 %2609
    %v2612 = vmul.f32 %v2610, %v796
    %2613 = vmatprep.subr.mxu0 0.0
    %2614 = vmatpush1.msra.mxu0 0.0
    %2615 = vmatprep.subr.mxu0 0.0
    %2616 = vmatpush1.msra.mxu0 0.0
    %2617 = vmatprep.subr.mxu0 0.0
    %2618 = vmatpush1.msra.mxu0 0.0
    %2619 = vmatprep.subr.mxu0 0.0
    %2620 = vmatpush1.msra.mxu0 0.0
    %2621 = vmatprep.subr.mxu0 0.0
    %2622 = vmatpush1.msra.mxu0 0.0
    %2623 = vmatprep.subr.mxu0 0.0
    %2624 = vmatpush1.msra.mxu0 0.0
    %2625 = vmatprep.subr.mxu0 0.0
    %2626 = vmatpush1.msra.mxu0 0.0
    %2627 = vmatprep.subr.mxu0 0.0
    %2628 = vmatpush1.msra.mxu0 0.0
    %2629 = vmatprep.subr.mxu0 0.0
    %2630 = vmatpush1.msra.mxu0 0.0
    %2631 = vmatprep.subr.mxu0 0.0
    %2632 = vmatpush1.msra.mxu0 0.0
    %2633 = vmatprep.subr.mxu0 0.0
    %2634 = vmatpush1.msra.mxu0 0.0
    %2635 = vmatprep.subr.mxu0 0.0
    %2636 = vmatpush1.msra.mxu0 0.0
    %2637 = vmatprep.subr.mxu0 0.0
    %2638 = vmatpush1.msra.mxu0 %v72
    %2639 = vmatprep.subr.mxu0 0.0
    %2640 = vmatpush1.msra.mxu0 %v71
    %2641 = vmatprep.subr.mxu0 0.0
    %2642 = vmatpush1.msra.mxu0 %v70
    %2643 = vmatprep.subr.mxu0 0.0
    %2644 = vmatpush1.msra.mxu0 %v69
    %2645 = vmatprep.subr.mxu0 0.0
    %2646 = vmatpush2.msra.mxu0 0.0
    %2647 = vmatprep.subr.mxu0 0.0
    %2648 = vmatpush2.msra.mxu0 0.0
    %2649 = vmatprep.subr.mxu0 0.0
    %2650 = vmatpush2.msra.mxu0 0.0
    %2651 = vmatprep.subr.mxu0 0.0
    %2652 = vmatpush2.msra.mxu0 0.0
    %2653 = vmatprep.subr.mxu0 0.0
    %2654 = vmatpush2.msra.mxu0 0.0
    %2655 = vmatprep.subr.mxu0 0.0
    %2656 = vmatpush2.msra.mxu0 0.0
    %2657 = vmatprep.subr.mxu0 0.0
    %2658 = vmatpush2.msra.mxu0 0.0
    %2659 = vmatprep.subr.mxu0 0.0
    %2660 = vmatpush2.msra.mxu0 0.0
    %2661 = vmatprep.subr.mxu0 0.0
    %2662 = vmatpush2.msra.mxu0 0.0
    %2663 = vmatprep.subr.mxu0 0.0
    %2664 = vmatpush2.msra.mxu0 0.0
    %2665 = vmatprep.subr.mxu0 0.0
    %2666 = vmatpush2.msra.mxu0 0.0
    %2667 = vmatprep.subr.mxu0 0.0
    %2668 = vmatpush2.msra.mxu0 0.0
    %2669 = vmatprep.subr.mxu0 0.0
    %2670 = vmatpush2.msra.mxu0 0.0
    %2671 = vmatprep.subr.mxu0 0.0
    %2672 = vmatpush2.msra.mxu0 0.0
    %2673 = vmatprep.subr.mxu0 0.0
    %2674 = vmatpush2.msra.mxu0 0.0
    %2675 = vmatprep.subr.mxu0 0.0
    %2676 = vmatpush2.msra.mxu0 0.0
    %2677 = vmatprep.mubr.f32.mxu0 0.0
    %2678 = vmatmul.mubr.f32.gmra.mxu0 %v2105
    %v2679 = vpop.f32.mrf.mxu0
    %v2680 = vadd.f32 %v2612, %v2679
    %v2681 = vpop.f32.mrf.mxu0
    %2682 = vdwg.mxu0
    %v2683 = vadd.f32 %v2680, %v871
    %v2684 = vmul.f32 %v2610, %v876
    %2685 = vmatprep.subr.mxu0 0.0
    %2686 = vmatpush1.msra.mxu0 0.0
    %2687 = vmatprep.subr.mxu0 0.0
    %2688 = vmatpush1.msra.mxu0 0.0
    %2689 = vmatprep.subr.mxu0 0.0
    %2690 = vmatpush1.msra.mxu0 0.0
    %2691 = vmatprep.subr.mxu0 0.0
    %2692 = vmatpush1.msra.mxu0 0.0
    %2693 = vmatprep.subr.mxu0 0.0
    %2694 = vmatpush1.msra.mxu0 0.0
    %2695 = vmatprep.subr.mxu0 0.0
    %2696 = vmatpush1.msra.mxu0 0.0
    %2697 = vmatprep.subr.mxu0 0.0
    %2698 = vmatpush1.msra.mxu0 0.0
    %2699 = vmatprep.subr.mxu0 0.0
    %2700 = vmatpush1.msra.mxu0 0.0
    %2701 = vmatprep.subr.mxu0 0.0
    %2702 = vmatpush1.msra.mxu0 0.0
    %2703 = vmatprep.subr.mxu0 0.0
    %2704 = vmatpush1.msra.mxu0 0.0
    %2705 = vmatprep.subr.mxu0 0.0
    %2706 = vmatpush1.msra.mxu0 0.0
    %2707 = vmatprep.subr.mxu0 0.0
    %2708 = vmatpush1.msra.mxu0 0.0
    %2709 = vmatprep.subr.mxu0 0.0
    %2710 = vmatpush1.msra.mxu0 %v76
    %2711 = vmatprep.subr.mxu0 0.0
    %2712 = vmatpush1.msra.mxu0 %v75
    %2713 = vmatprep.subr.mxu0 0.0
    %2714 = vmatpush1.msra.mxu0 %v74
    %2715 = vmatprep.subr.mxu0 0.0
    %2716 = vmatpush1.msra.mxu0 %v73
    %2717 = vmatprep.subr.mxu0 0.0
    %2718 = vmatpush2.msra.mxu0 0.0
    %2719 = vmatprep.subr.mxu0 0.0
    %2720 = vmatpush2.msra.mxu0 0.0
    %2721 = vmatprep.subr.mxu0 0.0
    %2722 = vmatpush2.msra.mxu0 0.0
    %2723 = vmatprep.subr.mxu0 0.0
    %2724 = vmatpush2.msra.mxu0 0.0
    %2725 = vmatprep.subr.mxu0 0.0
    %2726 = vmatpush2.msra.mxu0 0.0
    %2727 = vmatprep.subr.mxu0 0.0
    %2728 = vmatpush2.msra.mxu0 0.0
    %2729 = vmatprep.subr.mxu0 0.0
    %2730 = vmatpush2.msra.mxu0 0.0
    %2731 = vmatprep.subr.mxu0 0.0
    %2732 = vmatpush2.msra.mxu0 0.0
    %2733 = vmatprep.subr.mxu0 0.0
    %2734 = vmatpush2.msra.mxu0 0.0
    %2735 = vmatprep.subr.mxu0 0.0
    %2736 = vmatpush2.msra.mxu0 0.0
    %2737 = vmatprep.subr.mxu0 0.0
    %2738 = vmatpush2.msra.mxu0 0.0
    %2739 = vmatprep.subr.mxu0 0.0
    %2740 = vmatpush2.msra.mxu0 0.0
    %2741 = vmatprep.subr.mxu0 0.0
    %2742 = vmatpush2.msra.mxu0 0.0
    %2743 = vmatprep.subr.mxu0 0.0
    %2744 = vmatpush2.msra.mxu0 0.0
    %2745 = vmatprep.subr.mxu0 0.0
    %2746 = vmatpush2.msra.mxu0 0.0
    %2747 = vmatprep.subr.mxu0 0.0
    %2748 = vmatpush2.msra.mxu0 0.0
    %2749 = vmatprep.mubr.f32.mxu0 0.0
    %2750 = vmatmul.mubr.f32.gmra.mxu0 %v2105
    %v2751 = vpop.f32.mrf.mxu0
    %v2752 = vadd.f32 %v2684, %v2751
    %v2753 = vpop.f32.mrf.mxu0
    %2754 = vdwg.mxu0
    %v2755 = vadd.f32 %v2752, %v951
    %v2756 = vmul.f32 %v2610, %v956
    %2757 = vmatprep.subr.mxu0 0.0
    %2758 = vmatpush1.msra.mxu0 0.0
    %2759 = vmatprep.subr.mxu0 0.0
    %2760 = vmatpush1.msra.mxu0 0.0
    %2761 = vmatprep.subr.mxu0 0.0
    %2762 = vmatpush1.msra.mxu0 0.0
    %2763 = vmatprep.subr.mxu0 0.0
    %2764 = vmatpush1.msra.mxu0 0.0
    %2765 = vmatprep.subr.mxu0 0.0
    %2766 = vmatpush1.msra.mxu0 0.0
    %2767 = vmatprep.subr.mxu0 0.0
    %2768 = vmatpush1.msra.mxu0 0.0
    %2769 = vmatprep.subr.mxu0 0.0
    %2770 = vmatpush1.msra.mxu0 0.0
    %2771 = vmatprep.subr.mxu0 0.0
    %2772 = vmatpush1.msra.mxu0 0.0
    %2773 = vmatprep.subr.mxu0 0.0
    %2774 = vmatpush1.msra.mxu0 0.0
    %2775 = vmatprep.subr.mxu0 0.0
    %2776 = vmatpush1.msra.mxu0 0.0
    %2777 = vmatprep.subr.mxu0 0.0
    %2778 = vmatpush1.msra.mxu0 0.0
    %2779 = vmatprep.subr.mxu0 0.0
    %2780 = vmatpush1.msra.mxu0 0.0
    %2781 = vmatprep.subr.mxu0 0.0
    %2782 = vmatpush1.msra.mxu0 %v80
    %2783 = vmatprep.subr.mxu0 0.0
    %2784 = vmatpush1.msra.mxu0 %v79
    %2785 = vmatprep.subr.mxu0 0.0
    %2786 = vmatpush1.msra.mxu0 %v78
    %2787 = vmatprep.subr.mxu0 0.0
    %2788 = vmatpush1.msra.mxu0 %v77
    %2789 = vmatprep.subr.mxu0 0.0
    %2790 = vmatpush2.msra.mxu0 0.0
    %2791 = vmatprep.subr.mxu0 0.0
    %2792 = vmatpush2.msra.mxu0 0.0
    %2793 = vmatprep.subr.mxu0 0.0
    %2794 = vmatpush2.msra.mxu0 0.0
    %2795 = vmatprep.subr.mxu0 0.0
    %2796 = vmatpush2.msra.mxu0 0.0
    %2797 = vmatprep.subr.mxu0 0.0
    %2798 = vmatpush2.msra.mxu0 0.0
    %2799 = vmatprep.subr.mxu0 0.0
    %2800 = vmatpush2.msra.mxu0 0.0
    %2801 = vmatprep.subr.mxu0 0.0
    %2802 = vmatpush2.msra.mxu0 0.0
    %2803 = vmatprep.subr.mxu0 0.0
    %2804 = vmatpush2.msra.mxu0 0.0
    %2805 = vmatprep.subr.mxu0 0.0
    %2806 = vmatpush2.msra.mxu0 0.0
    %2807 = vmatprep.subr.mxu0 0.0
    %2808 = vmatpush2.msra.mxu0 0.0
    %2809 = vmatprep.subr.mxu0 0.0
    %2810 = vmatpush2.msra.mxu0 0.0
    %2811 = vmatprep.subr.mxu0 0.0
    %2812 = vmatpush2.msra.mxu0 0.0
    %2813 = vmatprep.subr.mxu0 0.0
    %2814 = vmatpush2.msra.mxu0 0.0
    %2815 = vmatprep.subr.mxu0 0.0
    %2816 = vmatpush2.msra.mxu0 0.0
    %2817 = vmatprep.subr.mxu0 0.0
    %2818 = vmatpush2.msra.mxu0 0.0
    %2819 = vmatprep.subr.mxu0 0.0
    %2820 = vmatpush2.msra.mxu0 0.0
    %2821 = vmatprep.mubr.f32.mxu0 0.0
    %2822 = vmatmul.mubr.f32.gmra.mxu0 %v2105
    %v2823 = vpop.f32.mrf.mxu0
    %v2824 = vadd.f32 %v2756, %v2823
    %v2825 = vpop.f32.mrf.mxu0
    %2826 = vdwg.mxu0
    %v2827 = vadd.f32 %v2824, %v1031
    %v2828 = vmul.f32 %v2610, %v1036
    %2829 = vmatprep.subr.mxu0 0.0
    %2830 = vmatpush1.msra.mxu0 0.0
    %2831 = vmatprep.subr.mxu0 0.0
    %2832 = vmatpush1.msra.mxu0 0.0
    %2833 = vmatprep.subr.mxu0 0.0
    %2834 = vmatpush1.msra.mxu0 0.0
    %2835 = vmatprep.subr.mxu0 0.0
    %2836 = vmatpush1.msra.mxu0 0.0
    %2837 = vmatprep.subr.mxu0 0.0
    %2838 = vmatpush1.msra.mxu0 0.0
    %2839 = vmatprep.subr.mxu0 0.0
    %2840 = vmatpush1.msra.mxu0 0.0
    %2841 = vmatprep.subr.mxu0 0.0
    %2842 = vmatpush1.msra.mxu0 0.0
    %2843 = vmatprep.subr.mxu0 0.0
    %2844 = vmatpush1.msra.mxu0 0.0
    %2845 = vmatprep.subr.mxu0 0.0
    %2846 = vmatpush1.msra.mxu0 0.0
    %2847 = vmatprep.subr.mxu0 0.0
    %2848 = vmatpush1.msra.mxu0 0.0
    %2849 = vmatprep.subr.mxu0 0.0
    %2850 = vmatpush1.msra.mxu0 0.0
    %2851 = vmatprep.subr.mxu0 0.0
    %2852 = vmatpush1.msra.mxu0 0.0
    %2853 = vmatprep.subr.mxu0 0.0
    %2854 = vmatpush1.msra.mxu0 %v84
    %2855 = vmatprep.subr.mxu0 0.0
    %2856 = vmatpush1.msra.mxu0 %v83
    %2857 = vmatprep.subr.mxu0 0.0
    %2858 = vmatpush1.msra.mxu0 %v82
    %2859 = vmatprep.subr.mxu0 0.0
    %2860 = vmatpush1.msra.mxu0 %v81
    %2861 = vmatprep.subr.mxu0 0.0
    %2862 = vmatpush2.msra.mxu0 0.0
    %2863 = vmatprep.subr.mxu0 0.0
    %2864 = vmatpush2.msra.mxu0 0.0
    %2865 = vmatprep.subr.mxu0 0.0
    %2866 = vmatpush2.msra.mxu0 0.0
    %2867 = vmatprep.subr.mxu0 0.0
    %2868 = vmatpush2.msra.mxu0 0.0
    %2869 = vmatprep.subr.mxu0 0.0
    %2870 = vmatpush2.msra.mxu0 0.0
    %2871 = vmatprep.subr.mxu0 0.0
    %2872 = vmatpush2.msra.mxu0 0.0
    %2873 = vmatprep.subr.mxu0 0.0
    %2874 = vmatpush2.msra.mxu0 0.0
    %2875 = vmatprep.subr.mxu0 0.0
    %2876 = vmatpush2.msra.mxu0 0.0
    %2877 = vmatprep.subr.mxu0 0.0
    %2878 = vmatpush2.msra.mxu0 0.0
    %2879 = vmatprep.subr.mxu0 0.0
    %2880 = vmatpush2.msra.mxu0 0.0
    %2881 = vmatprep.subr.mxu0 0.0
    %2882 = vmatpush2.msra.mxu0 0.0
    %2883 = vmatprep.subr.mxu0 0.0
    %2884 = vmatpush2.msra.mxu0 0.0
    %2885 = vmatprep.subr.mxu0 0.0
    %2886 = vmatpush2.msra.mxu0 0.0
    %2887 = vmatprep.subr.mxu0 0.0
    %2888 = vmatpush2.msra.mxu0 0.0
    %2889 = vmatprep.subr.mxu0 0.0
    %2890 = vmatpush2.msra.mxu0 0.0
    %2891 = vmatprep.subr.mxu0 0.0
    %2892 = vmatpush2.msra.mxu0 0.0
    %2893 = vmatprep.mubr.f32.mxu0 0.0
    %2894 = vmatmul.mubr.f32.gmra.mxu0 %v2105
    %v2895 = vpop.f32.mrf.mxu0
    %v2896 = vadd.f32 %v2828, %v2895
    %v2897 = vpop.f32.mrf.mxu0
    %2898 = vdwg.mxu0
    %v2899 = vadd.f32 %v2896, %v1111
    %v2900 = vxor.u32 %v2683, 2147483648
    %v2901 = vmul.f32 %v2900, 1.442695
    %v2902 = vpow.pop %v2901
    %v2903 = vadd.f32 %v2902, 1.0
    %v2904 = vrcp.pop %v2903
    %v2905 = vmul.f32 1.0, %v2904
    %v2906 = vxor.u32 %v2755, 2147483648
    %v2907 = vmul.f32 %v2906, 1.442695
    %v2908 = vpow.pop %v2907
    %v2909 = vadd.f32 %v2908, 1.0
    %v2910 = vrcp.pop %v2909
    %v2911 = vmul.f32 1.0, %v2910
    %v2912 = vtanh.pop %v2827
    %v2913 = vxor.u32 %v2899, 2147483648
    %v2914 = vmul.f32 %v2913, 1.442695
    %v2915 = vpow.pop %v2914
    %v2916 = vadd.f32 %v2915, 1.0
    %v2917 = vrcp.pop %v2916
    %v2918 = vmul.f32 1.0, %v2917
    %v2919 = vmul.f32 %v2911, %v2028
    %v2920 = vmul.f32 %v2905, %v2912
    %v2921 = vadd.f32 %v2919, %v2920
    %v2922 = vtanh.pop %v2921
    %v2923 = vmul.f32 %v2918, %v2922
    %v2925 = vsel %vm210, %v2921, 0
    %2927 = vmatprep.subr.mxu0 0.0
    %2928 = vmatpush1.msra.mxu0 0.0
    %2929 = vmatprep.subr.mxu0 0.0
    %2930 = vmatpush1.msra.mxu0 0.0
    %2931 = vmatprep.subr.mxu0 0.0
    %2932 = vmatpush1.msra.mxu0 0.0
    %2933 = vmatprep.subr.mxu0 0.0
    %2934 = vmatpush1.msra.mxu0 0.0
    %2935 = vmatprep.subr.mxu0 0.0
    %2936 = vmatpush1.msra.mxu0 0.0
    %2937 = vmatprep.subr.mxu0 0.0
    %2938 = vmatpush1.msra.mxu0 0.0
    %2939 = vmatprep.subr.mxu0 0.0
    %2940 = vmatpush1.msra.mxu0 0.0
    %2941 = vmatprep.subr.mxu0 0.0
    %2942 = vmatpush1.msra.mxu0 0.0
    %2943 = vmatprep.subr.mxu0 0.0
    %2944 = vmatpush1.msra.mxu0 0.0
    %2945 = vmatprep.subr.mxu0 0.0
    %2946 = vmatpush1.msra.mxu0 0.0
    %2947 = vmatprep.subr.mxu0 0.0
    %2948 = vmatpush1.msra.mxu0 0.0
    %2949 = vmatprep.subr.mxu0 0.0
    %2950 = vmatpush1.msra.mxu0 0.0
    %2951 = vmatprep.subr.mxu0 0.0
    %2952 = vmatpush1.msra.mxu0 %v92
    %2953 = vmatprep.subr.mxu0 0.0
    %2954 = vmatpush1.msra.mxu0 %v91
    %2955 = vmatprep.subr.mxu0 0.0
    %2956 = vmatpush1.msra.mxu0 %v90
    %2957 = vmatprep.subr.mxu0 0.0
    %2958 = vmatpush1.msra.mxu0 %v89
    %2959 = vmatprep.subr.mxu0 0.0
    %2960 = vmatpush2.msra.mxu0 0.0
    %2961 = vmatprep.subr.mxu0 0.0
    %2962 = vmatpush2.msra.mxu0 0.0
    %2963 = vmatprep.subr.mxu0 0.0
    %2964 = vmatpush2.msra.mxu0 0.0
    %2965 = vmatprep.subr.mxu0 0.0
    %2966 = vmatpush2.msra.mxu0 0.0
    %2967 = vmatprep.subr.mxu0 0.0
    %2968 = vmatpush2.msra.mxu0 0.0
    %2969 = vmatprep.subr.mxu0 0.0
    %2970 = vmatpush2.msra.mxu0 0.0
    %2971 = vmatprep.subr.mxu0 0.0
    %2972 = vmatpush2.msra.mxu0 0.0
    %2973 = vmatprep.subr.mxu0 0.0
    %2974 = vmatpush2.msra.mxu0 0.0
    %2975 = vmatprep.subr.mxu0 0.0
    %2976 = vmatpush2.msra.mxu0 0.0
    %2977 = vmatprep.subr.mxu0 0.0
    %2978 = vmatpush2.msra.mxu0 0.0
    %2979 = vmatprep.subr.mxu0 0.0
    %2980 = vmatpush2.msra.mxu0 0.0
    %2981 = vmatprep.subr.mxu0 0.0
    %2982 = vmatpush2.msra.mxu0 0.0
    %2983 = vmatprep.subr.mxu0 0.0
    %2984 = vmatpush2.msra.mxu0 0.0
    %2985 = vmatprep.subr.mxu0 0.0
    %2986 = vmatpush2.msra.mxu0 0.0
    %2987 = vmatprep.subr.mxu0 0.0
    %2988 = vmatpush2.msra.mxu0 0.0
    %2989 = vmatprep.subr.mxu0 0.0
    %2990 = vmatpush2.msra.mxu0 0.0
    %2991 = vmatprep.mubr.f32.mxu0 0.0
    %2992 = vmatmul.mubr.f32.gmra.mxu0 %v2925
    %v2993 = vpop.f32.mrf.mxu0
    %v2994 = vadd.f32 0.0, %v2993
    %v2995 = vpop.f32.mrf.mxu0
    %2996 = vdwg.mxu0
    %v2998 = vsel %vm210, %v2923, 0
    %3000 = vmatprep.subr.mxu0 0.0
    %3001 = vmatpush1.msra.mxu0 0.0
    %3002 = vmatprep.subr.mxu0 0.0
    %3003 = vmatpush1.msra.mxu0 0.0
    %3004 = vmatprep.subr.mxu0 0.0
    %3005 = vmatpush1.msra.mxu0 0.0
    %3006 = vmatprep.subr.mxu0 0.0
    %3007 = vmatpush1.msra.mxu0 0.0
    %3008 = vmatprep.subr.mxu0 0.0
    %3009 = vmatpush1.msra.mxu0 0.0
    %3010 = vmatprep.subr.mxu0 0.0
    %3011 = vmatpush1.msra.mxu0 0.0
    %3012 = vmatprep.subr.mxu0 0.0
    %3013 = vmatpush1.msra.mxu0 0.0
    %3014 = vmatprep.subr.mxu0 0.0
    %3015 = vmatpush1.msra.mxu0 0.0
    %3016 = vmatprep.subr.mxu0 0.0
    %3017 = vmatpush1.msra.mxu0 0.0
    %3018 = vmatprep.subr.mxu0 0.0
    %3019 = vmatpush1.msra.mxu0 0.0
    %3020 = vmatprep.subr.mxu0 0.0
    %3021 = vmatpush1.msra.mxu0 0.0
    %3022 = vmatprep.subr.mxu0 0.0
    %3023 = vmatpush1.msra.mxu0 0.0
    %3024 = vmatprep.subr.mxu0 0.0
    %3025 = vmatpush1.msra.mxu0 %v88
    %3026 = vmatprep.subr.mxu0 0.0
    %3027 = vmatpush1.msra.mxu0 %v87
    %3028 = vmatprep.subr.mxu0 0.0
    %3029 = vmatpush1.msra.mxu0 %v86
    %3030 = vmatprep.subr.mxu0 0.0
    %3031 = vmatpush1.msra.mxu0 %v85
    %3032 = vmatprep.subr.mxu0 0.0
    %3033 = vmatpush2.msra.mxu0 0.0
    %3034 = vmatprep.subr.mxu0 0.0
    %3035 = vmatpush2.msra.mxu0 0.0
    %3036 = vmatprep.subr.mxu0 0.0
    %3037 = vmatpush2.msra.mxu0 0.0
    %3038 = vmatprep.subr.mxu0 0.0
    %3039 = vmatpush2.msra.mxu0 0.0
    %3040 = vmatprep.subr.mxu0 0.0
    %3041 = vmatpush2.msra.mxu0 0.0
    %3042 = vmatprep.subr.mxu0 0.0
    %3043 = vmatpush2.msra.mxu0 0.0
    %3044 = vmatprep.subr.mxu0 0.0
    %3045 = vmatpush2.msra.mxu0 0.0
    %3046 = vmatprep.subr.mxu0 0.0
    %3047 = vmatpush2.msra.mxu0 0.0
    %3048 = vmatprep.subr.mxu0 0.0
    %3049 = vmatpush2.msra.mxu0 0.0
    %3050 = vmatprep.subr.mxu0 0.0
    %3051 = vmatpush2.msra.mxu0 0.0
    %3052 = vmatprep.subr.mxu0 0.0
    %3053 = vmatpush2.msra.mxu0 0.0
    %3054 = vmatprep.subr.mxu0 0.0
    %3055 = vmatpush2.msra.mxu0 0.0
    %3056 = vmatprep.subr.mxu0 0.0
    %3057 = vmatpush2.msra.mxu0 0.0
    %3058 = vmatprep.subr.mxu0 0.0
    %3059 = vmatpush2.msra.mxu0 0.0
    %3060 = vmatprep.subr.mxu0 0.0
    %3061 = vmatpush2.msra.mxu0 0.0
    %3062 = vmatprep.subr.mxu0 0.0
    %3063 = vmatpush2.msra.mxu0 0.0
    %3064 = vmatprep.mubr.f32.mxu0 0.0
    %3065 = vmatmul.mubr.f32.gmra.mxu0 %v2998
    %v3066 = vpop.f32.mrf.mxu0
    %v3067 = vadd.f32 %v2994, %v3066
    %v3068 = vpop.f32.mrf.mxu0
    %3069 = vdwg.mxu0
    %v3072 = vunpack.c.l.s4 1966171168
    %v3073 = vunpack.c.0.s8 %v3072
    %v3074 = vlaneseq
    %v3075 = vshrl.u32 %v3074, 7
    %v3076 = vsub.s32 %v3073, %v3075
    %v3077 = vrot.slane %v3067, %v3076
    %v3078 = vcombine.high %v3077, %v3077
    %v3080 = vunpack.c.l.s4 1966171168
    %v3081 = vunpack.c.0.s8 %v3080
    %v3082 = vlaneseq
    %v3083 = vshrl.u32 %v3082, 7
    %v3084 = vsub.s32 %v3081, %v3083
    %v3085 = vrot.slane %v3077, %v3084
    %v3087 = vunpack.c.l.s4 1966171168
    %v3088 = vunpack.c.0.s8 %v3087
    %v3089 = vlaneseq
    %v3090 = vshrl.u32 %v3089, 7
    %v3091 = vsub.s32 %v3088, %v3090
    %v3092 = vrot.slane %v3078, %v3091
    %v3093 = vlaneseq
    %v3094 = vshrl.u32 %v3093, 7
    %v3095 = vsub.s32 0, %v3094
    %v3096 = vrot.slane %v3085, %v3095
    %v3097 = vlaneseq
    %v3098 = vshrl.u32 %v3097, 7
    %v3099 = vsub.s32 0, %v3098
    %v3100 = vrot.slane %v3092, %v3099
    %v3103 = vadd.f32 %v198, %v3096
    %v3104 = vadd.f32 %v203, %v3100
    %v3105 = vtanh.pop %v3103
    %v3106 = vtanh.pop %v3104
    %v3108 = vsel %vm124, %v3105, 0
    %3110 = vmatprep.subr.mxu0 0.0
    %3111 = vmatpush1.xpose.msra.mxu0 0.0
    %3112 = vmatprep.subr.mxu0 0.0
    %3113 = vmatpush1.xpose.msra.mxu0 0.0
    %3114 = vmatprep.subr.mxu0 0.0
    %3115 = vmatpush1.xpose.msra.mxu0 0.0
    %3116 = vmatprep.subr.mxu0 0.0
    %3117 = vmatpush1.xpose.msra.mxu0 0.0
    %3118 = vmatprep.subr.mxu0 0.0
    %3119 = vmatpush1.xpose.msra.mxu0 0.0
    %3120 = vmatprep.subr.mxu0 0.0
    %3121 = vmatpush1.xpose.msra.mxu0 0.0
    %3122 = vmatprep.subr.mxu0 0.0
    %3123 = vmatpush1.xpose.msra.mxu0 0.0
    %3124 = vmatprep.subr.mxu0 0.0
    %3125 = vmatpush1.xpose.msra.mxu0 0.0
    %3126 = vmatprep.subr.mxu0 0.0
    %3127 = vmatpush1.xpose.msra.mxu0 0.0
    %3128 = vmatprep.subr.mxu0 0.0
    %3129 = vmatpush1.xpose.msra.mxu0 0.0
    %3130 = vmatprep.subr.mxu0 0.0
    %3131 = vmatpush1.xpose.msra.mxu0 0.0
    %3132 = vmatprep.subr.mxu0 0.0
    %3133 = vmatpush1.xpose.msra.mxu0 0.0
    %3134 = vmatprep.subr.mxu0 0.0
    %3135 = vmatpush1.xpose.msra.mxu0 0.0
    %3136 = vmatprep.subr.mxu0 0.0
    %3137 = vmatpush1.xpose.msra.mxu0 0.0
    %3138 = vmatprep.subr.mxu0 0.0
    %3139 = vmatpush1.xpose.msra.mxu0 0.0
    %3140 = vmatprep.subr.mxu0 0.0
    %3141 = vmatpush1.xpose.msra.mxu0 %v3108
    %3142 = vmatprep.subr.mxu0 0.0
    %3143 = vmatpush2.xpose.msra.mxu0 0.0
    %3144 = vmatprep.subr.mxu0 0.0
    %3145 = vmatpush2.xpose.msra.mxu0 0.0
    %3146 = vmatprep.subr.mxu0 0.0
    %3147 = vmatpush2.xpose.msra.mxu0 0.0
    %3148 = vmatprep.subr.mxu0 0.0
    %3149 = vmatpush2.xpose.msra.mxu0 0.0
    %3150 = vmatprep.subr.mxu0 0.0
    %3151 = vmatpush2.xpose.msra.mxu0 0.0
    %3152 = vmatprep.subr.mxu0 0.0
    %3153 = vmatpush2.xpose.msra.mxu0 0.0
    %3154 = vmatprep.subr.mxu0 0.0
    %3155 = vmatpush2.xpose.msra.mxu0 0.0
    %3156 = vmatprep.subr.mxu0 0.0
    %3157 = vmatpush2.xpose.msra.mxu0 0.0
    %3158 = vmatprep.subr.mxu0 0.0
    %3159 = vmatpush2.xpose.msra.mxu0 0.0
    %3160 = vmatprep.subr.mxu0 0.0
    %3161 = vmatpush2.xpose.msra.mxu0 0.0
    %3162 = vmatprep.subr.mxu0 0.0
    %3163 = vmatpush2.xpose.msra.mxu0 0.0
    %3164 = vmatprep.subr.mxu0 0.0
    %3165 = vmatpush2.xpose.msra.mxu0 0.0
    %3166 = vmatprep.subr.mxu0 0.0
    %3167 = vmatpush2.xpose.msra.mxu0 0.0
    %3168 = vmatprep.subr.mxu0 0.0
    %3169 = vmatpush2.xpose.msra.mxu0 0.0
    %3170 = vmatprep.subr.mxu0 0.0
    %3171 = vmatpush2.xpose.msra.mxu0 0.0
    %3172 = vmatprep.subr.mxu0 0.0
    %3173 = vmatpush2.xpose.msra.mxu0 0.0
    %3174 = vmatprep.mubr.f32.mxu0 0.0
    %3175 = vmatmul.mubr.f32.gmra.mxu0 %v393
    %v3176 = vpop.f32.mrf.mxu0
    %v3177 = vadd.f32 %v391, %v3176
    %v3178 = vpop.f32.mrf.mxu0
    %3179 = vdwg.mxu0
    %v3181 = vsel %vm124, %v3106, 0
    %3183 = vmatprep.subr.mxu0 0.0
    %3184 = vmatpush1.xpose.msra.mxu0 0.0
    %3185 = vmatprep.subr.mxu0 0.0
    %3186 = vmatpush1.xpose.msra.mxu0 0.0
    %3187 = vmatprep.subr.mxu0 0.0
    %3188 = vmatpush1.xpose.msra.mxu0 0.0
    %3189 = vmatprep.subr.mxu0 0.0
    %3190 = vmatpush1.xpose.msra.mxu0 0.0
    %3191 = vmatprep.subr.mxu0 0.0
    %3192 = vmatpush1.xpose.msra.mxu0 0.0
    %3193 = vmatprep.subr.mxu0 0.0
    %3194 = vmatpush1.xpose.msra.mxu0 0.0
    %3195 = vmatprep.subr.mxu0 0.0
    %3196 = vmatpush1.xpose.msra.mxu0 0.0
    %3197 = vmatprep.subr.mxu0 0.0
    %3198 = vmatpush1.xpose.msra.mxu0 0.0
    %3199 = vmatprep.subr.mxu0 0.0
    %3200 = vmatpush1.xpose.msra.mxu0 0.0
    %3201 = vmatprep.subr.mxu0 0.0
    %3202 = vmatpush1.xpose.msra.mxu0 0.0
    %3203 = vmatprep.subr.mxu0 0.0
    %3204 = vmatpush1.xpose.msra.mxu0 0.0
    %3205 = vmatprep.subr.mxu0 0.0
    %3206 = vmatpush1.xpose.msra.mxu0 0.0
    %3207 = vmatprep.subr.mxu0 0.0
    %3208 = vmatpush1.xpose.msra.mxu0 0.0
    %3209 = vmatprep.subr.mxu0 0.0
    %3210 = vmatpush1.xpose.msra.mxu0 0.0
    %3211 = vmatprep.subr.mxu0 0.0
    %3212 = vmatpush1.xpose.msra.mxu0 0.0
    %3213 = vmatprep.subr.mxu0 0.0
    %3214 = vmatpush1.xpose.msra.mxu0 %v3181
    %3215 = vmatprep.subr.mxu0 0.0
    %3216 = vmatpush2.xpose.msra.mxu0 0.0
    %3217 = vmatprep.subr.mxu0 0.0
    %3218 = vmatpush2.xpose.msra.mxu0 0.0
    %3219 = vmatprep.subr.mxu0 0.0
    %3220 = vmatpush2.xpose.msra.mxu0 0.0
    %3221 = vmatprep.subr.mxu0 0.0
    %3222 = vmatpush2.xpose.msra.mxu0 0.0
    %3223 = vmatprep.subr.mxu0 0.0
    %3224 = vmatpush2.xpose.msra.mxu0 0.0
    %3225 = vmatprep.subr.mxu0 0.0
    %3226 = vmatpush2.xpose.msra.mxu0 0.0
    %3227 = vmatprep.subr.mxu0 0.0
    %3228 = vmatpush2.xpose.msra.mxu0 0.0
    %3229 = vmatprep.subr.mxu0 0.0
    %3230 = vmatpush2.xpose.msra.mxu0 0.0
    %3231 = vmatprep.subr.mxu0 0.0
    %3232 = vmatpush2.xpose.msra.mxu0 0.0
    %3233 = vmatprep.subr.mxu0 0.0
    %3234 = vmatpush2.xpose.msra.mxu0 0.0
    %3235 = vmatprep.subr.mxu0 0.0
    %3236 = vmatpush2.xpose.msra.mxu0 0.0
    %3237 = vmatprep.subr.mxu0 0.0
    %3238 = vmatpush2.xpose.msra.mxu0 0.0
    %3239 = vmatprep.subr.mxu0 0.0
    %3240 = vmatpush2.xpose.msra.mxu0 0.0
    %3241 = vmatprep.subr.mxu0 0.0
    %3242 = vmatpush2.xpose.msra.mxu0 0.0
    %3243 = vmatprep.subr.mxu0 0.0
    %3244 = vmatpush2.xpose.msra.mxu0 0.0
    %3245 = vmatprep.subr.mxu0 0.0
    %3246 = vmatpush2.xpose.msra.mxu0 0.0
    %3247 = vmatprep.mubr.f32.mxu0 0.0
    %3248 = vmatmul.mubr.f32.gmra.mxu0 %v393
    %v3249 = vpop.f32.mrf.mxu0
    %v3250 = vadd.f32 %v391, %v3249
    %v3251 = vpop.f32.mrf.mxu0
    %3252 = vdwg.mxu0
    %v3253 = vsel %vm541, %v3177, -inf
    %3254 = vmax.xlane.f32.xlu0 %v3253
    %v3255 = vpop.xlane.xlu0 %3254
    %v3256 = vsel %vm541, %v3250, -inf
    %3257 = vmax.xlane.f32.xlu0 %v3256
    %v3258 = vpop.xlane.xlu0 %3257
    %v3259 = vsub.f32 %v3177, %v3255
    %v3260 = vsub.f32 %v3250, %v3258
    %v3261 = vmul.f32 %v3259, 1.442695
    %v3262 = vpow.pop %v3261
    %v3263 = vmul.f32 %v3260, 1.442695
    %v3264 = vpow.pop %v3263
    %v3265 = vsel %vm541, %v3262, 0.0
    %3266 = vadd.xlane.f32.xlu0 %v3265
    %v3267 = vpop.xlane.xlu0 %3266
    %v3268 = vsel %vm541, %v3264, 0.0
    %3269 = vadd.xlane.f32.xlu0 %v3268
    %v3270 = vpop.xlane.xlu0 %3269
    %v3271 = vrcp.pop %v3267
    %v3272 = vmul.f32 %v3262, %v3271
    %v3273 = vrcp.pop %v3270
    %v3274 = vmul.f32 %v3264, %v3273
    %v3276 = vsel %vm564, %v3272, 0
    %3278 = vmatprep.subr.mxu0 0.0
    %3279 = vmatpush1.msra.mxu0 0.0
    %3280 = vmatprep.subr.mxu0 0.0
    %3281 = vmatpush1.msra.mxu0 0.0
    %3282 = vmatprep.subr.mxu0 0.0
    %3283 = vmatpush1.msra.mxu0 0.0
    %3284 = vmatprep.subr.mxu0 0.0
    %3285 = vmatpush1.msra.mxu0 0.0
    %3286 = vmatprep.subr.mxu0 0.0
    %3287 = vmatpush1.msra.mxu0 0.0
    %3288 = vmatprep.subr.mxu0 0.0
    %3289 = vmatpush1.msra.mxu0 0.0
    %3290 = vmatprep.subr.mxu0 0.0
    %3291 = vmatpush1.msra.mxu0 0.0
    %3292 = vmatprep.subr.mxu0 0.0
    %3293 = vmatpush1.msra.mxu0 0.0
    %3294 = vmatprep.subr.mxu0 0.0
    %3295 = vmatpush1.msra.mxu0 0.0
    %3296 = vmatprep.subr.mxu0 0.0
    %3297 = vmatpush1.msra.mxu0 0.0
    %3298 = vmatprep.subr.mxu0 0.0
    %3299 = vmatpush1.msra.mxu0 0.0
    %3300 = vmatprep.subr.mxu0 0.0
    %3301 = vmatpush1.msra.mxu0 0.0
    %3302 = vmatprep.subr.mxu0 0.0
    %3303 = vmatpush1.msra.mxu0 0.0
    %3304 = vmatprep.subr.mxu0 0.0
    %3305 = vmatpush1.msra.mxu0 0.0
    %3306 = vmatprep.subr.mxu0 0.0
    %3307 = vmatpush1.msra.mxu0 0.0
    %3308 = vmatprep.subr.mxu0 0.0
    %3309 = vmatpush1.msra.mxu0 %v117
    %3310 = vmatprep.subr.mxu0 0.0
    %3311 = vmatpush2.msra.mxu0 0.0
    %3312 = vmatprep.subr.mxu0 0.0
    %3313 = vmatpush2.msra.mxu0 0.0
    %3314 = vmatprep.subr.mxu0 0.0
    %3315 = vmatpush2.msra.mxu0 0.0
    %3316 = vmatprep.subr.mxu0 0.0
    %3317 = vmatpush2.msra.mxu0 0.0
    %3318 = vmatprep.subr.mxu0 0.0
    %3319 = vmatpush2.msra.mxu0 0.0
    %3320 = vmatprep.subr.mxu0 0.0
    %3321 = vmatpush2.msra.mxu0 0.0
    %3322 = vmatprep.subr.mxu0 0.0
    %3323 = vmatpush2.msra.mxu0 0.0
    %3324 = vmatprep.subr.mxu0 0.0
    %3325 = vmatpush2.msra.mxu0 0.0
    %3326 = vmatprep.subr.mxu0 0.0
    %3327 = vmatpush2.msra.mxu0 0.0
    %3328 = vmatprep.subr.mxu0 0.0
    %3329 = vmatpush2.msra.mxu0 0.0
    %3330 = vmatprep.subr.mxu0 0.0
    %3331 = vmatpush2.msra.mxu0 0.0
    %3332 = vmatprep.subr.mxu0 0.0
    %3333 = vmatpush2.msra.mxu0 0.0
    %3334 = vmatprep.subr.mxu0 0.0
    %3335 = vmatpush2.msra.mxu0 0.0
    %3336 = vmatprep.subr.mxu0 0.0
    %3337 = vmatpush2.msra.mxu0 0.0
    %3338 = vmatprep.subr.mxu0 0.0
    %3339 = vmatpush2.msra.mxu0 0.0
    %3340 = vmatprep.subr.mxu0 0.0
    %3341 = vmatpush2.msra.mxu0 0.0
    %3342 = vmatprep.mubr.f32.mxu0 0.0
    %3343 = vmatmul.mubr.f32.gmra.mxu0 %v3276
    %v3344 = vpop.f32.mrf.mxu0
    %v3345 = vadd.f32 0.0, %v3344
    %v3346 = vpop.f32.mrf.mxu0
    %3347 = vdwg.mxu0
    %v3349 = vsel %vm564, %v3274, 0
    %3351 = vmatprep.subr.mxu0 0.0
    %3352 = vmatpush1.msra.mxu0 0.0
    %3353 = vmatprep.subr.mxu0 0.0
    %3354 = vmatpush1.msra.mxu0 0.0
    %3355 = vmatprep.subr.mxu0 0.0
    %3356 = vmatpush1.msra.mxu0 0.0
    %3357 = vmatprep.subr.mxu0 0.0
    %3358 = vmatpush1.msra.mxu0 0.0
    %3359 = vmatprep.subr.mxu0 0.0
    %3360 = vmatpush1.msra.mxu0 0.0
    %3361 = vmatprep.subr.mxu0 0.0
    %3362 = vmatpush1.msra.mxu0 0.0
    %3363 = vmatprep.subr.mxu0 0.0
    %3364 = vmatpush1.msra.mxu0 0.0
    %3365 = vmatprep.subr.mxu0 0.0
    %3366 = vmatpush1.msra.mxu0 0.0
    %3367 = vmatprep.subr.mxu0 0.0
    %3368 = vmatpush1.msra.mxu0 0.0
    %3369 = vmatprep.subr.mxu0 0.0
    %3370 = vmatpush1.msra.mxu0 0.0
    %3371 = vmatprep.subr.mxu0 0.0
    %3372 = vmatpush1.msra.mxu0 0.0
    %3373 = vmatprep.subr.mxu0 0.0
    %3374 = vmatpush1.msra.mxu0 0.0
    %3375 = vmatprep.subr.mxu0 0.0
    %3376 = vmatpush1.msra.mxu0 0.0
    %3377 = vmatprep.subr.mxu0 0.0
    %3378 = vmatpush1.msra.mxu0 0.0
    %3379 = vmatprep.subr.mxu0 0.0
    %3380 = vmatpush1.msra.mxu0 0.0
    %3381 = vmatprep.subr.mxu0 0.0
    %3382 = vmatpush1.msra.mxu0 %v118
    %3383 = vmatprep.subr.mxu0 0.0
    %3384 = vmatpush2.msra.mxu0 0.0
    %3385 = vmatprep.subr.mxu0 0.0
    %3386 = vmatpush2.msra.mxu0 0.0
    %3387 = vmatprep.subr.mxu0 0.0
    %3388 = vmatpush2.msra.mxu0 0.0
    %3389 = vmatprep.subr.mxu0 0.0
    %3390 = vmatpush2.msra.mxu0 0.0
    %3391 = vmatprep.subr.mxu0 0.0
    %3392 = vmatpush2.msra.mxu0 0.0
    %3393 = vmatprep.subr.mxu0 0.0
    %3394 = vmatpush2.msra.mxu0 0.0
    %3395 = vmatprep.subr.mxu0 0.0
    %3396 = vmatpush2.msra.mxu0 0.0
    %3397 = vmatprep.subr.mxu0 0.0
    %3398 = vmatpush2.msra.mxu0 0.0
    %3399 = vmatprep.subr.mxu0 0.0
    %3400 = vmatpush2.msra.mxu0 0.0
    %3401 = vmatprep.subr.mxu0 0.0
    %3402 = vmatpush2.msra.mxu0 0.0
    %3403 = vmatprep.subr.mxu0 0.0
    %3404 = vmatpush2.msra.mxu0 0.0
    %3405 = vmatprep.subr.mxu0 0.0
    %3406 = vmatpush2.msra.mxu0 0.0
    %3407 = vmatprep.subr.mxu0 0.0
    %3408 = vmatpush2.msra.mxu0 0.0
    %3409 = vmatprep.subr.mxu0 0.0
    %3410 = vmatpush2.msra.mxu0 0.0
    %3411 = vmatprep.subr.mxu0 0.0
    %3412 = vmatpush2.msra.mxu0 0.0
    %3413 = vmatprep.subr.mxu0 0.0
    %3414 = vmatpush2.msra.mxu0 0.0
    %3415 = vmatprep.mubr.f32.mxu0 0.0
    %3416 = vmatmul.mubr.f32.gmra.mxu0 %v3349
    %v3417 = vpop.f32.mrf.mxu0
    %v3418 = vadd.f32 0.0, %v3417
    %v3419 = vpop.f32.mrf.mxu0
    %3420 = vdwg.mxu0
    %v3423 = vrot.slane %v3418, 7
    %v3424 = vsel %vm714, %v3423, %v3345
    %3425 = vrot.lane.b32.xlu0 %v209, 125
    %v3426 = vpop.permute.xlu0 %3425
    %v3428 = vsel %vm124, %v3424, 0
    %3430 = vmatprep.subr.mxu0 0.0
    %3431 = vmatpush1.msra.mxu0 0.0
    %3432 = vmatprep.subr.mxu0 0.0
    %3433 = vmatpush1.msra.mxu0 0.0
    %3434 = vmatprep.subr.mxu0 0.0
    %3435 = vmatpush1.msra.mxu0 0.0
    %3436 = vmatprep.subr.mxu0 0.0
    %3437 = vmatpush1.msra.mxu0 0.0
    %3438 = vmatprep.subr.mxu0 0.0
    %3439 = vmatpush1.msra.mxu0 0.0
    %3440 = vmatprep.subr.mxu0 0.0
    %3441 = vmatpush1.msra.mxu0 0.0
    %3442 = vmatprep.subr.mxu0 0.0
    %3443 = vmatpush1.msra.mxu0 0.0
    %3444 = vmatprep.subr.mxu0 0.0
    %3445 = vmatpush1.msra.mxu0 0.0
    %3446 = vmatprep.subr.mxu0 0.0
    %3447 = vmatpush1.msra.mxu0 0.0
    %3448 = vmatprep.subr.mxu0 0.0
    %3449 = vmatpush1.msra.mxu0 0.0
    %3450 = vmatprep.subr.mxu0 0.0
    %3451 = vmatpush1.msra.mxu0 0.0
    %3452 = vmatprep.subr.mxu0 0.0
    %3453 = vmatpush1.msra.mxu0 0.0
    %3454 = vmatprep.subr.mxu0 0.0
    %3455 = vmatpush1.msra.mxu0 0.0
    %3456 = vmatprep.subr.mxu0 0.0
    %3457 = vmatpush1.msra.mxu0 0.0
    %3458 = vmatprep.subr.mxu0 0.0
    %3459 = vmatpush1.msra.mxu0 %v106
    %3460 = vmatprep.subr.mxu0 0.0
    %3461 = vmatpush1.msra.mxu0 %v105
    %3462 = vmatprep.subr.mxu0 0.0
    %3463 = vmatpush2.msra.mxu0 0.0
    %3464 = vmatprep.subr.mxu0 0.0
    %3465 = vmatpush2.msra.mxu0 0.0
    %3466 = vmatprep.subr.mxu0 0.0
    %3467 = vmatpush2.msra.mxu0 0.0
    %3468 = vmatprep.subr.mxu0 0.0
    %3469 = vmatpush2.msra.mxu0 0.0
    %3470 = vmatprep.subr.mxu0 0.0
    %3471 = vmatpush2.msra.mxu0 0.0
    %3472 = vmatprep.subr.mxu0 0.0
    %3473 = vmatpush2.msra.mxu0 0.0
    %3474 = vmatprep.subr.mxu0 0.0
    %3475 = vmatpush2.msra.mxu0 0.0
    %3476 = vmatprep.subr.mxu0 0.0
    %3477 = vmatpush2.msra.mxu0 0.0
    %3478 = vmatprep.subr.mxu0 0.0
    %3479 = vmatpush2.msra.mxu0 0.0
    %3480 = vmatprep.subr.mxu0 0.0
    %3481 = vmatpush2.msra.mxu0 0.0
    %3482 = vmatprep.subr.mxu0 0.0
    %3483 = vmatpush2.msra.mxu0 0.0
    %3484 = vmatprep.subr.mxu0 0.0
    %3485 = vmatpush2.msra.mxu0 0.0
    %3486 = vmatprep.subr.mxu0 0.0
    %3487 = vmatpush2.msra.mxu0 0.0
    %3488 = vmatprep.subr.mxu0 0.0
    %3489 = vmatpush2.msra.mxu0 0.0
    %3490 = vmatprep.subr.mxu0 0.0
    %3491 = vmatpush2.msra.mxu0 0.0
    %3492 = vmatprep.subr.mxu0 0.0
    %3493 = vmatpush2.msra.mxu0 0.0
    %3494 = vmatprep.mubr.f32.mxu0 0.0
    %3495 = vmatmul.mubr.f32.gmra.mxu0 %v3428
    %v3496 = vpop.f32.mrf.mxu0
    %v3497 = vadd.f32 %v3426, %v3496
    %v3498 = vpop.f32.mrf.mxu0
    %3499 = vdwg.mxu0
    %3501 = vset.pattern.permute.xlu0 0
    %3502 = vperm.xlu0 %3501, %v3497
    %v3503 = vpop.permute.xlu0 %3502
    %v3505 = vmul.f32 %v3503, %v796
    %3506 = vmatprep.subr.mxu0 0.0
    %3507 = vmatpush1.msra.mxu0 0.0
    %3508 = vmatprep.subr.mxu0 0.0
    %3509 = vmatpush1.msra.mxu0 0.0
    %3510 = vmatprep.subr.mxu0 0.0
    %3511 = vmatpush1.msra.mxu0 0.0
    %3512 = vmatprep.subr.mxu0 0.0
    %3513 = vmatpush1.msra.mxu0 0.0
    %3514 = vmatprep.subr.mxu0 0.0
    %3515 = vmatpush1.msra.mxu0 0.0
    %3516 = vmatprep.subr.mxu0 0.0
    %3517 = vmatpush1.msra.mxu0 0.0
    %3518 = vmatprep.subr.mxu0 0.0
    %3519 = vmatpush1.msra.mxu0 0.0
    %3520 = vmatprep.subr.mxu0 0.0
    %3521 = vmatpush1.msra.mxu0 0.0
    %3522 = vmatprep.subr.mxu0 0.0
    %3523 = vmatpush1.msra.mxu0 0.0
    %3524 = vmatprep.subr.mxu0 0.0
    %3525 = vmatpush1.msra.mxu0 0.0
    %3526 = vmatprep.subr.mxu0 0.0
    %3527 = vmatpush1.msra.mxu0 0.0
    %3528 = vmatprep.subr.mxu0 0.0
    %3529 = vmatpush1.msra.mxu0 0.0
    %3530 = vmatprep.subr.mxu0 0.0
    %3531 = vmatpush1.msra.mxu0 %v72
    %3532 = vmatprep.subr.mxu0 0.0
    %3533 = vmatpush1.msra.mxu0 %v71
    %3534 = vmatprep.subr.mxu0 0.0
    %3535 = vmatpush1.msra.mxu0 %v70
    %3536 = vmatprep.subr.mxu0 0.0
    %3537 = vmatpush1.msra.mxu0 %v69
    %3538 = vmatprep.subr.mxu0 0.0
    %3539 = vmatpush2.msra.mxu0 0.0
    %3540 = vmatprep.subr.mxu0 0.0
    %3541 = vmatpush2.msra.mxu0 0.0
    %3542 = vmatprep.subr.mxu0 0.0
    %3543 = vmatpush2.msra.mxu0 0.0
    %3544 = vmatprep.subr.mxu0 0.0
    %3545 = vmatpush2.msra.mxu0 0.0
    %3546 = vmatprep.subr.mxu0 0.0
    %3547 = vmatpush2.msra.mxu0 0.0
    %3548 = vmatprep.subr.mxu0 0.0
    %3549 = vmatpush2.msra.mxu0 0.0
    %3550 = vmatprep.subr.mxu0 0.0
    %3551 = vmatpush2.msra.mxu0 0.0
    %3552 = vmatprep.subr.mxu0 0.0
    %3553 = vmatpush2.msra.mxu0 0.0
    %3554 = vmatprep.subr.mxu0 0.0
    %3555 = vmatpush2.msra.mxu0 0.0
    %3556 = vmatprep.subr.mxu0 0.0
    %3557 = vmatpush2.msra.mxu0 0.0
    %3558 = vmatprep.subr.mxu0 0.0
    %3559 = vmatpush2.msra.mxu0 0.0
    %3560 = vmatprep.subr.mxu0 0.0
    %3561 = vmatpush2.msra.mxu0 0.0
    %3562 = vmatprep.subr.mxu0 0.0
    %3563 = vmatpush2.msra.mxu0 0.0
    %3564 = vmatprep.subr.mxu0 0.0
    %3565 = vmatpush2.msra.mxu0 0.0
    %3566 = vmatprep.subr.mxu0 0.0
    %3567 = vmatpush2.msra.mxu0 0.0
    %3568 = vmatprep.subr.mxu0 0.0
    %3569 = vmatpush2.msra.mxu0 0.0
    %3570 = vmatprep.mubr.f32.mxu0 0.0
    %3571 = vmatmul.mubr.f32.gmra.mxu0 %v2998
    %v3572 = vpop.f32.mrf.mxu0
    %v3573 = vadd.f32 %v3505, %v3572
    %v3574 = vpop.f32.mrf.mxu0
    %3575 = vdwg.mxu0
    %v3576 = vadd.f32 %v3573, %v871
    %v3577 = vmul.f32 %v3503, %v876
    %3578 = vmatprep.subr.mxu0 0.0
    %3579 = vmatpush1.msra.mxu0 0.0
    %3580 = vmatprep.subr.mxu0 0.0
    %3581 = vmatpush1.msra.mxu0 0.0
    %3582 = vmatprep.subr.mxu0 0.0
    %3583 = vmatpush1.msra.mxu0 0.0
    %3584 = vmatprep.subr.mxu0 0.0
    %3585 = vmatpush1.msra.mxu0 0.0
    %3586 = vmatprep.subr.mxu0 0.0
    %3587 = vmatpush1.msra.mxu0 0.0
    %3588 = vmatprep.subr.mxu0 0.0
    %3589 = vmatpush1.msra.mxu0 0.0
    %3590 = vmatprep.subr.mxu0 0.0
    %3591 = vmatpush1.msra.mxu0 0.0
    %3592 = vmatprep.subr.mxu0 0.0
    %3593 = vmatpush1.msra.mxu0 0.0
    %3594 = vmatprep.subr.mxu0 0.0
    %3595 = vmatpush1.msra.mxu0 0.0
    %3596 = vmatprep.subr.mxu0 0.0
    %3597 = vmatpush1.msra.mxu0 0.0
    %3598 = vmatprep.subr.mxu0 0.0
    %3599 = vmatpush1.msra.mxu0 0.0
    %3600 = vmatprep.subr.mxu0 0.0
    %3601 = vmatpush1.msra.mxu0 0.0
    %3602 = vmatprep.subr.mxu0 0.0
    %3603 = vmatpush1.msra.mxu0 %v76
    %3604 = vmatprep.subr.mxu0 0.0
    %3605 = vmatpush1.msra.mxu0 %v75
    %3606 = vmatprep.subr.mxu0 0.0
    %3607 = vmatpush1.msra.mxu0 %v74
    %3608 = vmatprep.subr.mxu0 0.0
    %3609 = vmatpush1.msra.mxu0 %v73
    %3610 = vmatprep.subr.mxu0 0.0
    %3611 = vmatpush2.msra.mxu0 0.0
    %3612 = vmatprep.subr.mxu0 0.0
    %3613 = vmatpush2.msra.mxu0 0.0
    %3614 = vmatprep.subr.mxu0 0.0
    %3615 = vmatpush2.msra.mxu0 0.0
    %3616 = vmatprep.subr.mxu0 0.0
    %3617 = vmatpush2.msra.mxu0 0.0
    %3618 = vmatprep.subr.mxu0 0.0
    %3619 = vmatpush2.msra.mxu0 0.0
    %3620 = vmatprep.subr.mxu0 0.0
    %3621 = vmatpush2.msra.mxu0 0.0
    %3622 = vmatprep.subr.mxu0 0.0
    %3623 = vmatpush2.msra.mxu0 0.0
    %3624 = vmatprep.subr.mxu0 0.0
    %3625 = vmatpush2.msra.mxu0 0.0
    %3626 = vmatprep.subr.mxu0 0.0
    %3627 = vmatpush2.msra.mxu0 0.0
    %3628 = vmatprep.subr.mxu0 0.0
    %3629 = vmatpush2.msra.mxu0 0.0
    %3630 = vmatprep.subr.mxu0 0.0
    %3631 = vmatpush2.msra.mxu0 0.0
    %3632 = vmatprep.subr.mxu0 0.0
    %3633 = vmatpush2.msra.mxu0 0.0
    %3634 = vmatprep.subr.mxu0 0.0
    %3635 = vmatpush2.msra.mxu0 0.0
    %3636 = vmatprep.subr.mxu0 0.0
    %3637 = vmatpush2.msra.mxu0 0.0
    %3638 = vmatprep.subr.mxu0 0.0
    %3639 = vmatpush2.msra.mxu0 0.0
    %3640 = vmatprep.subr.mxu0 0.0
    %3641 = vmatpush2.msra.mxu0 0.0
    %3642 = vmatprep.mubr.f32.mxu0 0.0
    %3643 = vmatmul.mubr.f32.gmra.mxu0 %v2998
    %v3644 = vpop.f32.mrf.mxu0
    %v3645 = vadd.f32 %v3577, %v3644
    %v3646 = vpop.f32.mrf.mxu0
    %3647 = vdwg.mxu0
    %v3648 = vadd.f32 %v3645, %v951
    %v3649 = vmul.f32 %v3503, %v956
    %3650 = vmatprep.subr.mxu0 0.0
    %3651 = vmatpush1.msra.mxu0 0.0
    %3652 = vmatprep.subr.mxu0 0.0
    %3653 = vmatpush1.msra.mxu0 0.0
    %3654 = vmatprep.subr.mxu0 0.0
    %3655 = vmatpush1.msra.mxu0 0.0
    %3656 = vmatprep.subr.mxu0 0.0
    %3657 = vmatpush1.msra.mxu0 0.0
    %3658 = vmatprep.subr.mxu0 0.0
    %3659 = vmatpush1.msra.mxu0 0.0
    %3660 = vmatprep.subr.mxu0 0.0
    %3661 = vmatpush1.msra.mxu0 0.0
    %3662 = vmatprep.subr.mxu0 0.0
    %3663 = vmatpush1.msra.mxu0 0.0
    %3664 = vmatprep.subr.mxu0 0.0
    %3665 = vmatpush1.msra.mxu0 0.0
    %3666 = vmatprep.subr.mxu0 0.0
    %3667 = vmatpush1.msra.mxu0 0.0
    %3668 = vmatprep.subr.mxu0 0.0
    %3669 = vmatpush1.msra.mxu0 0.0
    %3670 = vmatprep.subr.mxu0 0.0
    %3671 = vmatpush1.msra.mxu0 0.0
    %3672 = vmatprep.subr.mxu0 0.0
    %3673 = vmatpush1.msra.mxu0 0.0
    %3674 = vmatprep.subr.mxu0 0.0
    %3675 = vmatpush1.msra.mxu0 %v80
    %3676 = vmatprep.subr.mxu0 0.0
    %3677 = vmatpush1.msra.mxu0 %v79
    %3678 = vmatprep.subr.mxu0 0.0
    %3679 = vmatpush1.msra.mxu0 %v78
    %3680 = vmatprep.subr.mxu0 0.0
    %3681 = vmatpush1.msra.mxu0 %v77
    %3682 = vmatprep.subr.mxu0 0.0
    %3683 = vmatpush2.msra.mxu0 0.0
    %3684 = vmatprep.subr.mxu0 0.0
    %3685 = vmatpush2.msra.mxu0 0.0
    %3686 = vmatprep.subr.mxu0 0.0
    %3687 = vmatpush2.msra.mxu0 0.0
    %3688 = vmatprep.subr.mxu0 0.0
    %3689 = vmatpush2.msra.mxu0 0.0
    %3690 = vmatprep.subr.mxu0 0.0
    %3691 = vmatpush2.msra.mxu0 0.0
    %3692 = vmatprep.subr.mxu0 0.0
    %3693 = vmatpush2.msra.mxu0 0.0
    %3694 = vmatprep.subr.mxu0 0.0
    %3695 = vmatpush2.msra.mxu0 0.0
    %3696 = vmatprep.subr.mxu0 0.0
    %3697 = vmatpush2.msra.mxu0 0.0
    %3698 = vmatprep.subr.mxu0 0.0
    %3699 = vmatpush2.msra.mxu0 0.0
    %3700 = vmatprep.subr.mxu0 0.0
    %3701 = vmatpush2.msra.mxu0 0.0
    %3702 = vmatprep.subr.mxu0 0.0
    %3703 = vmatpush2.msra.mxu0 0.0
    %3704 = vmatprep.subr.mxu0 0.0
    %3705 = vmatpush2.msra.mxu0 0.0
    %3706 = vmatprep.subr.mxu0 0.0
    %3707 = vmatpush2.msra.mxu0 0.0
    %3708 = vmatprep.subr.mxu0 0.0
    %3709 = vmatpush2.msra.mxu0 0.0
    %3710 = vmatprep.subr.mxu0 0.0
    %3711 = vmatpush2.msra.mxu0 0.0
    %3712 = vmatprep.subr.mxu0 0.0
    %3713 = vmatpush2.msra.mxu0 0.0
    %3714 = vmatprep.mubr.f32.mxu0 0.0
    %3715 = vmatmul.mubr.f32.gmra.mxu0 %v2998
    %v3716 = vpop.f32.mrf.mxu0
    %v3717 = vadd.f32 %v3649, %v3716
    %v3718 = vpop.f32.mrf.mxu0
    %3719 = vdwg.mxu0
    %v3720 = vadd.f32 %v3717, %v1031
    %v3721 = vmul.f32 %v3503, %v1036
    %3722 = vmatprep.subr.mxu0 0.0
    %3723 = vmatpush1.msra.mxu0 0.0
    %3724 = vmatprep.subr.mxu0 0.0
    %3725 = vmatpush1.msra.mxu0 0.0
    %3726 = vmatprep.subr.mxu0 0.0
    %3727 = vmatpush1.msra.mxu0 0.0
    %3728 = vmatprep.subr.mxu0 0.0
    %3729 = vmatpush1.msra.mxu0 0.0
    %3730 = vmatprep.subr.mxu0 0.0
    %3731 = vmatpush1.msra.mxu0 0.0
    %3732 = vmatprep.subr.mxu0 0.0
    %3733 = vmatpush1.msra.mxu0 0.0
    %3734 = vmatprep.subr.mxu0 0.0
    %3735 = vmatpush1.msra.mxu0 0.0
    %3736 = vmatprep.subr.mxu0 0.0
    %3737 = vmatpush1.msra.mxu0 0.0
    %3738 = vmatprep.subr.mxu0 0.0
    %3739 = vmatpush1.msra.mxu0 0.0
    %3740 = vmatprep.subr.mxu0 0.0
    %3741 = vmatpush1.msra.mxu0 0.0
    %3742 = vmatprep.subr.mxu0 0.0
    %3743 = vmatpush1.msra.mxu0 0.0
    %3744 = vmatprep.subr.mxu0 0.0
    %3745 = vmatpush1.msra.mxu0 0.0
    %3746 = vmatprep.subr.mxu0 0.0
    %3747 = vmatpush1.msra.mxu0 %v84
    %3748 = vmatprep.subr.mxu0 0.0
    %3749 = vmatpush1.msra.mxu0 %v83
    %3750 = vmatprep.subr.mxu0 0.0
    %3751 = vmatpush1.msra.mxu0 %v82
    %3752 = vmatprep.subr.mxu0 0.0
    %3753 = vmatpush1.msra.mxu0 %v81
    %3754 = vmatprep.subr.mxu0 0.0
    %3755 = vmatpush2.msra.mxu0 0.0
    %3756 = vmatprep.subr.mxu0 0.0
    %3757 = vmatpush2.msra.mxu0 0.0
    %3758 = vmatprep.subr.mxu0 0.0
    %3759 = vmatpush2.msra.mxu0 0.0
    %3760 = vmatprep.subr.mxu0 0.0
    %3761 = vmatpush2.msra.mxu0 0.0
    %3762 = vmatprep.subr.mxu0 0.0
    %3763 = vmatpush2.msra.mxu0 0.0
    %3764 = vmatprep.subr.mxu0 0.0
    %3765 = vmatpush2.msra.mxu0 0.0
    %3766 = vmatprep.subr.mxu0 0.0
    %3767 = vmatpush2.msra.mxu0 0.0
    %3768 = vmatprep.subr.mxu0 0.0
    %3769 = vmatpush2.msra.mxu0 0.0
    %3770 = vmatprep.subr.mxu0 0.0
    %3771 = vmatpush2.msra.mxu0 0.0
    %3772 = vmatprep.subr.mxu0 0.0
    %3773 = vmatpush2.msra.mxu0 0.0
    %3774 = vmatprep.subr.mxu0 0.0
    %3775 = vmatpush2.msra.mxu0 0.0
    %3776 = vmatprep.subr.mxu0 0.0
    %3777 = vmatpush2.msra.mxu0 0.0
    %3778 = vmatprep.subr.mxu0 0.0
    %3779 = vmatpush2.msra.mxu0 0.0
    %3780 = vmatprep.subr.mxu0 0.0
    %3781 = vmatpush2.msra.mxu0 0.0
    %3782 = vmatprep.subr.mxu0 0.0
    %3783 = vmatpush2.msra.mxu0 0.0
    %3784 = vmatprep.subr.mxu0 0.0
    %3785 = vmatpush2.msra.mxu0 0.0
    %3786 = vmatprep.mubr.f32.mxu0 0.0
    %3787 = vmatmul.mubr.f32.gmra.mxu0 %v2998
    %v3788 = vpop.f32.mrf.mxu0
    %v3789 = vadd.f32 %v3721, %v3788
    %v3790 = vpop.f32.mrf.mxu0
    %3791 = vdwg.mxu0
    %v3792 = vadd.f32 %v3789, %v1111
    %v3793 = vxor.u32 %v3576, 2147483648
    %v3794 = vmul.f32 %v3793, 1.442695
    %v3795 = vpow.pop %v3794
    %v3796 = vadd.f32 %v3795, 1.0
    %v3797 = vrcp.pop %v3796
    %v3798 = vmul.f32 1.0, %v3797
    %v3799 = vxor.u32 %v3648, 2147483648
    %v3800 = vmul.f32 %v3799, 1.442695
    %v3801 = vpow.pop %v3800
    %v3802 = vadd.f32 %v3801, 1.0
    %v3803 = vrcp.pop %v3802
    %v3804 = vmul.f32 1.0, %v3803
    %v3805 = vtanh.pop %v3720
    %v3806 = vxor.u32 %v3792, 2147483648
    %v3807 = vmul.f32 %v3806, 1.442695
    %v3808 = vpow.pop %v3807
    %v3809 = vadd.f32 %v3808, 1.0
    %v3810 = vrcp.pop %v3809
    %v3811 = vmul.f32 1.0, %v3810
    %v3812 = vmul.f32 %v3804, %v2921
    %v3813 = vmul.f32 %v3798, %v3805
    %v3814 = vadd.f32 %v3812, %v3813
    %v3815 = vtanh.pop %v3814
    %v3816 = vmul.f32 %v3811, %v3815
    %v3818 = vsel %vm210, %v3814, 0
    %3820 = vmatprep.subr.mxu0 0.0
    %3821 = vmatpush1.msra.mxu0 0.0
    %3822 = vmatprep.subr.mxu0 0.0
    %3823 = vmatpush1.msra.mxu0 0.0
    %3824 = vmatprep.subr.mxu0 0.0
    %3825 = vmatpush1.msra.mxu0 0.0
    %3826 = vmatprep.subr.mxu0 0.0
    %3827 = vmatpush1.msra.mxu0 0.0
    %3828 = vmatprep.subr.mxu0 0.0
    %3829 = vmatpush1.msra.mxu0 0.0
    %3830 = vmatprep.subr.mxu0 0.0
    %3831 = vmatpush1.msra.mxu0 0.0
    %3832 = vmatprep.subr.mxu0 0.0
    %3833 = vmatpush1.msra.mxu0 0.0
    %3834 = vmatprep.subr.mxu0 0.0
    %3835 = vmatpush1.msra.mxu0 0.0
    %3836 = vmatprep.subr.mxu0 0.0
    %3837 = vmatpush1.msra.mxu0 0.0
    %3838 = vmatprep.subr.mxu0 0.0
    %3839 = vmatpush1.msra.mxu0 0.0
    %3840 = vmatprep.subr.mxu0 0.0
    %3841 = vmatpush1.msra.mxu0 0.0
    %3842 = vmatprep.subr.mxu0 0.0
    %3843 = vmatpush1.msra.mxu0 0.0
    %3844 = vmatprep.subr.mxu0 0.0
    %3845 = vmatpush1.msra.mxu0 %v92
    %3846 = vmatprep.subr.mxu0 0.0
    %3847 = vmatpush1.msra.mxu0 %v91
    %3848 = vmatprep.subr.mxu0 0.0
    %3849 = vmatpush1.msra.mxu0 %v90
    %3850 = vmatprep.subr.mxu0 0.0
    %3851 = vmatpush1.msra.mxu0 %v89
    %3852 = vmatprep.subr.mxu0 0.0
    %3853 = vmatpush2.msra.mxu0 0.0
    %3854 = vmatprep.subr.mxu0 0.0
    %3855 = vmatpush2.msra.mxu0 0.0
    %3856 = vmatprep.subr.mxu0 0.0
    %3857 = vmatpush2.msra.mxu0 0.0
    %3858 = vmatprep.subr.mxu0 0.0
    %3859 = vmatpush2.msra.mxu0 0.0
    %3860 = vmatprep.subr.mxu0 0.0
    %3861 = vmatpush2.msra.mxu0 0.0
    %3862 = vmatprep.subr.mxu0 0.0
    %3863 = vmatpush2.msra.mxu0 0.0
    %3864 = vmatprep.subr.mxu0 0.0
    %3865 = vmatpush2.msra.mxu0 0.0
    %3866 = vmatprep.subr.mxu0 0.0
    %3867 = vmatpush2.msra.mxu0 0.0
    %3868 = vmatprep.subr.mxu0 0.0
    %3869 = vmatpush2.msra.mxu0 0.0
    %3870 = vmatprep.subr.mxu0 0.0
    %3871 = vmatpush2.msra.mxu0 0.0
    %3872 = vmatprep.subr.mxu0 0.0
    %3873 = vmatpush2.msra.mxu0 0.0
    %3874 = vmatprep.subr.mxu0 0.0
    %3875 = vmatpush2.msra.mxu0 0.0
    %3876 = vmatprep.subr.mxu0 0.0
    %3877 = vmatpush2.msra.mxu0 0.0
    %3878 = vmatprep.subr.mxu0 0.0
    %3879 = vmatpush2.msra.mxu0 0.0
    %3880 = vmatprep.subr.mxu0 0.0
    %3881 = vmatpush2.msra.mxu0 0.0
    %3882 = vmatprep.subr.mxu0 0.0
    %3883 = vmatpush2.msra.mxu0 0.0
    %3884 = vmatprep.mubr.f32.mxu0 0.0
    %3885 = vmatmul.mubr.f32.gmra.mxu0 %v3818
    %v3886 = vpop.f32.mrf.mxu0
    %v3887 = vadd.f32 0.0, %v3886
    %v3888 = vpop.f32.mrf.mxu0
    %3889 = vdwg.mxu0
    %v3891 = vsel %vm210, %v3816, 0
    %3893 = vmatprep.subr.mxu0 0.0
    %3894 = vmatpush1.msra.mxu0 0.0
    %3895 = vmatprep.subr.mxu0 0.0
    %3896 = vmatpush1.msra.mxu0 0.0
    %3897 = vmatprep.subr.mxu0 0.0
    %3898 = vmatpush1.msra.mxu0 0.0
    %3899 = vmatprep.subr.mxu0 0.0
    %3900 = vmatpush1.msra.mxu0 0.0
    %3901 = vmatprep.subr.mxu0 0.0
    %3902 = vmatpush1.msra.mxu0 0.0
    %3903 = vmatprep.subr.mxu0 0.0
    %3904 = vmatpush1.msra.mxu0 0.0
    %3905 = vmatprep.subr.mxu0 0.0
    %3906 = vmatpush1.msra.mxu0 0.0
    %3907 = vmatprep.subr.mxu0 0.0
    %3908 = vmatpush1.msra.mxu0 0.0
    %3909 = vmatprep.subr.mxu0 0.0
    %3910 = vmatpush1.msra.mxu0 0.0
    %3911 = vmatprep.subr.mxu0 0.0
    %3912 = vmatpush1.msra.mxu0 0.0
    %3913 = vmatprep.subr.mxu0 0.0
    %3914 = vmatpush1.msra.mxu0 0.0
    %3915 = vmatprep.subr.mxu0 0.0
    %3916 = vmatpush1.msra.mxu0 0.0
    %3917 = vmatprep.subr.mxu0 0.0
    %3918 = vmatpush1.msra.mxu0 %v88
    %3919 = vmatprep.subr.mxu0 0.0
    %3920 = vmatpush1.msra.mxu0 %v87
    %3921 = vmatprep.subr.mxu0 0.0
    %3922 = vmatpush1.msra.mxu0 %v86
    %3923 = vmatprep.subr.mxu0 0.0
    %3924 = vmatpush1.msra.mxu0 %v85
    %3925 = vmatprep.subr.mxu0 0.0
    %3926 = vmatpush2.msra.mxu0 0.0
    %3927 = vmatprep.subr.mxu0 0.0
    %3928 = vmatpush2.msra.mxu0 0.0
    %3929 = vmatprep.subr.mxu0 0.0
    %3930 = vmatpush2.msra.mxu0 0.0
    %3931 = vmatprep.subr.mxu0 0.0
    %3932 = vmatpush2.msra.mxu0 0.0
    %3933 = vmatprep.subr.mxu0 0.0
    %3934 = vmatpush2.msra.mxu0 0.0
    %3935 = vmatprep.subr.mxu0 0.0
    %3936 = vmatpush2.msra.mxu0 0.0
    %3937 = vmatprep.subr.mxu0 0.0
    %3938 = vmatpush2.msra.mxu0 0.0
    %3939 = vmatprep.subr.mxu0 0.0
    %3940 = vmatpush2.msra.mxu0 0.0
    %3941 = vmatprep.subr.mxu0 0.0
    %3942 = vmatpush2.msra.mxu0 0.0
    %3943 = vmatprep.subr.mxu0 0.0
    %3944 = vmatpush2.msra.mxu0 0.0
    %3945 = vmatprep.subr.mxu0 0.0
    %3946 = vmatpush2.msra.mxu0 0.0
    %3947 = vmatprep.subr.mxu0 0.0
    %3948 = vmatpush2.msra.mxu0 0.0
    %3949 = vmatprep.subr.mxu0 0.0
    %3950 = vmatpush2.msra.mxu0 0.0
    %3951 = vmatprep.subr.mxu0 0.0
    %3952 = vmatpush2.msra.mxu0 0.0
    %3953 = vmatprep.subr.mxu0 0.0
    %3954 = vmatpush2.msra.mxu0 0.0
    %3955 = vmatprep.subr.mxu0 0.0
    %3956 = vmatpush2.msra.mxu0 0.0
    %3957 = vmatprep.mubr.f32.mxu0 0.0
    %3958 = vmatmul.mubr.f32.gmra.mxu0 %v3891
    %v3959 = vpop.f32.mrf.mxu0
    %v3960 = vadd.f32 %v3887, %v3959
    %v3961 = vpop.f32.mrf.mxu0
    %3962 = vdwg.mxu0
    %v3965 = vunpack.c.l.s4 1966171168
    %v3966 = vunpack.c.0.s8 %v3965
    %v3967 = vlaneseq
    %v3968 = vshrl.u32 %v3967, 7
    %v3969 = vsub.s32 %v3966, %v3968
    %v3970 = vrot.slane %v3960, %v3969
    %v3971 = vcombine.high %v3970, %v3970
    %v3973 = vunpack.c.l.s4 1966171168
    %v3974 = vunpack.c.0.s8 %v3973
    %v3975 = vlaneseq
    %v3976 = vshrl.u32 %v3975, 7
    %v3977 = vsub.s32 %v3974, %v3976
    %v3978 = vrot.slane %v3970, %v3977
    %v3980 = vunpack.c.l.s4 1966171168
    %v3981 = vunpack.c.0.s8 %v3980
    %v3982 = vlaneseq
    %v3983 = vshrl.u32 %v3982, 7
    %v3984 = vsub.s32 %v3981, %v3983
    %v3985 = vrot.slane %v3971, %v3984
    %v3986 = vlaneseq
    %v3987 = vshrl.u32 %v3986, 7
    %v3988 = vsub.s32 0, %v3987
    %v3989 = vrot.slane %v3978, %v3988
    %v3990 = vlaneseq
    %v3991 = vshrl.u32 %v3990, 7
    %v3992 = vsub.s32 0, %v3991
    %v3993 = vrot.slane %v3985, %v3992
    %v3996 = vadd.f32 %v198, %v3989
    %v3997 = vadd.f32 %v203, %v3993
    %v3998 = vtanh.pop %v3996
    %v3999 = vtanh.pop %v3997
    %v4001 = vsel %vm124, %v3998, 0
    %4003 = vmatprep.subr.mxu0 0.0
    %4004 = vmatpush1.xpose.msra.mxu0 0.0
    %4005 = vmatprep.subr.mxu0 0.0
    %4006 = vmatpush1.xpose.msra.mxu0 0.0
    %4007 = vmatprep.subr.mxu0 0.0
    %4008 = vmatpush1.xpose.msra.mxu0 0.0
    %4009 = vmatprep.subr.mxu0 0.0
    %4010 = vmatpush1.xpose.msra.mxu0 0.0
    %4011 = vmatprep.subr.mxu0 0.0
    %4012 = vmatpush1.xpose.msra.mxu0 0.0
    %4013 = vmatprep.subr.mxu0 0.0
    %4014 = vmatpush1.xpose.msra.mxu0 0.0
    %4015 = vmatprep.subr.mxu0 0.0
    %4016 = vmatpush1.xpose.msra.mxu0 0.0
    %4017 = vmatprep.subr.mxu0 0.0
    %4018 = vmatpush1.xpose.msra.mxu0 0.0
    %4019 = vmatprep.subr.mxu0 0.0
    %4020 = vmatpush1.xpose.msra.mxu0 0.0
    %4021 = vmatprep.subr.mxu0 0.0
    %4022 = vmatpush1.xpose.msra.mxu0 0.0
    %4023 = vmatprep.subr.mxu0 0.0
    %4024 = vmatpush1.xpose.msra.mxu0 0.0
    %4025 = vmatprep.subr.mxu0 0.0
    %4026 = vmatpush1.xpose.msra.mxu0 0.0
    %4027 = vmatprep.subr.mxu0 0.0
    %4028 = vmatpush1.xpose.msra.mxu0 0.0
    %4029 = vmatprep.subr.mxu0 0.0
    %4030 = vmatpush1.xpose.msra.mxu0 0.0
    %4031 = vmatprep.subr.mxu0 0.0
    %4032 = vmatpush1.xpose.msra.mxu0 0.0
    %4033 = vmatprep.subr.mxu0 0.0
    %4034 = vmatpush1.xpose.msra.mxu0 %v4001
    %4035 = vmatprep.subr.mxu0 0.0
    %4036 = vmatpush2.xpose.msra.mxu0 0.0
    %4037 = vmatprep.subr.mxu0 0.0
    %4038 = vmatpush2.xpose.msra.mxu0 0.0
    %4039 = vmatprep.subr.mxu0 0.0
    %4040 = vmatpush2.xpose.msra.mxu0 0.0
    %4041 = vmatprep.subr.mxu0 0.0
    %4042 = vmatpush2.xpose.msra.mxu0 0.0
    %4043 = vmatprep.subr.mxu0 0.0
    %4044 = vmatpush2.xpose.msra.mxu0 0.0
    %4045 = vmatprep.subr.mxu0 0.0
    %4046 = vmatpush2.xpose.msra.mxu0 0.0
    %4047 = vmatprep.subr.mxu0 0.0
    %4048 = vmatpush2.xpose.msra.mxu0 0.0
    %4049 = vmatprep.subr.mxu0 0.0
    %4050 = vmatpush2.xpose.msra.mxu0 0.0
    %4051 = vmatprep.subr.mxu0 0.0
    %4052 = vmatpush2.xpose.msra.mxu0 0.0
    %4053 = vmatprep.subr.mxu0 0.0
    %4054 = vmatpush2.xpose.msra.mxu0 0.0
    %4055 = vmatprep.subr.mxu0 0.0
    %4056 = vmatpush2.xpose.msra.mxu0 0.0
    %4057 = vmatprep.subr.mxu0 0.0
    %4058 = vmatpush2.xpose.msra.mxu0 0.0
    %4059 = vmatprep.subr.mxu0 0.0
    %4060 = vmatpush2.xpose.msra.mxu0 0.0
    %4061 = vmatprep.subr.mxu0 0.0
    %4062 = vmatpush2.xpose.msra.mxu0 0.0
    %4063 = vmatprep.subr.mxu0 0.0
    %4064 = vmatpush2.xpose.msra.mxu0 0.0
    %4065 = vmatprep.subr.mxu0 0.0
    %4066 = vmatpush2.xpose.msra.mxu0 0.0
    %4067 = vmatprep.mubr.f32.mxu0 0.0
    %4068 = vmatmul.mubr.f32.gmra.mxu0 %v393
    %v4069 = vpop.f32.mrf.mxu0
    %v4070 = vadd.f32 %v391, %v4069
    %v4071 = vpop.f32.mrf.mxu0
    %4072 = vdwg.mxu0
    %v4074 = vsel %vm124, %v3999, 0
    %4076 = vmatprep.subr.mxu0 0.0
    %4077 = vmatpush1.xpose.msra.mxu0 0.0
    %4078 = vmatprep.subr.mxu0 0.0
    %4079 = vmatpush1.xpose.msra.mxu0 0.0
    %4080 = vmatprep.subr.mxu0 0.0
    %4081 = vmatpush1.xpose.msra.mxu0 0.0
    %4082 = vmatprep.subr.mxu0 0.0
    %4083 = vmatpush1.xpose.msra.mxu0 0.0
    %4084 = vmatprep.subr.mxu0 0.0
    %4085 = vmatpush1.xpose.msra.mxu0 0.0
    %4086 = vmatprep.subr.mxu0 0.0
    %4087 = vmatpush1.xpose.msra.mxu0 0.0
    %4088 = vmatprep.subr.mxu0 0.0
    %4089 = vmatpush1.xpose.msra.mxu0 0.0
    %4090 = vmatprep.subr.mxu0 0.0
    %4091 = vmatpush1.xpose.msra.mxu0 0.0
    %4092 = vmatprep.subr.mxu0 0.0
    %4093 = vmatpush1.xpose.msra.mxu0 0.0
    %4094 = vmatprep.subr.mxu0 0.0
    %4095 = vmatpush1.xpose.msra.mxu0 0.0
    %4096 = vmatprep.subr.mxu0 0.0
    %4097 = vmatpush1.xpose.msra.mxu0 0.0
    %4098 = vmatprep.subr.mxu0 0.0
    %4099 = vmatpush1.xpose.msra.mxu0 0.0
    %4100 = vmatprep.subr.mxu0 0.0
    %4101 = vmatpush1.xpose.msra.mxu0 0.0
    %4102 = vmatprep.subr.mxu0 0.0
    %4103 = vmatpush1.xpose.msra.mxu0 0.0
    %4104 = vmatprep.subr.mxu0 0.0
    %4105 = vmatpush1.xpose.msra.mxu0 0.0
    %4106 = vmatprep.subr.mxu0 0.0
    %4107 = vmatpush1.xpose.msra.mxu0 %v4074
    %4108 = vmatprep.subr.mxu0 0.0
    %4109 = vmatpush2.xpose.msra.mxu0 0.0
    %4110 = vmatprep.subr.mxu0 0.0
    %4111 = vmatpush2.xpose.msra.mxu0 0.0
    %4112 = vmatprep.subr.mxu0 0.0
    %4113 = vmatpush2.xpose.msra.mxu0 0.0
    %4114 = vmatprep.subr.mxu0 0.0
    %4115 = vmatpush2.xpose.msra.mxu0 0.0
    %4116 = vmatprep.subr.mxu0 0.0
    %4117 = vmatpush2.xpose.msra.mxu0 0.0
    %4118 = vmatprep.subr.mxu0 0.0
    %4119 = vmatpush2.xpose.msra.mxu0 0.0
    %4120 = vmatprep.subr.mxu0 0.0
    %4121 = vmatpush2.xpose.msra.mxu0 0.0
    %4122 = vmatprep.subr.mxu0 0.0
    %4123 = vmatpush2.xpose.msra.mxu0 0.0
    %4124 = vmatprep.subr.mxu0 0.0
    %4125 = vmatpush2.xpose.msra.mxu0 0.0
    %4126 = vmatprep.subr.mxu0 0.0
    %4127 = vmatpush2.xpose.msra.mxu0 0.0
    %4128 = vmatprep.subr.mxu0 0.0
    %4129 = vmatpush2.xpose.msra.mxu0 0.0
    %4130 = vmatprep.subr.mxu0 0.0
    %4131 = vmatpush2.xpose.msra.mxu0 0.0
    %4132 = vmatprep.subr.mxu0 0.0
    %4133 = vmatpush2.xpose.msra.mxu0 0.0
    %4134 = vmatprep.subr.mxu0 0.0
    %4135 = vmatpush2.xpose.msra.mxu0 0.0
    %4136 = vmatprep.subr.mxu0 0.0
    %4137 = vmatpush2.xpose.msra.mxu0 0.0
    %4138 = vmatprep.subr.mxu0 0.0
    %4139 = vmatpush2.xpose.msra.mxu0 0.0
    %4140 = vmatprep.mubr.f32.mxu0 0.0
    %4141 = vmatmul.mubr.f32.gmra.mxu0 %v393
    %v4142 = vpop.f32.mrf.mxu0
    %v4143 = vadd.f32 %v391, %v4142
    %v4144 = vpop.f32.mrf.mxu0
    %4145 = vdwg.mxu0
    %v4146 = vsel %vm541, %v4070, -inf
    %4147 = vmax.xlane.f32.xlu0 %v4146
    %v4148 = vpop.xlane.xlu0 %4147
    %v4149 = vsel %vm541, %v4143, -inf
    %4150 = vmax.xlane.f32.xlu0 %v4149
    %v4151 = vpop.xlane.xlu0 %4150
    %v4152 = vsub.f32 %v4070, %v4148
    %v4153 = vsub.f32 %v4143, %v4151
    %v4154 = vmul.f32 %v4152, 1.442695
    %v4155 = vpow.pop %v4154
    %v4156 = vmul.f32 %v4153, 1.442695
    %v4157 = vpow.pop %v4156
    %v4158 = vsel %vm541, %v4155, 0.0
    %4159 = vadd.xlane.f32.xlu0 %v4158
    %v4160 = vpop.xlane.xlu0 %4159
    %v4161 = vsel %vm541, %v4157, 0.0
    %4162 = vadd.xlane.f32.xlu0 %v4161
    %v4163 = vpop.xlane.xlu0 %4162
    %v4164 = vrcp.pop %v4160
    %v4165 = vmul.f32 %v4155, %v4164
    %v4166 = vrcp.pop %v4163
    %v4167 = vmul.f32 %v4157, %v4166
    %v4169 = vsel %vm564, %v4165, 0
    %4171 = vmatprep.subr.mxu0 0.0
    %4172 = vmatpush1.msra.mxu0 0.0
    %4173 = vmatprep.subr.mxu0 0.0
    %4174 = vmatpush1.msra.mxu0 0.0
    %4175 = vmatprep.subr.mxu0 0.0
    %4176 = vmatpush1.msra.mxu0 0.0
    %4177 = vmatprep.subr.mxu0 0.0
    %4178 = vmatpush1.msra.mxu0 0.0
    %4179 = vmatprep.subr.mxu0 0.0
    %4180 = vmatpush1.msra.mxu0 0.0
    %4181 = vmatprep.subr.mxu0 0.0
    %4182 = vmatpush1.msra.mxu0 0.0
    %4183 = vmatprep.subr.mxu0 0.0
    %4184 = vmatpush1.msra.mxu0 0.0
    %4185 = vmatprep.subr.mxu0 0.0
    %4186 = vmatpush1.msra.mxu0 0.0
    %4187 = vmatprep.subr.mxu0 0.0
    %4188 = vmatpush1.msra.mxu0 0.0
    %4189 = vmatprep.subr.mxu0 0.0
    %4190 = vmatpush1.msra.mxu0 0.0
    %4191 = vmatprep.subr.mxu0 0.0
    %4192 = vmatpush1.msra.mxu0 0.0
    %4193 = vmatprep.subr.mxu0 0.0
    %4194 = vmatpush1.msra.mxu0 0.0
    %4195 = vmatprep.subr.mxu0 0.0
    %4196 = vmatpush1.msra.mxu0 0.0
    %4197 = vmatprep.subr.mxu0 0.0
    %4198 = vmatpush1.msra.mxu0 0.0
    %4199 = vmatprep.subr.mxu0 0.0
    %4200 = vmatpush1.msra.mxu0 0.0
    %4201 = vmatprep.subr.mxu0 0.0
    %4202 = vmatpush1.msra.mxu0 %v117
    %4203 = vmatprep.subr.mxu0 0.0
    %4204 = vmatpush2.msra.mxu0 0.0
    %4205 = vmatprep.subr.mxu0 0.0
    %4206 = vmatpush2.msra.mxu0 0.0
    %4207 = vmatprep.subr.mxu0 0.0
    %4208 = vmatpush2.msra.mxu0 0.0
    %4209 = vmatprep.subr.mxu0 0.0
    %4210 = vmatpush2.msra.mxu0 0.0
    %4211 = vmatprep.subr.mxu0 0.0
    %4212 = vmatpush2.msra.mxu0 0.0
    %4213 = vmatprep.subr.mxu0 0.0
    %4214 = vmatpush2.msra.mxu0 0.0
    %4215 = vmatprep.subr.mxu0 0.0
    %4216 = vmatpush2.msra.mxu0 0.0
    %4217 = vmatprep.subr.mxu0 0.0
    %4218 = vmatpush2.msra.mxu0 0.0
    %4219 = vmatprep.subr.mxu0 0.0
    %4220 = vmatpush2.msra.mxu0 0.0
    %4221 = vmatprep.subr.mxu0 0.0
    %4222 = vmatpush2.msra.mxu0 0.0
    %4223 = vmatprep.subr.mxu0 0.0
    %4224 = vmatpush2.msra.mxu0 0.0
    %4225 = vmatprep.subr.mxu0 0.0
    %4226 = vmatpush2.msra.mxu0 0.0
    %4227 = vmatprep.subr.mxu0 0.0
    %4228 = vmatpush2.msra.mxu0 0.0
    %4229 = vmatprep.subr.mxu0 0.0
    %4230 = vmatpush2.msra.mxu0 0.0
    %4231 = vmatprep.subr.mxu0 0.0
    %4232 = vmatpush2.msra.mxu0 0.0
    %4233 = vmatprep.subr.mxu0 0.0
    %4234 = vmatpush2.msra.mxu0 0.0
    %4235 = vmatprep.mubr.f32.mxu0 0.0
    %4236 = vmatmul.mubr.f32.gmra.mxu0 %v4169
    %v4237 = vpop.f32.mrf.mxu0
    %v4238 = vadd.f32 0.0, %v4237
    %v4239 = vpop.f32.mrf.mxu0
    %4240 = vdwg.mxu0
    %v4242 = vsel %vm564, %v4167, 0
    %4244 = vmatprep.subr.mxu0 0.0
    %4245 = vmatpush1.msra.mxu0 0.0
    %4246 = vmatprep.subr.mxu0 0.0
    %4247 = vmatpush1.msra.mxu0 0.0
    %4248 = vmatprep.subr.mxu0 0.0
    %4249 = vmatpush1.msra.mxu0 0.0
    %4250 = vmatprep.subr.mxu0 0.0
    %4251 = vmatpush1.msra.mxu0 0.0
    %4252 = vmatprep.subr.mxu0 0.0
    %4253 = vmatpush1.msra.mxu0 0.0
    %4254 = vmatprep.subr.mxu0 0.0
    %4255 = vmatpush1.msra.mxu0 0.0
    %4256 = vmatprep.subr.mxu0 0.0
    %4257 = vmatpush1.msra.mxu0 0.0
    %4258 = vmatprep.subr.mxu0 0.0
    %4259 = vmatpush1.msra.mxu0 0.0
    %4260 = vmatprep.subr.mxu0 0.0
    %4261 = vmatpush1.msra.mxu0 0.0
    %4262 = vmatprep.subr.mxu0 0.0
    %4263 = vmatpush1.msra.mxu0 0.0
    %4264 = vmatprep.subr.mxu0 0.0
    %4265 = vmatpush1.msra.mxu0 0.0
    %4266 = vmatprep.subr.mxu0 0.0
    %4267 = vmatpush1.msra.mxu0 0.0
    %4268 = vmatprep.subr.mxu0 0.0
    %4269 = vmatpush1.msra.mxu0 0.0
    %4270 = vmatprep.subr.mxu0 0.0
    %4271 = vmatpush1.msra.mxu0 0.0
    %4272 = vmatprep.subr.mxu0 0.0
    %4273 = vmatpush1.msra.mxu0 0.0
    %4274 = vmatprep.subr.mxu0 0.0
    %4275 = vmatpush1.msra.mxu0 %v118
    %4276 = vmatprep.subr.mxu0 0.0
    %4277 = vmatpush2.msra.mxu0 0.0
    %4278 = vmatprep.subr.mxu0 0.0
    %4279 = vmatpush2.msra.mxu0 0.0
    %4280 = vmatprep.subr.mxu0 0.0
    %4281 = vmatpush2.msra.mxu0 0.0
    %4282 = vmatprep.subr.mxu0 0.0
    %4283 = vmatpush2.msra.mxu0 0.0
    %4284 = vmatprep.subr.mxu0 0.0
    %4285 = vmatpush2.msra.mxu0 0.0
    %4286 = vmatprep.subr.mxu0 0.0
    %4287 = vmatpush2.msra.mxu0 0.0
    %4288 = vmatprep.subr.mxu0 0.0
    %4289 = vmatpush2.msra.mxu0 0.0
    %4290 = vmatprep.subr.mxu0 0.0
    %4291 = vmatpush2.msra.mxu0 0.0
    %4292 = vmatprep.subr.mxu0 0.0
    %4293 = vmatpush2.msra.mxu0 0.0
    %4294 = vmatprep.subr.mxu0 0.0
    %4295 = vmatpush2.msra.mxu0 0.0
    %4296 = vmatprep.subr.mxu0 0.0
    %4297 = vmatpush2.msra.mxu0 0.0
    %4298 = vmatprep.subr.mxu0 0.0
    %4299 = vmatpush2.msra.mxu0 0.0
    %4300 = vmatprep.subr.mxu0 0.0
    %4301 = vmatpush2.msra.mxu0 0.0
    %4302 = vmatprep.subr.mxu0 0.0
    %4303 = vmatpush2.msra.mxu0 0.0
    %4304 = vmatprep.subr.mxu0 0.0
    %4305 = vmatpush2.msra.mxu0 0.0
    %4306 = vmatprep.subr.mxu0 0.0
    %4307 = vmatpush2.msra.mxu0 0.0
    %4308 = vmatprep.mubr.f32.mxu0 0.0
    %4309 = vmatmul.mubr.f32.gmra.mxu0 %v4242
    %v4310 = vpop.f32.mrf.mxu0
    %v4311 = vadd.f32 0.0, %v4310
    %v4312 = vpop.f32.mrf.mxu0
    %4313 = vdwg.mxu0
    %v4316 = vrot.slane %v4311, 7
    %v4317 = vsel %vm714, %v4316, %v4238
    %4318 = vrot.lane.b32.xlu0 %v209, 124
    %v4319 = vpop.permute.xlu0 %4318
    %v4321 = vsel %vm124, %v4317, 0
    %4323 = vmatprep.subr.mxu0 0.0
    %4324 = vmatpush1.msra.mxu0 0.0
    %4325 = vmatprep.subr.mxu0 0.0
    %4326 = vmatpush1.msra.mxu0 0.0
    %4327 = vmatprep.subr.mxu0 0.0
    %4328 = vmatpush1.msra.mxu0 0.0
    %4329 = vmatprep.subr.mxu0 0.0
    %4330 = vmatpush1.msra.mxu0 0.0
    %4331 = vmatprep.subr.mxu0 0.0
    %4332 = vmatpush1.msra.mxu0 0.0
    %4333 = vmatprep.subr.mxu0 0.0
    %4334 = vmatpush1.msra.mxu0 0.0
    %4335 = vmatprep.subr.mxu0 0.0
    %4336 = vmatpush1.msra.mxu0 0.0
    %4337 = vmatprep.subr.mxu0 0.0
    %4338 = vmatpush1.msra.mxu0 0.0
    %4339 = vmatprep.subr.mxu0 0.0
    %4340 = vmatpush1.msra.mxu0 0.0
    %4341 = vmatprep.subr.mxu0 0.0
    %4342 = vmatpush1.msra.mxu0 0.0
    %4343 = vmatprep.subr.mxu0 0.0
    %4344 = vmatpush1.msra.mxu0 0.0
    %4345 = vmatprep.subr.mxu0 0.0
    %4346 = vmatpush1.msra.mxu0 0.0
    %4347 = vmatprep.subr.mxu0 0.0
    %4348 = vmatpush1.msra.mxu0 0.0
    %4349 = vmatprep.subr.mxu0 0.0
    %4350 = vmatpush1.msra.mxu0 0.0
    %4351 = vmatprep.subr.mxu0 0.0
    %4352 = vmatpush1.msra.mxu0 %v106
    %4353 = vmatprep.subr.mxu0 0.0
    %4354 = vmatpush1.msra.mxu0 %v105
    %4355 = vmatprep.subr.mxu0 0.0
    %4356 = vmatpush2.msra.mxu0 0.0
    %4357 = vmatprep.subr.mxu0 0.0
    %4358 = vmatpush2.msra.mxu0 0.0
    %4359 = vmatprep.subr.mxu0 0.0
    %4360 = vmatpush2.msra.mxu0 0.0
    %4361 = vmatprep.subr.mxu0 0.0
    %4362 = vmatpush2.msra.mxu0 0.0
    %4363 = vmatprep.subr.mxu0 0.0
    %4364 = vmatpush2.msra.mxu0 0.0
    %4365 = vmatprep.subr.mxu0 0.0
    %4366 = vmatpush2.msra.mxu0 0.0
    %4367 = vmatprep.subr.mxu0 0.0
    %4368 = vmatpush2.msra.mxu0 0.0
    %4369 = vmatprep.subr.mxu0 0.0
    %4370 = vmatpush2.msra.mxu0 0.0
    %4371 = vmatprep.subr.mxu0 0.0
    %4372 = vmatpush2.msra.mxu0 0.0
    %4373 = vmatprep.subr.mxu0 0.0
    %4374 = vmatpush2.msra.mxu0 0.0
    %4375 = vmatprep.subr.mxu0 0.0
    %4376 = vmatpush2.msra.mxu0 0.0
    %4377 = vmatprep.subr.mxu0 0.0
    %4378 = vmatpush2.msra.mxu0 0.0
    %4379 = vmatprep.subr.mxu0 0.0
    %4380 = vmatpush2.msra.mxu0 0.0
    %4381 = vmatprep.subr.mxu0 0.0
    %4382 = vmatpush2.msra.mxu0 0.0
    %4383 = vmatprep.subr.mxu0 0.0
    %4384 = vmatpush2.msra.mxu0 0.0
    %4385 = vmatprep.subr.mxu0 0.0
    %4386 = vmatpush2.msra.mxu0 0.0
    %4387 = vmatprep.mubr.f32.mxu0 0.0
    %4388 = vmatmul.mubr.f32.gmra.mxu0 %v4321
    %v4389 = vpop.f32.mrf.mxu0
    %v4390 = vadd.f32 %v4319, %v4389
    %v4391 = vpop.f32.mrf.mxu0
    %4392 = vdwg.mxu0
    %4394 = vset.pattern.permute.xlu0 0
    %4395 = vperm.xlu0 %4394, %v4390
    %v4396 = vpop.permute.xlu0 %4395
    %v4398 = vmul.f32 %v4396, %v796
    %4399 = vmatprep.subr.mxu0 0.0
    %4400 = vmatpush1.msra.mxu0 0.0
    %4401 = vmatprep.subr.mxu0 0.0
    %4402 = vmatpush1.msra.mxu0 0.0
    %4403 = vmatprep.subr.mxu0 0.0
    %4404 = vmatpush1.msra.mxu0 0.0
    %4405 = vmatprep.subr.mxu0 0.0
    %4406 = vmatpush1.msra.mxu0 0.0
    %4407 = vmatprep.subr.mxu0 0.0
    %4408 = vmatpush1.msra.mxu0 0.0
    %4409 = vmatprep.subr.mxu0 0.0
    %4410 = vmatpush1.msra.mxu0 0.0
    %4411 = vmatprep.subr.mxu0 0.0
    %4412 = vmatpush1.msra.mxu0 0.0
    %4413 = vmatprep.subr.mxu0 0.0
    %4414 = vmatpush1.msra.mxu0 0.0
    %4415 = vmatprep.subr.mxu0 0.0
    %4416 = vmatpush1.msra.mxu0 0.0
    %4417 = vmatprep.subr.mxu0 0.0
    %4418 = vmatpush1.msra.mxu0 0.0
    %4419 = vmatprep.subr.mxu0 0.0
    %4420 = vmatpush1.msra.mxu0 0.0
    %4421 = vmatprep.subr.mxu0 0.0
    %4422 = vmatpush1.msra.mxu0 0.0
    %4423 = vmatprep.subr.mxu0 0.0
    %4424 = vmatpush1.msra.mxu0 %v72
    %4425 = vmatprep.subr.mxu0 0.0
    %4426 = vmatpush1.msra.mxu0 %v71
    %4427 = vmatprep.subr.mxu0 0.0
    %4428 = vmatpush1.msra.mxu0 %v70
    %4429 = vmatprep.subr.mxu0 0.0
    %4430 = vmatpush1.msra.mxu0 %v69
    %4431 = vmatprep.subr.mxu0 0.0
    %4432 = vmatpush2.msra.mxu0 0.0
    %4433 = vmatprep.subr.mxu0 0.0
    %4434 = vmatpush2.msra.mxu0 0.0
    %4435 = vmatprep.subr.mxu0 0.0
    %4436 = vmatpush2.msra.mxu0 0.0
    %4437 = vmatprep.subr.mxu0 0.0
    %4438 = vmatpush2.msra.mxu0 0.0
    %4439 = vmatprep.subr.mxu0 0.0
    %4440 = vmatpush2.msra.mxu0 0.0
    %4441 = vmatprep.subr.mxu0 0.0
    %4442 = vmatpush2.msra.mxu0 0.0
    %4443 = vmatprep.subr.mxu0 0.0
    %4444 = vmatpush2.msra.mxu0 0.0
    %4445 = vmatprep.subr.mxu0 0.0
    %4446 = vmatpush2.msra.mxu0 0.0
    %4447 = vmatprep.subr.mxu0 0.0
    %4448 = vmatpush2.msra.mxu0 0.0
    %4449 = vmatprep.subr.mxu0 0.0
    %4450 = vmatpush2.msra.mxu0 0.0
    %4451 = vmatprep.subr.mxu0 0.0
    %4452 = vmatpush2.msra.mxu0 0.0
    %4453 = vmatprep.subr.mxu0 0.0
    %4454 = vmatpush2.msra.mxu0 0.0
    %4455 = vmatprep.subr.mxu0 0.0
    %4456 = vmatpush2.msra.mxu0 0.0
    %4457 = vmatprep.subr.mxu0 0.0
    %4458 = vmatpush2.msra.mxu0 0.0
    %4459 = vmatprep.subr.mxu0 0.0
    %4460 = vmatpush2.msra.mxu0 0.0
    %4461 = vmatprep.subr.mxu0 0.0
    %4462 = vmatpush2.msra.mxu0 0.0
    %4463 = vmatprep.mubr.f32.mxu0 0.0
    %4464 = vmatmul.mubr.f32.gmra.mxu0 %v3891
    %v4465 = vpop.f32.mrf.mxu0
    %v4466 = vadd.f32 %v4398, %v4465
    %v4467 = vpop.f32.mrf.mxu0
    %4468 = vdwg.mxu0
    %v4469 = vadd.f32 %v4466, %v871
    %v4470 = vmul.f32 %v4396, %v876
    %4471 = vmatprep.subr.mxu0 0.0
    %4472 = vmatpush1.msra.mxu0 0.0
    %4473 = vmatprep.subr.mxu0 0.0
    %4474 = vmatpush1.msra.mxu0 0.0
    %4475 = vmatprep.subr.mxu0 0.0
    %4476 = vmatpush1.msra.mxu0 0.0
    %4477 = vmatprep.subr.mxu0 0.0
    %4478 = vmatpush1.msra.mxu0 0.0
    %4479 = vmatprep.subr.mxu0 0.0
    %4480 = vmatpush1.msra.mxu0 0.0
    %4481 = vmatprep.subr.mxu0 0.0
    %4482 = vmatpush1.msra.mxu0 0.0
    %4483 = vmatprep.subr.mxu0 0.0
    %4484 = vmatpush1.msra.mxu0 0.0
    %4485 = vmatprep.subr.mxu0 0.0
    %4486 = vmatpush1.msra.mxu0 0.0
    %4487 = vmatprep.subr.mxu0 0.0
    %4488 = vmatpush1.msra.mxu0 0.0
    %4489 = vmatprep.subr.mxu0 0.0
    %4490 = vmatpush1.msra.mxu0 0.0
    %4491 = vmatprep.subr.mxu0 0.0
    %4492 = vmatpush1.msra.mxu0 0.0
    %4493 = vmatprep.subr.mxu0 0.0
    %4494 = vmatpush1.msra.mxu0 0.0
    %4495 = vmatprep.subr.mxu0 0.0
    %4496 = vmatpush1.msra.mxu0 %v76
    %4497 = vmatprep.subr.mxu0 0.0
    %4498 = vmatpush1.msra.mxu0 %v75
    %4499 = vmatprep.subr.mxu0 0.0
    %4500 = vmatpush1.msra.mxu0 %v74
    %4501 = vmatprep.subr.mxu0 0.0
    %4502 = vmatpush1.msra.mxu0 %v73
    %4503 = vmatprep.subr.mxu0 0.0
    %4504 = vmatpush2.msra.mxu0 0.0
    %4505 = vmatprep.subr.mxu0 0.0
    %4506 = vmatpush2.msra.mxu0 0.0
    %4507 = vmatprep.subr.mxu0 0.0
    %4508 = vmatpush2.msra.mxu0 0.0
    %4509 = vmatprep.subr.mxu0 0.0
    %4510 = vmatpush2.msra.mxu0 0.0
    %4511 = vmatprep.subr.mxu0 0.0
    %4512 = vmatpush2.msra.mxu0 0.0
    %4513 = vmatprep.subr.mxu0 0.0
    %4514 = vmatpush2.msra.mxu0 0.0
    %4515 = vmatprep.subr.mxu0 0.0
    %4516 = vmatpush2.msra.mxu0 0.0
    %4517 = vmatprep.subr.mxu0 0.0
    %4518 = vmatpush2.msra.mxu0 0.0
    %4519 = vmatprep.subr.mxu0 0.0
    %4520 = vmatpush2.msra.mxu0 0.0
    %4521 = vmatprep.subr.mxu0 0.0
    %4522 = vmatpush2.msra.mxu0 0.0
    %4523 = vmatprep.subr.mxu0 0.0
    %4524 = vmatpush2.msra.mxu0 0.0
    %4525 = vmatprep.subr.mxu0 0.0
    %4526 = vmatpush2.msra.mxu0 0.0
    %4527 = vmatprep.subr.mxu0 0.0
    %4528 = vmatpush2.msra.mxu0 0.0
    %4529 = vmatprep.subr.mxu0 0.0
    %4530 = vmatpush2.msra.mxu0 0.0
    %4531 = vmatprep.subr.mxu0 0.0
    %4532 = vmatpush2.msra.mxu0 0.0
    %4533 = vmatprep.subr.mxu0 0.0
    %4534 = vmatpush2.msra.mxu0 0.0
    %4535 = vmatprep.mubr.f32.mxu0 0.0
    %4536 = vmatmul.mubr.f32.gmra.mxu0 %v3891
    %v4537 = vpop.f32.mrf.mxu0
    %v4538 = vadd.f32 %v4470, %v4537
    %v4539 = vpop.f32.mrf.mxu0
    %4540 = vdwg.mxu0
    %v4541 = vadd.f32 %v4538, %v951
    %v4542 = vmul.f32 %v4396, %v956
    %4543 = vmatprep.subr.mxu0 0.0
    %4544 = vmatpush1.msra.mxu0 0.0
    %4545 = vmatprep.subr.mxu0 0.0
    %4546 = vmatpush1.msra.mxu0 0.0
    %4547 = vmatprep.subr.mxu0 0.0
    %4548 = vmatpush1.msra.mxu0 0.0
    %4549 = vmatprep.subr.mxu0 0.0
    %4550 = vmatpush1.msra.mxu0 0.0
    %4551 = vmatprep.subr.mxu0 0.0
    %4552 = vmatpush1.msra.mxu0 0.0
    %4553 = vmatprep.subr.mxu0 0.0
    %4554 = vmatpush1.msra.mxu0 0.0
    %4555 = vmatprep.subr.mxu0 0.0
    %4556 = vmatpush1.msra.mxu0 0.0
    %4557 = vmatprep.subr.mxu0 0.0
    %4558 = vmatpush1.msra.mxu0 0.0
    %4559 = vmatprep.subr.mxu0 0.0
    %4560 = vmatpush1.msra.mxu0 0.0
    %4561 = vmatprep.subr.mxu0 0.0
    %4562 = vmatpush1.msra.mxu0 0.0
    %4563 = vmatprep.subr.mxu0 0.0
    %4564 = vmatpush1.msra.mxu0 0.0
    %4565 = vmatprep.subr.mxu0 0.0
    %4566 = vmatpush1.msra.mxu0 0.0
    %4567 = vmatprep.subr.mxu0 0.0
    %4568 = vmatpush1.msra.mxu0 %v80
    %4569 = vmatprep.subr.mxu0 0.0
    %4570 = vmatpush1.msra.mxu0 %v79
    %4571 = vmatprep.subr.mxu0 0.0
    %4572 = vmatpush1.msra.mxu0 %v78
    %4573 = vmatprep.subr.mxu0 0.0
    %4574 = vmatpush1.msra.mxu0 %v77
    %4575 = vmatprep.subr.mxu0 0.0
    %4576 = vmatpush2.msra.mxu0 0.0
    %4577 = vmatprep.subr.mxu0 0.0
    %4578 = vmatpush2.msra.mxu0 0.0
    %4579 = vmatprep.subr.mxu0 0.0
    %4580 = vmatpush2.msra.mxu0 0.0
    %4581 = vmatprep.subr.mxu0 0.0
    %4582 = vmatpush2.msra.mxu0 0.0
    %4583 = vmatprep.subr.mxu0 0.0
    %4584 = vmatpush2.msra.mxu0 0.0
    %4585 = vmatprep.subr.mxu0 0.0
    %4586 = vmatpush2.msra.mxu0 0.0
    %4587 = vmatprep.subr.mxu0 0.0
    %4588 = vmatpush2.msra.mxu0 0.0
    %4589 = vmatprep.subr.mxu0 0.0
    %4590 = vmatpush2.msra.mxu0 0.0
    %4591 = vmatprep.subr.mxu0 0.0
    %4592 = vmatpush2.msra.mxu0 0.0
    %4593 = vmatprep.subr.mxu0 0.0
    %4594 = vmatpush2.msra.mxu0 0.0
    %4595 = vmatprep.subr.mxu0 0.0
    %4596 = vmatpush2.msra.mxu0 0.0
    %4597 = vmatprep.subr.mxu0 0.0
    %4598 = vmatpush2.msra.mxu0 0.0
    %4599 = vmatprep.subr.mxu0 0.0
    %4600 = vmatpush2.msra.mxu0 0.0
    %4601 = vmatprep.subr.mxu0 0.0
    %4602 = vmatpush2.msra.mxu0 0.0
    %4603 = vmatprep.subr.mxu0 0.0
    %4604 = vmatpush2.msra.mxu0 0.0
    %4605 = vmatprep.subr.mxu0 0.0
    %4606 = vmatpush2.msra.mxu0 0.0
    %4607 = vmatprep.mubr.f32.mxu0 0.0
    %4608 = vmatmul.mubr.f32.gmra.mxu0 %v3891
    %v4609 = vpop.f32.mrf.mxu0
    %v4610 = vadd.f32 %v4542, %v4609
    %v4611 = vpop.f32.mrf.mxu0
    %4612 = vdwg.mxu0
    %v4613 = vadd.f32 %v4610, %v1031
    %v4614 = vmul.f32 %v4396, %v1036
    %4615 = vmatprep.subr.mxu0 0.0
    %4616 = vmatpush1.msra.mxu0 0.0
    %4617 = vmatprep.subr.mxu0 0.0
    %4618 = vmatpush1.msra.mxu0 0.0
    %4619 = vmatprep.subr.mxu0 0.0
    %4620 = vmatpush1.msra.mxu0 0.0
    %4621 = vmatprep.subr.mxu0 0.0
    %4622 = vmatpush1.msra.mxu0 0.0
    %4623 = vmatprep.subr.mxu0 0.0
    %4624 = vmatpush1.msra.mxu0 0.0
    %4625 = vmatprep.subr.mxu0 0.0
    %4626 = vmatpush1.msra.mxu0 0.0
    %4627 = vmatprep.subr.mxu0 0.0
    %4628 = vmatpush1.msra.mxu0 0.0
    %4629 = vmatprep.subr.mxu0 0.0
    %4630 = vmatpush1.msra.mxu0 0.0
    %4631 = vmatprep.subr.mxu0 0.0
    %4632 = vmatpush1.msra.mxu0 0.0
    %4633 = vmatprep.subr.mxu0 0.0
    %4634 = vmatpush1.msra.mxu0 0.0
    %4635 = vmatprep.subr.mxu0 0.0
    %4636 = vmatpush1.msra.mxu0 0.0
    %4637 = vmatprep.subr.mxu0 0.0
    %4638 = vmatpush1.msra.mxu0 0.0
    %4639 = vmatprep.subr.mxu0 0.0
    %4640 = vmatpush1.msra.mxu0 %v84
    %4641 = vmatprep.subr.mxu0 0.0
    %4642 = vmatpush1.msra.mxu0 %v83
    %4643 = vmatprep.subr.mxu0 0.0
    %4644 = vmatpush1.msra.mxu0 %v82
    %4645 = vmatprep.subr.mxu0 0.0
    %4646 = vmatpush1.msra.mxu0 %v81
    %4647 = vmatprep.subr.mxu0 0.0
    %4648 = vmatpush2.msra.mxu0 0.0
    %4649 = vmatprep.subr.mxu0 0.0
    %4650 = vmatpush2.msra.mxu0 0.0
    %4651 = vmatprep.subr.mxu0 0.0
    %4652 = vmatpush2.msra.mxu0 0.0
    %4653 = vmatprep.subr.mxu0 0.0
    %4654 = vmatpush2.msra.mxu0 0.0
    %4655 = vmatprep.subr.mxu0 0.0
    %4656 = vmatpush2.msra.mxu0 0.0
    %4657 = vmatprep.subr.mxu0 0.0
    %4658 = vmatpush2.msra.mxu0 0.0
    %4659 = vmatprep.subr.mxu0 0.0
    %4660 = vmatpush2.msra.mxu0 0.0
    %4661 = vmatprep.subr.mxu0 0.0
    %4662 = vmatpush2.msra.mxu0 0.0
    %4663 = vmatprep.subr.mxu0 0.0
    %4664 = vmatpush2.msra.mxu0 0.0
    %4665 = vmatprep.subr.mxu0 0.0
    %4666 = vmatpush2.msra.mxu0 0.0
    %4667 = vmatprep.subr.mxu0 0.0
    %4668 = vmatpush2.msra.mxu0 0.0
    %4669 = vmatprep.subr.mxu0 0.0
    %4670 = vmatpush2.msra.mxu0 0.0
    %4671 = vmatprep.subr.mxu0 0.0
    %4672 = vmatpush2.msra.mxu0 0.0
    %4673 = vmatprep.subr.mxu0 0.0
    %4674 = vmatpush2.msra.mxu0 0.0
    %4675 = vmatprep.subr.mxu0 0.0
    %4676 = vmatpush2.msra.mxu0 0.0
    %4677 = vmatprep.subr.mxu0 0.0
    %4678 = vmatpush2.msra.mxu0 0.0
    %4679 = vmatprep.mubr.f32.mxu0 0.0
    %4680 = vmatmul.mubr.f32.gmra.mxu0 %v3891
    %v4681 = vpop.f32.mrf.mxu0
    %v4682 = vadd.f32 %v4614, %v4681
    %v4683 = vpop.f32.mrf.mxu0
    %4684 = vdwg.mxu0
    %v4685 = vadd.f32 %v4682, %v1111
    %v4686 = vxor.u32 %v4469, 2147483648
    %v4687 = vmul.f32 %v4686, 1.442695
    %v4688 = vpow.pop %v4687
    %v4689 = vadd.f32 %v4688, 1.0
    %v4690 = vrcp.pop %v4689
    %v4691 = vmul.f32 1.0, %v4690
    %v4692 = vxor.u32 %v4541, 2147483648
    %v4693 = vmul.f32 %v4692, 1.442695
    %v4694 = vpow.pop %v4693
    %v4695 = vadd.f32 %v4694, 1.0
    %v4696 = vrcp.pop %v4695
    %v4697 = vmul.f32 1.0, %v4696
    %v4698 = vtanh.pop %v4613
    %v4699 = vxor.u32 %v4685, 2147483648
    %v4700 = vmul.f32 %v4699, 1.442695
    %v4701 = vpow.pop %v4700
    %v4702 = vadd.f32 %v4701, 1.0
    %v4703 = vrcp.pop %v4702
    %v4704 = vmul.f32 1.0, %v4703
    %v4705 = vmul.f32 %v4697, %v3814
    %v4706 = vmul.f32 %v4691, %v4698
    %v4707 = vadd.f32 %v4705, %v4706
    %v4708 = vtanh.pop %v4707
    %v4709 = vmul.f32 %v4704, %v4708
    %v4711 = vsel %vm210, %v4707, 0
    %4713 = vmatprep.subr.mxu0 0.0
    %4714 = vmatpush1.msra.mxu0 0.0
    %4715 = vmatprep.subr.mxu0 0.0
    %4716 = vmatpush1.msra.mxu0 0.0
    %4717 = vmatprep.subr.mxu0 0.0
    %4718 = vmatpush1.msra.mxu0 0.0
    %4719 = vmatprep.subr.mxu0 0.0
    %4720 = vmatpush1.msra.mxu0 0.0
    %4721 = vmatprep.subr.mxu0 0.0
    %4722 = vmatpush1.msra.mxu0 0.0
    %4723 = vmatprep.subr.mxu0 0.0
    %4724 = vmatpush1.msra.mxu0 0.0
    %4725 = vmatprep.subr.mxu0 0.0
    %4726 = vmatpush1.msra.mxu0 0.0
    %4727 = vmatprep.subr.mxu0 0.0
    %4728 = vmatpush1.msra.mxu0 0.0
    %4729 = vmatprep.subr.mxu0 0.0
    %4730 = vmatpush1.msra.mxu0 0.0
    %4731 = vmatprep.subr.mxu0 0.0
    %4732 = vmatpush1.msra.mxu0 0.0
    %4733 = vmatprep.subr.mxu0 0.0
    %4734 = vmatpush1.msra.mxu0 0.0
    %4735 = vmatprep.subr.mxu0 0.0
    %4736 = vmatpush1.msra.mxu0 0.0
    %4737 = vmatprep.subr.mxu0 0.0
    %4738 = vmatpush1.msra.mxu0 %v92
    %4739 = vmatprep.subr.mxu0 0.0
    %4740 = vmatpush1.msra.mxu0 %v91
    %4741 = vmatprep.subr.mxu0 0.0
    %4742 = vmatpush1.msra.mxu0 %v90
    %4743 = vmatprep.subr.mxu0 0.0
    %4744 = vmatpush1.msra.mxu0 %v89
    %4745 = vmatprep.subr.mxu0 0.0
    %4746 = vmatpush2.msra.mxu0 0.0
    %4747 = vmatprep.subr.mxu0 0.0
    %4748 = vmatpush2.msra.mxu0 0.0
    %4749 = vmatprep.subr.mxu0 0.0
    %4750 = vmatpush2.msra.mxu0 0.0
    %4751 = vmatprep.subr.mxu0 0.0
    %4752 = vmatpush2.msra.mxu0 0.0
    %4753 = vmatprep.subr.mxu0 0.0
    %4754 = vmatpush2.msra.mxu0 0.0
    %4755 = vmatprep.subr.mxu0 0.0
    %4756 = vmatpush2.msra.mxu0 0.0
    %4757 = vmatprep.subr.mxu0 0.0
    %4758 = vmatpush2.msra.mxu0 0.0
    %4759 = vmatprep.subr.mxu0 0.0
    %4760 = vmatpush2.msra.mxu0 0.0
    %4761 = vmatprep.subr.mxu0 0.0
    %4762 = vmatpush2.msra.mxu0 0.0
    %4763 = vmatprep.subr.mxu0 0.0
    %4764 = vmatpush2.msra.mxu0 0.0
    %4765 = vmatprep.subr.mxu0 0.0
    %4766 = vmatpush2.msra.mxu0 0.0
    %4767 = vmatprep.subr.mxu0 0.0
    %4768 = vmatpush2.msra.mxu0 0.0
    %4769 = vmatprep.subr.mxu0 0.0
    %4770 = vmatpush2.msra.mxu0 0.0
    %4771 = vmatprep.subr.mxu0 0.0
    %4772 = vmatpush2.msra.mxu0 0.0
    %4773 = vmatprep.subr.mxu0 0.0
    %4774 = vmatpush2.msra.mxu0 0.0
    %4775 = vmatprep.subr.mxu0 0.0
    %4776 = vmatpush2.msra.mxu0 0.0
    %4777 = vmatprep.mubr.f32.mxu0 0.0
    %4778 = vmatmul.mubr.f32.gmra.mxu0 %v4711
    %v4779 = vpop.f32.mrf.mxu0
    %v4780 = vadd.f32 0.0, %v4779
    %v4781 = vpop.f32.mrf.mxu0
    %4782 = vdwg.mxu0
    %v4784 = vsel %vm210, %v4709, 0
    %4786 = vmatprep.subr.mxu0 0.0
    %4787 = vmatpush1.msra.mxu0 0.0
    %4788 = vmatprep.subr.mxu0 0.0
    %4789 = vmatpush1.msra.mxu0 0.0
    %4790 = vmatprep.subr.mxu0 0.0
    %4791 = vmatpush1.msra.mxu0 0.0
    %4792 = vmatprep.subr.mxu0 0.0
    %4793 = vmatpush1.msra.mxu0 0.0
    %4794 = vmatprep.subr.mxu0 0.0
    %4795 = vmatpush1.msra.mxu0 0.0
    %4796 = vmatprep.subr.mxu0 0.0
    %4797 = vmatpush1.msra.mxu0 0.0
    %4798 = vmatprep.subr.mxu0 0.0
    %4799 = vmatpush1.msra.mxu0 0.0
    %4800 = vmatprep.subr.mxu0 0.0
    %4801 = vmatpush1.msra.mxu0 0.0
    %4802 = vmatprep.subr.mxu0 0.0
    %4803 = vmatpush1.msra.mxu0 0.0
    %4804 = vmatprep.subr.mxu0 0.0
    %4805 = vmatpush1.msra.mxu0 0.0
    %4806 = vmatprep.subr.mxu0 0.0
    %4807 = vmatpush1.msra.mxu0 0.0
    %4808 = vmatprep.subr.mxu0 0.0
    %4809 = vmatpush1.msra.mxu0 0.0
    %4810 = vmatprep.subr.mxu0 0.0
    %4811 = vmatpush1.msra.mxu0 %v88
    %4812 = vmatprep.subr.mxu0 0.0
    %4813 = vmatpush1.msra.mxu0 %v87
    %4814 = vmatprep.subr.mxu0 0.0
    %4815 = vmatpush1.msra.mxu0 %v86
    %4816 = vmatprep.subr.mxu0 0.0
    %4817 = vmatpush1.msra.mxu0 %v85
    %4818 = vmatprep.subr.mxu0 0.0
    %4819 = vmatpush2.msra.mxu0 0.0
    %4820 = vmatprep.subr.mxu0 0.0
    %4821 = vmatpush2.msra.mxu0 0.0
    %4822 = vmatprep.subr.mxu0 0.0
    %4823 = vmatpush2.msra.mxu0 0.0
    %4824 = vmatprep.subr.mxu0 0.0
    %4825 = vmatpush2.msra.mxu0 0.0
    %4826 = vmatprep.subr.mxu0 0.0
    %4827 = vmatpush2.msra.mxu0 0.0
    %4828 = vmatprep.subr.mxu0 0.0
    %4829 = vmatpush2.msra.mxu0 0.0
    %4830 = vmatprep.subr.mxu0 0.0
    %4831 = vmatpush2.msra.mxu0 0.0
    %4832 = vmatprep.subr.mxu0 0.0
    %4833 = vmatpush2.msra.mxu0 0.0
    %4834 = vmatprep.subr.mxu0 0.0
    %4835 = vmatpush2.msra.mxu0 0.0
    %4836 = vmatprep.subr.mxu0 0.0
    %4837 = vmatpush2.msra.mxu0 0.0
    %4838 = vmatprep.subr.mxu0 0.0
    %4839 = vmatpush2.msra.mxu0 0.0
    %4840 = vmatprep.subr.mxu0 0.0
    %4841 = vmatpush2.msra.mxu0 0.0
    %4842 = vmatprep.subr.mxu0 0.0
    %4843 = vmatpush2.msra.mxu0 0.0
    %4844 = vmatprep.subr.mxu0 0.0
    %4845 = vmatpush2.msra.mxu0 0.0
    %4846 = vmatprep.subr.mxu0 0.0
    %4847 = vmatpush2.msra.mxu0 0.0
    %4848 = vmatprep.subr.mxu0 0.0
    %4849 = vmatpush2.msra.mxu0 0.0
    %4850 = vmatprep.mubr.f32.mxu0 0.0
    %4851 = vmatmul.mubr.f32.gmra.mxu0 %v4784
    %v4852 = vpop.f32.mrf.mxu0
    %v4853 = vadd.f32 %v4780, %v4852
    %v4854 = vpop.f32.mrf.mxu0
    %4855 = vdwg.mxu0
    %v4858 = vunpack.c.l.s4 1966171168
    %v4859 = vunpack.c.0.s8 %v4858
    %v4860 = vlaneseq
    %v4861 = vshrl.u32 %v4860, 7
    %v4862 = vsub.s32 %v4859, %v4861
    %v4863 = vrot.slane %v4853, %v4862
    %v4864 = vcombine.high %v4863, %v4863
    %v4866 = vunpack.c.l.s4 1966171168
    %v4867 = vunpack.c.0.s8 %v4866
    %v4868 = vlaneseq
    %v4869 = vshrl.u32 %v4868, 7
    %v4870 = vsub.s32 %v4867, %v4869
    %v4871 = vrot.slane %v4863, %v4870
    %v4873 = vunpack.c.l.s4 1966171168
    %v4874 = vunpack.c.0.s8 %v4873
    %v4875 = vlaneseq
    %v4876 = vshrl.u32 %v4875, 7
    %v4877 = vsub.s32 %v4874, %v4876
    %v4878 = vrot.slane %v4864, %v4877
    %v4879 = vlaneseq
    %v4880 = vshrl.u32 %v4879, 7
    %v4881 = vsub.s32 0, %v4880
    %v4882 = vrot.slane %v4871, %v4881
    %v4883 = vlaneseq
    %v4884 = vshrl.u32 %v4883, 7
    %v4885 = vsub.s32 0, %v4884
    %v4886 = vrot.slane %v4878, %v4885
    %v4889 = vadd.f32 %v198, %v4882
    %v4890 = vadd.f32 %v203, %v4886
    %v4891 = vtanh.pop %v4889
    %v4892 = vtanh.pop %v4890
    %v4894 = vsel %vm124, %v4891, 0
    %4896 = vmatprep.subr.mxu0 0.0
    %4897 = vmatpush1.xpose.msra.mxu0 0.0
    %4898 = vmatprep.subr.mxu0 0.0
    %4899 = vmatpush1.xpose.msra.mxu0 0.0
    %4900 = vmatprep.subr.mxu0 0.0
    %4901 = vmatpush1.xpose.msra.mxu0 0.0
    %4902 = vmatprep.subr.mxu0 0.0
    %4903 = vmatpush1.xpose.msra.mxu0 0.0
    %4904 = vmatprep.subr.mxu0 0.0
    %4905 = vmatpush1.xpose.msra.mxu0 0.0
    %4906 = vmatprep.subr.mxu0 0.0
    %4907 = vmatpush1.xpose.msra.mxu0 0.0
    %4908 = vmatprep.subr.mxu0 0.0
    %4909 = vmatpush1.xpose.msra.mxu0 0.0
    %4910 = vmatprep.subr.mxu0 0.0
    %4911 = vmatpush1.xpose.msra.mxu0 0.0
    %4912 = vmatprep.subr.mxu0 0.0
    %4913 = vmatpush1.xpose.msra.mxu0 0.0
    %4914 = vmatprep.subr.mxu0 0.0
    %4915 = vmatpush1.xpose.msra.mxu0 0.0
    %4916 = vmatprep.subr.mxu0 0.0
    %4917 = vmatpush1.xpose.msra.mxu0 0.0
    %4918 = vmatprep.subr.mxu0 0.0
    %4919 = vmatpush1.xpose.msra.mxu0 0.0
    %4920 = vmatprep.subr.mxu0 0.0
    %4921 = vmatpush1.xpose.msra.mxu0 0.0
    %4922 = vmatprep.subr.mxu0 0.0
    %4923 = vmatpush1.xpose.msra.mxu0 0.0
    %4924 = vmatprep.subr.mxu0 0.0
    %4925 = vmatpush1.xpose.msra.mxu0 0.0
    %4926 = vmatprep.subr.mxu0 0.0
    %4927 = vmatpush1.xpose.msra.mxu0 %v4894
    %4928 = vmatprep.subr.mxu0 0.0
    %4929 = vmatpush2.xpose.msra.mxu0 0.0
    %4930 = vmatprep.subr.mxu0 0.0
    %4931 = vmatpush2.xpose.msra.mxu0 0.0
    %4932 = vmatprep.subr.mxu0 0.0
    %4933 = vmatpush2.xpose.msra.mxu0 0.0
    %4934 = vmatprep.subr.mxu0 0.0
    %4935 = vmatpush2.xpose.msra.mxu0 0.0
    %4936 = vmatprep.subr.mxu0 0.0
    %4937 = vmatpush2.xpose.msra.mxu0 0.0
    %4938 = vmatprep.subr.mxu0 0.0
    %4939 = vmatpush2.xpose.msra.mxu0 0.0
    %4940 = vmatprep.subr.mxu0 0.0
    %4941 = vmatpush2.xpose.msra.mxu0 0.0
    %4942 = vmatprep.subr.mxu0 0.0
    %4943 = vmatpush2.xpose.msra.mxu0 0.0
    %4944 = vmatprep.subr.mxu0 0.0
    %4945 = vmatpush2.xpose.msra.mxu0 0.0
    %4946 = vmatprep.subr.mxu0 0.0
    %4947 = vmatpush2.xpose.msra.mxu0 0.0
    %4948 = vmatprep.subr.mxu0 0.0
    %4949 = vmatpush2.xpose.msra.mxu0 0.0
    %4950 = vmatprep.subr.mxu0 0.0
    %4951 = vmatpush2.xpose.msra.mxu0 0.0
    %4952 = vmatprep.subr.mxu0 0.0
    %4953 = vmatpush2.xpose.msra.mxu0 0.0
    %4954 = vmatprep.subr.mxu0 0.0
    %4955 = vmatpush2.xpose.msra.mxu0 0.0
    %4956 = vmatprep.subr.mxu0 0.0
    %4957 = vmatpush2.xpose.msra.mxu0 0.0
    %4958 = vmatprep.subr.mxu0 0.0
    %4959 = vmatpush2.xpose.msra.mxu0 0.0
    %4960 = vmatprep.mubr.f32.mxu0 0.0
    %4961 = vmatmul.mubr.f32.gmra.mxu0 %v393
    %v4962 = vpop.f32.mrf.mxu0
    %v4963 = vadd.f32 %v391, %v4962
    %v4964 = vpop.f32.mrf.mxu0
    %4965 = vdwg.mxu0
    %v4967 = vsel %vm124, %v4892, 0
    %4969 = vmatprep.subr.mxu0 0.0
    %4970 = vmatpush1.xpose.msra.mxu0 0.0
    %4971 = vmatprep.subr.mxu0 0.0
    %4972 = vmatpush1.xpose.msra.mxu0 0.0
    %4973 = vmatprep.subr.mxu0 0.0
    %4974 = vmatpush1.xpose.msra.mxu0 0.0
    %4975 = vmatprep.subr.mxu0 0.0
    %4976 = vmatpush1.xpose.msra.mxu0 0.0
    %4977 = vmatprep.subr.mxu0 0.0
    %4978 = vmatpush1.xpose.msra.mxu0 0.0
    %4979 = vmatprep.subr.mxu0 0.0
    %4980 = vmatpush1.xpose.msra.mxu0 0.0
    %4981 = vmatprep.subr.mxu0 0.0
    %4982 = vmatpush1.xpose.msra.mxu0 0.0
    %4983 = vmatprep.subr.mxu0 0.0
    %4984 = vmatpush1.xpose.msra.mxu0 0.0
    %4985 = vmatprep.subr.mxu0 0.0
    %4986 = vmatpush1.xpose.msra.mxu0 0.0
    %4987 = vmatprep.subr.mxu0 0.0
    %4988 = vmatpush1.xpose.msra.mxu0 0.0
    %4989 = vmatprep.subr.mxu0 0.0
    %4990 = vmatpush1.xpose.msra.mxu0 0.0
    %4991 = vmatprep.subr.mxu0 0.0
    %4992 = vmatpush1.xpose.msra.mxu0 0.0
    %4993 = vmatprep.subr.mxu0 0.0
    %4994 = vmatpush1.xpose.msra.mxu0 0.0
    %4995 = vmatprep.subr.mxu0 0.0
    %4996 = vmatpush1.xpose.msra.mxu0 0.0
    %4997 = vmatprep.subr.mxu0 0.0
    %4998 = vmatpush1.xpose.msra.mxu0 0.0
    %4999 = vmatprep.subr.mxu0 0.0
    %5000 = vmatpush1.xpose.msra.mxu0 %v4967
    %5001 = vmatprep.subr.mxu0 0.0
    %5002 = vmatpush2.xpose.msra.mxu0 0.0
    %5003 = vmatprep.subr.mxu0 0.0
    %5004 = vmatpush2.xpose.msra.mxu0 0.0
    %5005 = vmatprep.subr.mxu0 0.0
    %5006 = vmatpush2.xpose.msra.mxu0 0.0
    %5007 = vmatprep.subr.mxu0 0.0
    %5008 = vmatpush2.xpose.msra.mxu0 0.0
    %5009 = vmatprep.subr.mxu0 0.0
    %5010 = vmatpush2.xpose.msra.mxu0 0.0
    %5011 = vmatprep.subr.mxu0 0.0
    %5012 = vmatpush2.xpose.msra.mxu0 0.0
    %5013 = vmatprep.subr.mxu0 0.0
    %5014 = vmatpush2.xpose.msra.mxu0 0.0
    %5015 = vmatprep.subr.mxu0 0.0
    %5016 = vmatpush2.xpose.msra.mxu0 0.0
    %5017 = vmatprep.subr.mxu0 0.0
    %5018 = vmatpush2.xpose.msra.mxu0 0.0
    %5019 = vmatprep.subr.mxu0 0.0
    %5020 = vmatpush2.xpose.msra.mxu0 0.0
    %5021 = vmatprep.subr.mxu0 0.0
    %5022 = vmatpush2.xpose.msra.mxu0 0.0
    %5023 = vmatprep.subr.mxu0 0.0
    %5024 = vmatpush2.xpose.msra.mxu0 0.0
    %5025 = vmatprep.subr.mxu0 0.0
    %5026 = vmatpush2.xpose.msra.mxu0 0.0
    %5027 = vmatprep.subr.mxu0 0.0
    %5028 = vmatpush2.xpose.msra.mxu0 0.0
    %5029 = vmatprep.subr.mxu0 0.0
    %5030 = vmatpush2.xpose.msra.mxu0 0.0
    %5031 = vmatprep.subr.mxu0 0.0
    %5032 = vmatpush2.xpose.msra.mxu0 0.0
    %5033 = vmatprep.mubr.f32.mxu0 0.0
    %5034 = vmatmul.mubr.f32.gmra.mxu0 %v393
    %v5035 = vpop.f32.mrf.mxu0
    %v5036 = vadd.f32 %v391, %v5035
    %v5037 = vpop.f32.mrf.mxu0
    %5038 = vdwg.mxu0
    %v5039 = vsel %vm541, %v4963, -inf
    %5040 = vmax.xlane.f32.xlu0 %v5039
    %v5041 = vpop.xlane.xlu0 %5040
    %v5042 = vsel %vm541, %v5036, -inf
    %5043 = vmax.xlane.f32.xlu0 %v5042
    %v5044 = vpop.xlane.xlu0 %5043
    %v5045 = vsub.f32 %v4963, %v5041
    %v5046 = vsub.f32 %v5036, %v5044
    %v5047 = vmul.f32 %v5045, 1.442695
    %v5048 = vpow.pop %v5047
    %v5049 = vmul.f32 %v5046, 1.442695
    %v5050 = vpow.pop %v5049
    %v5051 = vsel %vm541, %v5048, 0.0
    %5052 = vadd.xlane.f32.xlu0 %v5051
    %v5053 = vpop.xlane.xlu0 %5052
    %v5054 = vsel %vm541, %v5050, 0.0
    %5055 = vadd.xlane.f32.xlu0 %v5054
    %v5056 = vpop.xlane.xlu0 %5055
    %v5057 = vrcp.pop %v5053
    %v5058 = vmul.f32 %v5048, %v5057
    %v5059 = vrcp.pop %v5056
    %v5060 = vmul.f32 %v5050, %v5059
    %v5062 = vsel %vm564, %v5058, 0
    %5064 = vmatprep.subr.mxu0 0.0
    %5065 = vmatpush1.msra.mxu0 0.0
    %5066 = vmatprep.subr.mxu0 0.0
    %5067 = vmatpush1.msra.mxu0 0.0
    %5068 = vmatprep.subr.mxu0 0.0
    %5069 = vmatpush1.msra.mxu0 0.0
    %5070 = vmatprep.subr.mxu0 0.0
    %5071 = vmatpush1.msra.mxu0 0.0
    %5072 = vmatprep.subr.mxu0 0.0
    %5073 = vmatpush1.msra.mxu0 0.0
    %5074 = vmatprep.subr.mxu0 0.0
    %5075 = vmatpush1.msra.mxu0 0.0
    %5076 = vmatprep.subr.mxu0 0.0
    %5077 = vmatpush1.msra.mxu0 0.0
    %5078 = vmatprep.subr.mxu0 0.0
    %5079 = vmatpush1.msra.mxu0 0.0
    %5080 = vmatprep.subr.mxu0 0.0
    %5081 = vmatpush1.msra.mxu0 0.0
    %5082 = vmatprep.subr.mxu0 0.0
    %5083 = vmatpush1.msra.mxu0 0.0
    %5084 = vmatprep.subr.mxu0 0.0
    %5085 = vmatpush1.msra.mxu0 0.0
    %5086 = vmatprep.subr.mxu0 0.0
    %5087 = vmatpush1.msra.mxu0 0.0
    %5088 = vmatprep.subr.mxu0 0.0
    %5089 = vmatpush1.msra.mxu0 0.0
    %5090 = vmatprep.subr.mxu0 0.0
    %5091 = vmatpush1.msra.mxu0 0.0
    %5092 = vmatprep.subr.mxu0 0.0
    %5093 = vmatpush1.msra.mxu0 0.0
    %5094 = vmatprep.subr.mxu0 0.0
    %5095 = vmatpush1.msra.mxu0 %v117
    %5096 = vmatprep.subr.mxu0 0.0
    %5097 = vmatpush2.msra.mxu0 0.0
    %5098 = vmatprep.subr.mxu0 0.0
    %5099 = vmatpush2.msra.mxu0 0.0
    %5100 = vmatprep.subr.mxu0 0.0
    %5101 = vmatpush2.msra.mxu0 0.0
    %5102 = vmatprep.subr.mxu0 0.0
    %5103 = vmatpush2.msra.mxu0 0.0
    %5104 = vmatprep.subr.mxu0 0.0
    %5105 = vmatpush2.msra.mxu0 0.0
    %5106 = vmatprep.subr.mxu0 0.0
    %5107 = vmatpush2.msra.mxu0 0.0
    %5108 = vmatprep.subr.mxu0 0.0
    %5109 = vmatpush2.msra.mxu0 0.0
    %5110 = vmatprep.subr.mxu0 0.0
    %5111 = vmatpush2.msra.mxu0 0.0
    %5112 = vmatprep.subr.mxu0 0.0
    %5113 = vmatpush2.msra.mxu0 0.0
    %5114 = vmatprep.subr.mxu0 0.0
    %5115 = vmatpush2.msra.mxu0 0.0
    %5116 = vmatprep.subr.mxu0 0.0
    %5117 = vmatpush2.msra.mxu0 0.0
    %5118 = vmatprep.subr.mxu0 0.0
    %5119 = vmatpush2.msra.mxu0 0.0
    %5120 = vmatprep.subr.mxu0 0.0
    %5121 = vmatpush2.msra.mxu0 0.0
    %5122 = vmatprep.subr.mxu0 0.0
    %5123 = vmatpush2.msra.mxu0 0.0
    %5124 = vmatprep.subr.mxu0 0.0
    %5125 = vmatpush2.msra.mxu0 0.0
    %5126 = vmatprep.subr.mxu0 0.0
    %5127 = vmatpush2.msra.mxu0 0.0
    %5128 = vmatprep.mubr.f32.mxu0 0.0
    %5129 = vmatmul.mubr.f32.gmra.mxu0 %v5062
    %v5130 = vpop.f32.mrf.mxu0
    %v5131 = vadd.f32 0.0, %v5130
    %v5132 = vpop.f32.mrf.mxu0
    %5133 = vdwg.mxu0
    %v5135 = vsel %vm564, %v5060, 0
    %5137 = vmatprep.subr.mxu0 0.0
    %5138 = vmatpush1.msra.mxu0 0.0
    %5139 = vmatprep.subr.mxu0 0.0
    %5140 = vmatpush1.msra.mxu0 0.0
    %5141 = vmatprep.subr.mxu0 0.0
    %5142 = vmatpush1.msra.mxu0 0.0
    %5143 = vmatprep.subr.mxu0 0.0
    %5144 = vmatpush1.msra.mxu0 0.0
    %5145 = vmatprep.subr.mxu0 0.0
    %5146 = vmatpush1.msra.mxu0 0.0
    %5147 = vmatprep.subr.mxu0 0.0
    %5148 = vmatpush1.msra.mxu0 0.0
    %5149 = vmatprep.subr.mxu0 0.0
    %5150 = vmatpush1.msra.mxu0 0.0
    %5151 = vmatprep.subr.mxu0 0.0
    %5152 = vmatpush1.msra.mxu0 0.0
    %5153 = vmatprep.subr.mxu0 0.0
    %5154 = vmatpush1.msra.mxu0 0.0
    %5155 = vmatprep.subr.mxu0 0.0
    %5156 = vmatpush1.msra.mxu0 0.0
    %5157 = vmatprep.subr.mxu0 0.0
    %5158 = vmatpush1.msra.mxu0 0.0
    %5159 = vmatprep.subr.mxu0 0.0
    %5160 = vmatpush1.msra.mxu0 0.0
    %5161 = vmatprep.subr.mxu0 0.0
    %5162 = vmatpush1.msra.mxu0 0.0
    %5163 = vmatprep.subr.mxu0 0.0
    %5164 = vmatpush1.msra.mxu0 0.0
    %5165 = vmatprep.subr.mxu0 0.0
    %5166 = vmatpush1.msra.mxu0 0.0
    %5167 = vmatprep.subr.mxu0 0.0
    %5168 = vmatpush1.msra.mxu0 %v118
    %5169 = vmatprep.subr.mxu0 0.0
    %5170 = vmatpush2.msra.mxu0 0.0
    %5171 = vmatprep.subr.mxu0 0.0
    %5172 = vmatpush2.msra.mxu0 0.0
    %5173 = vmatprep.subr.mxu0 0.0
    %5174 = vmatpush2.msra.mxu0 0.0
    %5175 = vmatprep.subr.mxu0 0.0
    %5176 = vmatpush2.msra.mxu0 0.0
    %5177 = vmatprep.subr.mxu0 0.0
    %5178 = vmatpush2.msra.mxu0 0.0
    %5179 = vmatprep.subr.mxu0 0.0
    %5180 = vmatpush2.msra.mxu0 0.0
    %5181 = vmatprep.subr.mxu0 0.0
    %5182 = vmatpush2.msra.mxu0 0.0
    %5183 = vmatprep.subr.mxu0 0.0
    %5184 = vmatpush2.msra.mxu0 0.0
    %5185 = vmatprep.subr.mxu0 0.0
    %5186 = vmatpush2.msra.mxu0 0.0
    %5187 = vmatprep.subr.mxu0 0.0
    %5188 = vmatpush2.msra.mxu0 0.0
    %5189 = vmatprep.subr.mxu0 0.0
    %5190 = vmatpush2.msra.mxu0 0.0
    %5191 = vmatprep.subr.mxu0 0.0
    %5192 = vmatpush2.msra.mxu0 0.0
    %5193 = vmatprep.subr.mxu0 0.0
    %5194 = vmatpush2.msra.mxu0 0.0
    %5195 = vmatprep.subr.mxu0 0.0
    %5196 = vmatpush2.msra.mxu0 0.0
    %5197 = vmatprep.subr.mxu0 0.0
    %5198 = vmatpush2.msra.mxu0 0.0
    %5199 = vmatprep.subr.mxu0 0.0
    %5200 = vmatpush2.msra.mxu0 0.0
    %5201 = vmatprep.mubr.f32.mxu0 0.0
    %5202 = vmatmul.mubr.f32.gmra.mxu0 %v5135
    %v5203 = vpop.f32.mrf.mxu0
    %v5204 = vadd.f32 0.0, %v5203
    %v5205 = vpop.f32.mrf.mxu0
    %5206 = vdwg.mxu0
    %v5209 = vrot.slane %v5204, 7
    %v5210 = vsel %vm714, %v5209, %v5131
    %5211 = vrot.lane.b32.xlu0 %v209, 123
    %v5212 = vpop.permute.xlu0 %5211
    %v5214 = vsel %vm124, %v5210, 0
    %5216 = vmatprep.subr.mxu0 0.0
    %5217 = vmatpush1.msra.mxu0 0.0
    %5218 = vmatprep.subr.mxu0 0.0
    %5219 = vmatpush1.msra.mxu0 0.0
    %5220 = vmatprep.subr.mxu0 0.0
    %5221 = vmatpush1.msra.mxu0 0.0
    %5222 = vmatprep.subr.mxu0 0.0
    %5223 = vmatpush1.msra.mxu0 0.0
    %5224 = vmatprep.subr.mxu0 0.0
    %5225 = vmatpush1.msra.mxu0 0.0
    %5226 = vmatprep.subr.mxu0 0.0
    %5227 = vmatpush1.msra.mxu0 0.0
    %5228 = vmatprep.subr.mxu0 0.0
    %5229 = vmatpush1.msra.mxu0 0.0
    %5230 = vmatprep.subr.mxu0 0.0
    %5231 = vmatpush1.msra.mxu0 0.0
    %5232 = vmatprep.subr.mxu0 0.0
    %5233 = vmatpush1.msra.mxu0 0.0
    %5234 = vmatprep.subr.mxu0 0.0
    %5235 = vmatpush1.msra.mxu0 0.0
    %5236 = vmatprep.subr.mxu0 0.0
    %5237 = vmatpush1.msra.mxu0 0.0
    %5238 = vmatprep.subr.mxu0 0.0
    %5239 = vmatpush1.msra.mxu0 0.0
    %5240 = vmatprep.subr.mxu0 0.0
    %5241 = vmatpush1.msra.mxu0 0.0
    %5242 = vmatprep.subr.mxu0 0.0
    %5243 = vmatpush1.msra.mxu0 0.0
    %5244 = vmatprep.subr.mxu0 0.0
    %5245 = vmatpush1.msra.mxu0 %v106
    %5246 = vmatprep.subr.mxu0 0.0
    %5247 = vmatpush1.msra.mxu0 %v105
    %5248 = vmatprep.subr.mxu0 0.0
    %5249 = vmatpush2.msra.mxu0 0.0
    %5250 = vmatprep.subr.mxu0 0.0
    %5251 = vmatpush2.msra.mxu0 0.0
    %5252 = vmatprep.subr.mxu0 0.0
    %5253 = vmatpush2.msra.mxu0 0.0
    %5254 = vmatprep.subr.mxu0 0.0
    %5255 = vmatpush2.msra.mxu0 0.0
    %5256 = vmatprep.subr.mxu0 0.0
    %5257 = vmatpush2.msra.mxu0 0.0
    %5258 = vmatprep.subr.mxu0 0.0
    %5259 = vmatpush2.msra.mxu0 0.0
    %5260 = vmatprep.subr.mxu0 0.0
    %5261 = vmatpush2.msra.mxu0 0.0
    %5262 = vmatprep.subr.mxu0 0.0
    %5263 = vmatpush2.msra.mxu0 0.0
    %5264 = vmatprep.subr.mxu0 0.0
    %5265 = vmatpush2.msra.mxu0 0.0
    %5266 = vmatprep.subr.mxu0 0.0
    %5267 = vmatpush2.msra.mxu0 0.0
    %5268 = vmatprep.subr.mxu0 0.0
    %5269 = vmatpush2.msra.mxu0 0.0
    %5270 = vmatprep.subr.mxu0 0.0
    %5271 = vmatpush2.msra.mxu0 0.0
    %5272 = vmatprep.subr.mxu0 0.0
    %5273 = vmatpush2.msra.mxu0 0.0
    %5274 = vmatprep.subr.mxu0 0.0
    %5275 = vmatpush2.msra.mxu0 0.0
    %5276 = vmatprep.subr.mxu0 0.0
    %5277 = vmatpush2.msra.mxu0 0.0
    %5278 = vmatprep.subr.mxu0 0.0
    %5279 = vmatpush2.msra.mxu0 0.0
    %5280 = vmatprep.mubr.f32.mxu0 0.0
    %5281 = vmatmul.mubr.f32.gmra.mxu0 %v5214
    %v5282 = vpop.f32.mrf.mxu0
    %v5283 = vadd.f32 %v5212, %v5282
    %v5284 = vpop.f32.mrf.mxu0
    %5285 = vdwg.mxu0
    %5287 = vset.pattern.permute.xlu0 0
    %5288 = vperm.xlu0 %5287, %v5283
    %v5289 = vpop.permute.xlu0 %5288
    %v5291 = vmul.f32 %v5289, %v796
    %5292 = vmatprep.subr.mxu0 0.0
    %5293 = vmatpush1.msra.mxu0 0.0
    %5294 = vmatprep.subr.mxu0 0.0
    %5295 = vmatpush1.msra.mxu0 0.0
    %5296 = vmatprep.subr.mxu0 0.0
    %5297 = vmatpush1.msra.mxu0 0.0
    %5298 = vmatprep.subr.mxu0 0.0
    %5299 = vmatpush1.msra.mxu0 0.0
    %5300 = vmatprep.subr.mxu0 0.0
    %5301 = vmatpush1.msra.mxu0 0.0
    %5302 = vmatprep.subr.mxu0 0.0
    %5303 = vmatpush1.msra.mxu0 0.0
    %5304 = vmatprep.subr.mxu0 0.0
    %5305 = vmatpush1.msra.mxu0 0.0
    %5306 = vmatprep.subr.mxu0 0.0
    %5307 = vmatpush1.msra.mxu0 0.0
    %5308 = vmatprep.subr.mxu0 0.0
    %5309 = vmatpush1.msra.mxu0 0.0
    %5310 = vmatprep.subr.mxu0 0.0
    %5311 = vmatpush1.msra.mxu0 0.0
    %5312 = vmatprep.subr.mxu0 0.0
    %5313 = vmatpush1.msra.mxu0 0.0
    %5314 = vmatprep.subr.mxu0 0.0
    %5315 = vmatpush1.msra.mxu0 0.0
    %5316 = vmatprep.subr.mxu0 0.0
    %5317 = vmatpush1.msra.mxu0 %v72
    %5318 = vmatprep.subr.mxu0 0.0
    %5319 = vmatpush1.msra.mxu0 %v71
    %5320 = vmatprep.subr.mxu0 0.0
    %5321 = vmatpush1.msra.mxu0 %v70
    %5322 = vmatprep.subr.mxu0 0.0
    %5323 = vmatpush1.msra.mxu0 %v69
    %5324 = vmatprep.subr.mxu0 0.0
    %5325 = vmatpush2.msra.mxu0 0.0
    %5326 = vmatprep.subr.mxu0 0.0
    %5327 = vmatpush2.msra.mxu0 0.0
    %5328 = vmatprep.subr.mxu0 0.0
    %5329 = vmatpush2.msra.mxu0 0.0
    %5330 = vmatprep.subr.mxu0 0.0
    %5331 = vmatpush2.msra.mxu0 0.0
    %5332 = vmatprep.subr.mxu0 0.0
    %5333 = vmatpush2.msra.mxu0 0.0
    %5334 = vmatprep.subr.mxu0 0.0
    %5335 = vmatpush2.msra.mxu0 0.0
    %5336 = vmatprep.subr.mxu0 0.0
    %5337 = vmatpush2.msra.mxu0 0.0
    %5338 = vmatprep.subr.mxu0 0.0
    %5339 = vmatpush2.msra.mxu0 0.0
    %5340 = vmatprep.subr.mxu0 0.0
    %5341 = vmatpush2.msra.mxu0 0.0
    %5342 = vmatprep.subr.mxu0 0.0
    %5343 = vmatpush2.msra.mxu0 0.0
    %5344 = vmatprep.subr.mxu0 0.0
    %5345 = vmatpush2.msra.mxu0 0.0
    %5346 = vmatprep.subr.mxu0 0.0
    %5347 = vmatpush2.msra.mxu0 0.0
    %5348 = vmatprep.subr.mxu0 0.0
    %5349 = vmatpush2.msra.mxu0 0.0
    %5350 = vmatprep.subr.mxu0 0.0
    %5351 = vmatpush2.msra.mxu0 0.0
    %5352 = vmatprep.subr.mxu0 0.0
    %5353 = vmatpush2.msra.mxu0 0.0
    %5354 = vmatprep.subr.mxu0 0.0
    %5355 = vmatpush2.msra.mxu0 0.0
    %5356 = vmatprep.mubr.f32.mxu0 0.0
    %5357 = vmatmul.mubr.f32.gmra.mxu0 %v4784
    %v5358 = vpop.f32.mrf.mxu0
    %v5359 = vadd.f32 %v5291, %v5358
    %v5360 = vpop.f32.mrf.mxu0
    %5361 = vdwg.mxu0
    %v5362 = vadd.f32 %v5359, %v871
    %v5363 = vmul.f32 %v5289, %v876
    %5364 = vmatprep.subr.mxu0 0.0
    %5365 = vmatpush1.msra.mxu0 0.0
    %5366 = vmatprep.subr.mxu0 0.0
    %5367 = vmatpush1.msra.mxu0 0.0
    %5368 = vmatprep.subr.mxu0 0.0
    %5369 = vmatpush1.msra.mxu0 0.0
    %5370 = vmatprep.subr.mxu0 0.0
    %5371 = vmatpush1.msra.mxu0 0.0
    %5372 = vmatprep.subr.mxu0 0.0
    %5373 = vmatpush1.msra.mxu0 0.0
    %5374 = vmatprep.subr.mxu0 0.0
    %5375 = vmatpush1.msra.mxu0 0.0
    %5376 = vmatprep.subr.mxu0 0.0
    %5377 = vmatpush1.msra.mxu0 0.0
    %5378 = vmatprep.subr.mxu0 0.0
    %5379 = vmatpush1.msra.mxu0 0.0
    %5380 = vmatprep.subr.mxu0 0.0
    %5381 = vmatpush1.msra.mxu0 0.0
    %5382 = vmatprep.subr.mxu0 0.0
    %5383 = vmatpush1.msra.mxu0 0.0
    %5384 = vmatprep.subr.mxu0 0.0
    %5385 = vmatpush1.msra.mxu0 0.0
    %5386 = vmatprep.subr.mxu0 0.0
    %5387 = vmatpush1.msra.mxu0 0.0
    %5388 = vmatprep.subr.mxu0 0.0
    %5389 = vmatpush1.msra.mxu0 %v76
    %5390 = vmatprep.subr.mxu0 0.0
    %5391 = vmatpush1.msra.mxu0 %v75
    %5392 = vmatprep.subr.mxu0 0.0
    %5393 = vmatpush1.msra.mxu0 %v74
    %5394 = vmatprep.subr.mxu0 0.0
    %5395 = vmatpush1.msra.mxu0 %v73
    %5396 = vmatprep.subr.mxu0 0.0
    %5397 = vmatpush2.msra.mxu0 0.0
    %5398 = vmatprep.subr.mxu0 0.0
    %5399 = vmatpush2.msra.mxu0 0.0
    %5400 = vmatprep.subr.mxu0 0.0
    %5401 = vmatpush2.msra.mxu0 0.0
    %5402 = vmatprep.subr.mxu0 0.0
    %5403 = vmatpush2.msra.mxu0 0.0
    %5404 = vmatprep.subr.mxu0 0.0
    %5405 = vmatpush2.msra.mxu0 0.0
    %5406 = vmatprep.subr.mxu0 0.0
    %5407 = vmatpush2.msra.mxu0 0.0
    %5408 = vmatprep.subr.mxu0 0.0
    %5409 = vmatpush2.msra.mxu0 0.0
    %5410 = vmatprep.subr.mxu0 0.0
    %5411 = vmatpush2.msra.mxu0 0.0
    %5412 = vmatprep.subr.mxu0 0.0
    %5413 = vmatpush2.msra.mxu0 0.0
    %5414 = vmatprep.subr.mxu0 0.0
    %5415 = vmatpush2.msra.mxu0 0.0
    %5416 = vmatprep.subr.mxu0 0.0
    %5417 = vmatpush2.msra.mxu0 0.0
    %5418 = vmatprep.subr.mxu0 0.0
    %5419 = vmatpush2.msra.mxu0 0.0
    %5420 = vmatprep.subr.mxu0 0.0
    %5421 = vmatpush2.msra.mxu0 0.0
    %5422 = vmatprep.subr.mxu0 0.0
    %5423 = vmatpush2.msra.mxu0 0.0
    %5424 = vmatprep.subr.mxu0 0.0
    %5425 = vmatpush2.msra.mxu0 0.0
    %5426 = vmatprep.subr.mxu0 0.0
    %5427 = vmatpush2.msra.mxu0 0.0
    %5428 = vmatprep.mubr.f32.mxu0 0.0
    %5429 = vmatmul.mubr.f32.gmra.mxu0 %v4784
    %v5430 = vpop.f32.mrf.mxu0
    %v5431 = vadd.f32 %v5363, %v5430
    %v5432 = vpop.f32.mrf.mxu0
    %5433 = vdwg.mxu0
    %v5434 = vadd.f32 %v5431, %v951
    %v5435 = vmul.f32 %v5289, %v956
    %5436 = vmatprep.subr.mxu0 0.0
    %5437 = vmatpush1.msra.mxu0 0.0
    %5438 = vmatprep.subr.mxu0 0.0
    %5439 = vmatpush1.msra.mxu0 0.0
    %5440 = vmatprep.subr.mxu0 0.0
    %5441 = vmatpush1.msra.mxu0 0.0
    %5442 = vmatprep.subr.mxu0 0.0
    %5443 = vmatpush1.msra.mxu0 0.0
    %5444 = vmatprep.subr.mxu0 0.0
    %5445 = vmatpush1.msra.mxu0 0.0
    %5446 = vmatprep.subr.mxu0 0.0
    %5447 = vmatpush1.msra.mxu0 0.0
    %5448 = vmatprep.subr.mxu0 0.0
    %5449 = vmatpush1.msra.mxu0 0.0
    %5450 = vmatprep.subr.mxu0 0.0
    %5451 = vmatpush1.msra.mxu0 0.0
    %5452 = vmatprep.subr.mxu0 0.0
    %5453 = vmatpush1.msra.mxu0 0.0
    %5454 = vmatprep.subr.mxu0 0.0
    %5455 = vmatpush1.msra.mxu0 0.0
    %5456 = vmatprep.subr.mxu0 0.0
    %5457 = vmatpush1.msra.mxu0 0.0
    %5458 = vmatprep.subr.mxu0 0.0
    %5459 = vmatpush1.msra.mxu0 0.0
    %5460 = vmatprep.subr.mxu0 0.0
    %5461 = vmatpush1.msra.mxu0 %v80
    %5462 = vmatprep.subr.mxu0 0.0
    %5463 = vmatpush1.msra.mxu0 %v79
    %5464 = vmatprep.subr.mxu0 0.0
    %5465 = vmatpush1.msra.mxu0 %v78
    %5466 = vmatprep.subr.mxu0 0.0
    %5467 = vmatpush1.msra.mxu0 %v77
    %5468 = vmatprep.subr.mxu0 0.0
    %5469 = vmatpush2.msra.mxu0 0.0
    %5470 = vmatprep.subr.mxu0 0.0
    %5471 = vmatpush2.msra.mxu0 0.0
    %5472 = vmatprep.subr.mxu0 0.0
    %5473 = vmatpush2.msra.mxu0 0.0
    %5474 = vmatprep.subr.mxu0 0.0
    %5475 = vmatpush2.msra.mxu0 0.0
    %5476 = vmatprep.subr.mxu0 0.0
    %5477 = vmatpush2.msra.mxu0 0.0
    %5478 = vmatprep.subr.mxu0 0.0
    %5479 = vmatpush2.msra.mxu0 0.0
    %5480 = vmatprep.subr.mxu0 0.0
    %5481 = vmatpush2.msra.mxu0 0.0
    %5482 = vmatprep.subr.mxu0 0.0
    %5483 = vmatpush2.msra.mxu0 0.0
    %5484 = vmatprep.subr.mxu0 0.0
    %5485 = vmatpush2.msra.mxu0 0.0
    %5486 = vmatprep.subr.mxu0 0.0
    %5487 = vmatpush2.msra.mxu0 0.0
    %5488 = vmatprep.subr.mxu0 0.0
    %5489 = vmatpush2.msra.mxu0 0.0
    %5490 = vmatprep.subr.mxu0 0.0
    %5491 = vmatpush2.msra.mxu0 0.0
    %5492 = vmatprep.subr.mxu0 0.0
    %5493 = vmatpush2.msra.mxu0 0.0
    %5494 = vmatprep.subr.mxu0 0.0
    %5495 = vmatpush2.msra.mxu0 0.0
    %5496 = vmatprep.subr.mxu0 0.0
    %5497 = vmatpush2.msra.mxu0 0.0
    %5498 = vmatprep.subr.mxu0 0.0
    %5499 = vmatpush2.msra.mxu0 0.0
    %5500 = vmatprep.mubr.f32.mxu0 0.0
    %5501 = vmatmul.mubr.f32.gmra.mxu0 %v4784
    %v5502 = vpop.f32.mrf.mxu0
    %v5503 = vadd.f32 %v5435, %v5502
    %v5504 = vpop.f32.mrf.mxu0
    %5505 = vdwg.mxu0
    %v5506 = vadd.f32 %v5503, %v1031
    %v5507 = vmul.f32 %v5289, %v1036
    %5508 = vmatprep.subr.mxu0 0.0
    %5509 = vmatpush1.msra.mxu0 0.0
    %5510 = vmatprep.subr.mxu0 0.0
    %5511 = vmatpush1.msra.mxu0 0.0
    %5512 = vmatprep.subr.mxu0 0.0
    %5513 = vmatpush1.msra.mxu0 0.0
    %5514 = vmatprep.subr.mxu0 0.0
    %5515 = vmatpush1.msra.mxu0 0.0
    %5516 = vmatprep.subr.mxu0 0.0
    %5517 = vmatpush1.msra.mxu0 0.0
    %5518 = vmatprep.subr.mxu0 0.0
    %5519 = vmatpush1.msra.mxu0 0.0
    %5520 = vmatprep.subr.mxu0 0.0
    %5521 = vmatpush1.msra.mxu0 0.0
    %5522 = vmatprep.subr.mxu0 0.0
    %5523 = vmatpush1.msra.mxu0 0.0
    %5524 = vmatprep.subr.mxu0 0.0
    %5525 = vmatpush1.msra.mxu0 0.0
    %5526 = vmatprep.subr.mxu0 0.0
    %5527 = vmatpush1.msra.mxu0 0.0
    %5528 = vmatprep.subr.mxu0 0.0
    %5529 = vmatpush1.msra.mxu0 0.0
    %5530 = vmatprep.subr.mxu0 0.0
    %5531 = vmatpush1.msra.mxu0 0.0
    %5532 = vmatprep.subr.mxu0 0.0
    %5533 = vmatpush1.msra.mxu0 %v84
    %5534 = vmatprep.subr.mxu0 0.0
    %5535 = vmatpush1.msra.mxu0 %v83
    %5536 = vmatprep.subr.mxu0 0.0
    %5537 = vmatpush1.msra.mxu0 %v82
    %5538 = vmatprep.subr.mxu0 0.0
    %5539 = vmatpush1.msra.mxu0 %v81
    %5540 = vmatprep.subr.mxu0 0.0
    %5541 = vmatpush2.msra.mxu0 0.0
    %5542 = vmatprep.subr.mxu0 0.0
    %5543 = vmatpush2.msra.mxu0 0.0
    %5544 = vmatprep.subr.mxu0 0.0
    %5545 = vmatpush2.msra.mxu0 0.0
    %5546 = vmatprep.subr.mxu0 0.0
    %5547 = vmatpush2.msra.mxu0 0.0
    %5548 = vmatprep.subr.mxu0 0.0
    %5549 = vmatpush2.msra.mxu0 0.0
    %5550 = vmatprep.subr.mxu0 0.0
    %5551 = vmatpush2.msra.mxu0 0.0
    %5552 = vmatprep.subr.mxu0 0.0
    %5553 = vmatpush2.msra.mxu0 0.0
    %5554 = vmatprep.subr.mxu0 0.0
    %5555 = vmatpush2.msra.mxu0 0.0
    %5556 = vmatprep.subr.mxu0 0.0
    %5557 = vmatpush2.msra.mxu0 0.0
    %5558 = vmatprep.subr.mxu0 0.0
    %5559 = vmatpush2.msra.mxu0 0.0
    %5560 = vmatprep.subr.mxu0 0.0
    %5561 = vmatpush2.msra.mxu0 0.0
    %5562 = vmatprep.subr.mxu0 0.0
    %5563 = vmatpush2.msra.mxu0 0.0
    %5564 = vmatprep.subr.mxu0 0.0
    %5565 = vmatpush2.msra.mxu0 0.0
    %5566 = vmatprep.subr.mxu0 0.0
    %5567 = vmatpush2.msra.mxu0 0.0
    %5568 = vmatprep.subr.mxu0 0.0
    %5569 = vmatpush2.msra.mxu0 0.0
    %5570 = vmatprep.subr.mxu0 0.0
    %5571 = vmatpush2.msra.mxu0 0.0
    %5572 = vmatprep.mubr.f32.mxu0 0.0
    %5573 = vmatmul.mubr.f32.gmra.mxu0 %v4784
    %v5574 = vpop.f32.mrf.mxu0
    %v5575 = vadd.f32 %v5507, %v5574
    %v5576 = vpop.f32.mrf.mxu0
    %5577 = vdwg.mxu0
    %v5578 = vadd.f32 %v5575, %v1111
    %v5579 = vxor.u32 %v5362, 2147483648
    %v5580 = vmul.f32 %v5579, 1.442695
    %v5581 = vpow.pop %v5580
    %v5582 = vadd.f32 %v5581, 1.0
    %v5583 = vrcp.pop %v5582
    %v5584 = vmul.f32 1.0, %v5583
    %v5585 = vxor.u32 %v5434, 2147483648
    %v5586 = vmul.f32 %v5585, 1.442695
    %v5587 = vpow.pop %v5586
    %v5588 = vadd.f32 %v5587, 1.0
    %v5589 = vrcp.pop %v5588
    %v5590 = vmul.f32 1.0, %v5589
    %v5591 = vtanh.pop %v5506
    %v5592 = vxor.u32 %v5578, 2147483648
    %v5593 = vmul.f32 %v5592, 1.442695
    %v5594 = vpow.pop %v5593
    %v5595 = vadd.f32 %v5594, 1.0
    %v5596 = vrcp.pop %v5595
    %v5597 = vmul.f32 1.0, %v5596
    %v5598 = vmul.f32 %v5590, %v4707
    %v5599 = vmul.f32 %v5584, %v5591
    %v5600 = vadd.f32 %v5598, %v5599
    %v5601 = vtanh.pop %v5600
    %v5602 = vmul.f32 %v5597, %v5601
    %v5604 = vsel %vm210, %v5600, 0
    %5606 = vmatprep.subr.mxu0 0.0
    %5607 = vmatpush1.msra.mxu0 0.0
    %5608 = vmatprep.subr.mxu0 0.0
    %5609 = vmatpush1.msra.mxu0 0.0
    %5610 = vmatprep.subr.mxu0 0.0
    %5611 = vmatpush1.msra.mxu0 0.0
    %5612 = vmatprep.subr.mxu0 0.0
    %5613 = vmatpush1.msra.mxu0 0.0
    %5614 = vmatprep.subr.mxu0 0.0
    %5615 = vmatpush1.msra.mxu0 0.0
    %5616 = vmatprep.subr.mxu0 0.0
    %5617 = vmatpush1.msra.mxu0 0.0
    %5618 = vmatprep.subr.mxu0 0.0
    %5619 = vmatpush1.msra.mxu0 0.0
    %5620 = vmatprep.subr.mxu0 0.0
    %5621 = vmatpush1.msra.mxu0 0.0
    %5622 = vmatprep.subr.mxu0 0.0
    %5623 = vmatpush1.msra.mxu0 0.0
    %5624 = vmatprep.subr.mxu0 0.0
    %5625 = vmatpush1.msra.mxu0 0.0
    %5626 = vmatprep.subr.mxu0 0.0
    %5627 = vmatpush1.msra.mxu0 0.0
    %5628 = vmatprep.subr.mxu0 0.0
    %5629 = vmatpush1.msra.mxu0 0.0
    %5630 = vmatprep.subr.mxu0 0.0
    %5631 = vmatpush1.msra.mxu0 %v92
    %5632 = vmatprep.subr.mxu0 0.0
    %5633 = vmatpush1.msra.mxu0 %v91
    %5634 = vmatprep.subr.mxu0 0.0
    %5635 = vmatpush1.msra.mxu0 %v90
    %5636 = vmatprep.subr.mxu0 0.0
    %5637 = vmatpush1.msra.mxu0 %v89
    %5638 = vmatprep.subr.mxu0 0.0
    %5639 = vmatpush2.msra.mxu0 0.0
    %5640 = vmatprep.subr.mxu0 0.0
    %5641 = vmatpush2.msra.mxu0 0.0
    %5642 = vmatprep.subr.mxu0 0.0
    %5643 = vmatpush2.msra.mxu0 0.0
    %5644 = vmatprep.subr.mxu0 0.0
    %5645 = vmatpush2.msra.mxu0 0.0
    %5646 = vmatprep.subr.mxu0 0.0
    %5647 = vmatpush2.msra.mxu0 0.0
    %5648 = vmatprep.subr.mxu0 0.0
    %5649 = vmatpush2.msra.mxu0 0.0
    %5650 = vmatprep.subr.mxu0 0.0
    %5651 = vmatpush2.msra.mxu0 0.0
    %5652 = vmatprep.subr.mxu0 0.0
    %5653 = vmatpush2.msra.mxu0 0.0
    %5654 = vmatprep.subr.mxu0 0.0
    %5655 = vmatpush2.msra.mxu0 0.0
    %5656 = vmatprep.subr.mxu0 0.0
    %5657 = vmatpush2.msra.mxu0 0.0
    %5658 = vmatprep.subr.mxu0 0.0
    %5659 = vmatpush2.msra.mxu0 0.0
    %5660 = vmatprep.subr.mxu0 0.0
    %5661 = vmatpush2.msra.mxu0 0.0
    %5662 = vmatprep.subr.mxu0 0.0
    %5663 = vmatpush2.msra.mxu0 0.0
    %5664 = vmatprep.subr.mxu0 0.0
    %5665 = vmatpush2.msra.mxu0 0.0
    %5666 = vmatprep.subr.mxu0 0.0
    %5667 = vmatpush2.msra.mxu0 0.0
    %5668 = vmatprep.subr.mxu0 0.0
    %5669 = vmatpush2.msra.mxu0 0.0
    %5670 = vmatprep.mubr.f32.mxu0 0.0
    %5671 = vmatmul.mubr.f32.gmra.mxu0 %v5604
    %v5672 = vpop.f32.mrf.mxu0
    %v5673 = vadd.f32 0.0, %v5672
    %v5674 = vpop.f32.mrf.mxu0
    %5675 = vdwg.mxu0
    %v5677 = vsel %vm210, %v5602, 0
    %5679 = vmatprep.subr.mxu0 0.0
    %5680 = vmatpush1.msra.mxu0 0.0
    %5681 = vmatprep.subr.mxu0 0.0
    %5682 = vmatpush1.msra.mxu0 0.0
    %5683 = vmatprep.subr.mxu0 0.0
    %5684 = vmatpush1.msra.mxu0 0.0
    %5685 = vmatprep.subr.mxu0 0.0
    %5686 = vmatpush1.msra.mxu0 0.0
    %5687 = vmatprep.subr.mxu0 0.0
    %5688 = vmatpush1.msra.mxu0 0.0
    %5689 = vmatprep.subr.mxu0 0.0
    %5690 = vmatpush1.msra.mxu0 0.0
    %5691 = vmatprep.subr.mxu0 0.0
    %5692 = vmatpush1.msra.mxu0 0.0
    %5693 = vmatprep.subr.mxu0 0.0
    %5694 = vmatpush1.msra.mxu0 0.0
    %5695 = vmatprep.subr.mxu0 0.0
    %5696 = vmatpush1.msra.mxu0 0.0
    %5697 = vmatprep.subr.mxu0 0.0
    %5698 = vmatpush1.msra.mxu0 0.0
    %5699 = vmatprep.subr.mxu0 0.0
    %5700 = vmatpush1.msra.mxu0 0.0
    %5701 = vmatprep.subr.mxu0 0.0
    %5702 = vmatpush1.msra.mxu0 0.0
    %5703 = vmatprep.subr.mxu0 0.0
    %5704 = vmatpush1.msra.mxu0 %v88
    %5705 = vmatprep.subr.mxu0 0.0
    %5706 = vmatpush1.msra.mxu0 %v87
    %5707 = vmatprep.subr.mxu0 0.0
    %5708 = vmatpush1.msra.mxu0 %v86
    %5709 = vmatprep.subr.mxu0 0.0
    %5710 = vmatpush1.msra.mxu0 %v85
    %5711 = vmatprep.subr.mxu0 0.0
    %5712 = vmatpush2.msra.mxu0 0.0
    %5713 = vmatprep.subr.mxu0 0.0
    %5714 = vmatpush2.msra.mxu0 0.0
    %5715 = vmatprep.subr.mxu0 0.0
    %5716 = vmatpush2.msra.mxu0 0.0
    %5717 = vmatprep.subr.mxu0 0.0
    %5718 = vmatpush2.msra.mxu0 0.0
    %5719 = vmatprep.subr.mxu0 0.0
    %5720 = vmatpush2.msra.mxu0 0.0
    %5721 = vmatprep.subr.mxu0 0.0
    %5722 = vmatpush2.msra.mxu0 0.0
    %5723 = vmatprep.subr.mxu0 0.0
    %5724 = vmatpush2.msra.mxu0 0.0
    %5725 = vmatprep.subr.mxu0 0.0
    %5726 = vmatpush2.msra.mxu0 0.0
    %5727 = vmatprep.subr.mxu0 0.0
    %5728 = vmatpush2.msra.mxu0 0.0
    %5729 = vmatprep.subr.mxu0 0.0
    %5730 = vmatpush2.msra.mxu0 0.0
    %5731 = vmatprep.subr.mxu0 0.0
    %5732 = vmatpush2.msra.mxu0 0.0
    %5733 = vmatprep.subr.mxu0 0.0
    %5734 = vmatpush2.msra.mxu0 0.0
    %5735 = vmatprep.subr.mxu0 0.0
    %5736 = vmatpush2.msra.mxu0 0.0
    %5737 = vmatprep.subr.mxu0 0.0
    %5738 = vmatpush2.msra.mxu0 0.0
    %5739 = vmatprep.subr.mxu0 0.0
    %5740 = vmatpush2.msra.mxu0 0.0
    %5741 = vmatprep.subr.mxu0 0.0
    %5742 = vmatpush2.msra.mxu0 0.0
    %5743 = vmatprep.mubr.f32.mxu0 0.0
    %5744 = vmatmul.mubr.f32.gmra.mxu0 %v5677
    %v5745 = vpop.f32.mrf.mxu0
    %v5746 = vadd.f32 %v5673, %v5745
    %v5747 = vpop.f32.mrf.mxu0
    %5748 = vdwg.mxu0
    %v5751 = vunpack.c.l.s4 1966171168
    %v5752 = vunpack.c.0.s8 %v5751
    %v5753 = vlaneseq
    %v5754 = vshrl.u32 %v5753, 7
    %v5755 = vsub.s32 %v5752, %v5754
    %v5756 = vrot.slane %v5746, %v5755
    %v5757 = vcombine.high %v5756, %v5756
    %v5759 = vunpack.c.l.s4 1966171168
    %v5760 = vunpack.c.0.s8 %v5759
    %v5761 = vlaneseq
    %v5762 = vshrl.u32 %v5761, 7
    %v5763 = vsub.s32 %v5760, %v5762
    %v5764 = vrot.slane %v5756, %v5763
    %v5766 = vunpack.c.l.s4 1966171168
    %v5767 = vunpack.c.0.s8 %v5766
    %v5768 = vlaneseq
    %v5769 = vshrl.u32 %v5768, 7
    %v5770 = vsub.s32 %v5767, %v5769
    %v5771 = vrot.slane %v5757, %v5770
    %v5772 = vlaneseq
    %v5773 = vshrl.u32 %v5772, 7
    %v5774 = vsub.s32 0, %v5773
    %v5775 = vrot.slane %v5764, %v5774
    %v5776 = vlaneseq
    %v5777 = vshrl.u32 %v5776, 7
    %v5778 = vsub.s32 0, %v5777
    %v5779 = vrot.slane %v5771, %v5778
    %v5782 = vadd.f32 %v198, %v5775
    %v5783 = vadd.f32 %v203, %v5779
    %v5784 = vtanh.pop %v5782
    %v5785 = vtanh.pop %v5783
    %v5787 = vsel %vm124, %v5784, 0
    %5789 = vmatprep.subr.mxu0 0.0
    %5790 = vmatpush1.xpose.msra.mxu0 0.0
    %5791 = vmatprep.subr.mxu0 0.0
    %5792 = vmatpush1.xpose.msra.mxu0 0.0
    %5793 = vmatprep.subr.mxu0 0.0
    %5794 = vmatpush1.xpose.msra.mxu0 0.0
    %5795 = vmatprep.subr.mxu0 0.0
    %5796 = vmatpush1.xpose.msra.mxu0 0.0
    %5797 = vmatprep.subr.mxu0 0.0
    %5798 = vmatpush1.xpose.msra.mxu0 0.0
    %5799 = vmatprep.subr.mxu0 0.0
    %5800 = vmatpush1.xpose.msra.mxu0 0.0
    %5801 = vmatprep.subr.mxu0 0.0
    %5802 = vmatpush1.xpose.msra.mxu0 0.0
    %5803 = vmatprep.subr.mxu0 0.0
    %5804 = vmatpush1.xpose.msra.mxu0 0.0
    %5805 = vmatprep.subr.mxu0 0.0
    %5806 = vmatpush1.xpose.msra.mxu0 0.0
    %5807 = vmatprep.subr.mxu0 0.0
    %5808 = vmatpush1.xpose.msra.mxu0 0.0
    %5809 = vmatprep.subr.mxu0 0.0
    %5810 = vmatpush1.xpose.msra.mxu0 0.0
    %5811 = vmatprep.subr.mxu0 0.0
    %5812 = vmatpush1.xpose.msra.mxu0 0.0
    %5813 = vmatprep.subr.mxu0 0.0
    %5814 = vmatpush1.xpose.msra.mxu0 0.0
    %5815 = vmatprep.subr.mxu0 0.0
    %5816 = vmatpush1.xpose.msra.mxu0 0.0
    %5817 = vmatprep.subr.mxu0 0.0
    %5818 = vmatpush1.xpose.msra.mxu0 0.0
    %5819 = vmatprep.subr.mxu0 0.0
    %5820 = vmatpush1.xpose.msra.mxu0 %v5787
    %5821 = vmatprep.subr.mxu0 0.0
    %5822 = vmatpush2.xpose.msra.mxu0 0.0
    %5823 = vmatprep.subr.mxu0 0.0
    %5824 = vmatpush2.xpose.msra.mxu0 0.0
    %5825 = vmatprep.subr.mxu0 0.0
    %5826 = vmatpush2.xpose.msra.mxu0 0.0
    %5827 = vmatprep.subr.mxu0 0.0
    %5828 = vmatpush2.xpose.msra.mxu0 0.0
    %5829 = vmatprep.subr.mxu0 0.0
    %5830 = vmatpush2.xpose.msra.mxu0 0.0
    %5831 = vmatprep.subr.mxu0 0.0
    %5832 = vmatpush2.xpose.msra.mxu0 0.0
    %5833 = vmatprep.subr.mxu0 0.0
    %5834 = vmatpush2.xpose.msra.mxu0 0.0
    %5835 = vmatprep.subr.mxu0 0.0
    %5836 = vmatpush2.xpose.msra.mxu0 0.0
    %5837 = vmatprep.subr.mxu0 0.0
    %5838 = vmatpush2.xpose.msra.mxu0 0.0
    %5839 = vmatprep.subr.mxu0 0.0
    %5840 = vmatpush2.xpose.msra.mxu0 0.0
    %5841 = vmatprep.subr.mxu0 0.0
    %5842 = vmatpush2.xpose.msra.mxu0 0.0
    %5843 = vmatprep.subr.mxu0 0.0
    %5844 = vmatpush2.xpose.msra.mxu0 0.0
    %5845 = vmatprep.subr.mxu0 0.0
    %5846 = vmatpush2.xpose.msra.mxu0 0.0
    %5847 = vmatprep.subr.mxu0 0.0
    %5848 = vmatpush2.xpose.msra.mxu0 0.0
    %5849 = vmatprep.subr.mxu0 0.0
    %5850 = vmatpush2.xpose.msra.mxu0 0.0
    %5851 = vmatprep.subr.mxu0 0.0
    %5852 = vmatpush2.xpose.msra.mxu0 0.0
    %5853 = vmatprep.mubr.f32.mxu0 0.0
    %5854 = vmatmul.mubr.f32.gmra.mxu0 %v393
    %v5855 = vpop.f32.mrf.mxu0
    %v5856 = vadd.f32 %v391, %v5855
    %v5857 = vpop.f32.mrf.mxu0
    %5858 = vdwg.mxu0
    %v5860 = vsel %vm124, %v5785, 0
    %5862 = vmatprep.subr.mxu0 0.0
    %5863 = vmatpush1.xpose.msra.mxu0 0.0
    %5864 = vmatprep.subr.mxu0 0.0
    %5865 = vmatpush1.xpose.msra.mxu0 0.0
    %5866 = vmatprep.subr.mxu0 0.0
    %5867 = vmatpush1.xpose.msra.mxu0 0.0
    %5868 = vmatprep.subr.mxu0 0.0
    %5869 = vmatpush1.xpose.msra.mxu0 0.0
    %5870 = vmatprep.subr.mxu0 0.0
    %5871 = vmatpush1.xpose.msra.mxu0 0.0
    %5872 = vmatprep.subr.mxu0 0.0
    %5873 = vmatpush1.xpose.msra.mxu0 0.0
    %5874 = vmatprep.subr.mxu0 0.0
    %5875 = vmatpush1.xpose.msra.mxu0 0.0
    %5876 = vmatprep.subr.mxu0 0.0
    %5877 = vmatpush1.xpose.msra.mxu0 0.0
    %5878 = vmatprep.subr.mxu0 0.0
    %5879 = vmatpush1.xpose.msra.mxu0 0.0
    %5880 = vmatprep.subr.mxu0 0.0
    %5881 = vmatpush1.xpose.msra.mxu0 0.0
    %5882 = vmatprep.subr.mxu0 0.0
    %5883 = vmatpush1.xpose.msra.mxu0 0.0
    %5884 = vmatprep.subr.mxu0 0.0
    %5885 = vmatpush1.xpose.msra.mxu0 0.0
    %5886 = vmatprep.subr.mxu0 0.0
    %5887 = vmatpush1.xpose.msra.mxu0 0.0
    %5888 = vmatprep.subr.mxu0 0.0
    %5889 = vmatpush1.xpose.msra.mxu0 0.0
    %5890 = vmatprep.subr.mxu0 0.0
    %5891 = vmatpush1.xpose.msra.mxu0 0.0
    %5892 = vmatprep.subr.mxu0 0.0
    %5893 = vmatpush1.xpose.msra.mxu0 %v5860
    %5894 = vmatprep.subr.mxu0 0.0
    %5895 = vmatpush2.xpose.msra.mxu0 0.0
    %5896 = vmatprep.subr.mxu0 0.0
    %5897 = vmatpush2.xpose.msra.mxu0 0.0
    %5898 = vmatprep.subr.mxu0 0.0
    %5899 = vmatpush2.xpose.msra.mxu0 0.0
    %5900 = vmatprep.subr.mxu0 0.0
    %5901 = vmatpush2.xpose.msra.mxu0 0.0
    %5902 = vmatprep.subr.mxu0 0.0
    %5903 = vmatpush2.xpose.msra.mxu0 0.0
    %5904 = vmatprep.subr.mxu0 0.0
    %5905 = vmatpush2.xpose.msra.mxu0 0.0
    %5906 = vmatprep.subr.mxu0 0.0
    %5907 = vmatpush2.xpose.msra.mxu0 0.0
    %5908 = vmatprep.subr.mxu0 0.0
    %5909 = vmatpush2.xpose.msra.mxu0 0.0
    %5910 = vmatprep.subr.mxu0 0.0
    %5911 = vmatpush2.xpose.msra.mxu0 0.0
    %5912 = vmatprep.subr.mxu0 0.0
    %5913 = vmatpush2.xpose.msra.mxu0 0.0
    %5914 = vmatprep.subr.mxu0 0.0
    %5915 = vmatpush2.xpose.msra.mxu0 0.0
    %5916 = vmatprep.subr.mxu0 0.0
    %5917 = vmatpush2.xpose.msra.mxu0 0.0
    %5918 = vmatprep.subr.mxu0 0.0
    %5919 = vmatpush2.xpose.msra.mxu0 0.0
    %5920 = vmatprep.subr.mxu0 0.0
    %5921 = vmatpush2.xpose.msra.mxu0 0.0
    %5922 = vmatprep.subr.mxu0 0.0
    %5923 = vmatpush2.xpose.msra.mxu0 0.0
    %5924 = vmatprep.subr.mxu0 0.0
    %5925 = vmatpush2.xpose.msra.mxu0 0.0
    %5926 = vmatprep.mubr.f32.mxu0 0.0
    %5927 = vmatmul.mubr.f32.gmra.mxu0 %v393
    %v5928 = vpop.f32.mrf.mxu0
    %v5929 = vadd.f32 %v391, %v5928
    %v5930 = vpop.f32.mrf.mxu0
    %5931 = vdwg.mxu0
    %v5932 = vsel %vm541, %v5856, -inf
    %5933 = vmax.xlane.f32.xlu0 %v5932
    %v5934 = vpop.xlane.xlu0 %5933
    %v5935 = vsel %vm541, %v5929, -inf
    %5936 = vmax.xlane.f32.xlu0 %v5935
    %v5937 = vpop.xlane.xlu0 %5936
    %v5938 = vsub.f32 %v5856, %v5934
    %v5939 = vsub.f32 %v5929, %v5937
    %v5940 = vmul.f32 %v5938, 1.442695
    %v5941 = vpow.pop %v5940
    %v5942 = vmul.f32 %v5939, 1.442695
    %v5943 = vpow.pop %v5942
    %v5944 = vsel %vm541, %v5941, 0.0
    %5945 = vadd.xlane.f32.xlu0 %v5944
    %v5946 = vpop.xlane.xlu0 %5945
    %v5947 = vsel %vm541, %v5943, 0.0
    %5948 = vadd.xlane.f32.xlu0 %v5947
    %v5949 = vpop.xlane.xlu0 %5948
    %v5950 = vrcp.pop %v5946
    %v5951 = vmul.f32 %v5941, %v5950
    %v5952 = vrcp.pop %v5949
    %v5953 = vmul.f32 %v5943, %v5952
    %v5955 = vsel %vm564, %v5951, 0
    %5957 = vmatprep.subr.mxu0 0.0
    %5958 = vmatpush1.msra.mxu0 0.0
    %5959 = vmatprep.subr.mxu0 0.0
    %5960 = vmatpush1.msra.mxu0 0.0
    %5961 = vmatprep.subr.mxu0 0.0
    %5962 = vmatpush1.msra.mxu0 0.0
    %5963 = vmatprep.subr.mxu0 0.0
    %5964 = vmatpush1.msra.mxu0 0.0
    %5965 = vmatprep.subr.mxu0 0.0
    %5966 = vmatpush1.msra.mxu0 0.0
    %5967 = vmatprep.subr.mxu0 0.0
    %5968 = vmatpush1.msra.mxu0 0.0
    %5969 = vmatprep.subr.mxu0 0.0
    %5970 = vmatpush1.msra.mxu0 0.0
    %5971 = vmatprep.subr.mxu0 0.0
    %5972 = vmatpush1.msra.mxu0 0.0
    %5973 = vmatprep.subr.mxu0 0.0
    %5974 = vmatpush1.msra.mxu0 0.0
    %5975 = vmatprep.subr.mxu0 0.0
    %5976 = vmatpush1.msra.mxu0 0.0
    %5977 = vmatprep.subr.mxu0 0.0
    %5978 = vmatpush1.msra.mxu0 0.0
    %5979 = vmatprep.subr.mxu0 0.0
    %5980 = vmatpush1.msra.mxu0 0.0
    %5981 = vmatprep.subr.mxu0 0.0
    %5982 = vmatpush1.msra.mxu0 0.0
    %5983 = vmatprep.subr.mxu0 0.0
    %5984 = vmatpush1.msra.mxu0 0.0
    %5985 = vmatprep.subr.mxu0 0.0
    %5986 = vmatpush1.msra.mxu0 0.0
    %5987 = vmatprep.subr.mxu0 0.0
    %5988 = vmatpush1.msra.mxu0 %v117
    %5989 = vmatprep.subr.mxu0 0.0
    %5990 = vmatpush2.msra.mxu0 0.0
    %5991 = vmatprep.subr.mxu0 0.0
    %5992 = vmatpush2.msra.mxu0 0.0
    %5993 = vmatprep.subr.mxu0 0.0
    %5994 = vmatpush2.msra.mxu0 0.0
    %5995 = vmatprep.subr.mxu0 0.0
    %5996 = vmatpush2.msra.mxu0 0.0
    %5997 = vmatprep.subr.mxu0 0.0
    %5998 = vmatpush2.msra.mxu0 0.0
    %5999 = vmatprep.subr.mxu0 0.0
    %6000 = vmatpush2.msra.mxu0 0.0
    %6001 = vmatprep.subr.mxu0 0.0
    %6002 = vmatpush2.msra.mxu0 0.0
    %6003 = vmatprep.subr.mxu0 0.0
    %6004 = vmatpush2.msra.mxu0 0.0
    %6005 = vmatprep.subr.mxu0 0.0
    %6006 = vmatpush2.msra.mxu0 0.0
    %6007 = vmatprep.subr.mxu0 0.0
    %6008 = vmatpush2.msra.mxu0 0.0
    %6009 = vmatprep.subr.mxu0 0.0
    %6010 = vmatpush2.msra.mxu0 0.0
    %6011 = vmatprep.subr.mxu0 0.0
    %6012 = vmatpush2.msra.mxu0 0.0
    %6013 = vmatprep.subr.mxu0 0.0
    %6014 = vmatpush2.msra.mxu0 0.0
    %6015 = vmatprep.subr.mxu0 0.0
    %6016 = vmatpush2.msra.mxu0 0.0
    %6017 = vmatprep.subr.mxu0 0.0
    %6018 = vmatpush2.msra.mxu0 0.0
    %6019 = vmatprep.subr.mxu0 0.0
    %6020 = vmatpush2.msra.mxu0 0.0
    %6021 = vmatprep.mubr.f32.mxu0 0.0
    %6022 = vmatmul.mubr.f32.gmra.mxu0 %v5955
    %v6023 = vpop.f32.mrf.mxu0
    %v6024 = vadd.f32 0.0, %v6023
    %v6025 = vpop.f32.mrf.mxu0
    %6026 = vdwg.mxu0
    %v6028 = vsel %vm564, %v5953, 0
    %6030 = vmatprep.subr.mxu0 0.0
    %6031 = vmatpush1.msra.mxu0 0.0
    %6032 = vmatprep.subr.mxu0 0.0
    %6033 = vmatpush1.msra.mxu0 0.0
    %6034 = vmatprep.subr.mxu0 0.0
    %6035 = vmatpush1.msra.mxu0 0.0
    %6036 = vmatprep.subr.mxu0 0.0
    %6037 = vmatpush1.msra.mxu0 0.0
    %6038 = vmatprep.subr.mxu0 0.0
    %6039 = vmatpush1.msra.mxu0 0.0
    %6040 = vmatprep.subr.mxu0 0.0
    %6041 = vmatpush1.msra.mxu0 0.0
    %6042 = vmatprep.subr.mxu0 0.0
    %6043 = vmatpush1.msra.mxu0 0.0
    %6044 = vmatprep.subr.mxu0 0.0
    %6045 = vmatpush1.msra.mxu0 0.0
    %6046 = vmatprep.subr.mxu0 0.0
    %6047 = vmatpush1.msra.mxu0 0.0
    %6048 = vmatprep.subr.mxu0 0.0
    %6049 = vmatpush1.msra.mxu0 0.0
    %6050 = vmatprep.subr.mxu0 0.0
    %6051 = vmatpush1.msra.mxu0 0.0
    %6052 = vmatprep.subr.mxu0 0.0
    %6053 = vmatpush1.msra.mxu0 0.0
    %6054 = vmatprep.subr.mxu0 0.0
    %6055 = vmatpush1.msra.mxu0 0.0
    %6056 = vmatprep.subr.mxu0 0.0
    %6057 = vmatpush1.msra.mxu0 0.0
    %6058 = vmatprep.subr.mxu0 0.0
    %6059 = vmatpush1.msra.mxu0 0.0
    %6060 = vmatprep.subr.mxu0 0.0
    %6061 = vmatpush1.msra.mxu0 %v118
    %6062 = vmatprep.subr.mxu0 0.0
    %6063 = vmatpush2.msra.mxu0 0.0
    %6064 = vmatprep.subr.mxu0 0.0
    %6065 = vmatpush2.msra.mxu0 0.0
    %6066 = vmatprep.subr.mxu0 0.0
    %6067 = vmatpush2.msra.mxu0 0.0
    %6068 = vmatprep.subr.mxu0 0.0
    %6069 = vmatpush2.msra.mxu0 0.0
    %6070 = vmatprep.subr.mxu0 0.0
    %6071 = vmatpush2.msra.mxu0 0.0
    %6072 = vmatprep.subr.mxu0 0.0
    %6073 = vmatpush2.msra.mxu0 0.0
    %6074 = vmatprep.subr.mxu0 0.0
    %6075 = vmatpush2.msra.mxu0 0.0
    %6076 = vmatprep.subr.mxu0 0.0
    %6077 = vmatpush2.msra.mxu0 0.0
    %6078 = vmatprep.subr.mxu0 0.0
    %6079 = vmatpush2.msra.mxu0 0.0
    %6080 = vmatprep.subr.mxu0 0.0
    %6081 = vmatpush2.msra.mxu0 0.0
    %6082 = vmatprep.subr.mxu0 0.0
    %6083 = vmatpush2.msra.mxu0 0.0
    %6084 = vmatprep.subr.mxu0 0.0
    %6085 = vmatpush2.msra.mxu0 0.0
    %6086 = vmatprep.subr.mxu0 0.0
    %6087 = vmatpush2.msra.mxu0 0.0
    %6088 = vmatprep.subr.mxu0 0.0
    %6089 = vmatpush2.msra.mxu0 0.0
    %6090 = vmatprep.subr.mxu0 0.0
    %6091 = vmatpush2.msra.mxu0 0.0
    %6092 = vmatprep.subr.mxu0 0.0
    %6093 = vmatpush2.msra.mxu0 0.0
    %6094 = vmatprep.mubr.f32.mxu0 0.0
    %6095 = vmatmul.mubr.f32.gmra.mxu0 %v6028
    %v6096 = vpop.f32.mrf.mxu0
    %v6097 = vadd.f32 0.0, %v6096
    %v6098 = vpop.f32.mrf.mxu0
    %6099 = vdwg.mxu0
    %v6102 = vrot.slane %v6097, 7
    %v6103 = vsel %vm714, %v6102, %v6024
    %6104 = vrot.lane.b32.xlu0 %v209, 122
    %v6105 = vpop.permute.xlu0 %6104
    %v6107 = vsel %vm124, %v6103, 0
    %6109 = vmatprep.subr.mxu0 0.0
    %6110 = vmatpush1.msra.mxu0 0.0
    %6111 = vmatprep.subr.mxu0 0.0
    %6112 = vmatpush1.msra.mxu0 0.0
    %6113 = vmatprep.subr.mxu0 0.0
    %6114 = vmatpush1.msra.mxu0 0.0
    %6115 = vmatprep.subr.mxu0 0.0
    %6116 = vmatpush1.msra.mxu0 0.0
    %6117 = vmatprep.subr.mxu0 0.0
    %6118 = vmatpush1.msra.mxu0 0.0
    %6119 = vmatprep.subr.mxu0 0.0
    %6120 = vmatpush1.msra.mxu0 0.0
    %6121 = vmatprep.subr.mxu0 0.0
    %6122 = vmatpush1.msra.mxu0 0.0
    %6123 = vmatprep.subr.mxu0 0.0
    %6124 = vmatpush1.msra.mxu0 0.0
    %6125 = vmatprep.subr.mxu0 0.0
    %6126 = vmatpush1.msra.mxu0 0.0
    %6127 = vmatprep.subr.mxu0 0.0
    %6128 = vmatpush1.msra.mxu0 0.0
    %6129 = vmatprep.subr.mxu0 0.0
    %6130 = vmatpush1.msra.mxu0 0.0
    %6131 = vmatprep.subr.mxu0 0.0
    %6132 = vmatpush1.msra.mxu0 0.0
    %6133 = vmatprep.subr.mxu0 0.0
    %6134 = vmatpush1.msra.mxu0 0.0
    %6135 = vmatprep.subr.mxu0 0.0
    %6136 = vmatpush1.msra.mxu0 0.0
    %6137 = vmatprep.subr.mxu0 0.0
    %6138 = vmatpush1.msra.mxu0 %v106
    %6139 = vmatprep.subr.mxu0 0.0
    %6140 = vmatpush1.msra.mxu0 %v105
    %6141 = vmatprep.subr.mxu0 0.0
    %6142 = vmatpush2.msra.mxu0 0.0
    %6143 = vmatprep.subr.mxu0 0.0
    %6144 = vmatpush2.msra.mxu0 0.0
    %6145 = vmatprep.subr.mxu0 0.0
    %6146 = vmatpush2.msra.mxu0 0.0
    %6147 = vmatprep.subr.mxu0 0.0
    %6148 = vmatpush2.msra.mxu0 0.0
    %6149 = vmatprep.subr.mxu0 0.0
    %6150 = vmatpush2.msra.mxu0 0.0
    %6151 = vmatprep.subr.mxu0 0.0
    %6152 = vmatpush2.msra.mxu0 0.0
    %6153 = vmatprep.subr.mxu0 0.0
    %6154 = vmatpush2.msra.mxu0 0.0
    %6155 = vmatprep.subr.mxu0 0.0
    %6156 = vmatpush2.msra.mxu0 0.0
    %6157 = vmatprep.subr.mxu0 0.0
    %6158 = vmatpush2.msra.mxu0 0.0
    %6159 = vmatprep.subr.mxu0 0.0
    %6160 = vmatpush2.msra.mxu0 0.0
    %6161 = vmatprep.subr.mxu0 0.0
    %6162 = vmatpush2.msra.mxu0 0.0
    %6163 = vmatprep.subr.mxu0 0.0
    %6164 = vmatpush2.msra.mxu0 0.0
    %6165 = vmatprep.subr.mxu0 0.0
    %6166 = vmatpush2.msra.mxu0 0.0
    %6167 = vmatprep.subr.mxu0 0.0
    %6168 = vmatpush2.msra.mxu0 0.0
    %6169 = vmatprep.subr.mxu0 0.0
    %6170 = vmatpush2.msra.mxu0 0.0
    %6171 = vmatprep.subr.mxu0 0.0
    %6172 = vmatpush2.msra.mxu0 0.0
    %6173 = vmatprep.mubr.f32.mxu0 0.0
    %6174 = vmatmul.mubr.f32.gmra.mxu0 %v6107
    %v6175 = vpop.f32.mrf.mxu0
    %v6176 = vadd.f32 %v6105, %v6175
    %v6177 = vpop.f32.mrf.mxu0
    %6178 = vdwg.mxu0
    %6180 = vset.pattern.permute.xlu0 0
    %6181 = vperm.xlu0 %6180, %v6176
    %v6182 = vpop.permute.xlu0 %6181
    %v6184 = vmul.f32 %v6182, %v796
    %6185 = vmatprep.subr.mxu0 0.0
    %6186 = vmatpush1.msra.mxu0 0.0
    %6187 = vmatprep.subr.mxu0 0.0
    %6188 = vmatpush1.msra.mxu0 0.0
    %6189 = vmatprep.subr.mxu0 0.0
    %6190 = vmatpush1.msra.mxu0 0.0
    %6191 = vmatprep.subr.mxu0 0.0
    %6192 = vmatpush1.msra.mxu0 0.0
    %6193 = vmatprep.subr.mxu0 0.0
    %6194 = vmatpush1.msra.mxu0 0.0
    %6195 = vmatprep.subr.mxu0 0.0
    %6196 = vmatpush1.msra.mxu0 0.0
    %6197 = vmatprep.subr.mxu0 0.0
    %6198 = vmatpush1.msra.mxu0 0.0
    %6199 = vmatprep.subr.mxu0 0.0
    %6200 = vmatpush1.msra.mxu0 0.0
    %6201 = vmatprep.subr.mxu0 0.0
    %6202 = vmatpush1.msra.mxu0 0.0
    %6203 = vmatprep.subr.mxu0 0.0
    %6204 = vmatpush1.msra.mxu0 0.0
    %6205 = vmatprep.subr.mxu0 0.0
    %6206 = vmatpush1.msra.mxu0 0.0
    %6207 = vmatprep.subr.mxu0 0.0
    %6208 = vmatpush1.msra.mxu0 0.0
    %6209 = vmatprep.subr.mxu0 0.0
    %6210 = vmatpush1.msra.mxu0 %v72
    %6211 = vmatprep.subr.mxu0 0.0
    %6212 = vmatpush1.msra.mxu0 %v71
    %6213 = vmatprep.subr.mxu0 0.0
    %6214 = vmatpush1.msra.mxu0 %v70
    %6215 = vmatprep.subr.mxu0 0.0
    %6216 = vmatpush1.msra.mxu0 %v69
    %6217 = vmatprep.subr.mxu0 0.0
    %6218 = vmatpush2.msra.mxu0 0.0
    %6219 = vmatprep.subr.mxu0 0.0
    %6220 = vmatpush2.msra.mxu0 0.0
    %6221 = vmatprep.subr.mxu0 0.0
    %6222 = vmatpush2.msra.mxu0 0.0
    %6223 = vmatprep.subr.mxu0 0.0
    %6224 = vmatpush2.msra.mxu0 0.0
    %6225 = vmatprep.subr.mxu0 0.0
    %6226 = vmatpush2.msra.mxu0 0.0
    %6227 = vmatprep.subr.mxu0 0.0
    %6228 = vmatpush2.msra.mxu0 0.0
    %6229 = vmatprep.subr.mxu0 0.0
    %6230 = vmatpush2.msra.mxu0 0.0
    %6231 = vmatprep.subr.mxu0 0.0
    %6232 = vmatpush2.msra.mxu0 0.0
    %6233 = vmatprep.subr.mxu0 0.0
    %6234 = vmatpush2.msra.mxu0 0.0
    %6235 = vmatprep.subr.mxu0 0.0
    %6236 = vmatpush2.msra.mxu0 0.0
    %6237 = vmatprep.subr.mxu0 0.0
    %6238 = vmatpush2.msra.mxu0 0.0
    %6239 = vmatprep.subr.mxu0 0.0
    %6240 = vmatpush2.msra.mxu0 0.0
    %6241 = vmatprep.subr.mxu0 0.0
    %6242 = vmatpush2.msra.mxu0 0.0
    %6243 = vmatprep.subr.mxu0 0.0
    %6244 = vmatpush2.msra.mxu0 0.0
    %6245 = vmatprep.subr.mxu0 0.0
    %6246 = vmatpush2.msra.mxu0 0.0
    %6247 = vmatprep.subr.mxu0 0.0
    %6248 = vmatpush2.msra.mxu0 0.0
    %6249 = vmatprep.mubr.f32.mxu0 0.0
    %6250 = vmatmul.mubr.f32.gmra.mxu0 %v5677
    %v6251 = vpop.f32.mrf.mxu0
    %v6252 = vadd.f32 %v6184, %v6251
    %v6253 = vpop.f32.mrf.mxu0
    %6254 = vdwg.mxu0
    %v6255 = vadd.f32 %v6252, %v871
    %v6256 = vmul.f32 %v6182, %v876
    %6257 = vmatprep.subr.mxu0 0.0
    %6258 = vmatpush1.msra.mxu0 0.0
    %6259 = vmatprep.subr.mxu0 0.0
    %6260 = vmatpush1.msra.mxu0 0.0
    %6261 = vmatprep.subr.mxu0 0.0
    %6262 = vmatpush1.msra.mxu0 0.0
    %6263 = vmatprep.subr.mxu0 0.0
    %6264 = vmatpush1.msra.mxu0 0.0
    %6265 = vmatprep.subr.mxu0 0.0
    %6266 = vmatpush1.msra.mxu0 0.0
    %6267 = vmatprep.subr.mxu0 0.0
    %6268 = vmatpush1.msra.mxu0 0.0
    %6269 = vmatprep.subr.mxu0 0.0
    %6270 = vmatpush1.msra.mxu0 0.0
    %6271 = vmatprep.subr.mxu0 0.0
    %6272 = vmatpush1.msra.mxu0 0.0
    %6273 = vmatprep.subr.mxu0 0.0
    %6274 = vmatpush1.msra.mxu0 0.0
    %6275 = vmatprep.subr.mxu0 0.0
    %6276 = vmatpush1.msra.mxu0 0.0
    %6277 = vmatprep.subr.mxu0 0.0
    %6278 = vmatpush1.msra.mxu0 0.0
    %6279 = vmatprep.subr.mxu0 0.0
    %6280 = vmatpush1.msra.mxu0 0.0
    %6281 = vmatprep.subr.mxu0 0.0
    %6282 = vmatpush1.msra.mxu0 %v76
    %6283 = vmatprep.subr.mxu0 0.0
    %6284 = vmatpush1.msra.mxu0 %v75
    %6285 = vmatprep.subr.mxu0 0.0
    %6286 = vmatpush1.msra.mxu0 %v74
    %6287 = vmatprep.subr.mxu0 0.0
    %6288 = vmatpush1.msra.mxu0 %v73
    %6289 = vmatprep.subr.mxu0 0.0
    %6290 = vmatpush2.msra.mxu0 0.0
    %6291 = vmatprep.subr.mxu0 0.0
    %6292 = vmatpush2.msra.mxu0 0.0
    %6293 = vmatprep.subr.mxu0 0.0
    %6294 = vmatpush2.msra.mxu0 0.0
    %6295 = vmatprep.subr.mxu0 0.0
    %6296 = vmatpush2.msra.mxu0 0.0
    %6297 = vmatprep.subr.mxu0 0.0
    %6298 = vmatpush2.msra.mxu0 0.0
    %6299 = vmatprep.subr.mxu0 0.0
    %6300 = vmatpush2.msra.mxu0 0.0
    %6301 = vmatprep.subr.mxu0 0.0
    %6302 = vmatpush2.msra.mxu0 0.0
    %6303 = vmatprep.subr.mxu0 0.0
    %6304 = vmatpush2.msra.mxu0 0.0
    %6305 = vmatprep.subr.mxu0 0.0
    %6306 = vmatpush2.msra.mxu0 0.0
    %6307 = vmatprep.subr.mxu0 0.0
    %6308 = vmatpush2.msra.mxu0 0.0
    %6309 = vmatprep.subr.mxu0 0.0
    %6310 = vmatpush2.msra.mxu0 0.0
    %6311 = vmatprep.subr.mxu0 0.0
    %6312 = vmatpush2.msra.mxu0 0.0
    %6313 = vmatprep.subr.mxu0 0.0
    %6314 = vmatpush2.msra.mxu0 0.0
    %6315 = vmatprep.subr.mxu0 0.0
    %6316 = vmatpush2.msra.mxu0 0.0
    %6317 = vmatprep.subr.mxu0 0.0
    %6318 = vmatpush2.msra.mxu0 0.0
    %6319 = vmatprep.subr.mxu0 0.0
    %6320 = vmatpush2.msra.mxu0 0.0
    %6321 = vmatprep.mubr.f32.mxu0 0.0
    %6322 = vmatmul.mubr.f32.gmra.mxu0 %v5677
    %v6323 = vpop.f32.mrf.mxu0
    %v6324 = vadd.f32 %v6256, %v6323
    %v6325 = vpop.f32.mrf.mxu0
    %6326 = vdwg.mxu0
    %v6327 = vadd.f32 %v6324, %v951
    %v6328 = vmul.f32 %v6182, %v956
    %6329 = vmatprep.subr.mxu0 0.0
    %6330 = vmatpush1.msra.mxu0 0.0
    %6331 = vmatprep.subr.mxu0 0.0
    %6332 = vmatpush1.msra.mxu0 0.0
    %6333 = vmatprep.subr.mxu0 0.0
    %6334 = vmatpush1.msra.mxu0 0.0
    %6335 = vmatprep.subr.mxu0 0.0
    %6336 = vmatpush1.msra.mxu0 0.0
    %6337 = vmatprep.subr.mxu0 0.0
    %6338 = vmatpush1.msra.mxu0 0.0
    %6339 = vmatprep.subr.mxu0 0.0
    %6340 = vmatpush1.msra.mxu0 0.0
    %6341 = vmatprep.subr.mxu0 0.0
    %6342 = vmatpush1.msra.mxu0 0.0
    %6343 = vmatprep.subr.mxu0 0.0
    %6344 = vmatpush1.msra.mxu0 0.0
    %6345 = vmatprep.subr.mxu0 0.0
    %6346 = vmatpush1.msra.mxu0 0.0
    %6347 = vmatprep.subr.mxu0 0.0
    %6348 = vmatpush1.msra.mxu0 0.0
    %6349 = vmatprep.subr.mxu0 0.0
    %6350 = vmatpush1.msra.mxu0 0.0
    %6351 = vmatprep.subr.mxu0 0.0
    %6352 = vmatpush1.msra.mxu0 0.0
    %6353 = vmatprep.subr.mxu0 0.0
    %6354 = vmatpush1.msra.mxu0 %v80
    %6355 = vmatprep.subr.mxu0 0.0
    %6356 = vmatpush1.msra.mxu0 %v79
    %6357 = vmatprep.subr.mxu0 0.0
    %6358 = vmatpush1.msra.mxu0 %v78
    %6359 = vmatprep.subr.mxu0 0.0
    %6360 = vmatpush1.msra.mxu0 %v77
    %6361 = vmatprep.subr.mxu0 0.0
    %6362 = vmatpush2.msra.mxu0 0.0
    %6363 = vmatprep.subr.mxu0 0.0
    %6364 = vmatpush2.msra.mxu0 0.0
    %6365 = vmatprep.subr.mxu0 0.0
    %6366 = vmatpush2.msra.mxu0 0.0
    %6367 = vmatprep.subr.mxu0 0.0
    %6368 = vmatpush2.msra.mxu0 0.0
    %6369 = vmatprep.subr.mxu0 0.0
    %6370 = vmatpush2.msra.mxu0 0.0
    %6371 = vmatprep.subr.mxu0 0.0
    %6372 = vmatpush2.msra.mxu0 0.0
    %6373 = vmatprep.subr.mxu0 0.0
    %6374 = vmatpush2.msra.mxu0 0.0
    %6375 = vmatprep.subr.mxu0 0.0
    %6376 = vmatpush2.msra.mxu0 0.0
    %6377 = vmatprep.subr.mxu0 0.0
    %6378 = vmatpush2.msra.mxu0 0.0
    %6379 = vmatprep.subr.mxu0 0.0
    %6380 = vmatpush2.msra.mxu0 0.0
    %6381 = vmatprep.subr.mxu0 0.0
    %6382 = vmatpush2.msra.mxu0 0.0
    %6383 = vmatprep.subr.mxu0 0.0
    %6384 = vmatpush2.msra.mxu0 0.0
    %6385 = vmatprep.subr.mxu0 0.0
    %6386 = vmatpush2.msra.mxu0 0.0
    %6387 = vmatprep.subr.mxu0 0.0
    %6388 = vmatpush2.msra.mxu0 0.0
    %6389 = vmatprep.subr.mxu0 0.0
    %6390 = vmatpush2.msra.mxu0 0.0
    %6391 = vmatprep.subr.mxu0 0.0
    %6392 = vmatpush2.msra.mxu0 0.0
    %6393 = vmatprep.mubr.f32.mxu0 0.0
    %6394 = vmatmul.mubr.f32.gmra.mxu0 %v5677
    %v6395 = vpop.f32.mrf.mxu0
    %v6396 = vadd.f32 %v6328, %v6395
    %v6397 = vpop.f32.mrf.mxu0
    %6398 = vdwg.mxu0
    %v6399 = vadd.f32 %v6396, %v1031
    %v6400 = vmul.f32 %v6182, %v1036
    %6401 = vmatprep.subr.mxu0 0.0
    %6402 = vmatpush1.msra.mxu0 0.0
    %6403 = vmatprep.subr.mxu0 0.0
    %6404 = vmatpush1.msra.mxu0 0.0
    %6405 = vmatprep.subr.mxu0 0.0
    %6406 = vmatpush1.msra.mxu0 0.0
    %6407 = vmatprep.subr.mxu0 0.0
    %6408 = vmatpush1.msra.mxu0 0.0
    %6409 = vmatprep.subr.mxu0 0.0
    %6410 = vmatpush1.msra.mxu0 0.0
    %6411 = vmatprep.subr.mxu0 0.0
    %6412 = vmatpush1.msra.mxu0 0.0
    %6413 = vmatprep.subr.mxu0 0.0
    %6414 = vmatpush1.msra.mxu0 0.0
    %6415 = vmatprep.subr.mxu0 0.0
    %6416 = vmatpush1.msra.mxu0 0.0
    %6417 = vmatprep.subr.mxu0 0.0
    %6418 = vmatpush1.msra.mxu0 0.0
    %6419 = vmatprep.subr.mxu0 0.0
    %6420 = vmatpush1.msra.mxu0 0.0
    %6421 = vmatprep.subr.mxu0 0.0
    %6422 = vmatpush1.msra.mxu0 0.0
    %6423 = vmatprep.subr.mxu0 0.0
    %6424 = vmatpush1.msra.mxu0 0.0
    %6425 = vmatprep.subr.mxu0 0.0
    %6426 = vmatpush1.msra.mxu0 %v84
    %6427 = vmatprep.subr.mxu0 0.0
    %6428 = vmatpush1.msra.mxu0 %v83
    %6429 = vmatprep.subr.mxu0 0.0
    %6430 = vmatpush1.msra.mxu0 %v82
    %6431 = vmatprep.subr.mxu0 0.0
    %6432 = vmatpush1.msra.mxu0 %v81
    %6433 = vmatprep.subr.mxu0 0.0
    %6434 = vmatpush2.msra.mxu0 0.0
    %6435 = vmatprep.subr.mxu0 0.0
    %6436 = vmatpush2.msra.mxu0 0.0
    %6437 = vmatprep.subr.mxu0 0.0
    %6438 = vmatpush2.msra.mxu0 0.0
    %6439 = vmatprep.subr.mxu0 0.0
    %6440 = vmatpush2.msra.mxu0 0.0
    %6441 = vmatprep.subr.mxu0 0.0
    %6442 = vmatpush2.msra.mxu0 0.0
    %6443 = vmatprep.subr.mxu0 0.0
    %6444 = vmatpush2.msra.mxu0 0.0
    %6445 = vmatprep.subr.mxu0 0.0
    %6446 = vmatpush2.msra.mxu0 0.0
    %6447 = vmatprep.subr.mxu0 0.0
    %6448 = vmatpush2.msra.mxu0 0.0
    %6449 = vmatprep.subr.mxu0 0.0
    %6450 = vmatpush2.msra.mxu0 0.0
    %6451 = vmatprep.subr.mxu0 0.0
    %6452 = vmatpush2.msra.mxu0 0.0
    %6453 = vmatprep.subr.mxu0 0.0
    %6454 = vmatpush2.msra.mxu0 0.0
    %6455 = vmatprep.subr.mxu0 0.0
    %6456 = vmatpush2.msra.mxu0 0.0
    %6457 = vmatprep.subr.mxu0 0.0
    %6458 = vmatpush2.msra.mxu0 0.0
    %6459 = vmatprep.subr.mxu0 0.0
    %6460 = vmatpush2.msra.mxu0 0.0
    %6461 = vmatprep.subr.mxu0 0.0
    %6462 = vmatpush2.msra.mxu0 0.0
    %6463 = vmatprep.subr.mxu0 0.0
    %6464 = vmatpush2.msra.mxu0 0.0
    %6465 = vmatprep.mubr.f32.mxu0 0.0
    %6466 = vmatmul.mubr.f32.gmra.mxu0 %v5677
    %v6467 = vpop.f32.mrf.mxu0
    %v6468 = vadd.f32 %v6400, %v6467
    %v6469 = vpop.f32.mrf.mxu0
    %6470 = vdwg.mxu0
    %v6471 = vadd.f32 %v6468, %v1111
    %v6472 = vxor.u32 %v6255, 2147483648
    %v6473 = vmul.f32 %v6472, 1.442695
    %v6474 = vpow.pop %v6473
    %v6475 = vadd.f32 %v6474, 1.0
    %v6476 = vrcp.pop %v6475
    %v6477 = vmul.f32 1.0, %v6476
    %v6478 = vxor.u32 %v6327, 2147483648
    %v6479 = vmul.f32 %v6478, 1.442695
    %v6480 = vpow.pop %v6479
    %v6481 = vadd.f32 %v6480, 1.0
    %v6482 = vrcp.pop %v6481
    %v6483 = vmul.f32 1.0, %v6482
    %v6484 = vtanh.pop %v6399
    %v6485 = vxor.u32 %v6471, 2147483648
    %v6486 = vmul.f32 %v6485, 1.442695
    %v6487 = vpow.pop %v6486
    %v6488 = vadd.f32 %v6487, 1.0
    %v6489 = vrcp.pop %v6488
    %v6490 = vmul.f32 1.0, %v6489
    %v6491 = vmul.f32 %v6483, %v5600
    %v6492 = vmul.f32 %v6477, %v6484
    %v6493 = vadd.f32 %v6491, %v6492
    %v6494 = vtanh.pop %v6493
    %v6495 = vmul.f32 %v6490, %v6494
    %v6497 = vsel %vm210, %v6493, 0
    %6499 = vmatprep.subr.mxu0 0.0
    %6500 = vmatpush1.msra.mxu0 0.0
    %6501 = vmatprep.subr.mxu0 0.0
    %6502 = vmatpush1.msra.mxu0 0.0
    %6503 = vmatprep.subr.mxu0 0.0
    %6504 = vmatpush1.msra.mxu0 0.0
    %6505 = vmatprep.subr.mxu0 0.0
    %6506 = vmatpush1.msra.mxu0 0.0
    %6507 = vmatprep.subr.mxu0 0.0
    %6508 = vmatpush1.msra.mxu0 0.0
    %6509 = vmatprep.subr.mxu0 0.0
    %6510 = vmatpush1.msra.mxu0 0.0
    %6511 = vmatprep.subr.mxu0 0.0
    %6512 = vmatpush1.msra.mxu0 0.0
    %6513 = vmatprep.subr.mxu0 0.0
    %6514 = vmatpush1.msra.mxu0 0.0
    %6515 = vmatprep.subr.mxu0 0.0
    %6516 = vmatpush1.msra.mxu0 0.0
    %6517 = vmatprep.subr.mxu0 0.0
    %6518 = vmatpush1.msra.mxu0 0.0
    %6519 = vmatprep.subr.mxu0 0.0
    %6520 = vmatpush1.msra.mxu0 0.0
    %6521 = vmatprep.subr.mxu0 0.0
    %6522 = vmatpush1.msra.mxu0 0.0
    %6523 = vmatprep.subr.mxu0 0.0
    %6524 = vmatpush1.msra.mxu0 %v92
    %6525 = vmatprep.subr.mxu0 0.0
    %6526 = vmatpush1.msra.mxu0 %v91
    %6527 = vmatprep.subr.mxu0 0.0
    %6528 = vmatpush1.msra.mxu0 %v90
    %6529 = vmatprep.subr.mxu0 0.0
    %6530 = vmatpush1.msra.mxu0 %v89
    %6531 = vmatprep.subr.mxu0 0.0
    %6532 = vmatpush2.msra.mxu0 0.0
    %6533 = vmatprep.subr.mxu0 0.0
    %6534 = vmatpush2.msra.mxu0 0.0
    %6535 = vmatprep.subr.mxu0 0.0
    %6536 = vmatpush2.msra.mxu0 0.0
    %6537 = vmatprep.subr.mxu0 0.0
    %6538 = vmatpush2.msra.mxu0 0.0
    %6539 = vmatprep.subr.mxu0 0.0
    %6540 = vmatpush2.msra.mxu0 0.0
    %6541 = vmatprep.subr.mxu0 0.0
    %6542 = vmatpush2.msra.mxu0 0.0
    %6543 = vmatprep.subr.mxu0 0.0
    %6544 = vmatpush2.msra.mxu0 0.0
    %6545 = vmatprep.subr.mxu0 0.0
    %6546 = vmatpush2.msra.mxu0 0.0
    %6547 = vmatprep.subr.mxu0 0.0
    %6548 = vmatpush2.msra.mxu0 0.0
    %6549 = vmatprep.subr.mxu0 0.0
    %6550 = vmatpush2.msra.mxu0 0.0
    %6551 = vmatprep.subr.mxu0 0.0
    %6552 = vmatpush2.msra.mxu0 0.0
    %6553 = vmatprep.subr.mxu0 0.0
    %6554 = vmatpush2.msra.mxu0 0.0
    %6555 = vmatprep.subr.mxu0 0.0
    %6556 = vmatpush2.msra.mxu0 0.0
    %6557 = vmatprep.subr.mxu0 0.0
    %6558 = vmatpush2.msra.mxu0 0.0
    %6559 = vmatprep.subr.mxu0 0.0
    %6560 = vmatpush2.msra.mxu0 0.0
    %6561 = vmatprep.subr.mxu0 0.0
    %6562 = vmatpush2.msra.mxu0 0.0
    %6563 = vmatprep.mubr.f32.mxu0 0.0
    %6564 = vmatmul.mubr.f32.gmra.mxu0 %v6497
    %v6565 = vpop.f32.mrf.mxu0
    %v6566 = vadd.f32 0.0, %v6565
    %v6567 = vpop.f32.mrf.mxu0
    %6568 = vdwg.mxu0
    %v6570 = vsel %vm210, %v6495, 0
    %6572 = vmatprep.subr.mxu0 0.0
    %6573 = vmatpush1.msra.mxu0 0.0
    %6574 = vmatprep.subr.mxu0 0.0
    %6575 = vmatpush1.msra.mxu0 0.0
    %6576 = vmatprep.subr.mxu0 0.0
    %6577 = vmatpush1.msra.mxu0 0.0
    %6578 = vmatprep.subr.mxu0 0.0
    %6579 = vmatpush1.msra.mxu0 0.0
    %6580 = vmatprep.subr.mxu0 0.0
    %6581 = vmatpush1.msra.mxu0 0.0
    %6582 = vmatprep.subr.mxu0 0.0
    %6583 = vmatpush1.msra.mxu0 0.0
    %6584 = vmatprep.subr.mxu0 0.0
    %6585 = vmatpush1.msra.mxu0 0.0
    %6586 = vmatprep.subr.mxu0 0.0
    %6587 = vmatpush1.msra.mxu0 0.0
    %6588 = vmatprep.subr.mxu0 0.0
    %6589 = vmatpush1.msra.mxu0 0.0
    %6590 = vmatprep.subr.mxu0 0.0
    %6591 = vmatpush1.msra.mxu0 0.0
    %6592 = vmatprep.subr.mxu0 0.0
    %6593 = vmatpush1.msra.mxu0 0.0
    %6594 = vmatprep.subr.mxu0 0.0
    %6595 = vmatpush1.msra.mxu0 0.0
    %6596 = vmatprep.subr.mxu0 0.0
    %6597 = vmatpush1.msra.mxu0 %v88
    %6598 = vmatprep.subr.mxu0 0.0
    %6599 = vmatpush1.msra.mxu0 %v87
    %6600 = vmatprep.subr.mxu0 0.0
    %6601 = vmatpush1.msra.mxu0 %v86
    %6602 = vmatprep.subr.mxu0 0.0
    %6603 = vmatpush1.msra.mxu0 %v85
    %6604 = vmatprep.subr.mxu0 0.0
    %6605 = vmatpush2.msra.mxu0 0.0
    %6606 = vmatprep.subr.mxu0 0.0
    %6607 = vmatpush2.msra.mxu0 0.0
    %6608 = vmatprep.subr.mxu0 0.0
    %6609 = vmatpush2.msra.mxu0 0.0
    %6610 = vmatprep.subr.mxu0 0.0
    %6611 = vmatpush2.msra.mxu0 0.0
    %6612 = vmatprep.subr.mxu0 0.0
    %6613 = vmatpush2.msra.mxu0 0.0
    %6614 = vmatprep.subr.mxu0 0.0
    %6615 = vmatpush2.msra.mxu0 0.0
    %6616 = vmatprep.subr.mxu0 0.0
    %6617 = vmatpush2.msra.mxu0 0.0
    %6618 = vmatprep.subr.mxu0 0.0
    %6619 = vmatpush2.msra.mxu0 0.0
    %6620 = vmatprep.subr.mxu0 0.0
    %6621 = vmatpush2.msra.mxu0 0.0
    %6622 = vmatprep.subr.mxu0 0.0
    %6623 = vmatpush2.msra.mxu0 0.0
    %6624 = vmatprep.subr.mxu0 0.0
    %6625 = vmatpush2.msra.mxu0 0.0
    %6626 = vmatprep.subr.mxu0 0.0
    %6627 = vmatpush2.msra.mxu0 0.0
    %6628 = vmatprep.subr.mxu0 0.0
    %6629 = vmatpush2.msra.mxu0 0.0
    %6630 = vmatprep.subr.mxu0 0.0
    %6631 = vmatpush2.msra.mxu0 0.0
    %6632 = vmatprep.subr.mxu0 0.0
    %6633 = vmatpush2.msra.mxu0 0.0
    %6634 = vmatprep.subr.mxu0 0.0
    %6635 = vmatpush2.msra.mxu0 0.0
    %6636 = vmatprep.mubr.f32.mxu0 0.0
    %6637 = vmatmul.mubr.f32.gmra.mxu0 %v6570
    %v6638 = vpop.f32.mrf.mxu0
    %v6639 = vadd.f32 %v6566, %v6638
    %v6640 = vpop.f32.mrf.mxu0
    %6641 = vdwg.mxu0
    %v6644 = vunpack.c.l.s4 1966171168
    %v6645 = vunpack.c.0.s8 %v6644
    %v6646 = vlaneseq
    %v6647 = vshrl.u32 %v6646, 7
    %v6648 = vsub.s32 %v6645, %v6647
    %v6649 = vrot.slane %v6639, %v6648
    %v6650 = vcombine.high %v6649, %v6649
    %v6652 = vunpack.c.l.s4 1966171168
    %v6653 = vunpack.c.0.s8 %v6652
    %v6654 = vlaneseq
    %v6655 = vshrl.u32 %v6654, 7
    %v6656 = vsub.s32 %v6653, %v6655
    %v6657 = vrot.slane %v6649, %v6656
    %v6659 = vunpack.c.l.s4 1966171168
    %v6660 = vunpack.c.0.s8 %v6659
    %v6661 = vlaneseq
    %v6662 = vshrl.u32 %v6661, 7
    %v6663 = vsub.s32 %v6660, %v6662
    %v6664 = vrot.slane %v6650, %v6663
    %v6665 = vlaneseq
    %v6666 = vshrl.u32 %v6665, 7
    %v6667 = vsub.s32 0, %v6666
    %v6668 = vrot.slane %v6657, %v6667
    %v6669 = vlaneseq
    %v6670 = vshrl.u32 %v6669, 7
    %v6671 = vsub.s32 0, %v6670
    %v6672 = vrot.slane %v6664, %v6671
    %v6675 = vadd.f32 %v198, %v6668
    %v6676 = vadd.f32 %v203, %v6672
    %v6677 = vtanh.pop %v6675
    %v6678 = vtanh.pop %v6676
    %v6680 = vsel %vm124, %v6677, 0
    %6682 = vmatprep.subr.mxu0 0.0
    %6683 = vmatpush1.xpose.msra.mxu0 0.0
    %6684 = vmatprep.subr.mxu0 0.0
    %6685 = vmatpush1.xpose.msra.mxu0 0.0
    %6686 = vmatprep.subr.mxu0 0.0
    %6687 = vmatpush1.xpose.msra.mxu0 0.0
    %6688 = vmatprep.subr.mxu0 0.0
    %6689 = vmatpush1.xpose.msra.mxu0 0.0
    %6690 = vmatprep.subr.mxu0 0.0
    %6691 = vmatpush1.xpose.msra.mxu0 0.0
    %6692 = vmatprep.subr.mxu0 0.0
    %6693 = vmatpush1.xpose.msra.mxu0 0.0
    %6694 = vmatprep.subr.mxu0 0.0
    %6695 = vmatpush1.xpose.msra.mxu0 0.0
    %6696 = vmatprep.subr.mxu0 0.0
    %6697 = vmatpush1.xpose.msra.mxu0 0.0
    %6698 = vmatprep.subr.mxu0 0.0
    %6699 = vmatpush1.xpose.msra.mxu0 0.0
    %6700 = vmatprep.subr.mxu0 0.0
    %6701 = vmatpush1.xpose.msra.mxu0 0.0
    %6702 = vmatprep.subr.mxu0 0.0
    %6703 = vmatpush1.xpose.msra.mxu0 0.0
    %6704 = vmatprep.subr.mxu0 0.0
    %6705 = vmatpush1.xpose.msra.mxu0 0.0
    %6706 = vmatprep.subr.mxu0 0.0
    %6707 = vmatpush1.xpose.msra.mxu0 0.0
    %6708 = vmatprep.subr.mxu0 0.0
    %6709 = vmatpush1.xpose.msra.mxu0 0.0
    %6710 = vmatprep.subr.mxu0 0.0
    %6711 = vmatpush1.xpose.msra.mxu0 0.0
    %6712 = vmatprep.subr.mxu0 0.0
    %6713 = vmatpush1.xpose.msra.mxu0 %v6680
    %6714 = vmatprep.subr.mxu0 0.0
    %6715 = vmatpush2.xpose.msra.mxu0 0.0
    %6716 = vmatprep.subr.mxu0 0.0
    %6717 = vmatpush2.xpose.msra.mxu0 0.0
    %6718 = vmatprep.subr.mxu0 0.0
    %6719 = vmatpush2.xpose.msra.mxu0 0.0
    %6720 = vmatprep.subr.mxu0 0.0
    %6721 = vmatpush2.xpose.msra.mxu0 0.0
    %6722 = vmatprep.subr.mxu0 0.0
    %6723 = vmatpush2.xpose.msra.mxu0 0.0
    %6724 = vmatprep.subr.mxu0 0.0
    %6725 = vmatpush2.xpose.msra.mxu0 0.0
    %6726 = vmatprep.subr.mxu0 0.0
    %6727 = vmatpush2.xpose.msra.mxu0 0.0
    %6728 = vmatprep.subr.mxu0 0.0
    %6729 = vmatpush2.xpose.msra.mxu0 0.0
    %6730 = vmatprep.subr.mxu0 0.0
    %6731 = vmatpush2.xpose.msra.mxu0 0.0
    %6732 = vmatprep.subr.mxu0 0.0
    %6733 = vmatpush2.xpose.msra.mxu0 0.0
    %6734 = vmatprep.subr.mxu0 0.0
    %6735 = vmatpush2.xpose.msra.mxu0 0.0
    %6736 = vmatprep.subr.mxu0 0.0
    %6737 = vmatpush2.xpose.msra.mxu0 0.0
    %6738 = vmatprep.subr.mxu0 0.0
    %6739 = vmatpush2.xpose.msra.mxu0 0.0
    %6740 = vmatprep.subr.mxu0 0.0
    %6741 = vmatpush2.xpose.msra.mxu0 0.0
    %6742 = vmatprep.subr.mxu0 0.0
    %6743 = vmatpush2.xpose.msra.mxu0 0.0
    %6744 = vmatprep.subr.mxu0 0.0
    %6745 = vmatpush2.xpose.msra.mxu0 0.0
    %6746 = vmatprep.mubr.f32.mxu0 0.0
    %6747 = vmatmul.mubr.f32.gmra.mxu0 %v393
    %v6748 = vpop.f32.mrf.mxu0
    %v6749 = vadd.f32 %v391, %v6748
    %v6750 = vpop.f32.mrf.mxu0
    %6751 = vdwg.mxu0
    %v6753 = vsel %vm124, %v6678, 0
    %6755 = vmatprep.subr.mxu0 0.0
    %6756 = vmatpush1.xpose.msra.mxu0 0.0
    %6757 = vmatprep.subr.mxu0 0.0
    %6758 = vmatpush1.xpose.msra.mxu0 0.0
    %6759 = vmatprep.subr.mxu0 0.0
    %6760 = vmatpush1.xpose.msra.mxu0 0.0
    %6761 = vmatprep.subr.mxu0 0.0
    %6762 = vmatpush1.xpose.msra.mxu0 0.0
    %6763 = vmatprep.subr.mxu0 0.0
    %6764 = vmatpush1.xpose.msra.mxu0 0.0
    %6765 = vmatprep.subr.mxu0 0.0
    %6766 = vmatpush1.xpose.msra.mxu0 0.0
    %6767 = vmatprep.subr.mxu0 0.0
    %6768 = vmatpush1.xpose.msra.mxu0 0.0
    %6769 = vmatprep.subr.mxu0 0.0
    %6770 = vmatpush1.xpose.msra.mxu0 0.0
    %6771 = vmatprep.subr.mxu0 0.0
    %6772 = vmatpush1.xpose.msra.mxu0 0.0
    %6773 = vmatprep.subr.mxu0 0.0
    %6774 = vmatpush1.xpose.msra.mxu0 0.0
    %6775 = vmatprep.subr.mxu0 0.0
    %6776 = vmatpush1.xpose.msra.mxu0 0.0
    %6777 = vmatprep.subr.mxu0 0.0
    %6778 = vmatpush1.xpose.msra.mxu0 0.0
    %6779 = vmatprep.subr.mxu0 0.0
    %6780 = vmatpush1.xpose.msra.mxu0 0.0
    %6781 = vmatprep.subr.mxu0 0.0
    %6782 = vmatpush1.xpose.msra.mxu0 0.0
    %6783 = vmatprep.subr.mxu0 0.0
    %6784 = vmatpush1.xpose.msra.mxu0 0.0
    %6785 = vmatprep.subr.mxu0 0.0
    %6786 = vmatpush1.xpose.msra.mxu0 %v6753
    %6787 = vmatprep.subr.mxu0 0.0
    %6788 = vmatpush2.xpose.msra.mxu0 0.0
    %6789 = vmatprep.subr.mxu0 0.0
    %6790 = vmatpush2.xpose.msra.mxu0 0.0
    %6791 = vmatprep.subr.mxu0 0.0
    %6792 = vmatpush2.xpose.msra.mxu0 0.0
    %6793 = vmatprep.subr.mxu0 0.0
    %6794 = vmatpush2.xpose.msra.mxu0 0.0
    %6795 = vmatprep.subr.mxu0 0.0
    %6796 = vmatpush2.xpose.msra.mxu0 0.0
    %6797 = vmatprep.subr.mxu0 0.0
    %6798 = vmatpush2.xpose.msra.mxu0 0.0
    %6799 = vmatprep.subr.mxu0 0.0
    %6800 = vmatpush2.xpose.msra.mxu0 0.0
    %6801 = vmatprep.subr.mxu0 0.0
    %6802 = vmatpush2.xpose.msra.mxu0 0.0
    %6803 = vmatprep.subr.mxu0 0.0
    %6804 = vmatpush2.xpose.msra.mxu0 0.0
    %6805 = vmatprep.subr.mxu0 0.0
    %6806 = vmatpush2.xpose.msra.mxu0 0.0
    %6807 = vmatprep.subr.mxu0 0.0
    %6808 = vmatpush2.xpose.msra.mxu0 0.0
    %6809 = vmatprep.subr.mxu0 0.0
    %6810 = vmatpush2.xpose.msra.mxu0 0.0
    %6811 = vmatprep.subr.mxu0 0.0
    %6812 = vmatpush2.xpose.msra.mxu0 0.0
    %6813 = vmatprep.subr.mxu0 0.0
    %6814 = vmatpush2.xpose.msra.mxu0 0.0
    %6815 = vmatprep.subr.mxu0 0.0
    %6816 = vmatpush2.xpose.msra.mxu0 0.0
    %6817 = vmatprep.subr.mxu0 0.0
    %6818 = vmatpush2.xpose.msra.mxu0 0.0
    %6819 = vmatprep.mubr.f32.mxu0 0.0
    %6820 = vmatmul.mubr.f32.gmra.mxu0 %v393
    %v6821 = vpop.f32.mrf.mxu0
    %v6822 = vadd.f32 %v391, %v6821
    %v6823 = vpop.f32.mrf.mxu0
    %6824 = vdwg.mxu0
    %v6825 = vsel %vm541, %v6749, -inf
    %6826 = vmax.xlane.f32.xlu0 %v6825
    %v6827 = vpop.xlane.xlu0 %6826
    %v6828 = vsel %vm541, %v6822, -inf
    %6829 = vmax.xlane.f32.xlu0 %v6828
    %v6830 = vpop.xlane.xlu0 %6829
    %v6831 = vsub.f32 %v6749, %v6827
    %v6832 = vsub.f32 %v6822, %v6830
    %v6833 = vmul.f32 %v6831, 1.442695
    %v6834 = vpow.pop %v6833
    %v6835 = vmul.f32 %v6832, 1.442695
    %v6836 = vpow.pop %v6835
    %v6837 = vsel %vm541, %v6834, 0.0
    %6838 = vadd.xlane.f32.xlu0 %v6837
    %v6839 = vpop.xlane.xlu0 %6838
    %v6840 = vsel %vm541, %v6836, 0.0
    %6841 = vadd.xlane.f32.xlu0 %v6840
    %v6842 = vpop.xlane.xlu0 %6841
    %v6843 = vrcp.pop %v6839
    %v6844 = vmul.f32 %v6834, %v6843
    %v6845 = vrcp.pop %v6842
    %v6846 = vmul.f32 %v6836, %v6845
    %v6848 = vsel %vm564, %v6844, 0
    %6850 = vmatprep.subr.mxu0 0.0
    %6851 = vmatpush1.msra.mxu0 0.0
    %6852 = vmatprep.subr.mxu0 0.0
    %6853 = vmatpush1.msra.mxu0 0.0
    %6854 = vmatprep.subr.mxu0 0.0
    %6855 = vmatpush1.msra.mxu0 0.0
    %6856 = vmatprep.subr.mxu0 0.0
    %6857 = vmatpush1.msra.mxu0 0.0
    %6858 = vmatprep.subr.mxu0 0.0
    %6859 = vmatpush1.msra.mxu0 0.0
    %6860 = vmatprep.subr.mxu0 0.0
    %6861 = vmatpush1.msra.mxu0 0.0
    %6862 = vmatprep.subr.mxu0 0.0
    %6863 = vmatpush1.msra.mxu0 0.0
    %6864 = vmatprep.subr.mxu0 0.0
    %6865 = vmatpush1.msra.mxu0 0.0
    %6866 = vmatprep.subr.mxu0 0.0
    %6867 = vmatpush1.msra.mxu0 0.0
    %6868 = vmatprep.subr.mxu0 0.0
    %6869 = vmatpush1.msra.mxu0 0.0
    %6870 = vmatprep.subr.mxu0 0.0
    %6871 = vmatpush1.msra.mxu0 0.0
    %6872 = vmatprep.subr.mxu0 0.0
    %6873 = vmatpush1.msra.mxu0 0.0
    %6874 = vmatprep.subr.mxu0 0.0
    %6875 = vmatpush1.msra.mxu0 0.0
    %6876 = vmatprep.subr.mxu0 0.0
    %6877 = vmatpush1.msra.mxu0 0.0
    %6878 = vmatprep.subr.mxu0 0.0
    %6879 = vmatpush1.msra.mxu0 0.0
    %6880 = vmatprep.subr.mxu0 0.0
    %6881 = vmatpush1.msra.mxu0 %v117
    %6882 = vmatprep.subr.mxu0 0.0
    %6883 = vmatpush2.msra.mxu0 0.0
    %6884 = vmatprep.subr.mxu0 0.0
    %6885 = vmatpush2.msra.mxu0 0.0
    %6886 = vmatprep.subr.mxu0 0.0
    %6887 = vmatpush2.msra.mxu0 0.0
    %6888 = vmatprep.subr.mxu0 0.0
    %6889 = vmatpush2.msra.mxu0 0.0
    %6890 = vmatprep.subr.mxu0 0.0
    %6891 = vmatpush2.msra.mxu0 0.0
    %6892 = vmatprep.subr.mxu0 0.0
    %6893 = vmatpush2.msra.mxu0 0.0
    %6894 = vmatprep.subr.mxu0 0.0
    %6895 = vmatpush2.msra.mxu0 0.0
    %6896 = vmatprep.subr.mxu0 0.0
    %6897 = vmatpush2.msra.mxu0 0.0
    %6898 = vmatprep.subr.mxu0 0.0
    %6899 = vmatpush2.msra.mxu0 0.0
    %6900 = vmatprep.subr.mxu0 0.0
    %6901 = vmatpush2.msra.mxu0 0.0
    %6902 = vmatprep.subr.mxu0 0.0
    %6903 = vmatpush2.msra.mxu0 0.0
    %6904 = vmatprep.subr.mxu0 0.0
    %6905 = vmatpush2.msra.mxu0 0.0
    %6906 = vmatprep.subr.mxu0 0.0
    %6907 = vmatpush2.msra.mxu0 0.0
    %6908 = vmatprep.subr.mxu0 0.0
    %6909 = vmatpush2.msra.mxu0 0.0
    %6910 = vmatprep.subr.mxu0 0.0
    %6911 = vmatpush2.msra.mxu0 0.0
    %6912 = vmatprep.subr.mxu0 0.0
    %6913 = vmatpush2.msra.mxu0 0.0
    %6914 = vmatprep.mubr.f32.mxu0 0.0
    %6915 = vmatmul.mubr.f32.gmra.mxu0 %v6848
    %v6916 = vpop.f32.mrf.mxu0
    %v6917 = vadd.f32 0.0, %v6916
    %v6918 = vpop.f32.mrf.mxu0
    %6919 = vdwg.mxu0
    %v6921 = vsel %vm564, %v6846, 0
    %6923 = vmatprep.subr.mxu0 0.0
    %6924 = vmatpush1.msra.mxu0 0.0
    %6925 = vmatprep.subr.mxu0 0.0
    %6926 = vmatpush1.msra.mxu0 0.0
    %6927 = vmatprep.subr.mxu0 0.0
    %6928 = vmatpush1.msra.mxu0 0.0
    %6929 = vmatprep.subr.mxu0 0.0
    %6930 = vmatpush1.msra.mxu0 0.0
    %6931 = vmatprep.subr.mxu0 0.0
    %6932 = vmatpush1.msra.mxu0 0.0
    %6933 = vmatprep.subr.mxu0 0.0
    %6934 = vmatpush1.msra.mxu0 0.0
    %6935 = vmatprep.subr.mxu0 0.0
    %6936 = vmatpush1.msra.mxu0 0.0
    %6937 = vmatprep.subr.mxu0 0.0
    %6938 = vmatpush1.msra.mxu0 0.0
    %6939 = vmatprep.subr.mxu0 0.0
    %6940 = vmatpush1.msra.mxu0 0.0
    %6941 = vmatprep.subr.mxu0 0.0
    %6942 = vmatpush1.msra.mxu0 0.0
    %6943 = vmatprep.subr.mxu0 0.0
    %6944 = vmatpush1.msra.mxu0 0.0
    %6945 = vmatprep.subr.mxu0 0.0
    %6946 = vmatpush1.msra.mxu0 0.0
    %6947 = vmatprep.subr.mxu0 0.0
    %6948 = vmatpush1.msra.mxu0 0.0
    %6949 = vmatprep.subr.mxu0 0.0
    %6950 = vmatpush1.msra.mxu0 0.0
    %6951 = vmatprep.subr.mxu0 0.0
    %6952 = vmatpush1.msra.mxu0 0.0
    %6953 = vmatprep.subr.mxu0 0.0
    %6954 = vmatpush1.msra.mxu0 %v118
    %6955 = vmatprep.subr.mxu0 0.0
    %6956 = vmatpush2.msra.mxu0 0.0
    %6957 = vmatprep.subr.mxu0 0.0
    %6958 = vmatpush2.msra.mxu0 0.0
    %6959 = vmatprep.subr.mxu0 0.0
    %6960 = vmatpush2.msra.mxu0 0.0
    %6961 = vmatprep.subr.mxu0 0.0
    %6962 = vmatpush2.msra.mxu0 0.0
    %6963 = vmatprep.subr.mxu0 0.0
    %6964 = vmatpush2.msra.mxu0 0.0
    %6965 = vmatprep.subr.mxu0 0.0
    %6966 = vmatpush2.msra.mxu0 0.0
    %6967 = vmatprep.subr.mxu0 0.0
    %6968 = vmatpush2.msra.mxu0 0.0
    %6969 = vmatprep.subr.mxu0 0.0
    %6970 = vmatpush2.msra.mxu0 0.0
    %6971 = vmatprep.subr.mxu0 0.0
    %6972 = vmatpush2.msra.mxu0 0.0
    %6973 = vmatprep.subr.mxu0 0.0
    %6974 = vmatpush2.msra.mxu0 0.0
    %6975 = vmatprep.subr.mxu0 0.0
    %6976 = vmatpush2.msra.mxu0 0.0
    %6977 = vmatprep.subr.mxu0 0.0
    %6978 = vmatpush2.msra.mxu0 0.0
    %6979 = vmatprep.subr.mxu0 0.0
    %6980 = vmatpush2.msra.mxu0 0.0
    %6981 = vmatprep.subr.mxu0 0.0
    %6982 = vmatpush2.msra.mxu0 0.0
    %6983 = vmatprep.subr.mxu0 0.0
    %6984 = vmatpush2.msra.mxu0 0.0
    %6985 = vmatprep.subr.mxu0 0.0
    %6986 = vmatpush2.msra.mxu0 0.0
    %6987 = vmatprep.mubr.f32.mxu0 0.0
    %6988 = vmatmul.mubr.f32.gmra.mxu0 %v6921
    %v6989 = vpop.f32.mrf.mxu0
    %v6990 = vadd.f32 0.0, %v6989
    %v6991 = vpop.f32.mrf.mxu0
    %6992 = vdwg.mxu0
    %v6995 = vrot.slane %v6990, 7
    %v6996 = vsel %vm714, %v6995, %v6917
    %6997 = vrot.lane.b32.xlu0 %v209, 121
    %v6998 = vpop.permute.xlu0 %6997
    %v7000 = vsel %vm124, %v6996, 0
    %7002 = vmatprep.subr.mxu0 0.0
    %7003 = vmatpush1.msra.mxu0 0.0
    %7004 = vmatprep.subr.mxu0 0.0
    %7005 = vmatpush1.msra.mxu0 0.0
    %7006 = vmatprep.subr.mxu0 0.0
    %7007 = vmatpush1.msra.mxu0 0.0
    %7008 = vmatprep.subr.mxu0 0.0
    %7009 = vmatpush1.msra.mxu0 0.0
    %7010 = vmatprep.subr.mxu0 0.0
    %7011 = vmatpush1.msra.mxu0 0.0
    %7012 = vmatprep.subr.mxu0 0.0
    %7013 = vmatpush1.msra.mxu0 0.0
    %7014 = vmatprep.subr.mxu0 0.0
    %7015 = vmatpush1.msra.mxu0 0.0
    %7016 = vmatprep.subr.mxu0 0.0
    %7017 = vmatpush1.msra.mxu0 0.0
    %7018 = vmatprep.subr.mxu0 0.0
    %7019 = vmatpush1.msra.mxu0 0.0
    %7020 = vmatprep.subr.mxu0 0.0
    %7021 = vmatpush1.msra.mxu0 0.0
    %7022 = vmatprep.subr.mxu0 0.0
    %7023 = vmatpush1.msra.mxu0 0.0
    %7024 = vmatprep.subr.mxu0 0.0
    %7025 = vmatpush1.msra.mxu0 0.0
    %7026 = vmatprep.subr.mxu0 0.0
    %7027 = vmatpush1.msra.mxu0 0.0
    %7028 = vmatprep.subr.mxu0 0.0
    %7029 = vmatpush1.msra.mxu0 0.0
    %7030 = vmatprep.subr.mxu0 0.0
    %7031 = vmatpush1.msra.mxu0 %v106
    %7032 = vmatprep.subr.mxu0 0.0
    %7033 = vmatpush1.msra.mxu0 %v105
    %7034 = vmatprep.subr.mxu0 0.0
    %7035 = vmatpush2.msra.mxu0 0.0
    %7036 = vmatprep.subr.mxu0 0.0
    %7037 = vmatpush2.msra.mxu0 0.0
    %7038 = vmatprep.subr.mxu0 0.0
    %7039 = vmatpush2.msra.mxu0 0.0
    %7040 = vmatprep.subr.mxu0 0.0
    %7041 = vmatpush2.msra.mxu0 0.0
    %7042 = vmatprep.subr.mxu0 0.0
    %7043 = vmatpush2.msra.mxu0 0.0
    %7044 = vmatprep.subr.mxu0 0.0
    %7045 = vmatpush2.msra.mxu0 0.0
    %7046 = vmatprep.subr.mxu0 0.0
    %7047 = vmatpush2.msra.mxu0 0.0
    %7048 = vmatprep.subr.mxu0 0.0
    %7049 = vmatpush2.msra.mxu0 0.0
    %7050 = vmatprep.subr.mxu0 0.0
    %7051 = vmatpush2.msra.mxu0 0.0
    %7052 = vmatprep.subr.mxu0 0.0
    %7053 = vmatpush2.msra.mxu0 0.0
    %7054 = vmatprep.subr.mxu0 0.0
    %7055 = vmatpush2.msra.mxu0 0.0
    %7056 = vmatprep.subr.mxu0 0.0
    %7057 = vmatpush2.msra.mxu0 0.0
    %7058 = vmatprep.subr.mxu0 0.0
    %7059 = vmatpush2.msra.mxu0 0.0
    %7060 = vmatprep.subr.mxu0 0.0
    %7061 = vmatpush2.msra.mxu0 0.0
    %7062 = vmatprep.subr.mxu0 0.0
    %7063 = vmatpush2.msra.mxu0 0.0
    %7064 = vmatprep.subr.mxu0 0.0
    %7065 = vmatpush2.msra.mxu0 0.0
    %7066 = vmatprep.mubr.f32.mxu0 0.0
    %7067 = vmatmul.mubr.f32.gmra.mxu0 %v7000
    %v7068 = vpop.f32.mrf.mxu0
    %v7069 = vadd.f32 %v6998, %v7068
    %v7070 = vpop.f32.mrf.mxu0
    %7071 = vdwg.mxu0
    %7073 = vset.pattern.permute.xlu0 0
    %7074 = vperm.xlu0 %7073, %v7069
    %v7075 = vpop.permute.xlu0 %7074
    %v7077 = vmul.f32 %v7075, %v796
    %7078 = vmatprep.subr.mxu0 0.0
    %7079 = vmatpush1.msra.mxu0 0.0
    %7080 = vmatprep.subr.mxu0 0.0
    %7081 = vmatpush1.msra.mxu0 0.0
    %7082 = vmatprep.subr.mxu0 0.0
    %7083 = vmatpush1.msra.mxu0 0.0
    %7084 = vmatprep.subr.mxu0 0.0
    %7085 = vmatpush1.msra.mxu0 0.0
    %7086 = vmatprep.subr.mxu0 0.0
    %7087 = vmatpush1.msra.mxu0 0.0
    %7088 = vmatprep.subr.mxu0 0.0
    %7089 = vmatpush1.msra.mxu0 0.0
    %7090 = vmatprep.subr.mxu0 0.0
    %7091 = vmatpush1.msra.mxu0 0.0
    %7092 = vmatprep.subr.mxu0 0.0
    %7093 = vmatpush1.msra.mxu0 0.0
    %7094 = vmatprep.subr.mxu0 0.0
    %7095 = vmatpush1.msra.mxu0 0.0
    %7096 = vmatprep.subr.mxu0 0.0
    %7097 = vmatpush1.msra.mxu0 0.0
    %7098 = vmatprep.subr.mxu0 0.0
    %7099 = vmatpush1.msra.mxu0 0.0
    %7100 = vmatprep.subr.mxu0 0.0
    %7101 = vmatpush1.msra.mxu0 0.0
    %7102 = vmatprep.subr.mxu0 0.0
    %7103 = vmatpush1.msra.mxu0 %v72
    %7104 = vmatprep.subr.mxu0 0.0
    %7105 = vmatpush1.msra.mxu0 %v71
    %7106 = vmatprep.subr.mxu0 0.0
    %7107 = vmatpush1.msra.mxu0 %v70
    %7108 = vmatprep.subr.mxu0 0.0
    %7109 = vmatpush1.msra.mxu0 %v69
    %7110 = vmatprep.subr.mxu0 0.0
    %7111 = vmatpush2.msra.mxu0 0.0
    %7112 = vmatprep.subr.mxu0 0.0
    %7113 = vmatpush2.msra.mxu0 0.0
    %7114 = vmatprep.subr.mxu0 0.0
    %7115 = vmatpush2.msra.mxu0 0.0
    %7116 = vmatprep.subr.mxu0 0.0
    %7117 = vmatpush2.msra.mxu0 0.0
    %7118 = vmatprep.subr.mxu0 0.0
    %7119 = vmatpush2.msra.mxu0 0.0
    %7120 = vmatprep.subr.mxu0 0.0
    %7121 = vmatpush2.msra.mxu0 0.0
    %7122 = vmatprep.subr.mxu0 0.0
    %7123 = vmatpush2.msra.mxu0 0.0
    %7124 = vmatprep.subr.mxu0 0.0
    %7125 = vmatpush2.msra.mxu0 0.0
    %7126 = vmatprep.subr.mxu0 0.0
    %7127 = vmatpush2.msra.mxu0 0.0
    %7128 = vmatprep.subr.mxu0 0.0
    %7129 = vmatpush2.msra.mxu0 0.0
    %7130 = vmatprep.subr.mxu0 0.0
    %7131 = vmatpush2.msra.mxu0 0.0
    %7132 = vmatprep.subr.mxu0 0.0
    %7133 = vmatpush2.msra.mxu0 0.0
    %7134 = vmatprep.subr.mxu0 0.0
    %7135 = vmatpush2.msra.mxu0 0.0
    %7136 = vmatprep.subr.mxu0 0.0
    %7137 = vmatpush2.msra.mxu0 0.0
    %7138 = vmatprep.subr.mxu0 0.0
    %7139 = vmatpush2.msra.mxu0 0.0
    %7140 = vmatprep.subr.mxu0 0.0
    %7141 = vmatpush2.msra.mxu0 0.0
    %7142 = vmatprep.mubr.f32.mxu0 0.0
    %7143 = vmatmul.mubr.f32.gmra.mxu0 %v6570
    %v7144 = vpop.f32.mrf.mxu0
    %v7145 = vadd.f32 %v7077, %v7144
    %v7146 = vpop.f32.mrf.mxu0
    %7147 = vdwg.mxu0
    %v7148 = vadd.f32 %v7145, %v871
    %v7149 = vmul.f32 %v7075, %v876
    %7150 = vmatprep.subr.mxu0 0.0
    %7151 = vmatpush1.msra.mxu0 0.0
    %7152 = vmatprep.subr.mxu0 0.0
    %7153 = vmatpush1.msra.mxu0 0.0
    %7154 = vmatprep.subr.mxu0 0.0
    %7155 = vmatpush1.msra.mxu0 0.0
    %7156 = vmatprep.subr.mxu0 0.0
    %7157 = vmatpush1.msra.mxu0 0.0
    %7158 = vmatprep.subr.mxu0 0.0
    %7159 = vmatpush1.msra.mxu0 0.0
    %7160 = vmatprep.subr.mxu0 0.0
    %7161 = vmatpush1.msra.mxu0 0.0
    %7162 = vmatprep.subr.mxu0 0.0
    %7163 = vmatpush1.msra.mxu0 0.0
    %7164 = vmatprep.subr.mxu0 0.0
    %7165 = vmatpush1.msra.mxu0 0.0
    %7166 = vmatprep.subr.mxu0 0.0
    %7167 = vmatpush1.msra.mxu0 0.0
    %7168 = vmatprep.subr.mxu0 0.0
    %7169 = vmatpush1.msra.mxu0 0.0
    %7170 = vmatprep.subr.mxu0 0.0
    %7171 = vmatpush1.msra.mxu0 0.0
    %7172 = vmatprep.subr.mxu0 0.0
    %7173 = vmatpush1.msra.mxu0 0.0
    %7174 = vmatprep.subr.mxu0 0.0
    %7175 = vmatpush1.msra.mxu0 %v76
    %7176 = vmatprep.subr.mxu0 0.0
    %7177 = vmatpush1.msra.mxu0 %v75
    %7178 = vmatprep.subr.mxu0 0.0
    %7179 = vmatpush1.msra.mxu0 %v74
    %7180 = vmatprep.subr.mxu0 0.0
    %7181 = vmatpush1.msra.mxu0 %v73
    %7182 = vmatprep.subr.mxu0 0.0
    %7183 = vmatpush2.msra.mxu0 0.0
    %7184 = vmatprep.subr.mxu0 0.0
    %7185 = vmatpush2.msra.mxu0 0.0
    %7186 = vmatprep.subr.mxu0 0.0
    %7187 = vmatpush2.msra.mxu0 0.0
    %7188 = vmatprep.subr.mxu0 0.0
    %7189 = vmatpush2.msra.mxu0 0.0
    %7190 = vmatprep.subr.mxu0 0.0
    %7191 = vmatpush2.msra.mxu0 0.0
    %7192 = vmatprep.subr.mxu0 0.0
    %7193 = vmatpush2.msra.mxu0 0.0
    %7194 = vmatprep.subr.mxu0 0.0
    %7195 = vmatpush2.msra.mxu0 0.0
    %7196 = vmatprep.subr.mxu0 0.0
    %7197 = vmatpush2.msra.mxu0 0.0
    %7198 = vmatprep.subr.mxu0 0.0
    %7199 = vmatpush2.msra.mxu0 0.0
    %7200 = vmatprep.subr.mxu0 0.0
    %7201 = vmatpush2.msra.mxu0 0.0
    %7202 = vmatprep.subr.mxu0 0.0
    %7203 = vmatpush2.msra.mxu0 0.0
    %7204 = vmatprep.subr.mxu0 0.0
    %7205 = vmatpush2.msra.mxu0 0.0
    %7206 = vmatprep.subr.mxu0 0.0
    %7207 = vmatpush2.msra.mxu0 0.0
    %7208 = vmatprep.subr.mxu0 0.0
    %7209 = vmatpush2.msra.mxu0 0.0
    %7210 = vmatprep.subr.mxu0 0.0
    %7211 = vmatpush2.msra.mxu0 0.0
    %7212 = vmatprep.subr.mxu0 0.0
    %7213 = vmatpush2.msra.mxu0 0.0
    %7214 = vmatprep.mubr.f32.mxu0 0.0
    %7215 = vmatmul.mubr.f32.gmra.mxu0 %v6570
    %v7216 = vpop.f32.mrf.mxu0
    %v7217 = vadd.f32 %v7149, %v7216
    %v7218 = vpop.f32.mrf.mxu0
    %7219 = vdwg.mxu0
    %v7220 = vadd.f32 %v7217, %v951
    %v7221 = vmul.f32 %v7075, %v956
    %7222 = vmatprep.subr.mxu0 0.0
    %7223 = vmatpush1.msra.mxu0 0.0
    %7224 = vmatprep.subr.mxu0 0.0
    %7225 = vmatpush1.msra.mxu0 0.0
    %7226 = vmatprep.subr.mxu0 0.0
    %7227 = vmatpush1.msra.mxu0 0.0
    %7228 = vmatprep.subr.mxu0 0.0
    %7229 = vmatpush1.msra.mxu0 0.0
    %7230 = vmatprep.subr.mxu0 0.0
    %7231 = vmatpush1.msra.mxu0 0.0
    %7232 = vmatprep.subr.mxu0 0.0
    %7233 = vmatpush1.msra.mxu0 0.0
    %7234 = vmatprep.subr.mxu0 0.0
    %7235 = vmatpush1.msra.mxu0 0.0
    %7236 = vmatprep.subr.mxu0 0.0
    %7237 = vmatpush1.msra.mxu0 0.0
    %7238 = vmatprep.subr.mxu0 0.0
    %7239 = vmatpush1.msra.mxu0 0.0
    %7240 = vmatprep.subr.mxu0 0.0
    %7241 = vmatpush1.msra.mxu0 0.0
    %7242 = vmatprep.subr.mxu0 0.0
    %7243 = vmatpush1.msra.mxu0 0.0
    %7244 = vmatprep.subr.mxu0 0.0
    %7245 = vmatpush1.msra.mxu0 0.0
    %7246 = vmatprep.subr.mxu0 0.0
    %7247 = vmatpush1.msra.mxu0 %v80
    %7248 = vmatprep.subr.mxu0 0.0
    %7249 = vmatpush1.msra.mxu0 %v79
    %7250 = vmatprep.subr.mxu0 0.0
    %7251 = vmatpush1.msra.mxu0 %v78
    %7252 = vmatprep.subr.mxu0 0.0
    %7253 = vmatpush1.msra.mxu0 %v77
    %7254 = vmatprep.subr.mxu0 0.0
    %7255 = vmatpush2.msra.mxu0 0.0
    %7256 = vmatprep.subr.mxu0 0.0
    %7257 = vmatpush2.msra.mxu0 0.0
    %7258 = vmatprep.subr.mxu0 0.0
    %7259 = vmatpush2.msra.mxu0 0.0
    %7260 = vmatprep.subr.mxu0 0.0
    %7261 = vmatpush2.msra.mxu0 0.0
    %7262 = vmatprep.subr.mxu0 0.0
    %7263 = vmatpush2.msra.mxu0 0.0
    %7264 = vmatprep.subr.mxu0 0.0
    %7265 = vmatpush2.msra.mxu0 0.0
    %7266 = vmatprep.subr.mxu0 0.0
    %7267 = vmatpush2.msra.mxu0 0.0
    %7268 = vmatprep.subr.mxu0 0.0
    %7269 = vmatpush2.msra.mxu0 0.0
    %7270 = vmatprep.subr.mxu0 0.0
    %7271 = vmatpush2.msra.mxu0 0.0
    %7272 = vmatprep.subr.mxu0 0.0
    %7273 = vmatpush2.msra.mxu0 0.0
    %7274 = vmatprep.subr.mxu0 0.0
    %7275 = vmatpush2.msra.mxu0 0.0
    %7276 = vmatprep.subr.mxu0 0.0
    %7277 = vmatpush2.msra.mxu0 0.0
    %7278 = vmatprep.subr.mxu0 0.0
    %7279 = vmatpush2.msra.mxu0 0.0
    %7280 = vmatprep.subr.mxu0 0.0
    %7281 = vmatpush2.msra.mxu0 0.0
    %7282 = vmatprep.subr.mxu0 0.0
    %7283 = vmatpush2.msra.mxu0 0.0
    %7284 = vmatprep.subr.mxu0 0.0
    %7285 = vmatpush2.msra.mxu0 0.0
    %7286 = vmatprep.mubr.f32.mxu0 0.0
    %7287 = vmatmul.mubr.f32.gmra.mxu0 %v6570
    %v7288 = vpop.f32.mrf.mxu0
    %v7289 = vadd.f32 %v7221, %v7288
    %v7290 = vpop.f32.mrf.mxu0
    %7291 = vdwg.mxu0
    %v7292 = vadd.f32 %v7289, %v1031
    %v7293 = vmul.f32 %v7075, %v1036
    %7294 = vmatprep.subr.mxu0 0.0
    %7295 = vmatpush1.msra.mxu0 0.0
    %7296 = vmatprep.subr.mxu0 0.0
    %7297 = vmatpush1.msra.mxu0 0.0
    %7298 = vmatprep.subr.mxu0 0.0
    %7299 = vmatpush1.msra.mxu0 0.0
    %7300 = vmatprep.subr.mxu0 0.0
    %7301 = vmatpush1.msra.mxu0 0.0
    %7302 = vmatprep.subr.mxu0 0.0
    %7303 = vmatpush1.msra.mxu0 0.0
    %7304 = vmatprep.subr.mxu0 0.0
    %7305 = vmatpush1.msra.mxu0 0.0
    %7306 = vmatprep.subr.mxu0 0.0
    %7307 = vmatpush1.msra.mxu0 0.0
    %7308 = vmatprep.subr.mxu0 0.0
    %7309 = vmatpush1.msra.mxu0 0.0
    %7310 = vmatprep.subr.mxu0 0.0
    %7311 = vmatpush1.msra.mxu0 0.0
    %7312 = vmatprep.subr.mxu0 0.0
    %7313 = vmatpush1.msra.mxu0 0.0
    %7314 = vmatprep.subr.mxu0 0.0
    %7315 = vmatpush1.msra.mxu0 0.0
    %7316 = vmatprep.subr.mxu0 0.0
    %7317 = vmatpush1.msra.mxu0 0.0
    %7318 = vmatprep.subr.mxu0 0.0
    %7319 = vmatpush1.msra.mxu0 %v84
    %7320 = vmatprep.subr.mxu0 0.0
    %7321 = vmatpush1.msra.mxu0 %v83
    %7322 = vmatprep.subr.mxu0 0.0
    %7323 = vmatpush1.msra.mxu0 %v82
    %7324 = vmatprep.subr.mxu0 0.0
    %7325 = vmatpush1.msra.mxu0 %v81
    %7326 = vmatprep.subr.mxu0 0.0
    %7327 = vmatpush2.msra.mxu0 0.0
    %7328 = vmatprep.subr.mxu0 0.0
    %7329 = vmatpush2.msra.mxu0 0.0
    %7330 = vmatprep.subr.mxu0 0.0
    %7331 = vmatpush2.msra.mxu0 0.0
    %7332 = vmatprep.subr.mxu0 0.0
    %7333 = vmatpush2.msra.mxu0 0.0
    %7334 = vmatprep.subr.mxu0 0.0
    %7335 = vmatpush2.msra.mxu0 0.0
    %7336 = vmatprep.subr.mxu0 0.0
    %7337 = vmatpush2.msra.mxu0 0.0
    %7338 = vmatprep.subr.mxu0 0.0
    %7339 = vmatpush2.msra.mxu0 0.0
    %7340 = vmatprep.subr.mxu0 0.0
    %7341 = vmatpush2.msra.mxu0 0.0
    %7342 = vmatprep.subr.mxu0 0.0
    %7343 = vmatpush2.msra.mxu0 0.0
    %7344 = vmatprep.subr.mxu0 0.0
    %7345 = vmatpush2.msra.mxu0 0.0
    %7346 = vmatprep.subr.mxu0 0.0
    %7347 = vmatpush2.msra.mxu0 0.0
    %7348 = vmatprep.subr.mxu0 0.0
    %7349 = vmatpush2.msra.mxu0 0.0
    %7350 = vmatprep.subr.mxu0 0.0
    %7351 = vmatpush2.msra.mxu0 0.0
    %7352 = vmatprep.subr.mxu0 0.0
    %7353 = vmatpush2.msra.mxu0 0.0
    %7354 = vmatprep.subr.mxu0 0.0
    %7355 = vmatpush2.msra.mxu0 0.0
    %7356 = vmatprep.subr.mxu0 0.0
    %7357 = vmatpush2.msra.mxu0 0.0
    %7358 = vmatprep.mubr.f32.mxu0 0.0
    %7359 = vmatmul.mubr.f32.gmra.mxu0 %v6570
    %v7360 = vpop.f32.mrf.mxu0
    %v7361 = vadd.f32 %v7293, %v7360
    %v7362 = vpop.f32.mrf.mxu0
    %7363 = vdwg.mxu0
    %v7364 = vadd.f32 %v7361, %v1111
    %v7365 = vxor.u32 %v7148, 2147483648
    %v7366 = vmul.f32 %v7365, 1.442695
    %v7367 = vpow.pop %v7366
    %v7368 = vadd.f32 %v7367, 1.0
    %v7369 = vrcp.pop %v7368
    %v7370 = vmul.f32 1.0, %v7369
    %v7371 = vxor.u32 %v7220, 2147483648
    %v7372 = vmul.f32 %v7371, 1.442695
    %v7373 = vpow.pop %v7372
    %v7374 = vadd.f32 %v7373, 1.0
    %v7375 = vrcp.pop %v7374
    %v7376 = vmul.f32 1.0, %v7375
    %v7377 = vtanh.pop %v7292
    %v7378 = vxor.u32 %v7364, 2147483648
    %v7379 = vmul.f32 %v7378, 1.442695
    %v7380 = vpow.pop %v7379
    %v7381 = vadd.f32 %v7380, 1.0
    %v7382 = vrcp.pop %v7381
    %v7383 = vmul.f32 1.0, %v7382
    %v7384 = vmul.f32 %v7376, %v6493
    %v7385 = vmul.f32 %v7370, %v7377
    %v7386 = vadd.f32 %v7384, %v7385
    %v7387 = vtanh.pop %v7386
    %v7388 = vmul.f32 %v7383, %v7387
    %7389 = vmatprep.subr.mxu0 0.0
    %7390 = vmatpush1.msra.mxu0 0.0
    %7391 = vmatprep.subr.mxu0 0.0
    %7392 = vmatpush1.msra.mxu0 0.0
    %7393 = vmatprep.subr.mxu0 0.0
    %7394 = vmatpush1.msra.mxu0 0.0
    %7395 = vmatprep.subr.mxu0 0.0
    %7396 = vmatpush1.msra.mxu0 0.0
    %7397 = vmatprep.subr.mxu0 0.0
    %7398 = vmatpush1.msra.mxu0 0.0
    %7399 = vmatprep.subr.mxu0 0.0
    %7400 = vmatpush1.msra.mxu0 0.0
    %7401 = vmatprep.subr.mxu0 0.0
    %7402 = vmatpush1.msra.mxu0 0.0
    %7403 = vmatprep.subr.mxu0 0.0
    %7404 = vmatpush1.msra.mxu0 0.0
    %7405 = vmatprep.subr.mxu0 0.0
    %7406 = vmatpush1.msra.mxu0 0.0
    %7407 = vmatprep.subr.mxu0 0.0
    %7408 = vmatpush1.msra.mxu0 0.0
    %7409 = vmatprep.subr.mxu0 0.0
    %7410 = vmatpush1.msra.mxu0 0.0
    %7411 = vmatprep.subr.mxu0 0.0
    %7412 = vmatpush1.msra.mxu0 0.0
    %7413 = vmatprep.subr.mxu0 0.0
    %7414 = vmatpush1.msra.mxu0 0.0
    %7415 = vmatprep.subr.mxu0 0.0
    %7416 = vmatpush1.msra.mxu0 0.0
    %7417 = vmatprep.subr.mxu0 0.0
    %7418 = vmatpush1.msra.mxu0 %v112
    %7419 = vmatprep.subr.mxu0 0.0
    %7420 = vmatpush1.msra.mxu0 %v111
    %7421 = vmatprep.subr.mxu0 0.0
    %7422 = vmatpush2.msra.mxu0 0.0
    %7423 = vmatprep.subr.mxu0 0.0
    %7424 = vmatpush2.msra.mxu0 0.0
    %7425 = vmatprep.subr.mxu0 0.0
    %7426 = vmatpush2.msra.mxu0 0.0
    %7427 = vmatprep.subr.mxu0 0.0
    %7428 = vmatpush2.msra.mxu0 0.0
    %7429 = vmatprep.subr.mxu0 0.0
    %7430 = vmatpush2.msra.mxu0 0.0
    %7431 = vmatprep.subr.mxu0 0.0
    %7432 = vmatpush2.msra.mxu0 0.0
    %7433 = vmatprep.subr.mxu0 0.0
    %7434 = vmatpush2.msra.mxu0 0.0
    %7435 = vmatprep.subr.mxu0 0.0
    %7436 = vmatpush2.msra.mxu0 0.0
    %7437 = vmatprep.subr.mxu0 0.0
    %7438 = vmatpush2.msra.mxu0 0.0
    %7439 = vmatprep.subr.mxu0 0.0
    %7440 = vmatpush2.msra.mxu0 0.0
    %7441 = vmatprep.subr.mxu0 0.0
    %7442 = vmatpush2.msra.mxu0 0.0
    %7443 = vmatprep.subr.mxu0 0.0
    %7444 = vmatpush2.msra.mxu0 0.0
    %7445 = vmatprep.subr.mxu0 0.0
    %7446 = vmatpush2.msra.mxu0 0.0
    %7447 = vmatprep.subr.mxu0 0.0
    %7448 = vmatpush2.msra.mxu0 0.0
    %7449 = vmatprep.subr.mxu0 0.0
    %7450 = vmatpush2.msra.mxu0 0.0
    %7451 = vmatprep.subr.mxu0 0.0
    %7452 = vmatpush2.msra.mxu0 0.0
    %7453 = vmatprep.mubr.f32.mxu0 0.0
    %7454 = vmatmul.mubr.f32.gmra.mxu0 %v7000
    %v7455 = vpop.f32.mrf.mxu0
    %v7456 = vadd.f32 0.0, %v7455
    %v7457 = vpop.f32.mrf.mxu0
    %7458 = vdwg.mxu0
    %v7460 = vsel %vm210, %v7388, 0
    %7462 = vmatprep.subr.mxu0 0.0
    %7463 = vmatpush1.msra.mxu0 0.0
    %7464 = vmatprep.subr.mxu0 0.0
    %7465 = vmatpush1.msra.mxu0 0.0
    %7466 = vmatprep.subr.mxu0 0.0
    %7467 = vmatpush1.msra.mxu0 0.0
    %7468 = vmatprep.subr.mxu0 0.0
    %7469 = vmatpush1.msra.mxu0 0.0
    %7470 = vmatprep.subr.mxu0 0.0
    %7471 = vmatpush1.msra.mxu0 0.0
    %7472 = vmatprep.subr.mxu0 0.0
    %7473 = vmatpush1.msra.mxu0 0.0
    %7474 = vmatprep.subr.mxu0 0.0
    %7475 = vmatpush1.msra.mxu0 0.0
    %7476 = vmatprep.subr.mxu0 0.0
    %7477 = vmatpush1.msra.mxu0 0.0
    %7478 = vmatprep.subr.mxu0 0.0
    %7479 = vmatpush1.msra.mxu0 0.0
    %7480 = vmatprep.subr.mxu0 0.0
    %7481 = vmatpush1.msra.mxu0 0.0
    %7482 = vmatprep.subr.mxu0 0.0
    %7483 = vmatpush1.msra.mxu0 0.0
    %7484 = vmatprep.subr.mxu0 0.0
    %7485 = vmatpush1.msra.mxu0 0.0
    %7486 = vmatprep.subr.mxu0 0.0
    %7487 = vmatpush1.msra.mxu0 %v110
    %7488 = vmatprep.subr.mxu0 0.0
    %7489 = vmatpush1.msra.mxu0 %v109
    %7490 = vmatprep.subr.mxu0 0.0
    %7491 = vmatpush1.msra.mxu0 %v108
    %7492 = vmatprep.subr.mxu0 0.0
    %7493 = vmatpush1.msra.mxu0 %v107
    %7494 = vmatprep.subr.mxu0 0.0
    %7495 = vmatpush2.msra.mxu0 0.0
    %7496 = vmatprep.subr.mxu0 0.0
    %7497 = vmatpush2.msra.mxu0 0.0
    %7498 = vmatprep.subr.mxu0 0.0
    %7499 = vmatpush2.msra.mxu0 0.0
    %7500 = vmatprep.subr.mxu0 0.0
    %7501 = vmatpush2.msra.mxu0 0.0
    %7502 = vmatprep.subr.mxu0 0.0
    %7503 = vmatpush2.msra.mxu0 0.0
    %7504 = vmatprep.subr.mxu0 0.0
    %7505 = vmatpush2.msra.mxu0 0.0
    %7506 = vmatprep.subr.mxu0 0.0
    %7507 = vmatpush2.msra.mxu0 0.0
    %7508 = vmatprep.subr.mxu0 0.0
    %7509 = vmatpush2.msra.mxu0 0.0
    %7510 = vmatprep.subr.mxu0 0.0
    %7511 = vmatpush2.msra.mxu0 0.0
    %7512 = vmatprep.subr.mxu0 0.0
    %7513 = vmatpush2.msra.mxu0 0.0
    %7514 = vmatprep.subr.mxu0 0.0
    %7515 = vmatpush2.msra.mxu0 0.0
    %7516 = vmatprep.subr.mxu0 0.0
    %7517 = vmatpush2.msra.mxu0 0.0
    %7518 = vmatprep.subr.mxu0 0.0
    %7519 = vmatpush2.msra.mxu0 0.0
    %7520 = vmatprep.subr.mxu0 0.0
    %7521 = vmatpush2.msra.mxu0 0.0
    %7522 = vmatprep.subr.mxu0 0.0
    %7523 = vmatpush2.msra.mxu0 0.0
    %7524 = vmatprep.subr.mxu0 0.0
    %7525 = vmatpush2.msra.mxu0 0.0
    %7526 = vmatprep.mubr.f32.mxu0 0.0
    %7527 = vmatmul.mubr.f32.gmra.mxu0 %v7460
    %v7528 = vpop.f32.mrf.mxu0
    %v7529 = vadd.f32 %v7456, %v7528
    %v7530 = vpop.f32.mrf.mxu0
    %7531 = vdwg.mxu0
    %v7532 = vstv %s116
    %v7533 = vadd.f32 %v7529, %v7532
    %vm7534 = vcmask 1024
    %7535 = vst.msk [vmem:[%s4] sm:$0x3] %vm7534, %v7533
    // Predicated region
    $region34: #{tpu_custom_call.1} parent=1 // pred_check
      _
    $region35: #{tpu_custom_call.1} parent=1 // pred_check_branch
      %7537 = sbr.rel (0) target = $region37
    $region36: #{tpu_custom_call.1} parent=1 // pred_region
      _
    $region37: #{tpu_custom_call.1} parent=1 // pred_fallthru
      _
    // Predicated region
    $region38: #{tpu_custom_call.1} parent=1 // pred_check
      _
    $region39: #{tpu_custom_call.1} parent=1 // pred_check_branch
      %7539 = sbr.rel (0) target = $region41
    $region40: #{tpu_custom_call.1} parent=1 // pred_region
      _
    $region41: #{tpu_custom_call.1} parent=1 // pred_fallthru
      _
    %7540 = vsyncpa [#allocation3], 1
    %7541 = vsyncpa [#allocation6], 1
    %7542 = vsyncpa [#allocation4], 1

</llo_original>
